<compile_context>
chip_gen: v7x
topology: tpu7x:2x2x1
jax: 0.10.0
libtpu: 0.0.40
codegen_flags: <defaults>
</compile_context>

<pallas_src>
import functools

import jax
import jax.numpy as jnp
import numpy as np
from jax.experimental import pallas as pl
from jax.experimental.pallas import tpu as pltpu

# Set to jnp.bfloat16 on v6e/v7x to halve operand bytes (accumulation stays f32).
MATMUL_DTYPE = jnp.float32


# ----------------------------- in-kernel helpers -----------------------------

def _conv3x3(read_rows, w_ref, b_ref, n_rows, width):
    """VALID 3x3 conv + bias + ReLU on a flat (row = h*width + w, cin) activation.

    out[p] = relu(sum_{kh,kw} act[p + kh*width + kw] @ W[kh,kw] + b)
    `read_rows(off, n)` returns rows [off, off+n) of the activation.
    Weights are passed flattened as (9*cin, cout) in (kh, kw, cin) row order.
    """
    cin = w_ref.shape[0] // 9
    cout = w_ref.shape[1]
    acc = jnp.zeros((n_rows, cout), jnp.float32)
    for kh in range(3):
        for kw in range(3):
            k = kh * 3 + kw
            lhs = read_rows(kh * width + kw, n_rows)                # (n_rows, cin)
            acc = acc + jnp.dot(lhs, w_ref[k * cin:(k + 1) * cin, :],
                                preferred_element_type=jnp.float32)
    return jnp.maximum(acc + b_ref[...], 0.0)


def _pool2x2(act, width, m_rows, sel_ref):
    """2x2 / stride-2 max pool on a flat (row = h*width + w, c) activation.

    Stride-1 window max via 4 row-shifted slices, then a 0/1 selection matmul
    that keeps the stride-2 rows and re-compacts to the pooled flat width.
    `act` may be a Ref (VMEM scratch) or a value.
    """
    m = jnp.maximum(
        jnp.maximum(act[0:m_rows, :], act[1:m_rows + 1, :]),
        jnp.maximum(act[width:width + m_rows, :],
                    act[width + 1:width + 1 + m_rows, :]))
    return jnp.dot(sel_ref[...], m, preferred_element_type=jnp.float32)


def _fused_reward_kernel(x_ref, w1_ref, b1_ref, w2_ref, b2_ref, w3_ref, b3_ref,
                         s1_ref, s2_ref, wf1_ref, bf1_ref, wf2_ref, bf2_ref,
                         o_ref, act1_ref, act2_ref, *, w0, wp1):
    r1 = act1_ref.shape[0]          # rows of conv1 output kept
    r2 = act2_ref.shape[0]          # rows of conv2 output kept
    m1 = s1_ref.shape[1]            # rows of stride-1 pool1 max
    m2 = s2_ref.shape[1]            # rows of stride-1 pool2 max
    npos = s2_ref.shape[0]          # spatial positions after pool2
    nh = bf1_ref.shape[1]           # MLP hidden width (128)
    r3 = m2 + wp1 + 1               # rows of conv3 output kept
    cdt = act1_ref.dtype

    # conv1 + ReLU  (flat input block -> VMEM scratch)
    h = _conv3x3(lambda off, n: x_ref[0, off:off + n, :], w1_ref, b1_ref, r1, w0)
    act1_ref[...] = h.astype(cdt)

    # conv2 + ReLU  (scratch -> scratch)
    h = _conv3x3(lambda off, n: act1_ref[off:off + n, :], w2_ref, b2_ref, r2, w0)
    act2_ref[...] = h.astype(cdt)

    # maxpool 2x2 #1  (re-compacts flat width w0 -> wp1)
    a1 = _pool2x2(act2_ref, w0, m1, s1_ref).astype(cdt)

    # conv3 + ReLU  (on the compact pooled activation, width wp1)
    h3 = _conv3x3(lambda off, n: a1[off:off + n, :], w3_ref, b3_ref, r3, wp1)
    h3 = h3.astype(cdt)

    # maxpool 2x2 #2
    a2 = _pool2x2(h3, wp1, m2, s2_ref).astype(cdt)                  # (npos, c3)

    # MLP head.  PyTorch flatten order is (c, h, w) = (c, p); wf1 is passed
    # pre-reshaped to (c3, npos*nh) so one matmul + a diagonal-block sum
    # realizes feats @ Wf1 without any transpose/reshape of a2 in-kernel.
    hd = jnp.dot(a2, wf1_ref[...], preferred_element_type=jnp.float32)
    h1 = bf1_ref[...]
    for p in range(npos):
        h1 = h1 + hd[p:p + 1, p * nh:(p + 1) * nh]
    h1 = jnp.maximum(h1, 0.0)                                       # (1, nh)
    # 128 -> 1 linear as VPU multiply + lane reduction (no 1-lane MXU pass).
    out = jnp.sum(h1 * wf2_ref[...], axis=1, keepdims=True) + bf2_ref[...]
    o_ref[0] = out.astype(o_ref.dtype)


# ------------------------------ host-side helpers ----------------------------

def _make_select(out_h, out_w, in_w, n_cols, dtype, n_rows=None):
    """0/1 matrix picking flat rows 2*h*in_w + 2*w (stride-2 subsample)."""
    n_valid = out_h * out_w
    n_rows = n_valid if n_rows is None else n_rows
    s = np.zeros((n_rows, n_cols), np.float32)
    for r in range(n_valid):
        hh, ww = divmod(r, out_w)
        s[r, 2 * hh * in_w + 2 * ww] = 1.0
    return jnp.asarray(s, dtype=dtype)


def trainable_reward_forward(x_nchw, params):
    B, C, H, W = x_nchw.shape
    c1 = params["w1"].shape[-1]
    c2 = params["w2"].shape[-1]
    c3 = params["w3"].shape[-1]
    nh = params["wf1"].shape[-1]

    # spatial bookkeeping (VALID 3x3 convs, floor 2x2 pools)
    Hp1, Wp1 = (H - 4) // 2, (W - 4) // 2          # after conv1, conv2, pool1
    Hp2, Wp2 = (Hp1 - 2) // 2, (Wp1 - 2) // 2      # after conv3, pool2
    npos = Hp2 * Wp2

    # flat-row ("shift & matmul") sizes — each stage keeps exactly the rows the
    # next stage needs (valid outputs never read garbage/wrapped rows).
    M1 = 2 * (Hp1 - 1) * W + 2 * (Wp1 - 1) + 1     # stride-1 pool1 max rows
    R2 = M1 + W + 1                                # conv2 output rows
    R1 = R2 + 2 * W + 2                            # conv1 output rows
    R0 = R1 + 2 * W + 2                            # flat input rows needed
    M2 = 2 * (Hp2 - 1) * Wp1 + 2 * (Wp2 - 1) + 1   # stride-1 pool2 max rows
    R3 = M2 + Wp1 + 1                              # conv3 output rows
    A1R = max(Hp1 * Wp1, R3 + 2 * Wp1 + 2)         # pooled-activation rows

    # NCHW -> NHWC -> flat (h*W + w, c); pad with zero rows if the shift window
    # runs past H*W (not needed for even H, W).
    x_flat = jnp.transpose(x_nchw, (0, 2, 3, 1)).reshape(B, H * W, C)
    if R0 > H * W:
        x_flat = jnp.pad(x_flat, ((0, 0), (0, R0 - H * W), (0, 0)))
    x_flat = x_flat.astype(MATMUL_DTYPE)

    # conv weights flattened HWIO -> (9*cin, cout), (kh, kw, cin) row order.
    w1f = params["w1"].reshape(9 * C, c1).astype(MATMUL_DTYPE)
    w2f = params["w2"].reshape(9 * c1, c2).astype(MATMUL_DTYPE)
    w3f = params["w3"].reshape(9 * c2, c3).astype(MATMUL_DTYPE)
    b1 = params["b1"].reshape(1, c1).astype(jnp.float32)
    b2 = params["b2"].reshape(1, c2).astype(jnp.float32)
    b3 = params["b3"].reshape(1, c3).astype(jnp.float32)
    # Linear(flat,128): rows are (c, p) in PyTorch flatten order; regroup to
    # (c3, npos*nh) so column block p holds position p's weights.
    wf1c = params["wf1"].reshape(c3, npos * nh).astype(MATMUL_DTYPE)
    bf1 = params["bf1"].reshape(1, nh).astype(jnp.float32)
    wf2r = params["wf2"].reshape(1, nh).astype(jnp.float32)
    bf2 = params["bf2"].reshape(1, 1).astype(jnp.float32)

    s1 = _make_select(Hp1, Wp1, W, M1, MATMUL_DTYPE, n_rows=A1R)
    s2 = _make_select(Hp2, Wp2, Wp1, M2, MATMUL_DTYPE)

    kernel = functools.partial(_fused_reward_kernel, w0=W, wp1=Wp1)
    const2d = lambda shape: pl.BlockSpec(shape, lambda i: (0, 0))

    out = pl.pallas_call(
        kernel,
        out_shape=jax.ShapeDtypeStruct((B, 1, 1), jnp.float32),
        grid=(B,),
        in_specs=[
            pl.BlockSpec((1, R0, C), lambda i: (i, 0, 0)),
            const2d(w1f.shape), const2d(b1.shape),
            const2d(w2f.shape), const2d(b2.shape),
            const2d(w3f.shape), const2d(b3.shape),
            const2d(s1.shape), const2d(s2.shape),
            const2d(wf1c.shape), const2d(bf1.shape),
            const2d(wf2r.shape), const2d(bf2.shape),
        ],
        out_specs=pl.BlockSpec((1, 1, 1), lambda i: (i, 0, 0)),
        scratch_shapes=[
            pltpu.VMEM((R1, c1), MATMUL_DTYPE),   # conv1 output
            pltpu.VMEM((R2, c2), MATMUL_DTYPE),   # conv2 output
        ],
        compiler_params=pltpu.CompilerParams(
            dimension_semantics=("parallel",)),   # 1 image / TensorCore on v7x
    )(x_flat, w1f, b1, w2f, b2, w3f, b3, s1, s2, wf1c, bf1, wf2r, bf2)
    return out.reshape(B, 1)


# ----------------------------- params / reference ---------------------------

def init_params(key, in_shape):
    C, H, W = in_shape
    flat = 64 * ((H - 4) // 2 - 2) // 2 * ((W - 4) // 2 - 2) // 2  # PyTorch expr
    ks = jax.random.split(key, 10)

    def cw(k, cin, cout):
        return jax.random.normal(k, (3, 3, cin, cout), jnp.float32) * (2.0 / (9 * cin)) ** 0.5

    def lw(k, fin, fout):
        return jax.random.normal(k, (fin, fout), jnp.float32) * (2.0 / fin) ** 0.5

    return {
        "w1": cw(ks[0], C, 32),   "b1": jax.random.normal(ks[1], (32,), jnp.float32) * 0.01,
        "w2": cw(ks[2], 32, 64),  "b2": jax.random.normal(ks[3], (64,), jnp.float32) * 0.01,
        "w3": cw(ks[4], 64, 64),  "b3": jax.random.normal(ks[5], (64,), jnp.float32) * 0.01,
        "wf1": lw(ks[6], flat, 128), "bf1": jax.random.normal(ks[7], (128,), jnp.float32) * 0.01,
        "wf2": lw(ks[8], 128, 1),    "bf2": jax.random.normal(ks[9], (1,), jnp.float32) * 0.01,
    }


def reference_forward(x_nchw, params):
    x = jnp.transpose(x_nchw, (0, 2, 3, 1))

    def conv(x, w, b):
        y = jax.lax.conv_general_dilated(
            x, w, window_strides=(1, 1), padding="VALID",
            dimension_numbers=("NHWC", "HWIO", "NHWC"))
        return jnp.maximum(y + b.reshape(1, 1, 1, -1), 0.0)

    def pool(x):
        Ho, Wo = x.shape[1] // 2, x.shape[2] // 2
        return jnp.maximum(
            jnp.maximum(x[:, 0:2 * Ho:2, 0:2 * Wo:2], x[:, 0:2 * Ho:2, 1:2 * Wo:2]),
            jnp.maximum(x[:, 1:2 * Ho:2, 0:2 * Wo:2], x[:, 1:2 * Ho:2, 1:2 * Wo:2]))

    h = conv(x, params["w1"], params["b1"])
    h = conv(h, params["w2"], params["b2"])
    h = pool(h)
    h = conv(h, params["w3"], params["b3"])
    h = pool(h)
    B = h.shape[0]
    f = jnp.transpose(h, (0, 3, 1, 2)).reshape(B, -1)
    h1 = jnp.maximum(f @ params["wf1"] + params["bf1"].reshape(1, -1), 0.0)
    return h1 @ params["wf2"] + params["bf2"].reshape(1, -1)


if __name__ == "__main__":
    key = jax.random.PRNGKey(0)
    k_x, k_p = jax.random.split(key)

    B, C, H, W = 2, 4, 16, 16                    # in_shape = (4, 16, 16)
    x = jax.random.normal(k_x, (B, C, H, W), jnp.float32)
    params = init_params(k_p, (C, H, W))

    out = jax.jit(trainable_reward_forward)(x, params)
    out = jax.block_until_ready(out)
    assert out.shape == (B, 1) and out.dtype == jnp.float32

    ref = jax.block_until_ready(reference_forward(x, params))
    assert np.allclose(np.asarray(out), np.asarray(ref), rtol=1e-2, atol=1e-2), (out, ref)

    print("KERNEL_OK")
</pallas_src>

<mosaic_0001>
module attributes {stable_mosaic.version = 11 : i64} {
  func.func @_fused_reward_kernel(%arg0: i32, %arg1: memref<1x256x4xf32, #tpu.memory_space<vmem>>, %arg2: memref<36x32xf32, #tpu.memory_space<vmem>>, %arg3: memref<1x32xf32, #tpu.memory_space<vmem>>, %arg4: memref<288x64xf32, #tpu.memory_space<vmem>>, %arg5: memref<1x64xf32, #tpu.memory_space<vmem>>, %arg6: memref<576x64xf32, #tpu.memory_space<vmem>>, %arg7: memref<1x64xf32, #tpu.memory_space<vmem>>, %arg8: memref<36x171xf32, #tpu.memory_space<vmem>>, %arg9: memref<4x15xf32, #tpu.memory_space<vmem>>, %arg10: memref<64x512xf32, #tpu.memory_space<vmem>>, %arg11: memref<1x128xf32, #tpu.memory_space<vmem>>, %arg12: memref<1x128xf32, #tpu.memory_space<vmem>>, %arg13: memref<1x1xf32, #tpu.memory_space<vmem>>, %arg14: memref<1x1x1xf32, #tpu.memory_space<vmem>>, %arg15: memref<222x32xf32, #tpu.memory_space<vmem>>, %arg16: memref<188x64xf32, #tpu.memory_space<vmem>>) attributes {dimension_semantics = [#tpu.dimension_semantics<parallel>], iteration_bounds = array<i64: 2>, scalar_prefetch = 0 : i64, scratch_operands = 2 : i64, tpu.core_type = #tpu.core_type<tc>, window_params = [{transform_indices = @transform_0, window_bounds = array<i64: 1, 256, 4>}, {pipeline_mode = #tpu.pipeline_mode<synchronous>, transform_indices = @transform_1, window_bounds = array<i64: 36, 32>}, {pipeline_mode = #tpu.pipeline_mode<synchronous>, transform_indices = @transform_2, window_bounds = array<i64: 1, 32>}, {pipeline_mode = #tpu.pipeline_mode<synchronous>, transform_indices = @transform_3, window_bounds = array<i64: 288, 64>}, {pipeline_mode = #tpu.pipeline_mode<synchronous>, transform_indices = @transform_4, window_bounds = array<i64: 1, 64>}, {pipeline_mode = #tpu.pipeline_mode<synchronous>, transform_indices = @transform_5, window_bounds = array<i64: 576, 64>}, {pipeline_mode = #tpu.pipeline_mode<synchronous>, transform_indices = @transform_6, window_bounds = array<i64: 1, 64>}, {pipeline_mode = #tpu.pipeline_mode<synchronous>, transform_indices = @transform_7, window_bounds = array<i64: 36, 171>}, {pipeline_mode = #tpu.pipeline_mode<synchronous>, transform_indices = @transform_8, window_bounds = array<i64: 4, 15>}, {pipeline_mode = #tpu.pipeline_mode<synchronous>, transform_indices = @transform_9, window_bounds = array<i64: 64, 512>}, {pipeline_mode = #tpu.pipeline_mode<synchronous>, transform_indices = @transform_10, window_bounds = array<i64: 1, 128>}, {pipeline_mode = #tpu.pipeline_mode<synchronous>, transform_indices = @transform_11, window_bounds = array<i64: 1, 128>}, {pipeline_mode = #tpu.pipeline_mode<synchronous>, transform_indices = @transform_12, window_bounds = array<i64: 1, 1>}, {transform_indices = @transform_13, window_bounds = array<i64: 1, 1, 1>}]} {
    %cst = arith.constant 0.000000e+00 : f32
    %0 = vector.broadcast %cst : f32 to vector<222x32xf32>
    %c0 = arith.constant 0 : index
    %c0_0 = arith.constant 0 : index
    %c0_1 = arith.constant 0 : index
    %1 = vector.load %arg1[%c0, %c0_0, %c0_1] : memref<1x256x4xf32, #tpu.memory_space<vmem>>, vector<1x222x4xf32>
    %2 = vector.shape_cast %1 : vector<1x222x4xf32> to vector<222x4xf32>
    %c0_2 = arith.constant 0 : index
    %c0_3 = arith.constant 0 : index
    %3 = vector.load %arg2[%c0_2, %c0_3] : memref<36x32xf32, #tpu.memory_space<vmem>>, vector<4x32xf32>
    %cst_4 = arith.constant dense<0.000000e+00> : vector<222x32xf32>
    %4 = tpu.matmul %2, %3, %cst_4 {dimension_numbers = #tpu.dot_dimension_numbers<[1], [0], [0], [1], [0, 0, 1, 1], [], []>} : vector<222x4xf32>, vector<4x32xf32>, vector<222x32xf32> -> vector<222x32xf32>
    %5 = arith.addf %0, %4 : vector<222x32xf32>
    %c0_5 = arith.constant 0 : index
    %c1 = arith.constant 1 : index
    %c0_6 = arith.constant 0 : index
    %6 = vector.load %arg1[%c0_5, %c1, %c0_6] : memref<1x256x4xf32, #tpu.memory_space<vmem>>, vector<1x222x4xf32>
    %7 = vector.shape_cast %6 : vector<1x222x4xf32> to vector<222x4xf32>
    %c4 = arith.constant 4 : index
    %c0_7 = arith.constant 0 : index
    %8 = vector.load %arg2[%c4, %c0_7] : memref<36x32xf32, #tpu.memory_space<vmem>>, vector<4x32xf32>
    %cst_8 = arith.constant dense<0.000000e+00> : vector<222x32xf32>
    %9 = tpu.matmul %7, %8, %cst_8 {dimension_numbers = #tpu.dot_dimension_numbers<[1], [0], [0], [1], [0, 0, 1, 1], [], []>} : vector<222x4xf32>, vector<4x32xf32>, vector<222x32xf32> -> vector<222x32xf32>
    %10 = arith.addf %5, %9 : vector<222x32xf32>
    %c0_9 = arith.constant 0 : index
    %c2 = arith.constant 2 : index
    %c0_10 = arith.constant 0 : index
    %11 = vector.load %arg1[%c0_9, %c2, %c0_10] : memref<1x256x4xf32, #tpu.memory_space<vmem>>, vector<1x222x4xf32>
    %12 = vector.shape_cast %11 : vector<1x222x4xf32> to vector<222x4xf32>
    %c8 = arith.constant 8 : index
    %c0_11 = arith.constant 0 : index
    %13 = vector.load %arg2[%c8, %c0_11] : memref<36x32xf32, #tpu.memory_space<vmem>>, vector<4x32xf32>
    %cst_12 = arith.constant dense<0.000000e+00> : vector<222x32xf32>
    %14 = tpu.matmul %12, %13, %cst_12 {dimension_numbers = #tpu.dot_dimension_numbers<[1], [0], [0], [1], [0, 0, 1, 1], [], []>} : vector<222x4xf32>, vector<4x32xf32>, vector<222x32xf32> -> vector<222x32xf32>
    %15 = arith.addf %10, %14 : vector<222x32xf32>
    %c0_13 = arith.constant 0 : index
    %c16 = arith.constant 16 : index
    %c0_14 = arith.constant 0 : index
    %16 = vector.load %arg1[%c0_13, %c16, %c0_14] : memref<1x256x4xf32, #tpu.memory_space<vmem>>, vector<1x222x4xf32>
    %17 = vector.shape_cast %16 : vector<1x222x4xf32> to vector<222x4xf32>
    %c12 = arith.constant 12 : index
    %c0_15 = arith.constant 0 : index
    %18 = vector.load %arg2[%c12, %c0_15] : memref<36x32xf32, #tpu.memory_space<vmem>>, vector<4x32xf32>
    %cst_16 = arith.constant dense<0.000000e+00> : vector<222x32xf32>
    %19 = tpu.matmul %17, %18, %cst_16 {dimension_numbers = #tpu.dot_dimension_numbers<[1], [0], [0], [1], [0, 0, 1, 1], [], []>} : vector<222x4xf32>, vector<4x32xf32>, vector<222x32xf32> -> vector<222x32xf32>
    %20 = arith.addf %15, %19 : vector<222x32xf32>
    %c0_17 = arith.constant 0 : index
    %c17 = arith.constant 17 : index
    %c0_18 = arith.constant 0 : index
    %21 = vector.load %arg1[%c0_17, %c17, %c0_18] : memref<1x256x4xf32, #tpu.memory_space<vmem>>, vector<1x222x4xf32>
    %22 = vector.shape_cast %21 : vector<1x222x4xf32> to vector<222x4xf32>
    %c16_19 = arith.constant 16 : index
    %c0_20 = arith.constant 0 : index
    %23 = vector.load %arg2[%c16_19, %c0_20] : memref<36x32xf32, #tpu.memory_space<vmem>>, vector<4x32xf32>
    %cst_21 = arith.constant dense<0.000000e+00> : vector<222x32xf32>
    %24 = tpu.matmul %22, %23, %cst_21 {dimension_numbers = #tpu.dot_dimension_numbers<[1], [0], [0], [1], [0, 0, 1, 1], [], []>} : vector<222x4xf32>, vector<4x32xf32>, vector<222x32xf32> -> vector<222x32xf32>
    %25 = arith.addf %20, %24 : vector<222x32xf32>
    %c0_22 = arith.constant 0 : index
    %c18 = arith.constant 18 : index
    %c0_23 = arith.constant 0 : index
    %26 = vector.load %arg1[%c0_22, %c18, %c0_23] : memref<1x256x4xf32, #tpu.memory_space<vmem>>, vector<1x222x4xf32>
    %27 = vector.shape_cast %26 : vector<1x222x4xf32> to vector<222x4xf32>
    %c20 = arith.constant 20 : index
    %c0_24 = arith.constant 0 : index
    %28 = vector.load %arg2[%c20, %c0_24] : memref<36x32xf32, #tpu.memory_space<vmem>>, vector<4x32xf32>
    %cst_25 = arith.constant dense<0.000000e+00> : vector<222x32xf32>
    %29 = tpu.matmul %27, %28, %cst_25 {dimension_numbers = #tpu.dot_dimension_numbers<[1], [0], [0], [1], [0, 0, 1, 1], [], []>} : vector<222x4xf32>, vector<4x32xf32>, vector<222x32xf32> -> vector<222x32xf32>
    %30 = arith.addf %25, %29 : vector<222x32xf32>
    %c0_26 = arith.constant 0 : index
    %c32 = arith.constant 32 : index
    %c0_27 = arith.constant 0 : index
    %31 = vector.load %arg1[%c0_26, %c32, %c0_27] : memref<1x256x4xf32, #tpu.memory_space<vmem>>, vector<1x222x4xf32>
    %32 = vector.shape_cast %31 : vector<1x222x4xf32> to vector<222x4xf32>
    %c24 = arith.constant 24 : index
    %c0_28 = arith.constant 0 : index
    %33 = vector.load %arg2[%c24, %c0_28] : memref<36x32xf32, #tpu.memory_space<vmem>>, vector<4x32xf32>
    %cst_29 = arith.constant dense<0.000000e+00> : vector<222x32xf32>
    %34 = tpu.matmul %32, %33, %cst_29 {dimension_numbers = #tpu.dot_dimension_numbers<[1], [0], [0], [1], [0, 0, 1, 1], [], []>} : vector<222x4xf32>, vector<4x32xf32>, vector<222x32xf32> -> vector<222x32xf32>
    %35 = arith.addf %30, %34 : vector<222x32xf32>
    %c0_30 = arith.constant 0 : index
    %c33 = arith.constant 33 : index
    %c0_31 = arith.constant 0 : index
    %36 = vector.load %arg1[%c0_30, %c33, %c0_31] : memref<1x256x4xf32, #tpu.memory_space<vmem>>, vector<1x222x4xf32>
    %37 = vector.shape_cast %36 : vector<1x222x4xf32> to vector<222x4xf32>
    %c28 = arith.constant 28 : index
    %c0_32 = arith.constant 0 : index
    %38 = vector.load %arg2[%c28, %c0_32] : memref<36x32xf32, #tpu.memory_space<vmem>>, vector<4x32xf32>
    %cst_33 = arith.constant dense<0.000000e+00> : vector<222x32xf32>
    %39 = tpu.matmul %37, %38, %cst_33 {dimension_numbers = #tpu.dot_dimension_numbers<[1], [0], [0], [1], [0, 0, 1, 1], [], []>} : vector<222x4xf32>, vector<4x32xf32>, vector<222x32xf32> -> vector<222x32xf32>
    %40 = arith.addf %35, %39 : vector<222x32xf32>
    %c0_34 = arith.constant 0 : index
    %c34 = arith.constant 34 : index
    %c0_35 = arith.constant 0 : index
    %41 = vector.load %arg1[%c0_34, %c34, %c0_35] : memref<1x256x4xf32, #tpu.memory_space<vmem>>, vector<1x222x4xf32>
    %42 = vector.shape_cast %41 : vector<1x222x4xf32> to vector<222x4xf32>
    %c32_36 = arith.constant 32 : index
    %c0_37 = arith.constant 0 : index
    %43 = vector.load %arg2[%c32_36, %c0_37] : memref<36x32xf32, #tpu.memory_space<vmem>>, vector<4x32xf32>
    %cst_38 = arith.constant dense<0.000000e+00> : vector<222x32xf32>
    %44 = tpu.matmul %42, %43, %cst_38 {dimension_numbers = #tpu.dot_dimension_numbers<[1], [0], [0], [1], [0, 0, 1, 1], [], []>} : vector<222x4xf32>, vector<4x32xf32>, vector<222x32xf32> -> vector<222x32xf32>
    %45 = arith.addf %40, %44 : vector<222x32xf32>
    %c0_39 = arith.constant 0 : index
    %c0_40 = arith.constant 0 : index
    %46 = vector.load %arg3[%c0_39, %c0_40] : memref<1x32xf32, #tpu.memory_space<vmem>>, vector<1x32xf32>
    %47 = vector.broadcast %46 : vector<1x32xf32> to vector<222x32xf32>
    %48 = arith.addf %45, %47 : vector<222x32xf32>
    %cst_41 = arith.constant 0.000000e+00 : f32
    %49 = vector.broadcast %cst_41 : f32 to vector<222x32xf32>
    %50 = arith.maximumf %48, %49 : vector<222x32xf32>
    %c0_42 = arith.constant 0 : index
    %c0_43 = arith.constant 0 : index
    %51 = vector.load %arg15[%c0_42, %c0_43] : memref<222x32xf32, #tpu.memory_space<vmem>>, vector<222x32xf32>
    tpu.vector_store %arg15[%c0_42, %c0_43], %50 {strides = array<i32>} : memref<222x32xf32, #tpu.memory_space<vmem>>, vector<222x32xf32>,
    %cst_44 = arith.constant 0.000000e+00 : f32
    %52 = vector.broadcast %cst_44 : f32 to vector<188x64xf32>
    %c0_45 = arith.constant 0 : index
    %c0_46 = arith.constant 0 : index
    %53 = vector.load %arg15[%c0_45, %c0_46] : memref<222x32xf32, #tpu.memory_space<vmem>>, vector<188x32xf32>
    %c0_47 = arith.constant 0 : index
    %c0_48 = arith.constant 0 : index
    %54 = vector.load %arg4[%c0_47, %c0_48] : memref<288x64xf32, #tpu.memory_space<vmem>>, vector<32x64xf32>
    %cst_49 = arith.constant dense<0.000000e+00> : vector<188x64xf32>
    %55 = tpu.matmul %53, %54, %cst_49 {dimension_numbers = #tpu.dot_dimension_numbers<[1], [0], [0], [1], [0, 0, 1, 1], [], []>} : vector<188x32xf32>, vector<32x64xf32>, vector<188x64xf32> -> vector<188x64xf32>
    %56 = arith.addf %52, %55 : vector<188x64xf32>
    %c1_50 = arith.constant 1 : index
    %c0_51 = arith.constant 0 : index
    %57 = vector.load %arg15[%c1_50, %c0_51] : memref<222x32xf32, #tpu.memory_space<vmem>>, vector<188x32xf32>
    %c32_52 = arith.constant 32 : index
    %c0_53 = arith.constant 0 : index
    %58 = vector.load %arg4[%c32_52, %c0_53] : memref<288x64xf32, #tpu.memory_space<vmem>>, vector<32x64xf32>
    %cst_54 = arith.constant dense<0.000000e+00> : vector<188x64xf32>
    %59 = tpu.matmul %57, %58, %cst_54 {dimension_numbers = #tpu.dot_dimension_numbers<[1], [0], [0], [1], [0, 0, 1, 1], [], []>} : vector<188x32xf32>, vector<32x64xf32>, vector<188x64xf32> -> vector<188x64xf32>
    %60 = arith.addf %56, %59 : vector<188x64xf32>
    %c2_55 = arith.constant 2 : index
    %c0_56 = arith.constant 0 : index
    %61 = vector.load %arg15[%c2_55, %c0_56] : memref<222x32xf32, #tpu.memory_space<vmem>>, vector<188x32xf32>
    %c64 = arith.constant 64 : index
    %c0_57 = arith.constant 0 : index
    %62 = vector.load %arg4[%c64, %c0_57] : memref<288x64xf32, #tpu.memory_space<vmem>>, vector<32x64xf32>
    %cst_58 = arith.constant dense<0.000000e+00> : vector<188x64xf32>
    %63 = tpu.matmul %61, %62, %cst_58 {dimension_numbers = #tpu.dot_dimension_numbers<[1], [0], [0], [1], [0, 0, 1, 1], [], []>} : vector<188x32xf32>, vector<32x64xf32>, vector<188x64xf32> -> vector<188x64xf32>
    %64 = arith.addf %60, %63 : vector<188x64xf32>
    %c16_59 = arith.constant 16 : index
    %c0_60 = arith.constant 0 : index
    %65 = vector.load %arg15[%c16_59, %c0_60] : memref<222x32xf32, #tpu.memory_space<vmem>>, vector<188x32xf32>
    %c96 = arith.constant 96 : index
    %c0_61 = arith.constant 0 : index
    %66 = vector.load %arg4[%c96, %c0_61] : memref<288x64xf32, #tpu.memory_space<vmem>>, vector<32x64xf32>
    %cst_62 = arith.constant dense<0.000000e+00> : vector<188x64xf32>
    %67 = tpu.matmul %65, %66, %cst_62 {dimension_numbers = #tpu.dot_dimension_numbers<[1], [0], [0], [1], [0, 0, 1, 1], [], []>} : vector<188x32xf32>, vector<32x64xf32>, vector<188x64xf32> -> vector<188x64xf32>
    %68 = arith.addf %64, %67 : vector<188x64xf32>
    %c17_63 = arith.constant 17 : index
    %c0_64 = arith.constant 0 : index
    %69 = vector.load %arg15[%c17_63, %c0_64] : memref<222x32xf32, #tpu.memory_space<vmem>>, vector<188x32xf32>
    %c128 = arith.constant 128 : index
    %c0_65 = arith.constant 0 : index
    %70 = vector.load %arg4[%c128, %c0_65] : memref<288x64xf32, #tpu.memory_space<vmem>>, vector<32x64xf32>
    %cst_66 = arith.constant dense<0.000000e+00> : vector<188x64xf32>
    %71 = tpu.matmul %69, %70, %cst_66 {dimension_numbers = #tpu.dot_dimension_numbers<[1], [0], [0], [1], [0, 0, 1, 1], [], []>} : vector<188x32xf32>, vector<32x64xf32>, vector<188x64xf32> -> vector<188x64xf32>
    %72 = arith.addf %68, %71 : vector<188x64xf32>
    %c18_67 = arith.constant 18 : index
    %c0_68 = arith.constant 0 : index
    %73 = vector.load %arg15[%c18_67, %c0_68] : memref<222x32xf32, #tpu.memory_space<vmem>>, vector<188x32xf32>
    %c160 = arith.constant 160 : index
    %c0_69 = arith.constant 0 : index
    %74 = vector.load %arg4[%c160, %c0_69] : memref<288x64xf32, #tpu.memory_space<vmem>>, vector<32x64xf32>
    %cst_70 = arith.constant dense<0.000000e+00> : vector<188x64xf32>
    %75 = tpu.matmul %73, %74, %cst_70 {dimension_numbers = #tpu.dot_dimension_numbers<[1], [0], [0], [1], [0, 0, 1, 1], [], []>} : vector<188x32xf32>, vector<32x64xf32>, vector<188x64xf32> -> vector<188x64xf32>
    %76 = arith.addf %72, %75 : vector<188x64xf32>
    %c32_71 = arith.constant 32 : index
    %c0_72 = arith.constant 0 : index
    %77 = vector.load %arg15[%c32_71, %c0_72] : memref<222x32xf32, #tpu.memory_space<vmem>>, vector<188x32xf32>
    %c192 = arith.constant 192 : index
    %c0_73 = arith.constant 0 : index
    %78 = vector.load %arg4[%c192, %c0_73] : memref<288x64xf32, #tpu.memory_space<vmem>>, vector<32x64xf32>
    %cst_74 = arith.constant dense<0.000000e+00> : vector<188x64xf32>
    %79 = tpu.matmul %77, %78, %cst_74 {dimension_numbers = #tpu.dot_dimension_numbers<[1], [0], [0], [1], [0, 0, 1, 1], [], []>} : vector<188x32xf32>, vector<32x64xf32>, vector<188x64xf32> -> vector<188x64xf32>
    %80 = arith.addf %76, %79 : vector<188x64xf32>
    %c33_75 = arith.constant 33 : index
    %c0_76 = arith.constant 0 : index
    %81 = vector.load %arg15[%c33_75, %c0_76] : memref<222x32xf32, #tpu.memory_space<vmem>>, vector<188x32xf32>
    %c224 = arith.constant 224 : index
    %c0_77 = arith.constant 0 : index
    %82 = vector.load %arg4[%c224, %c0_77] : memref<288x64xf32, #tpu.memory_space<vmem>>, vector<32x64xf32>
    %cst_78 = arith.constant dense<0.000000e+00> : vector<188x64xf32>
    %83 = tpu.matmul %81, %82, %cst_78 {dimension_numbers = #tpu.dot_dimension_numbers<[1], [0], [0], [1], [0, 0, 1, 1], [], []>} : vector<188x32xf32>, vector<32x64xf32>, vector<188x64xf32> -> vector<188x64xf32>
    %84 = arith.addf %80, %83 : vector<188x64xf32>
    %c34_79 = arith.constant 34 : index
    %c0_80 = arith.constant 0 : index
    %85 = vector.load %arg15[%c34_79, %c0_80] : memref<222x32xf32, #tpu.memory_space<vmem>>, vector<188x32xf32>
    %c256 = arith.constant 256 : index
    %c0_81 = arith.constant 0 : index
    %86 = vector.load %arg4[%c256, %c0_81] : memref<288x64xf32, #tpu.memory_space<vmem>>, vector<32x64xf32>
    %cst_82 = arith.constant dense<0.000000e+00> : vector<188x64xf32>
    %87 = tpu.matmul %85, %86, %cst_82 {dimension_numbers = #tpu.dot_dimension_numbers<[1], [0], [0], [1], [0, 0, 1, 1], [], []>} : vector<188x32xf32>, vector<32x64xf32>, vector<188x64xf32> -> vector<188x64xf32>
    %88 = arith.addf %84, %87 : vector<188x64xf32>
    %c0_83 = arith.constant 0 : index
    %c0_84 = arith.constant 0 : index
    %89 = vector.load %arg5[%c0_83, %c0_84] : memref<1x64xf32, #tpu.memory_space<vmem>>, vector<1x64xf32>
    %90 = vector.broadcast %89 : vector<1x64xf32> to vector<188x64xf32>
    %91 = arith.addf %88, %90 : vector<188x64xf32>
    %cst_85 = arith.constant 0.000000e+00 : f32
    %92 = vector.broadcast %cst_85 : f32 to vector<188x64xf32>
    %93 = arith.maximumf %91, %92 : vector<188x64xf32>
    %c0_86 = arith.constant 0 : index
    %c0_87 = arith.constant 0 : index
    %94 = vector.load %arg16[%c0_86, %c0_87] : memref<188x64xf32, #tpu.memory_space<vmem>>, vector<188x64xf32>
    tpu.vector_store %arg16[%c0_86, %c0_87], %93 {strides = array<i32>} : memref<188x64xf32, #tpu.memory_space<vmem>>, vector<188x64xf32>,
    %c0_88 = arith.constant 0 : index
    %c0_89 = arith.constant 0 : index
    %95 = vector.load %arg16[%c0_88, %c0_89] : memref<188x64xf32, #tpu.memory_space<vmem>>, vector<171x64xf32>
    %c1_90 = arith.constant 1 : index
    %c0_91 = arith.constant 0 : index
    %96 = vector.load %arg16[%c1_90, %c0_91] : memref<188x64xf32, #tpu.memory_space<vmem>>, vector<171x64xf32>
    %97 = arith.maximumf %95, %96 : vector<171x64xf32>
    %c16_92 = arith.constant 16 : index
    %c0_93 = arith.constant 0 : index
    %98 = vector.load %arg16[%c16_92, %c0_93] : memref<188x64xf32, #tpu.memory_space<vmem>>, vector<171x64xf32>
    %c17_94 = arith.constant 17 : index
    %c0_95 = arith.constant 0 : index
    %99 = vector.load %arg16[%c17_94, %c0_95] : memref<188x64xf32, #tpu.memory_space<vmem>>, vector<171x64xf32>
    %100 = arith.maximumf %98, %99 : vector<171x64xf32>
    %101 = arith.maximumf %97, %100 : vector<171x64xf32>
    %c0_96 = arith.constant 0 : index
    %c0_97 = arith.constant 0 : index
    %102 = vector.load %arg8[%c0_96, %c0_97] : memref<36x171xf32, #tpu.memory_space<vmem>>, vector<36x171xf32>
    %cst_98 = arith.constant dense<0.000000e+00> : vector<36x64xf32>
    %103 = tpu.matmul %102, %101, %cst_98 {dimension_numbers = #tpu.dot_dimension_numbers<[1], [0], [0], [1], [0, 0, 1, 1], [], []>} : vector<36x171xf32>, vector<171x64xf32>, vector<36x64xf32> -> vector<36x64xf32>
    %cst_99 = arith.constant 0.000000e+00 : f32
    %104 = vector.broadcast %cst_99 : f32 to vector<22x64xf32>
    %105 = vector.extract_strided_slice %103 {offsets = [0, 0], sizes = [22, 64], strides = [1, 1]} : vector<36x64xf32> to vector<22x64xf32>
    %c0_100 = arith.constant 0 : index
    %c0_101 = arith.constant 0 : index
    %106 = vector.load %arg6[%c0_100, %c0_101] : memref<576x64xf32, #tpu.memory_space<vmem>>, vector<64x64xf32>
    %cst_102 = arith.constant dense<0.000000e+00> : vector<22x64xf32>
    %107 = tpu.matmul %105, %106, %cst_102 {dimension_numbers = #tpu.dot_dimension_numbers<[1], [0], [0], [1], [0, 0, 1, 1], [], []>} : vector<22x64xf32>, vector<64x64xf32>, vector<22x64xf32> -> vector<22x64xf32>
    %108 = arith.addf %104, %107 : vector<22x64xf32>
    %109 = vector.extract_strided_slice %103 {offsets = [1, 0], sizes = [22, 64], strides = [1, 1]} : vector<36x64xf32> to vector<22x64xf32>
    %c64_103 = arith.constant 64 : index
    %c0_104 = arith.constant 0 : index
    %110 = vector.load %arg6[%c64_103, %c0_104] : memref<576x64xf32, #tpu.memory_space<vmem>>, vector<64x64xf32>
    %cst_105 = arith.constant dense<0.000000e+00> : vector<22x64xf32>
    %111 = tpu.matmul %109, %110, %cst_105 {dimension_numbers = #tpu.dot_dimension_numbers<[1], [0], [0], [1], [0, 0, 1, 1], [], []>} : vector<22x64xf32>, vector<64x64xf32>, vector<22x64xf32> -> vector<22x64xf32>
    %112 = arith.addf %108, %111 : vector<22x64xf32>
    %113 = vector.extract_strided_slice %103 {offsets = [2, 0], sizes = [22, 64], strides = [1, 1]} : vector<36x64xf32> to vector<22x64xf32>
    %c128_106 = arith.constant 128 : index
    %c0_107 = arith.constant 0 : index
    %114 = vector.load %arg6[%c128_106, %c0_107] : memref<576x64xf32, #tpu.memory_space<vmem>>, vector<64x64xf32>
    %cst_108 = arith.constant dense<0.000000e+00> : vector<22x64xf32>
    %115 = tpu.matmul %113, %114, %cst_108 {dimension_numbers = #tpu.dot_dimension_numbers<[1], [0], [0], [1], [0, 0, 1, 1], [], []>} : vector<22x64xf32>, vector<64x64xf32>, vector<22x64xf32> -> vector<22x64xf32>
    %116 = arith.addf %112, %115 : vector<22x64xf32>
    %117 = vector.extract_strided_slice %103 {offsets = [6, 0], sizes = [22, 64], strides = [1, 1]} : vector<36x64xf32> to vector<22x64xf32>
    %c192_109 = arith.constant 192 : index
    %c0_110 = arith.constant 0 : index
    %118 = vector.load %arg6[%c192_109, %c0_110] : memref<576x64xf32, #tpu.memory_space<vmem>>, vector<64x64xf32>
    %cst_111 = arith.constant dense<0.000000e+00> : vector<22x64xf32>
    %119 = tpu.matmul %117, %118, %cst_111 {dimension_numbers = #tpu.dot_dimension_numbers<[1], [0], [0], [1], [0, 0, 1, 1], [], []>} : vector<22x64xf32>, vector<64x64xf32>, vector<22x64xf32> -> vector<22x64xf32>
    %120 = arith.addf %116, %119 : vector<22x64xf32>
    %121 = vector.extract_strided_slice %103 {offsets = [7, 0], sizes = [22, 64], strides = [1, 1]} : vector<36x64xf32> to vector<22x64xf32>
    %c256_112 = arith.constant 256 : index
    %c0_113 = arith.constant 0 : index
    %122 = vector.load %arg6[%c256_112, %c0_113] : memref<576x64xf32, #tpu.memory_space<vmem>>, vector<64x64xf32>
    %cst_114 = arith.constant dense<0.000000e+00> : vector<22x64xf32>
    %123 = tpu.matmul %121, %122, %cst_114 {dimension_numbers = #tpu.dot_dimension_numbers<[1], [0], [0], [1], [0, 0, 1, 1], [], []>} : vector<22x64xf32>, vector<64x64xf32>, vector<22x64xf32> -> vector<22x64xf32>
    %124 = arith.addf %120, %123 : vector<22x64xf32>
    %125 = vector.extract_strided_slice %103 {offsets = [8, 0], sizes = [22, 64], strides = [1, 1]} : vector<36x64xf32> to vector<22x64xf32>
    %c320 = arith.constant 320 : index
    %c0_115 = arith.constant 0 : index
    %126 = vector.load %arg6[%c320, %c0_115] : memref<576x64xf32, #tpu.memory_space<vmem>>, vector<64x64xf32>
    %cst_116 = arith.constant dense<0.000000e+00> : vector<22x64xf32>
    %127 = tpu.matmul %125, %126, %cst_116 {dimension_numbers = #tpu.dot_dimension_numbers<[1], [0], [0], [1], [0, 0, 1, 1], [], []>} : vector<22x64xf32>, vector<64x64xf32>, vector<22x64xf32> -> vector<22x64xf32>
    %128 = arith.addf %124, %127 : vector<22x64xf32>
    %129 = vector.extract_strided_slice %103 {offsets = [12, 0], sizes = [22, 64], strides = [1, 1]} : vector<36x64xf32> to vector<22x64xf32>
    %c384 = arith.constant 384 : index
    %c0_117 = arith.constant 0 : index
    %130 = vector.load %arg6[%c384, %c0_117] : memref<576x64xf32, #tpu.memory_space<vmem>>, vector<64x64xf32>
    %cst_118 = arith.constant dense<0.000000e+00> : vector<22x64xf32>
    %131 = tpu.matmul %129, %130, %cst_118 {dimension_numbers = #tpu.dot_dimension_numbers<[1], [0], [0], [1], [0, 0, 1, 1], [], []>} : vector<22x64xf32>, vector<64x64xf32>, vector<22x64xf32> -> vector<22x64xf32>
    %132 = arith.addf %128, %131 : vector<22x64xf32>
    %133 = vector.extract_strided_slice %103 {offsets = [13, 0], sizes = [22, 64], strides = [1, 1]} : vector<36x64xf32> to vector<22x64xf32>
    %c448 = arith.constant 448 : index
    %c0_119 = arith.constant 0 : index
    %134 = vector.load %arg6[%c448, %c0_119] : memref<576x64xf32, #tpu.memory_space<vmem>>, vector<64x64xf32>
    %cst_120 = arith.constant dense<0.000000e+00> : vector<22x64xf32>
    %135 = tpu.matmul %133, %134, %cst_120 {dimension_numbers = #tpu.dot_dimension_numbers<[1], [0], [0], [1], [0, 0, 1, 1], [], []>} : vector<22x64xf32>, vector<64x64xf32>, vector<22x64xf32> -> vector<22x64xf32>
    %136 = arith.addf %132, %135 : vector<22x64xf32>
    %137 = vector.extract_strided_slice %103 {offsets = [14, 0], sizes = [22, 64], strides = [1, 1]} : vector<36x64xf32> to vector<22x64xf32>
    %c512 = arith.constant 512 : index
    %c0_121 = arith.constant 0 : index
    %138 = vector.load %arg6[%c512, %c0_121] : memref<576x64xf32, #tpu.memory_space<vmem>>, vector<64x64xf32>
    %cst_122 = arith.constant dense<0.000000e+00> : vector<22x64xf32>
    %139 = tpu.matmul %137, %138, %cst_122 {dimension_numbers = #tpu.dot_dimension_numbers<[1], [0], [0], [1], [0, 0, 1, 1], [], []>} : vector<22x64xf32>, vector<64x64xf32>, vector<22x64xf32> -> vector<22x64xf32>
    %140 = arith.addf %136, %139 : vector<22x64xf32>
    %c0_123 = arith.constant 0 : index
    %c0_124 = arith.constant 0 : index
    %141 = vector.load %arg7[%c0_123, %c0_124] : memref<1x64xf32, #tpu.memory_space<vmem>>, vector<1x64xf32>
    %142 = vector.broadcast %141 : vector<1x64xf32> to vector<22x64xf32>
    %143 = arith.addf %140, %142 : vector<22x64xf32>
    %cst_125 = arith.constant 0.000000e+00 : f32
    %144 = vector.broadcast %cst_125 : f32 to vector<22x64xf32>
    %145 = arith.maximumf %143, %144 : vector<22x64xf32>
    %146 = vector.extract_strided_slice %145 {offsets = [0, 0], sizes = [15, 64], strides = [1, 1]} : vector<22x64xf32> to vector<15x64xf32>
    %147 = vector.extract_strided_slice %145 {offsets = [1, 0], sizes = [15, 64], strides = [1, 1]} : vector<22x64xf32> to vector<15x64xf32>
    %148 = arith.maximumf %146, %147 : vector<15x64xf32>
    %149 = vector.extract_strided_slice %145 {offsets = [6, 0], sizes = [15, 64], strides = [1, 1]} : vector<22x64xf32> to vector<15x64xf32>
    %150 = vector.extract_strided_slice %145 {offsets = [7, 0], sizes = [15, 64], strides = [1, 1]} : vector<22x64xf32> to vector<15x64xf32>
    %151 = arith.maximumf %149, %150 : vector<15x64xf32>
    %152 = arith.maximumf %148, %151 : vector<15x64xf32>
    %c0_126 = arith.constant 0 : index
    %c0_127 = arith.constant 0 : index
    %153 = vector.load %arg9[%c0_126, %c0_127] : memref<4x15xf32, #tpu.memory_space<vmem>>, vector<4x15xf32>
    %cst_128 = arith.constant dense<0.000000e+00> : vector<4x64xf32>
    %154 = tpu.matmul %153, %152, %cst_128 {dimension_numbers = #tpu.dot_dimension_numbers<[1], [0], [0], [1], [0, 0, 1, 1], [], []>} : vector<4x15xf32>, vector<15x64xf32>, vector<4x64xf32> -> vector<4x64xf32>
    %c0_129 = arith.constant 0 : index
    %c0_130 = arith.constant 0 : index
    %155 = vector.load %arg10[%c0_129, %c0_130] : memref<64x512xf32, #tpu.memory_space<vmem>>, vector<64x512xf32>
    %cst_131 = arith.constant dense<0.000000e+00> : vector<4x512xf32>
    %156 = tpu.matmul %154, %155, %cst_131 {dimension_numbers = #tpu.dot_dimension_numbers<[1], [0], [0], [1], [0, 0, 1, 1], [], []>} : vector<4x64xf32>, vector<64x512xf32>, vector<4x512xf32> -> vector<4x512xf32>
    %c0_132 = arith.constant 0 : index
    %c0_133 = arith.constant 0 : index
    %157 = vector.load %arg11[%c0_132, %c0_133] : memref<1x128xf32, #tpu.memory_space<vmem>>, vector<1x128xf32>
    %158 = vector.extract_strided_slice %156 {offsets = [0, 0], sizes = [1, 128], strides = [1, 1]} : vector<4x512xf32> to vector<1x128xf32>
    %159 = arith.addf %157, %158 : vector<1x128xf32>
    %160 = vector.extract_strided_slice %156 {offsets = [1, 128], sizes = [1, 128], strides = [1, 1]} : vector<4x512xf32> to vector<1x128xf32>
    %161 = arith.addf %159, %160 : vector<1x128xf32>
    %162 = vector.extract_strided_slice %156 {offsets = [2, 256], sizes = [1, 128], strides = [1, 1]} : vector<4x512xf32> to vector<1x128xf32>
    %163 = arith.addf %161, %162 : vector<1x128xf32>
    %164 = vector.extract_strided_slice %156 {offsets = [3, 384], sizes = [1, 128], strides = [1, 1]} : vector<4x512xf32> to vector<1x128xf32>
    %165 = arith.addf %163, %164 : vector<1x128xf32>
    %cst_134 = arith.constant 0.000000e+00 : f32
    %166 = vector.broadcast %cst_134 : f32 to vector<1x128xf32>
    %167 = arith.maximumf %165, %166 : vector<1x128xf32>
    %c0_135 = arith.constant 0 : index
    %c0_136 = arith.constant 0 : index
    %168 = vector.load %arg12[%c0_135, %c0_136] : memref<1x128xf32, #tpu.memory_space<vmem>>, vector<1x128xf32>
    %169 = arith.mulf %167, %168 : vector<1x128xf32>
    %cst_137 = arith.constant dense<0.000000e+00> : vector<1xf32>
    %170 = vector.multi_reduction <add>, %169, %cst_137 [1] : vector<1x128xf32> to vector<1xf32>
    %171 = vector.shape_cast %170 : vector<1xf32> to vector<1x1xf32>
    %c0_138 = arith.constant 0 : index
    %c0_139 = arith.constant 0 : index
    %172 = vector.load %arg13[%c0_138, %c0_139] : memref<1x1xf32, #tpu.memory_space<vmem>>, vector<1x1xf32>
    %173 = arith.addf %171, %172 : vector<1x1xf32>
    %c0_140 = arith.constant 0 : index
    %c0_141 = arith.constant 0 : index
    %c0_142 = arith.constant 0 : index
    %174 = vector.load %arg14[%c0_140, %c0_141, %c0_142] : memref<1x1x1xf32, #tpu.memory_space<vmem>>, vector<1x1x1xf32>
    %175 = vector.shape_cast %174 : vector<1x1x1xf32> to vector<1x1xf32>
    %176 = vector.shape_cast %173 : vector<1x1xf32> to vector<1x1x1xf32>
    tpu.vector_store %arg14[%c0_140, %c0_141, %c0_142], %176 {strides = array<i32>} : memref<1x1x1xf32, #tpu.memory_space<vmem>>, vector<1x1x1xf32>,
    return
  }
  func.func @transform_0(%arg0: i32) -> (i32, i32, i32) {
    %c0_i32 = arith.constant 0 : i32
    %c0_i32_0 = arith.constant 0 : i32
    %c0_i32_1 = arith.constant 0 : i32
    return %arg0, %c0_i32, %c0_i32_0 : i32, i32, i32
  }
  func.func @transform_1(%arg0: i32) -> (i32, i32) {
    %c0_i32 = arith.constant 0 : i32
    %c0_i32_0 = arith.constant 0 : i32
    %c0_i32_1 = arith.constant 0 : i32
    return %c0_i32, %c0_i32_0 : i32, i32
  }
  func.func @transform_2(%arg0: i32) -> (i32, i32) {
    %c0_i32 = arith.constant 0 : i32
    %c0_i32_0 = arith.constant 0 : i32
    %c0_i32_1 = arith.constant 0 : i32
    return %c0_i32, %c0_i32_0 : i32, i32
  }
  func.func @transform_3(%arg0: i32) -> (i32, i32) {
    %c0_i32 = arith.constant 0 : i32
    %c0_i32_0 = arith.constant 0 : i32
    %c0_i32_1 = arith.constant 0 : i32
    return %c0_i32, %c0_i32_0 : i32, i32
  }
  func.func @transform_4(%arg0: i32) -> (i32, i32) {
    %c0_i32 = arith.constant 0 : i32
    %c0_i32_0 = arith.constant 0 : i32
    %c0_i32_1 = arith.constant 0 : i32
    return %c0_i32, %c0_i32_0 : i32, i32
  }
  func.func @transform_5(%arg0: i32) -> (i32, i32) {
    %c0_i32 = arith.constant 0 : i32
    %c0_i32_0 = arith.constant 0 : i32
    %c0_i32_1 = arith.constant 0 : i32
    return %c0_i32, %c0_i32_0 : i32, i32
  }
  func.func @transform_6(%arg0: i32) -> (i32, i32) {
    %c0_i32 = arith.constant 0 : i32
    %c0_i32_0 = arith.constant 0 : i32
    %c0_i32_1 = arith.constant 0 : i32
    return %c0_i32, %c0_i32_0 : i32, i32
  }
  func.func @transform_7(%arg0: i32) -> (i32, i32) {
    %c0_i32 = arith.constant 0 : i32
    %c0_i32_0 = arith.constant 0 : i32
    %c0_i32_1 = arith.constant 0 : i32
    return %c0_i32, %c0_i32_0 : i32, i32
  }
  func.func @transform_8(%arg0: i32) -> (i32, i32) {
    %c0_i32 = arith.constant 0 : i32
    %c0_i32_0 = arith.constant 0 : i32
    %c0_i32_1 = arith.constant 0 : i32
    return %c0_i32, %c0_i32_0 : i32, i32
  }
  func.func @transform_9(%arg0: i32) -> (i32, i32) {
    %c0_i32 = arith.constant 0 : i32
    %c0_i32_0 = arith.constant 0 : i32
    %c0_i32_1 = arith.constant 0 : i32
    return %c0_i32, %c0_i32_0 : i32, i32
  }
  func.func @transform_10(%arg0: i32) -> (i32, i32) {
    %c0_i32 = arith.constant 0 : i32
    %c0_i32_0 = arith.constant 0 : i32
    %c0_i32_1 = arith.constant 0 : i32
    return %c0_i32, %c0_i32_0 : i32, i32
  }
  func.func @transform_11(%arg0: i32) -> (i32, i32) {
    %c0_i32 = arith.constant 0 : i32
    %c0_i32_0 = arith.constant 0 : i32
    %c0_i32_1 = arith.constant 0 : i32
    return %c0_i32, %c0_i32_0 : i32, i32
  }
  func.func @transform_12(%arg0: i32) -> (i32, i32) {
    %c0_i32 = arith.constant 0 : i32
    %c0_i32_0 = arith.constant 0 : i32
    %c0_i32_1 = arith.constant 0 : i32
    return %c0_i32, %c0_i32_0 : i32, i32
  }
  func.func @transform_13(%arg0: i32) -> (i32, i32, i32) {
    %c0_i32 = arith.constant 0 : i32
    %c0_i32_0 = arith.constant 0 : i32
    %c0_i32_1 = arith.constant 0 : i32
    return %arg0, %c0_i32, %c0_i32_0 : i32, i32, i32
  }
}

</mosaic_0001>

<llo_original>
// kernel: trainable_reward_forward.1
$region0: #{trainable_reward_forward.1}
  #allocation0 [shape = 'u32[]', space=smem, size = 0x4, offset = 0x4, fixed_abs, tag = 'smem constant byte address 0x4 - core index']
  #allocation1 [shape = 'u32[144,128]{1,0:T(1,128)}', space=vmem, size = 0x12000, scoped, tag = 'internal scratch']
  #allocation2 [shape = 'f32[222,32]{1,0:T(8,128)}', space=vmem, size = 0x1c000, scoped, tag = 'scratch operand']
  #allocation3 [shape = 'f32[188,64]{1,0:T(8,128)}', space=vmem, size = 0x18000, scoped, tag = 'scratch operand']
  #allocation4 [shape = 'f32[1,1]{1,0:T(1,128)S(1)}', space=vmem, size = 0x200, scoped, tag = 'scoped memory for trainable_reward_forward.1']
  %s0 = inlined_call_operand.vmem [shape: f32[2,256,4], index: 0, kind: input, shape index: {}]
  %s1 = inlined_call_operand.vmem [shape: f32[36,32], index: 1, kind: input, shape index: {}]
  %s2 = inlined_call_operand.vmem [shape: f32[1,32], index: 2, kind: input, shape index: {}]
  %s3 = inlined_call_operand.vmem [shape: f32[288,64], index: 3, kind: input, shape index: {}]
  %s4 = inlined_call_operand.vmem [shape: f32[1,64], index: 4, kind: input, shape index: {}]
  %s5 = inlined_call_operand.vmem [shape: f32[576,64], index: 5, kind: input, shape index: {}]
  %s6 = inlined_call_operand.vmem [shape: f32[1,64], index: 6, kind: input, shape index: {}]
  %s7 = inlined_call_operand.vmem [shape: f32[36,171], index: 7, kind: input, shape index: {}]
  %s8 = inlined_call_operand.vmem [shape: f32[4,15], index: 8, kind: input, shape index: {}]
  %s9 = inlined_call_operand.vmem [shape: f32[64,512], index: 9, kind: input, shape index: {}]
  %s10 = inlined_call_operand.vmem [shape: f32[1,128], index: 10, kind: input, shape index: {}]
  %s11 = inlined_call_operand.vmem [shape: f32[1,128], index: 11, kind: input, shape index: {}]
  %s12 = inlined_call_operand.<no memory space> [shape: f32[1,1], index: 12, kind: input, shape index: {}]
  %s13 = inlined_call_operand.vmem [shape: f32[2,1,1], index: 13, kind: output, shape index: {}]
  %s14 = sld [smem:[#allocation0]]
  $region85: #{trainable_reward_forward.1} parent=0
    _
  %s16 = ssub.s32 1, %s14
  %s17 = scalar_select 0, %s16, %s14
  %v18 = vstv %s12
  %19 = vst [vmem:[#allocation4] sm:$0x1] %v18
  loop: start=0, step=1, limit=4
  $region2: #{trainable_reward_forward.1} parent=0 // loop_pre_header
    _
  $region3: #{trainable_reward_forward.1} parent=0 // loop_header
    %s21 = sphi 0, %s25
    %p22 = scmp.ge.s32.totalorder %s21, 4
    %s31 = sphi 0, %s33
    %s34 = sphi 0, %s31
    %s35 = sphi 0, %s34
    %s51 = sphi 0, %s35
    %s55 = sphi 0, %s55
    %s57 = sphi 0, %s55
    %s58 = sphi 0, %s57
    %s72 = sphi 0, %s58
    %s76 = sphi 0, %s76
    %s78 = sphi 0, %s76
    %s79 = sphi 0, %s78
    %s93 = sphi 0, %s79
    %s97 = sphi 0, %s97
    %s99 = sphi 0, %s97
    %s100 = sphi 0, %s99
    %s114 = sphi 0, %s100
    %s118 = sphi 0, %s118
    %s120 = sphi 0, %s118
    %s121 = sphi 0, %s120
    %s135 = sphi 0, %s121
    %s139 = sphi 0, %s139
    %s141 = sphi 0, %s139
    %s142 = sphi 0, %s141
    %s156 = sphi 0, %s142
    %s160 = sphi 0, %s160
    %s162 = sphi 0, %s160
    %s163 = sphi 0, %s162
    %s177 = sphi 0, %s163
    %s181 = sphi 0, %s181
    %s183 = sphi 0, %s181
    %s184 = sphi 0, %s183
    %s198 = sphi 0, %s184
    %s202 = sphi 0, %s202
    %s204 = sphi 0, %s202
    %s205 = sphi 0, %s204
    %s219 = sphi 0, %s205
    %s223 = sphi 0, %s223
    %s225 = sphi 0, %s223
    %s226 = sphi 0, %s225
    %s240 = sphi 0, %s226
    %s244 = sphi 0, %s244
    %s246 = sphi 0, %s244
    %s247 = sphi 0, %s246
    %s261 = sphi 0, %s247
    %s265 = sphi 0, %s265
    %s267 = sphi 0, %s265
    %s268 = sphi 0, %s267
    %s282 = sphi 0, %s268
    %s286 = sphi 0, %s286
    %s288 = sphi 0, %s286
    %s289 = sphi 0, %s288
    %s303 = sphi 0, %s289
    %s309 = sphi 0, %s311
    %s312 = sphi 0, %s309
    %s313 = sphi 0, %s312
    %s329 = sphi 0, %s313
  $region4: #{trainable_reward_forward.1} parent=0 // loop_header_branch
    %24 = sbr.rel (%p22) target = $region8
  $region5: #{trainable_reward_forward.1} parent=0 // loop_body
    %s26 = ssub.s32 %s21, 1
    %s27 = ssub.s32 %s21, 2
    %s28 = sadd.s32 %s21, 1
    %s29 = ssub.s32 %s21, %s28
    %p30 = scmp.eq.s32.totalorder %s29, 0
    %s32 = sadd.s32 %s31, 1
    %s33 = scalar_select %p30, %s31, %s32
    %p36 = pneg %p30
    %p37 = scmp.eq.s32.totalorder %s21, 1
    %p38 = por %p36, %p37
    %p39 = scmp.ne.s32.totalorder %s31, %s34
    %p40 = scmp.eq.s32.totalorder %s21, 0
    %p41 = por %p39, %p40
    %p42 = scmp.ne.s32.totalorder %s31, %s34
    %p43 = scmp.eq.s32.totalorder %s26, 1
    %p44 = por %p42, %p43
    %p45 = scmp.ne.s32.totalorder %s34, %s35
    %p46 = scmp.eq.s32.totalorder %s26, 0
    %p47 = por %p45, %p46
    %p48 = scmp.ne.s32.totalorder %s34, %s35
    %p49 = scmp.eq.s32.totalorder %s27, 1
    %p50 = por %p48, %p49
    %p52 = scmp.ne.s32.totalorder %s35, %s51
    %p53 = scmp.eq.s32.totalorder %s27, 0
    %p54 = por %p52, %p53
    %s56 = sadd.s32 %s55, 1
    %p59 = scmp.eq.s32.totalorder %s21, 1
    %p60 = scmp.ne.s32.totalorder %s55, %s57
    %p61 = scmp.eq.s32.totalorder %s21, 0
    %p62 = por %p60, %p61
    %p63 = scmp.ne.s32.totalorder %s55, %s57
    %p64 = scmp.eq.s32.totalorder %s26, 1
    %p65 = por %p63, %p64
    %p66 = scmp.ne.s32.totalorder %s57, %s58
    %p67 = scmp.eq.s32.totalorder %s26, 0
    %p68 = por %p66, %p67
    %p69 = scmp.ne.s32.totalorder %s57, %s58
    %p70 = scmp.eq.s32.totalorder %s27, 1
    %p71 = por %p69, %p70
    %p73 = scmp.ne.s32.totalorder %s58, %s72
    %p74 = scmp.eq.s32.totalorder %s27, 0
    %p75 = por %p73, %p74
    %s77 = sadd.s32 %s76, 1
    %p80 = scmp.eq.s32.totalorder %s21, 1
    %p81 = scmp.ne.s32.totalorder %s76, %s78
    %p82 = scmp.eq.s32.totalorder %s21, 0
    %p83 = por %p81, %p82
    %p84 = scmp.ne.s32.totalorder %s76, %s78
    %p85 = scmp.eq.s32.totalorder %s26, 1
    %p86 = por %p84, %p85
    %p87 = scmp.ne.s32.totalorder %s78, %s79
    %p88 = scmp.eq.s32.totalorder %s26, 0
    %p89 = por %p87, %p88
    %p90 = scmp.ne.s32.totalorder %s78, %s79
    %p91 = scmp.eq.s32.totalorder %s27, 1
    %p92 = por %p90, %p91
    %p94 = scmp.ne.s32.totalorder %s79, %s93
    %p95 = scmp.eq.s32.totalorder %s27, 0
    %p96 = por %p94, %p95
    %s98 = sadd.s32 %s97, 1
    %p101 = scmp.eq.s32.totalorder %s21, 1
    %p102 = scmp.ne.s32.totalorder %s97, %s99
    %p103 = scmp.eq.s32.totalorder %s21, 0
    %p104 = por %p102, %p103
    %p105 = scmp.ne.s32.totalorder %s97, %s99
    %p106 = scmp.eq.s32.totalorder %s26, 1
    %p107 = por %p105, %p106
    %p108 = scmp.ne.s32.totalorder %s99, %s100
    %p109 = scmp.eq.s32.totalorder %s26, 0
    %p110 = por %p108, %p109
    %p111 = scmp.ne.s32.totalorder %s99, %s100
    %p112 = scmp.eq.s32.totalorder %s27, 1
    %p113 = por %p111, %p112
    %p115 = scmp.ne.s32.totalorder %s100, %s114
    %p116 = scmp.eq.s32.totalorder %s27, 0
    %p117 = por %p115, %p116
    %s119 = sadd.s32 %s118, 1
    %p122 = scmp.eq.s32.totalorder %s21, 1
    %p123 = scmp.ne.s32.totalorder %s118, %s120
    %p124 = scmp.eq.s32.totalorder %s21, 0
    %p125 = por %p123, %p124
    %p126 = scmp.ne.s32.totalorder %s118, %s120
    %p127 = scmp.eq.s32.totalorder %s26, 1
    %p128 = por %p126, %p127
    %p129 = scmp.ne.s32.totalorder %s120, %s121
    %p130 = scmp.eq.s32.totalorder %s26, 0
    %p131 = por %p129, %p130
    %p132 = scmp.ne.s32.totalorder %s120, %s121
    %p133 = scmp.eq.s32.totalorder %s27, 1
    %p134 = por %p132, %p133
    %p136 = scmp.ne.s32.totalorder %s121, %s135
    %p137 = scmp.eq.s32.totalorder %s27, 0
    %p138 = por %p136, %p137
    %s140 = sadd.s32 %s139, 1
    %p143 = scmp.eq.s32.totalorder %s21, 1
    %p144 = scmp.ne.s32.totalorder %s139, %s141
    %p145 = scmp.eq.s32.totalorder %s21, 0
    %p146 = por %p144, %p145
    %p147 = scmp.ne.s32.totalorder %s139, %s141
    %p148 = scmp.eq.s32.totalorder %s26, 1
    %p149 = por %p147, %p148
    %p150 = scmp.ne.s32.totalorder %s141, %s142
    %p151 = scmp.eq.s32.totalorder %s26, 0
    %p152 = por %p150, %p151
    %p153 = scmp.ne.s32.totalorder %s141, %s142
    %p154 = scmp.eq.s32.totalorder %s27, 1
    %p155 = por %p153, %p154
    %p157 = scmp.ne.s32.totalorder %s142, %s156
    %p158 = scmp.eq.s32.totalorder %s27, 0
    %p159 = por %p157, %p158
    %s161 = sadd.s32 %s160, 1
    %p164 = scmp.eq.s32.totalorder %s21, 1
    %p165 = scmp.ne.s32.totalorder %s160, %s162
    %p166 = scmp.eq.s32.totalorder %s21, 0
    %p167 = por %p165, %p166
    %p168 = scmp.ne.s32.totalorder %s160, %s162
    %p169 = scmp.eq.s32.totalorder %s26, 1
    %p170 = por %p168, %p169
    %p171 = scmp.ne.s32.totalorder %s162, %s163
    %p172 = scmp.eq.s32.totalorder %s26, 0
    %p173 = por %p171, %p172
    %p174 = scmp.ne.s32.totalorder %s162, %s163
    %p175 = scmp.eq.s32.totalorder %s27, 1
    %p176 = por %p174, %p175
    %p178 = scmp.ne.s32.totalorder %s163, %s177
    %p179 = scmp.eq.s32.totalorder %s27, 0
    %p180 = por %p178, %p179
    %s182 = sadd.s32 %s181, 1
    %p185 = scmp.eq.s32.totalorder %s21, 1
    %p186 = scmp.ne.s32.totalorder %s181, %s183
    %p187 = scmp.eq.s32.totalorder %s21, 0
    %p188 = por %p186, %p187
    %p189 = scmp.ne.s32.totalorder %s181, %s183
    %p190 = scmp.eq.s32.totalorder %s26, 1
    %p191 = por %p189, %p190
    %p192 = scmp.ne.s32.totalorder %s183, %s184
    %p193 = scmp.eq.s32.totalorder %s26, 0
    %p194 = por %p192, %p193
    %p195 = scmp.ne.s32.totalorder %s183, %s184
    %p196 = scmp.eq.s32.totalorder %s27, 1
    %p197 = por %p195, %p196
    %p199 = scmp.ne.s32.totalorder %s184, %s198
    %p200 = scmp.eq.s32.totalorder %s27, 0
    %p201 = por %p199, %p200
    %s203 = sadd.s32 %s202, 1
    %p206 = scmp.eq.s32.totalorder %s21, 1
    %p207 = scmp.ne.s32.totalorder %s202, %s204
    %p208 = scmp.eq.s32.totalorder %s21, 0
    %p209 = por %p207, %p208
    %p210 = scmp.ne.s32.totalorder %s202, %s204
    %p211 = scmp.eq.s32.totalorder %s26, 1
    %p212 = por %p210, %p211
    %p213 = scmp.ne.s32.totalorder %s204, %s205
    %p214 = scmp.eq.s32.totalorder %s26, 0
    %p215 = por %p213, %p214
    %p216 = scmp.ne.s32.totalorder %s204, %s205
    %p217 = scmp.eq.s32.totalorder %s27, 1
    %p218 = por %p216, %p217
    %p220 = scmp.ne.s32.totalorder %s205, %s219
    %p221 = scmp.eq.s32.totalorder %s27, 0
    %p222 = por %p220, %p221
    %s224 = sadd.s32 %s223, 1
    %p227 = scmp.eq.s32.totalorder %s21, 1
    %p228 = scmp.ne.s32.totalorder %s223, %s225
    %p229 = scmp.eq.s32.totalorder %s21, 0
    %p230 = por %p228, %p229
    %p231 = scmp.ne.s32.totalorder %s223, %s225
    %p232 = scmp.eq.s32.totalorder %s26, 1
    %p233 = por %p231, %p232
    %p234 = scmp.ne.s32.totalorder %s225, %s226
    %p235 = scmp.eq.s32.totalorder %s26, 0
    %p236 = por %p234, %p235
    %p237 = scmp.ne.s32.totalorder %s225, %s226
    %p238 = scmp.eq.s32.totalorder %s27, 1
    %p239 = por %p237, %p238
    %p241 = scmp.ne.s32.totalorder %s226, %s240
    %p242 = scmp.eq.s32.totalorder %s27, 0
    %p243 = por %p241, %p242
    %s245 = sadd.s32 %s244, 1
    %p248 = scmp.eq.s32.totalorder %s21, 1
    %p249 = scmp.ne.s32.totalorder %s244, %s246
    %p250 = scmp.eq.s32.totalorder %s21, 0
    %p251 = por %p249, %p250
    %p252 = scmp.ne.s32.totalorder %s244, %s246
    %p253 = scmp.eq.s32.totalorder %s26, 1
    %p254 = por %p252, %p253
    %p255 = scmp.ne.s32.totalorder %s246, %s247
    %p256 = scmp.eq.s32.totalorder %s26, 0
    %p257 = por %p255, %p256
    %p258 = scmp.ne.s32.totalorder %s246, %s247
    %p259 = scmp.eq.s32.totalorder %s27, 1
    %p260 = por %p258, %p259
    %p262 = scmp.ne.s32.totalorder %s247, %s261
    %p263 = scmp.eq.s32.totalorder %s27, 0
    %p264 = por %p262, %p263
    %s266 = sadd.s32 %s265, 1
    %p269 = scmp.eq.s32.totalorder %s21, 1
    %p270 = scmp.ne.s32.totalorder %s265, %s267
    %p271 = scmp.eq.s32.totalorder %s21, 0
    %p272 = por %p270, %p271
    %p273 = scmp.ne.s32.totalorder %s265, %s267
    %p274 = scmp.eq.s32.totalorder %s26, 1
    %p275 = por %p273, %p274
    %p276 = scmp.ne.s32.totalorder %s267, %s268
    %p277 = scmp.eq.s32.totalorder %s26, 0
    %p278 = por %p276, %p277
    %p279 = scmp.ne.s32.totalorder %s267, %s268
    %p280 = scmp.eq.s32.totalorder %s27, 1
    %p281 = por %p279, %p280
    %p283 = scmp.ne.s32.totalorder %s268, %s282
    %p284 = scmp.eq.s32.totalorder %s27, 0
    %p285 = por %p283, %p284
    %s287 = sadd.s32 %s286, 1
    %p290 = scmp.eq.s32.totalorder %s21, 1
    %p291 = scmp.ne.s32.totalorder %s286, %s288
    %p292 = scmp.eq.s32.totalorder %s21, 0
    %p293 = por %p291, %p292
    %p294 = scmp.ne.s32.totalorder %s286, %s288
    %p295 = scmp.eq.s32.totalorder %s26, 1
    %p296 = por %p294, %p295
    %p297 = scmp.ne.s32.totalorder %s288, %s289
    %p298 = scmp.eq.s32.totalorder %s26, 0
    %p299 = por %p297, %p298
    %p300 = scmp.ne.s32.totalorder %s288, %s289
    %p301 = scmp.eq.s32.totalorder %s27, 1
    %p302 = por %p300, %p301
    %p304 = scmp.ne.s32.totalorder %s289, %s303
    %p305 = scmp.eq.s32.totalorder %s27, 0
    %p306 = por %p304, %p305
    %s307 = ssub.s32 %s21, %s28
    %p308 = scmp.eq.s32.totalorder %s307, 0
    %s310 = sadd.s32 %s309, 1
    %s311 = scalar_select %p308, %s309, %s310
    %p314 = pneg %p308
    %p315 = scmp.eq.s32.totalorder %s21, 1
    %p316 = por %p314, %p315
    %p317 = scmp.ne.s32.totalorder %s309, %s312
    %p318 = scmp.eq.s32.totalorder %s21, 0
    %p319 = por %p317, %p318
    %p320 = scmp.ne.s32.totalorder %s309, %s312
    %p321 = scmp.eq.s32.totalorder %s26, 1
    %p322 = por %p320, %p321
    %p323 = scmp.ne.s32.totalorder %s312, %s313
    %p324 = scmp.eq.s32.totalorder %s26, 0
    %p325 = por %p323, %p324
    %p326 = scmp.ne.s32.totalorder %s312, %s313
    %p327 = scmp.eq.s32.totalorder %s27, 1
    %p328 = por %p326, %p327
    %p330 = scmp.ne.s32.totalorder %s313, %s329
    %p331 = scmp.eq.s32.totalorder %s27, 0
    %p332 = por %p330, %p331
    %p333 = scmp.le.s32.totalorder 1, %s21
    %p334 = scmp.lt.s32.totalorder %s21, 3
    %p335 = pnand %p333, %p334
    %p336 = pneg %p335
    // Predicated region
    $region9: #{trainable_reward_forward.1} parent=5 // pred_check
      _
    $region10: #{trainable_reward_forward.1} parent=5 // pred_check_branch
      %338 = sbr.rel (%p335) target = $region12
    $region11: #{trainable_reward_forward.1} parent=5 // pred_region
      %s339 = ssub.s32 %s21, 1
      // Predicated region
      $region13: #{trainable_reward_forward.1} parent=11 // pred_check
        %p340 = pneg %p68
      $region14: #{trainable_reward_forward.1} parent=11 // pred_check_branch
        %342 = sbr.rel (%p340) target = $region16
      $region15: #{trainable_reward_forward.1} parent=11 // pred_region
        _
      $region16: #{trainable_reward_forward.1} parent=11 // pred_fallthru
        _
      // Predicated region
      $region17: #{trainable_reward_forward.1} parent=11 // pred_check
        %p343 = pneg %p89
      $region18: #{trainable_reward_forward.1} parent=11 // pred_check_branch
        %345 = sbr.rel (%p343) target = $region20
      $region19: #{trainable_reward_forward.1} parent=11 // pred_region
        _
      $region20: #{trainable_reward_forward.1} parent=11 // pred_fallthru
        _
      // Predicated region
      $region21: #{trainable_reward_forward.1} parent=11 // pred_check
        %p346 = pneg %p110
      $region22: #{trainable_reward_forward.1} parent=11 // pred_check_branch
        %348 = sbr.rel (%p346) target = $region24
      $region23: #{trainable_reward_forward.1} parent=11 // pred_region
        _
      $region24: #{trainable_reward_forward.1} parent=11 // pred_fallthru
        _
      // Predicated region
      $region25: #{trainable_reward_forward.1} parent=11 // pred_check
        %p349 = pneg %p131
      $region26: #{trainable_reward_forward.1} parent=11 // pred_check_branch
        %351 = sbr.rel (%p349) target = $region28
      $region27: #{trainable_reward_forward.1} parent=11 // pred_region
        _
      $region28: #{trainable_reward_forward.1} parent=11 // pred_fallthru
        _
      // Predicated region
      $region29: #{trainable_reward_forward.1} parent=11 // pred_check
        %p352 = pneg %p152
      $region30: #{trainable_reward_forward.1} parent=11 // pred_check_branch
        %354 = sbr.rel (%p352) target = $region32
      $region31: #{trainable_reward_forward.1} parent=11 // pred_region
        _
      $region32: #{trainable_reward_forward.1} parent=11 // pred_fallthru
        _
      // Predicated region
      $region33: #{trainable_reward_forward.1} parent=11 // pred_check
        %p355 = pneg %p173
      $region34: #{trainable_reward_forward.1} parent=11 // pred_check_branch
        %357 = sbr.rel (%p355) target = $region36
      $region35: #{trainable_reward_forward.1} parent=11 // pred_region
        _
      $region36: #{trainable_reward_forward.1} parent=11 // pred_fallthru
        _
      // Predicated region
      $region37: #{trainable_reward_forward.1} parent=11 // pred_check
        %p358 = pneg %p194
      $region38: #{trainable_reward_forward.1} parent=11 // pred_check_branch
        %360 = sbr.rel (%p358) target = $region40
      $region39: #{trainable_reward_forward.1} parent=11 // pred_region
        _
      $region40: #{trainable_reward_forward.1} parent=11 // pred_fallthru
        _
      // Predicated region
      $region41: #{trainable_reward_forward.1} parent=11 // pred_check
        %p361 = pneg %p215
      $region42: #{trainable_reward_forward.1} parent=11 // pred_check_branch
        %363 = sbr.rel (%p361) target = $region44
      $region43: #{trainable_reward_forward.1} parent=11 // pred_region
        _
      $region44: #{trainable_reward_forward.1} parent=11 // pred_fallthru
        _
      // Predicated region
      $region45: #{trainable_reward_forward.1} parent=11 // pred_check
        %p364 = pneg %p236
      $region46: #{trainable_reward_forward.1} parent=11 // pred_check_branch
        %366 = sbr.rel (%p364) target = $region48
      $region47: #{trainable_reward_forward.1} parent=11 // pred_region
        _
      $region48: #{trainable_reward_forward.1} parent=11 // pred_fallthru
        _
      // Predicated region
      $region49: #{trainable_reward_forward.1} parent=11 // pred_check
        %p367 = pneg %p257
      $region50: #{trainable_reward_forward.1} parent=11 // pred_check_branch
        %369 = sbr.rel (%p367) target = $region52
      $region51: #{trainable_reward_forward.1} parent=11 // pred_region
        _
      $region52: #{trainable_reward_forward.1} parent=11 // pred_fallthru
        _
      // Predicated region
      $region53: #{trainable_reward_forward.1} parent=11 // pred_check
        %p370 = pneg %p278
      $region54: #{trainable_reward_forward.1} parent=11 // pred_check_branch
        %372 = sbr.rel (%p370) target = $region56
      $region55: #{trainable_reward_forward.1} parent=11 // pred_region
        _
      $region56: #{trainable_reward_forward.1} parent=11 // pred_fallthru
        _
      // Predicated region
      $region57: #{trainable_reward_forward.1} parent=11 // pred_check
        %p373 = pneg %p299
      $region58: #{trainable_reward_forward.1} parent=11 // pred_check_branch
        %375 = sbr.rel (%p373) target = $region60
      $region59: #{trainable_reward_forward.1} parent=11 // pred_region
        _
      $region60: #{trainable_reward_forward.1} parent=11 // pred_fallthru
        _
    $region12: #{trainable_reward_forward.1} parent=5 // pred_fallthru
      _
    %p376 = scmp.lt.s32.totalorder %s21, 2
    // Predicated region
    $region61: #{trainable_reward_forward.1} parent=5 // pred_check
      %p377 = pneg %p376
    $region62: #{trainable_reward_forward.1} parent=5 // pred_check_branch
      %379 = sbr.rel (%p377) target = $region64
    $region63: #{trainable_reward_forward.1} parent=5 // pred_region
      // Predicated region
      $region65: #{trainable_reward_forward.1} parent=63 // pred_check
        %p380 = pneg %p41
      $region66: #{trainable_reward_forward.1} parent=63 // pred_check_branch
        %382 = sbr.rel (%p380) target = $region68
      $region67: #{trainable_reward_forward.1} parent=63 // pred_region
        %p383 = scmp.lt.s32.totalorder %s21, 1
        %s384 = scalar_select %p383, %s21, 1
        %s385 = smul.addr %s384, 32
        %s386 = smul.addr %s385, 8
        %s387 = scalar_lea.vmem %s0, %s386
      $region68: #{trainable_reward_forward.1} parent=63 // pred_fallthru
        _
    $region64: #{trainable_reward_forward.1} parent=5 // pred_fallthru
      _
    %p388 = scmp.le.s32.totalorder 1, %s21
    %p389 = scmp.lt.s32.totalorder %s21, 3
    %p390 = pnand %p388, %p389
    %p391 = pneg %p390
    // Predicated region
    $region69: #{trainable_reward_forward.1} parent=5 // pred_check
      _
    $region70: #{trainable_reward_forward.1} parent=5 // pred_check_branch
      %393 = sbr.rel (%p390) target = $region72
    $region71: #{trainable_reward_forward.1} parent=5 // pred_region
      %s394 = ssub.s32 %s21, 1
      %p395 = scmp.lt.s32.totalorder %s26, 1
      %s396 = scalar_select %p395, %s26, 1
      %s397 = smul.addr %s396, 32
      %s398 = smul.addr %s397, 8
      %s399 = scalar_lea.vmem %s0, %s398
      %p400 = pneg %p47
      %p401 = pneg %p44
      %p402 = pneg %p68
      %p403 = pneg %p65
      %p404 = pneg %p89
      %p405 = pneg %p86
      %p406 = pneg %p110
      %p407 = pneg %p107
      %p408 = pneg %p131
      %p409 = pneg %p128
      %p410 = pneg %p152
      %p411 = pneg %p149
      %p412 = pneg %p173
      %p413 = pneg %p170
      %p414 = pneg %p194
      %p415 = pneg %p191
      %p416 = pneg %p215
      %p417 = pneg %p212
      %p418 = pneg %p236
      %p419 = pneg %p233
      %p420 = pneg %p257
      %p421 = pneg %p254
      %p422 = pneg %p278
      %p423 = pneg %p275
      %p424 = pneg %p299
      %p425 = pneg %p296
      %p426 = pneg %p325
      %p427 = pneg %p322
      %p428 = scmp.lt.s32.totalorder %s26, 1
      %s429 = scalar_select %p428, %s26, 1
      %s430 = scalar_lea.vmem %s13, %s429
      %p431 = scmp.lt.s32.totalorder %s26, 1
      %s432 = scalar_select %p431, %s26, 1
      %s433 = smul.addr %s432, 32
      %s434 = smul.addr %s433, 8
      %s435 = scalar_lea.vmem %s0, %s434
      %p436 = scmp.lt.s32.totalorder %s26, 1
      %s437 = scalar_select %p436, %s26, 1
      %s438 = scalar_lea.vmem %s13, %s437
      %v439 = vld [vmem:[%s435] sm:$0xff]
      %v440 = vld [vmem:[%s435 + $0x8] sm:$0xff]
      %v441 = vld [vmem:[%s435 + $0x10] sm:$0xff]
      %v442 = vld [vmem:[%s435 + $0x18] sm:$0xff]
      %v443 = vld [vmem:[%s435 + $0x20] sm:$0xff]
      %v444 = vld [vmem:[%s435 + $0x28] sm:$0xff]
      %v445 = vld [vmem:[%s435 + $0x30] sm:$0xff]
      %v446 = vld [vmem:[%s435 + $0x38] sm:$0xff]
      %v447 = vld [vmem:[%s435 + $0x40] sm:$0xff]
      %v448 = vld [vmem:[%s435 + $0x48] sm:$0xff]
      %v449 = vld [vmem:[%s435 + $0x50] sm:$0xff]
      %v450 = vld [vmem:[%s435 + $0x58] sm:$0xff]
      %v451 = vld [vmem:[%s435 + $0x60] sm:$0xff]
      %v452 = vld [vmem:[%s435 + $0x68] sm:$0xff]
      %v453 = vld [vmem:[%s435 + $0x70] sm:$0xff]
      %v454 = vld [vmem:[%s435 + $0x78] sm:$0xff]
      %v455 = vld [vmem:[%s435 + $0x80] sm:$0xff]
      %v456 = vld [vmem:[%s435 + $0x88] sm:$0xff]
      %v457 = vld [vmem:[%s435 + $0x90] sm:$0xff]
      %v458 = vld [vmem:[%s435 + $0x98] sm:$0xff]
      %v459 = vld [vmem:[%s435 + $0xa0] sm:$0xff]
      %v460 = vld [vmem:[%s435 + $0xa8] sm:$0xff]
      %v461 = vld [vmem:[%s435 + $0xb0] sm:$0xff]
      %v462 = vld [vmem:[%s435 + $0xb8] sm:$0xff]
      %v463 = vld [vmem:[%s435 + $0xc0] sm:$0xff]
      %v464 = vld [vmem:[%s435 + $0xc8] sm:$0xff]
      %v465 = vld [vmem:[%s435 + $0xd0] sm:$0xff]
      %v466 = vld [vmem:[%s435 + $0xd8] sm:$0x3f]
      %v467 = vld [vmem:[%s1] sm:$0xf]
      %v468 = vld [vmem:[%s435 + $0x1] sm:$0xff]
      %v469 = vld [vmem:[%s435 + $0x9] sm:$0xff]
      %v470 = vld [vmem:[%s435 + $0x11] sm:$0xff]
      %v471 = vld [vmem:[%s435 + $0x19] sm:$0xff]
      %v472 = vld [vmem:[%s435 + $0x21] sm:$0xff]
      %v473 = vld [vmem:[%s435 + $0x29] sm:$0xff]
      %v474 = vld [vmem:[%s435 + $0x31] sm:$0xff]
      %v475 = vld [vmem:[%s435 + $0x39] sm:$0xff]
      %v476 = vld [vmem:[%s435 + $0x41] sm:$0xff]
      %v477 = vld [vmem:[%s435 + $0x49] sm:$0xff]
      %v478 = vld [vmem:[%s435 + $0x51] sm:$0xff]
      %v479 = vld [vmem:[%s435 + $0x59] sm:$0xff]
      %v480 = vld [vmem:[%s435 + $0x61] sm:$0xff]
      %v481 = vld [vmem:[%s435 + $0x69] sm:$0xff]
      %v482 = vld [vmem:[%s435 + $0x71] sm:$0xff]
      %v483 = vld [vmem:[%s435 + $0x79] sm:$0xff]
      %v484 = vld [vmem:[%s435 + $0x81] sm:$0xff]
      %v485 = vld [vmem:[%s435 + $0x89] sm:$0xff]
      %v486 = vld [vmem:[%s435 + $0x91] sm:$0xff]
      %v487 = vld [vmem:[%s435 + $0x99] sm:$0xff]
      %v488 = vld [vmem:[%s435 + $0xa1] sm:$0xff]
      %v489 = vld [vmem:[%s435 + $0xa9] sm:$0xff]
      %v490 = vld [vmem:[%s435 + $0xb1] sm:$0xff]
      %v491 = vld [vmem:[%s435 + $0xb9] sm:$0xff]
      %v492 = vld [vmem:[%s435 + $0xc1] sm:$0xff]
      %v493 = vld [vmem:[%s435 + $0xc9] sm:$0xff]
      %v494 = vld [vmem:[%s435 + $0xd1] sm:$0xff]
      %v495 = vld [vmem:[%s435 + $0xd9] sm:$0x3f]
      %v496 = vld [vmem:[%s1 + $0x4] sm:$0xf]
      %vm497 = vcmask 31744
      %v499 = vsel %vm497, %v468, 0
      %v502 = vsel %vm497, %v469, 0
      %v505 = vsel %vm497, %v470, 0
      %v508 = vsel %vm497, %v471, 0
      %v511 = vsel %vm497, %v472, 0
      %v514 = vsel %vm497, %v473, 0
      %v517 = vsel %vm497, %v474, 0
      %v520 = vsel %vm497, %v475, 0
      %v523 = vsel %vm497, %v476, 0
      %v526 = vsel %vm497, %v477, 0
      %v529 = vsel %vm497, %v478, 0
      %v532 = vsel %vm497, %v479, 0
      %v535 = vsel %vm497, %v480, 0
      %v538 = vsel %vm497, %v481, 0
      %v541 = vsel %vm497, %v482, 0
      %v544 = vsel %vm497, %v483, 0
      %v547 = vsel %vm497, %v484, 0
      %v550 = vsel %vm497, %v485, 0
      %v553 = vsel %vm497, %v486, 0
      %v556 = vsel %vm497, %v487, 0
      %v559 = vsel %vm497, %v488, 0
      %v562 = vsel %vm497, %v489, 0
      %v565 = vsel %vm497, %v490, 0
      %v568 = vsel %vm497, %v491, 0
      %v571 = vsel %vm497, %v492, 0
      %v574 = vsel %vm497, %v493, 0
      %v577 = vsel %vm497, %v494, 0
      %v580 = vsel %vm497, %v495, 0
      %vm582 = vcmask 1043456
      %v584 = vsel %vm582, %v496, 0
      %586 = vmatprep.subr.mxu0 0.0
      %587 = vmatpush1.msra.mxu0 %v584
      %588 = vmatprep.subr.mxu0 0.0
      %589 = vmatpush1.msra.mxu0 0.0
      %590 = vmatprep.subr.mxu0 0.0
      %591 = vmatpush1.msra.mxu0 0.0
      %592 = vmatprep.subr.mxu0 0.0
      %593 = vmatpush1.msra.mxu0 0.0
      %594 = vmatprep.subr.mxu0 0.0
      %595 = vmatpush1.msra.mxu0 0.0
      %596 = vmatprep.subr.mxu0 0.0
      %597 = vmatpush1.msra.mxu0 0.0
      %598 = vmatprep.subr.mxu0 0.0
      %599 = vmatpush1.msra.mxu0 0.0
      %600 = vmatprep.subr.mxu0 0.0
      %601 = vmatpush1.msra.mxu0 0.0
      %602 = vmatprep.subr.mxu0 0.0
      %603 = vmatpush1.msra.mxu0 0.0
      %604 = vmatprep.subr.mxu0 0.0
      %605 = vmatpush1.msra.mxu0 0.0
      %606 = vmatprep.subr.mxu0 0.0
      %607 = vmatpush1.msra.mxu0 0.0
      %608 = vmatprep.subr.mxu0 0.0
      %609 = vmatpush1.msra.mxu0 0.0
      %610 = vmatprep.subr.mxu0 0.0
      %611 = vmatpush1.msra.mxu0 0.0
      %612 = vmatprep.subr.mxu0 0.0
      %613 = vmatpush1.msra.mxu0 0.0
      %614 = vmatprep.subr.mxu0 0.0
      %615 = vmatpush1.msra.mxu0 0.0
      %616 = vmatprep.subr.mxu0 0.0
      %617 = vmatpush1.msra.mxu0 0.0
      %618 = vmatprep.subr.mxu0 0.0
      %619 = vmatpush1.msra.mxu0 0.0
      %620 = vmatprep.subr.mxu0 0.0
      %621 = vmatpush1.msra.mxu0 0.0
      %622 = vmatprep.subr.mxu0 0.0
      %623 = vmatpush1.msra.mxu0 0.0
      %624 = vmatprep.subr.mxu0 0.0
      %625 = vmatpush1.msra.mxu0 0.0
      %626 = vmatprep.subr.mxu0 0.0
      %627 = vmatpush1.msra.mxu0 0.0
      %628 = vmatprep.subr.mxu0 0.0
      %629 = vmatpush1.msra.mxu0 0.0
      %630 = vmatprep.subr.mxu0 0.0
      %631 = vmatpush1.msra.mxu0 0.0
      %632 = vmatprep.subr.mxu0 0.0
      %633 = vmatpush1.msra.mxu0 0.0
      %634 = vmatprep.subr.mxu0 0.0
      %635 = vmatpush1.msra.mxu0 0.0
      %636 = vmatprep.subr.mxu0 0.0
      %637 = vmatpush1.msra.mxu0 0.0
      %638 = vmatprep.subr.mxu0 0.0
      %639 = vmatpush1.msra.mxu0 0.0
      %640 = vmatprep.subr.mxu0 0.0
      %641 = vmatpush1.msra.mxu0 0.0
      %642 = vmatprep.subr.mxu0 0.0
      %643 = vmatpush1.msra.mxu0 0.0
      %644 = vmatprep.subr.mxu0 0.0
      %645 = vmatpush1.msra.mxu0 0.0
      %646 = vmatprep.subr.mxu0 0.0
      %647 = vmatpush1.msra.mxu0 0.0
      %648 = vmatprep.subr.mxu0 0.0
      %649 = vmatpush1.msra.mxu0 0.0
      %650 = vmatprep.mubr.f32.mxu0 0.0
      %651 = vmatmul.mubr.f32.gmra.mrb[0].mxu0 %v499
      %v652 = vpop.f32.mrb[0].mxu0
      %v653 = vadd.f32 0.0, %v652
      %v654 = vpop.f32.mrb[0].mxu0
      %655 = vmatprep.mubr.f32.mxu0 0.0
      %656 = vmatmul.mubr.f32.gmra.mrb[0].mxu0 %v502
      %v657 = vpop.f32.mrb[0].mxu0
      %v658 = vadd.f32 0.0, %v657
      %v659 = vpop.f32.mrb[0].mxu0
      %660 = vmatprep.mubr.f32.mxu0 0.0
      %661 = vmatmul.mubr.f32.gmra.mrb[0].mxu0 %v505
      %v662 = vpop.f32.mrb[0].mxu0
      %v663 = vadd.f32 0.0, %v662
      %v664 = vpop.f32.mrb[0].mxu0
      %665 = vmatprep.mubr.f32.mxu0 0.0
      %666 = vmatmul.mubr.f32.gmra.mrb[0].mxu0 %v508
      %v667 = vpop.f32.mrb[0].mxu0
      %v668 = vadd.f32 0.0, %v667
      %v669 = vpop.f32.mrb[0].mxu0
      %670 = vmatprep.mubr.f32.mxu0 0.0
      %671 = vmatmul.mubr.f32.gmra.mrb[0].mxu0 %v511
      %v672 = vpop.f32.mrb[0].mxu0
      %v673 = vadd.f32 0.0, %v672
      %v674 = vpop.f32.mrb[0].mxu0
      %675 = vmatprep.mubr.f32.mxu0 0.0
      %676 = vmatmul.mubr.f32.gmra.mrb[0].mxu0 %v514
      %v677 = vpop.f32.mrb[0].mxu0
      %v678 = vadd.f32 0.0, %v677
      %v679 = vpop.f32.mrb[0].mxu0
      %680 = vmatprep.mubr.f32.mxu0 0.0
      %681 = vmatmul.mubr.f32.gmra.mrb[0].mxu0 %v517
      %v682 = vpop.f32.mrb[0].mxu0
      %v683 = vadd.f32 0.0, %v682
      %v684 = vpop.f32.mrb[0].mxu0
      %685 = vmatprep.mubr.f32.mxu0 0.0
      %686 = vmatmul.mubr.f32.gmra.mrb[0].mxu0 %v520
      %v687 = vpop.f32.mrb[0].mxu0
      %v688 = vadd.f32 0.0, %v687
      %v689 = vpop.f32.mrb[0].mxu0
      %690 = vmatprep.mubr.f32.mxu0 0.0
      %691 = vmatmul.mubr.f32.gmra.mrb[0].mxu0 %v523
      %v692 = vpop.f32.mrb[0].mxu0
      %v693 = vadd.f32 0.0, %v692
      %v694 = vpop.f32.mrb[0].mxu0
      %695 = vmatprep.mubr.f32.mxu0 0.0
      %696 = vmatmul.mubr.f32.gmra.mrb[0].mxu0 %v526
      %v697 = vpop.f32.mrb[0].mxu0
      %v698 = vadd.f32 0.0, %v697
      %v699 = vpop.f32.mrb[0].mxu0
      %700 = vmatprep.mubr.f32.mxu0 0.0
      %701 = vmatmul.mubr.f32.gmra.mrb[0].mxu0 %v529
      %v702 = vpop.f32.mrb[0].mxu0
      %v703 = vadd.f32 0.0, %v702
      %v704 = vpop.f32.mrb[0].mxu0
      %705 = vmatprep.mubr.f32.mxu0 0.0
      %706 = vmatmul.mubr.f32.gmra.mrb[0].mxu0 %v532
      %v707 = vpop.f32.mrb[0].mxu0
      %v708 = vadd.f32 0.0, %v707
      %v709 = vpop.f32.mrb[0].mxu0
      %710 = vmatprep.mubr.f32.mxu0 0.0
      %711 = vmatmul.mubr.f32.gmra.mrb[0].mxu0 %v535
      %v712 = vpop.f32.mrb[0].mxu0
      %v713 = vadd.f32 0.0, %v712
      %v714 = vpop.f32.mrb[0].mxu0
      %715 = vmatprep.mubr.f32.mxu0 0.0
      %716 = vmatmul.mubr.f32.gmra.mrb[0].mxu0 %v538
      %v717 = vpop.f32.mrb[0].mxu0
      %v718 = vadd.f32 0.0, %v717
      %v719 = vpop.f32.mrb[0].mxu0
      %720 = vmatprep.mubr.f32.mxu0 0.0
      %721 = vmatmul.mubr.f32.gmra.mrb[0].mxu0 %v541
      %v722 = vpop.f32.mrb[0].mxu0
      %v723 = vadd.f32 0.0, %v722
      %v724 = vpop.f32.mrb[0].mxu0
      %725 = vmatprep.mubr.f32.mxu0 0.0
      %726 = vmatmul.mubr.f32.gmra.mrb[0].mxu0 %v544
      %v727 = vpop.f32.mrb[0].mxu0
      %v728 = vadd.f32 0.0, %v727
      %v729 = vpop.f32.mrb[0].mxu0
      %730 = vmatprep.mubr.f32.mxu0 0.0
      %731 = vmatmul.mubr.f32.gmra.mrb[0].mxu0 %v547
      %v732 = vpop.f32.mrb[0].mxu0
      %v733 = vadd.f32 0.0, %v732
      %v734 = vpop.f32.mrb[0].mxu0
      %735 = vmatprep.mubr.f32.mxu0 0.0
      %736 = vmatmul.mubr.f32.gmra.mrb[0].mxu0 %v550
      %v737 = vpop.f32.mrb[0].mxu0
      %v738 = vadd.f32 0.0, %v737
      %v739 = vpop.f32.mrb[0].mxu0
      %740 = vmatprep.mubr.f32.mxu0 0.0
      %741 = vmatmul.mubr.f32.gmra.mrb[0].mxu0 %v553
      %v742 = vpop.f32.mrb[0].mxu0
      %v743 = vadd.f32 0.0, %v742
      %v744 = vpop.f32.mrb[0].mxu0
      %745 = vmatprep.mubr.f32.mxu0 0.0
      %746 = vmatmul.mubr.f32.gmra.mrb[0].mxu0 %v556
      %v747 = vpop.f32.mrb[0].mxu0
      %v748 = vadd.f32 0.0, %v747
      %v749 = vpop.f32.mrb[0].mxu0
      %750 = vmatprep.mubr.f32.mxu0 0.0
      %751 = vmatmul.mubr.f32.gmra.mrb[0].mxu0 %v559
      %v752 = vpop.f32.mrb[0].mxu0
      %v753 = vadd.f32 0.0, %v752
      %v754 = vpop.f32.mrb[0].mxu0
      %755 = vmatprep.mubr.f32.mxu0 0.0
      %756 = vmatmul.mubr.f32.gmra.mrb[0].mxu0 %v562
      %v757 = vpop.f32.mrb[0].mxu0
      %v758 = vadd.f32 0.0, %v757
      %v759 = vpop.f32.mrb[0].mxu0
      %760 = vmatprep.mubr.f32.mxu0 0.0
      %761 = vmatmul.mubr.f32.gmra.mrb[0].mxu0 %v565
      %v762 = vpop.f32.mrb[0].mxu0
      %v763 = vadd.f32 0.0, %v762
      %v764 = vpop.f32.mrb[0].mxu0
      %765 = vmatprep.mubr.f32.mxu0 0.0
      %766 = vmatmul.mubr.f32.gmra.mrb[0].mxu0 %v568
      %v767 = vpop.f32.mrb[0].mxu0
      %v768 = vadd.f32 0.0, %v767
      %v769 = vpop.f32.mrb[0].mxu0
      %770 = vmatprep.mubr.f32.mxu0 0.0
      %771 = vmatmul.mubr.f32.gmra.mrb[0].mxu0 %v571
      %v772 = vpop.f32.mrb[0].mxu0
      %v773 = vadd.f32 0.0, %v772
      %v774 = vpop.f32.mrb[0].mxu0
      %775 = vmatprep.mubr.f32.mxu0 0.0
      %776 = vmatmul.mubr.f32.gmra.mrb[0].mxu0 %v574
      %v777 = vpop.f32.mrb[0].mxu0
      %v778 = vadd.f32 0.0, %v777
      %v779 = vpop.f32.mrb[0].mxu0
      %780 = vmatprep.mubr.f32.mxu0 0.0
      %781 = vmatmul.mubr.f32.gmra.mrb[0].mxu0 %v577
      %v782 = vpop.f32.mrb[0].mxu0
      %v783 = vadd.f32 0.0, %v782
      %v784 = vpop.f32.mrb[0].mxu0
      %785 = vmatprep.mubr.f32.mxu0 0.0
      %786 = vmatmul.mubr.f32.gmra.mrb[0].mxu0 %v580
      %v787 = vpop.f32.mrb[0].mxu0
      %v788 = vadd.f32 0.0, %v787
      %v789 = vpop.f32.mrb[0].mxu0
      %790 = vdwg.mxu0
      %v792 = vsel %vm497, %v439, 0
      %v795 = vsel %vm497, %v440, 0
      %v798 = vsel %vm497, %v441, 0
      %v801 = vsel %vm497, %v442, 0
      %v804 = vsel %vm497, %v443, 0
      %v807 = vsel %vm497, %v444, 0
      %v810 = vsel %vm497, %v445, 0
      %v813 = vsel %vm497, %v446, 0
      %v816 = vsel %vm497, %v447, 0
      %v819 = vsel %vm497, %v448, 0
      %v822 = vsel %vm497, %v449, 0
      %v825 = vsel %vm497, %v450, 0
      %v828 = vsel %vm497, %v451, 0
      %v831 = vsel %vm497, %v452, 0
      %v834 = vsel %vm497, %v453, 0
      %v837 = vsel %vm497, %v454, 0
      %v840 = vsel %vm497, %v455, 0
      %v843 = vsel %vm497, %v456, 0
      %v846 = vsel %vm497, %v457, 0
      %v849 = vsel %vm497, %v458, 0
      %v852 = vsel %vm497, %v459, 0
      %v855 = vsel %vm497, %v460, 0
      %v858 = vsel %vm497, %v461, 0
      %v861 = vsel %vm497, %v462, 0
      %v864 = vsel %vm497, %v463, 0
      %v867 = vsel %vm497, %v464, 0
      %v870 = vsel %vm497, %v465, 0
      %v873 = vsel %vm497, %v466, 0
      %v876 = vsel %vm582, %v467, 0
      %878 = vmatprep.subr.mxu0 0.0
      %879 = vmatpush1.msra.mxu0 %v876
      %880 = vmatprep.subr.mxu0 0.0
      %881 = vmatpush1.msra.mxu0 0.0
      %882 = vmatprep.subr.mxu0 0.0
      %883 = vmatpush1.msra.mxu0 0.0
      %884 = vmatprep.subr.mxu0 0.0
      %885 = vmatpush1.msra.mxu0 0.0
      %886 = vmatprep.subr.mxu0 0.0
      %887 = vmatpush1.msra.mxu0 0.0
      %888 = vmatprep.subr.mxu0 0.0
      %889 = vmatpush1.msra.mxu0 0.0
      %890 = vmatprep.subr.mxu0 0.0
      %891 = vmatpush1.msra.mxu0 0.0
      %892 = vmatprep.subr.mxu0 0.0
      %893 = vmatpush1.msra.mxu0 0.0
      %894 = vmatprep.subr.mxu0 0.0
      %895 = vmatpush1.msra.mxu0 0.0
      %896 = vmatprep.subr.mxu0 0.0
      %897 = vmatpush1.msra.mxu0 0.0
      %898 = vmatprep.subr.mxu0 0.0
      %899 = vmatpush1.msra.mxu0 0.0
      %900 = vmatprep.subr.mxu0 0.0
      %901 = vmatpush1.msra.mxu0 0.0
      %902 = vmatprep.subr.mxu0 0.0
      %903 = vmatpush1.msra.mxu0 0.0
      %904 = vmatprep.subr.mxu0 0.0
      %905 = vmatpush1.msra.mxu0 0.0
      %906 = vmatprep.subr.mxu0 0.0
      %907 = vmatpush1.msra.mxu0 0.0
      %908 = vmatprep.subr.mxu0 0.0
      %909 = vmatpush1.msra.mxu0 0.0
      %910 = vmatprep.subr.mxu0 0.0
      %911 = vmatpush1.msra.mxu0 0.0
      %912 = vmatprep.subr.mxu0 0.0
      %913 = vmatpush1.msra.mxu0 0.0
      %914 = vmatprep.subr.mxu0 0.0
      %915 = vmatpush1.msra.mxu0 0.0
      %916 = vmatprep.subr.mxu0 0.0
      %917 = vmatpush1.msra.mxu0 0.0
      %918 = vmatprep.subr.mxu0 0.0
      %919 = vmatpush1.msra.mxu0 0.0
      %920 = vmatprep.subr.mxu0 0.0
      %921 = vmatpush1.msra.mxu0 0.0
      %922 = vmatprep.subr.mxu0 0.0
      %923 = vmatpush1.msra.mxu0 0.0
      %924 = vmatprep.subr.mxu0 0.0
      %925 = vmatpush1.msra.mxu0 0.0
      %926 = vmatprep.subr.mxu0 0.0
      %927 = vmatpush1.msra.mxu0 0.0
      %928 = vmatprep.subr.mxu0 0.0
      %929 = vmatpush1.msra.mxu0 0.0
      %930 = vmatprep.subr.mxu0 0.0
      %931 = vmatpush1.msra.mxu0 0.0
      %932 = vmatprep.subr.mxu0 0.0
      %933 = vmatpush1.msra.mxu0 0.0
      %934 = vmatprep.subr.mxu0 0.0
      %935 = vmatpush1.msra.mxu0 0.0
      %936 = vmatprep.subr.mxu0 0.0
      %937 = vmatpush1.msra.mxu0 0.0
      %938 = vmatprep.subr.mxu0 0.0
      %939 = vmatpush1.msra.mxu0 0.0
      %940 = vmatprep.subr.mxu0 0.0
      %941 = vmatpush1.msra.mxu0 0.0
      %942 = vmatprep.mubr.f32.mxu0 0.0
      %943 = vmatmul.mubr.f32.gmra.mrb[0].mxu0 %v792
      %v944 = vpop.f32.mrb[0].mxu0
      %v945 = vadd.f32 %v653, %v944
      %v946 = vpop.f32.mrb[0].mxu0
      %947 = vmatprep.mubr.f32.mxu0 0.0
      %948 = vmatmul.mubr.f32.gmra.mrb[0].mxu0 %v795
      %v949 = vpop.f32.mrb[0].mxu0
      %v950 = vadd.f32 %v658, %v949
      %v951 = vpop.f32.mrb[0].mxu0
      %952 = vmatprep.mubr.f32.mxu0 0.0
      %953 = vmatmul.mubr.f32.gmra.mrb[0].mxu0 %v798
      %v954 = vpop.f32.mrb[0].mxu0
      %v955 = vadd.f32 %v663, %v954
      %v956 = vpop.f32.mrb[0].mxu0
      %957 = vmatprep.mubr.f32.mxu0 0.0
      %958 = vmatmul.mubr.f32.gmra.mrb[0].mxu0 %v801
      %v959 = vpop.f32.mrb[0].mxu0
      %v960 = vadd.f32 %v668, %v959
      %v961 = vpop.f32.mrb[0].mxu0
      %962 = vmatprep.mubr.f32.mxu0 0.0
      %963 = vmatmul.mubr.f32.gmra.mrb[0].mxu0 %v804
      %v964 = vpop.f32.mrb[0].mxu0
      %v965 = vadd.f32 %v673, %v964
      %v966 = vpop.f32.mrb[0].mxu0
      %967 = vmatprep.mubr.f32.mxu0 0.0
      %968 = vmatmul.mubr.f32.gmra.mrb[0].mxu0 %v807
      %v969 = vpop.f32.mrb[0].mxu0
      %v970 = vadd.f32 %v678, %v969
      %v971 = vpop.f32.mrb[0].mxu0
      %972 = vmatprep.mubr.f32.mxu0 0.0
      %973 = vmatmul.mubr.f32.gmra.mrb[0].mxu0 %v810
      %v974 = vpop.f32.mrb[0].mxu0
      %v975 = vadd.f32 %v683, %v974
      %v976 = vpop.f32.mrb[0].mxu0
      %977 = vmatprep.mubr.f32.mxu0 0.0
      %978 = vmatmul.mubr.f32.gmra.mrb[0].mxu0 %v813
      %v979 = vpop.f32.mrb[0].mxu0
      %v980 = vadd.f32 %v688, %v979
      %v981 = vpop.f32.mrb[0].mxu0
      %982 = vmatprep.mubr.f32.mxu0 0.0
      %983 = vmatmul.mubr.f32.gmra.mrb[0].mxu0 %v816
      %v984 = vpop.f32.mrb[0].mxu0
      %v985 = vadd.f32 %v693, %v984
      %v986 = vpop.f32.mrb[0].mxu0
      %987 = vmatprep.mubr.f32.mxu0 0.0
      %988 = vmatmul.mubr.f32.gmra.mrb[0].mxu0 %v819
      %v989 = vpop.f32.mrb[0].mxu0
      %v990 = vadd.f32 %v698, %v989
      %v991 = vpop.f32.mrb[0].mxu0
      %992 = vmatprep.mubr.f32.mxu0 0.0
      %993 = vmatmul.mubr.f32.gmra.mrb[0].mxu0 %v822
      %v994 = vpop.f32.mrb[0].mxu0
      %v995 = vadd.f32 %v703, %v994
      %v996 = vpop.f32.mrb[0].mxu0
      %997 = vmatprep.mubr.f32.mxu0 0.0
      %998 = vmatmul.mubr.f32.gmra.mrb[0].mxu0 %v825
      %v999 = vpop.f32.mrb[0].mxu0
      %v1000 = vadd.f32 %v708, %v999
      %v1001 = vpop.f32.mrb[0].mxu0
      %1002 = vmatprep.mubr.f32.mxu0 0.0
      %1003 = vmatmul.mubr.f32.gmra.mrb[0].mxu0 %v828
      %v1004 = vpop.f32.mrb[0].mxu0
      %v1005 = vadd.f32 %v713, %v1004
      %v1006 = vpop.f32.mrb[0].mxu0
      %1007 = vmatprep.mubr.f32.mxu0 0.0
      %1008 = vmatmul.mubr.f32.gmra.mrb[0].mxu0 %v831
      %v1009 = vpop.f32.mrb[0].mxu0
      %v1010 = vadd.f32 %v718, %v1009
      %v1011 = vpop.f32.mrb[0].mxu0
      %1012 = vmatprep.mubr.f32.mxu0 0.0
      %1013 = vmatmul.mubr.f32.gmra.mrb[0].mxu0 %v834
      %v1014 = vpop.f32.mrb[0].mxu0
      %v1015 = vadd.f32 %v723, %v1014
      %v1016 = vpop.f32.mrb[0].mxu0
      %1017 = vmatprep.mubr.f32.mxu0 0.0
      %1018 = vmatmul.mubr.f32.gmra.mrb[0].mxu0 %v837
      %v1019 = vpop.f32.mrb[0].mxu0
      %v1020 = vadd.f32 %v728, %v1019
      %v1021 = vpop.f32.mrb[0].mxu0
      %1022 = vmatprep.mubr.f32.mxu0 0.0
      %1023 = vmatmul.mubr.f32.gmra.mrb[0].mxu0 %v840
      %v1024 = vpop.f32.mrb[0].mxu0
      %v1025 = vadd.f32 %v733, %v1024
      %v1026 = vpop.f32.mrb[0].mxu0
      %1027 = vmatprep.mubr.f32.mxu0 0.0
      %1028 = vmatmul.mubr.f32.gmra.mrb[0].mxu0 %v843
      %v1029 = vpop.f32.mrb[0].mxu0
      %v1030 = vadd.f32 %v738, %v1029
      %v1031 = vpop.f32.mrb[0].mxu0
      %1032 = vmatprep.mubr.f32.mxu0 0.0
      %1033 = vmatmul.mubr.f32.gmra.mrb[0].mxu0 %v846
      %v1034 = vpop.f32.mrb[0].mxu0
      %v1035 = vadd.f32 %v743, %v1034
      %v1036 = vpop.f32.mrb[0].mxu0
      %1037 = vmatprep.mubr.f32.mxu0 0.0
      %1038 = vmatmul.mubr.f32.gmra.mrb[0].mxu0 %v849
      %v1039 = vpop.f32.mrb[0].mxu0
      %v1040 = vadd.f32 %v748, %v1039
      %v1041 = vpop.f32.mrb[0].mxu0
      %1042 = vmatprep.mubr.f32.mxu0 0.0
      %1043 = vmatmul.mubr.f32.gmra.mrb[0].mxu0 %v852
      %v1044 = vpop.f32.mrb[0].mxu0
      %v1045 = vadd.f32 %v753, %v1044
      %v1046 = vpop.f32.mrb[0].mxu0
      %1047 = vmatprep.mubr.f32.mxu0 0.0
      %1048 = vmatmul.mubr.f32.gmra.mrb[0].mxu0 %v855
      %v1049 = vpop.f32.mrb[0].mxu0
      %v1050 = vadd.f32 %v758, %v1049
      %v1051 = vpop.f32.mrb[0].mxu0
      %1052 = vmatprep.mubr.f32.mxu0 0.0
      %1053 = vmatmul.mubr.f32.gmra.mrb[0].mxu0 %v858
      %v1054 = vpop.f32.mrb[0].mxu0
      %v1055 = vadd.f32 %v763, %v1054
      %v1056 = vpop.f32.mrb[0].mxu0
      %1057 = vmatprep.mubr.f32.mxu0 0.0
      %1058 = vmatmul.mubr.f32.gmra.mrb[0].mxu0 %v861
      %v1059 = vpop.f32.mrb[0].mxu0
      %v1060 = vadd.f32 %v768, %v1059
      %v1061 = vpop.f32.mrb[0].mxu0
      %1062 = vmatprep.mubr.f32.mxu0 0.0
      %1063 = vmatmul.mubr.f32.gmra.mrb[0].mxu0 %v864
      %v1064 = vpop.f32.mrb[0].mxu0
      %v1065 = vadd.f32 %v773, %v1064
      %v1066 = vpop.f32.mrb[0].mxu0
      %1067 = vmatprep.mubr.f32.mxu0 0.0
      %1068 = vmatmul.mubr.f32.gmra.mrb[0].mxu0 %v867
      %v1069 = vpop.f32.mrb[0].mxu0
      %v1070 = vadd.f32 %v778, %v1069
      %v1071 = vpop.f32.mrb[0].mxu0
      %1072 = vmatprep.mubr.f32.mxu0 0.0
      %1073 = vmatmul.mubr.f32.gmra.mrb[0].mxu0 %v870
      %v1074 = vpop.f32.mrb[0].mxu0
      %v1075 = vadd.f32 %v783, %v1074
      %v1076 = vpop.f32.mrb[0].mxu0
      %1077 = vmatprep.mubr.f32.mxu0 0.0
      %1078 = vmatmul.mubr.f32.gmra.mrb[0].mxu0 %v873
      %v1079 = vpop.f32.mrb[0].mxu0
      %v1080 = vadd.f32 %v788, %v1079
      %v1081 = vpop.f32.mrb[0].mxu0
      %1082 = vdwg.mxu0
      %v1083 = vld [vmem:[%s435 + $0x2] sm:$0xff]
      %v1084 = vld [vmem:[%s435 + $0xa] sm:$0xff]
      %v1085 = vld [vmem:[%s435 + $0x12] sm:$0xff]
      %v1086 = vld [vmem:[%s435 + $0x1a] sm:$0xff]
      %v1087 = vld [vmem:[%s435 + $0x22] sm:$0xff]
      %v1088 = vld [vmem:[%s435 + $0x2a] sm:$0xff]
      %v1089 = vld [vmem:[%s435 + $0x32] sm:$0xff]
      %v1090 = vld [vmem:[%s435 + $0x3a] sm:$0xff]
      %v1091 = vld [vmem:[%s435 + $0x42] sm:$0xff]
      %v1092 = vld [vmem:[%s435 + $0x4a] sm:$0xff]
      %v1093 = vld [vmem:[%s435 + $0x52] sm:$0xff]
      %v1094 = vld [vmem:[%s435 + $0x5a] sm:$0xff]
      %v1095 = vld [vmem:[%s435 + $0x62] sm:$0xff]
      %v1096 = vld [vmem:[%s435 + $0x6a] sm:$0xff]
      %v1097 = vld [vmem:[%s435 + $0x72] sm:$0xff]
      %v1098 = vld [vmem:[%s435 + $0x7a] sm:$0xff]
      %v1099 = vld [vmem:[%s435 + $0x82] sm:$0xff]
      %v1100 = vld [vmem:[%s435 + $0x8a] sm:$0xff]
      %v1101 = vld [vmem:[%s435 + $0x92] sm:$0xff]
      %v1102 = vld [vmem:[%s435 + $0x9a] sm:$0xff]
      %v1103 = vld [vmem:[%s435 + $0xa2] sm:$0xff]
      %v1104 = vld [vmem:[%s435 + $0xaa] sm:$0xff]
      %v1105 = vld [vmem:[%s435 + $0xb2] sm:$0xff]
      %v1106 = vld [vmem:[%s435 + $0xba] sm:$0xff]
      %v1107 = vld [vmem:[%s435 + $0xc2] sm:$0xff]
      %v1108 = vld [vmem:[%s435 + $0xca] sm:$0xff]
      %v1109 = vld [vmem:[%s435 + $0xd2] sm:$0xff]
      %v1110 = vld [vmem:[%s435 + $0xda] sm:$0x3f]
      %v1111 = vld [vmem:[%s1 + $0x8] sm:$0xf]
      %v1113 = vsel %vm497, %v1083, 0
      %v1116 = vsel %vm497, %v1084, 0
      %v1119 = vsel %vm497, %v1085, 0
      %v1122 = vsel %vm497, %v1086, 0
      %v1125 = vsel %vm497, %v1087, 0
      %v1128 = vsel %vm497, %v1088, 0
      %v1131 = vsel %vm497, %v1089, 0
      %v1134 = vsel %vm497, %v1090, 0
      %v1137 = vsel %vm497, %v1091, 0
      %v1140 = vsel %vm497, %v1092, 0
      %v1143 = vsel %vm497, %v1093, 0
      %v1146 = vsel %vm497, %v1094, 0
      %v1149 = vsel %vm497, %v1095, 0
      %v1152 = vsel %vm497, %v1096, 0
      %v1155 = vsel %vm497, %v1097, 0
      %v1158 = vsel %vm497, %v1098, 0
      %v1161 = vsel %vm497, %v1099, 0
      %v1164 = vsel %vm497, %v1100, 0
      %v1167 = vsel %vm497, %v1101, 0
      %v1170 = vsel %vm497, %v1102, 0
      %v1173 = vsel %vm497, %v1103, 0
      %v1176 = vsel %vm497, %v1104, 0
      %v1179 = vsel %vm497, %v1105, 0
      %v1182 = vsel %vm497, %v1106, 0
      %v1185 = vsel %vm497, %v1107, 0
      %v1188 = vsel %vm497, %v1108, 0
      %v1191 = vsel %vm497, %v1109, 0
      %v1194 = vsel %vm497, %v1110, 0
      %v1197 = vsel %vm582, %v1111, 0
      %1199 = vmatprep.subr.mxu0 0.0
      %1200 = vmatpush1.msra.mxu0 %v1197
      %1201 = vmatprep.subr.mxu0 0.0
      %1202 = vmatpush1.msra.mxu0 0.0
      %1203 = vmatprep.subr.mxu0 0.0
      %1204 = vmatpush1.msra.mxu0 0.0
      %1205 = vmatprep.subr.mxu0 0.0
      %1206 = vmatpush1.msra.mxu0 0.0
      %1207 = vmatprep.subr.mxu0 0.0
      %1208 = vmatpush1.msra.mxu0 0.0
      %1209 = vmatprep.subr.mxu0 0.0
      %1210 = vmatpush1.msra.mxu0 0.0
      %1211 = vmatprep.subr.mxu0 0.0
      %1212 = vmatpush1.msra.mxu0 0.0
      %1213 = vmatprep.subr.mxu0 0.0
      %1214 = vmatpush1.msra.mxu0 0.0
      %1215 = vmatprep.subr.mxu0 0.0
      %1216 = vmatpush1.msra.mxu0 0.0
      %1217 = vmatprep.subr.mxu0 0.0
      %1218 = vmatpush1.msra.mxu0 0.0
      %1219 = vmatprep.subr.mxu0 0.0
      %1220 = vmatpush1.msra.mxu0 0.0
      %1221 = vmatprep.subr.mxu0 0.0
      %1222 = vmatpush1.msra.mxu0 0.0
      %1223 = vmatprep.subr.mxu0 0.0
      %1224 = vmatpush1.msra.mxu0 0.0
      %1225 = vmatprep.subr.mxu0 0.0
      %1226 = vmatpush1.msra.mxu0 0.0
      %1227 = vmatprep.subr.mxu0 0.0
      %1228 = vmatpush1.msra.mxu0 0.0
      %1229 = vmatprep.subr.mxu0 0.0
      %1230 = vmatpush1.msra.mxu0 0.0
      %1231 = vmatprep.subr.mxu0 0.0
      %1232 = vmatpush1.msra.mxu0 0.0
      %1233 = vmatprep.subr.mxu0 0.0
      %1234 = vmatpush1.msra.mxu0 0.0
      %1235 = vmatprep.subr.mxu0 0.0
      %1236 = vmatpush1.msra.mxu0 0.0
      %1237 = vmatprep.subr.mxu0 0.0
      %1238 = vmatpush1.msra.mxu0 0.0
      %1239 = vmatprep.subr.mxu0 0.0
      %1240 = vmatpush1.msra.mxu0 0.0
      %1241 = vmatprep.subr.mxu0 0.0
      %1242 = vmatpush1.msra.mxu0 0.0
      %1243 = vmatprep.subr.mxu0 0.0
      %1244 = vmatpush1.msra.mxu0 0.0
      %1245 = vmatprep.subr.mxu0 0.0
      %1246 = vmatpush1.msra.mxu0 0.0
      %1247 = vmatprep.subr.mxu0 0.0
      %1248 = vmatpush1.msra.mxu0 0.0
      %1249 = vmatprep.subr.mxu0 0.0
      %1250 = vmatpush1.msra.mxu0 0.0
      %1251 = vmatprep.subr.mxu0 0.0
      %1252 = vmatpush1.msra.mxu0 0.0
      %1253 = vmatprep.subr.mxu0 0.0
      %1254 = vmatpush1.msra.mxu0 0.0
      %1255 = vmatprep.subr.mxu0 0.0
      %1256 = vmatpush1.msra.mxu0 0.0
      %1257 = vmatprep.subr.mxu0 0.0
      %1258 = vmatpush1.msra.mxu0 0.0
      %1259 = vmatprep.subr.mxu0 0.0
      %1260 = vmatpush1.msra.mxu0 0.0
      %1261 = vmatprep.subr.mxu0 0.0
      %1262 = vmatpush1.msra.mxu0 0.0
      %1263 = vmatprep.mubr.f32.mxu0 0.0
      %1264 = vmatmul.mubr.f32.gmra.mrb[0].mxu0 %v1113
      %v1265 = vpop.f32.mrb[0].mxu0
      %v1266 = vadd.f32 0.0, %v1265
      %v1267 = vpop.f32.mrb[0].mxu0
      %1268 = vmatprep.mubr.f32.mxu0 0.0
      %1269 = vmatmul.mubr.f32.gmra.mrb[0].mxu0 %v1116
      %v1270 = vpop.f32.mrb[0].mxu0
      %v1271 = vadd.f32 0.0, %v1270
      %v1272 = vpop.f32.mrb[0].mxu0
      %1273 = vmatprep.mubr.f32.mxu0 0.0
      %1274 = vmatmul.mubr.f32.gmra.mrb[0].mxu0 %v1119
      %v1275 = vpop.f32.mrb[0].mxu0
      %v1276 = vadd.f32 0.0, %v1275
      %v1277 = vpop.f32.mrb[0].mxu0
      %1278 = vmatprep.mubr.f32.mxu0 0.0
      %1279 = vmatmul.mubr.f32.gmra.mrb[0].mxu0 %v1122
      %v1280 = vpop.f32.mrb[0].mxu0
      %v1281 = vadd.f32 0.0, %v1280
      %v1282 = vpop.f32.mrb[0].mxu0
      %1283 = vmatprep.mubr.f32.mxu0 0.0
      %1284 = vmatmul.mubr.f32.gmra.mrb[0].mxu0 %v1125
      %v1285 = vpop.f32.mrb[0].mxu0
      %v1286 = vadd.f32 0.0, %v1285
      %v1287 = vpop.f32.mrb[0].mxu0
      %1288 = vmatprep.mubr.f32.mxu0 0.0
      %1289 = vmatmul.mubr.f32.gmra.mrb[0].mxu0 %v1128
      %v1290 = vpop.f32.mrb[0].mxu0
      %v1291 = vadd.f32 0.0, %v1290
      %v1292 = vpop.f32.mrb[0].mxu0
      %1293 = vmatprep.mubr.f32.mxu0 0.0
      %1294 = vmatmul.mubr.f32.gmra.mrb[0].mxu0 %v1131
      %v1295 = vpop.f32.mrb[0].mxu0
      %v1296 = vadd.f32 0.0, %v1295
      %v1297 = vpop.f32.mrb[0].mxu0
      %1298 = vmatprep.mubr.f32.mxu0 0.0
      %1299 = vmatmul.mubr.f32.gmra.mrb[0].mxu0 %v1134
      %v1300 = vpop.f32.mrb[0].mxu0
      %v1301 = vadd.f32 0.0, %v1300
      %v1302 = vpop.f32.mrb[0].mxu0
      %1303 = vmatprep.mubr.f32.mxu0 0.0
      %1304 = vmatmul.mubr.f32.gmra.mrb[0].mxu0 %v1137
      %v1305 = vpop.f32.mrb[0].mxu0
      %v1306 = vadd.f32 0.0, %v1305
      %v1307 = vpop.f32.mrb[0].mxu0
      %1308 = vmatprep.mubr.f32.mxu0 0.0
      %1309 = vmatmul.mubr.f32.gmra.mrb[0].mxu0 %v1140
      %v1310 = vpop.f32.mrb[0].mxu0
      %v1311 = vadd.f32 0.0, %v1310
      %v1312 = vpop.f32.mrb[0].mxu0
      %1313 = vmatprep.mubr.f32.mxu0 0.0
      %1314 = vmatmul.mubr.f32.gmra.mrb[0].mxu0 %v1143
      %v1315 = vpop.f32.mrb[0].mxu0
      %v1316 = vadd.f32 0.0, %v1315
      %v1317 = vpop.f32.mrb[0].mxu0
      %1318 = vmatprep.mubr.f32.mxu0 0.0
      %1319 = vmatmul.mubr.f32.gmra.mrb[0].mxu0 %v1146
      %v1320 = vpop.f32.mrb[0].mxu0
      %v1321 = vadd.f32 0.0, %v1320
      %v1322 = vpop.f32.mrb[0].mxu0
      %1323 = vmatprep.mubr.f32.mxu0 0.0
      %1324 = vmatmul.mubr.f32.gmra.mrb[0].mxu0 %v1149
      %v1325 = vpop.f32.mrb[0].mxu0
      %v1326 = vadd.f32 0.0, %v1325
      %v1327 = vpop.f32.mrb[0].mxu0
      %1328 = vmatprep.mubr.f32.mxu0 0.0
      %1329 = vmatmul.mubr.f32.gmra.mrb[0].mxu0 %v1152
      %v1330 = vpop.f32.mrb[0].mxu0
      %v1331 = vadd.f32 0.0, %v1330
      %v1332 = vpop.f32.mrb[0].mxu0
      %1333 = vmatprep.mubr.f32.mxu0 0.0
      %1334 = vmatmul.mubr.f32.gmra.mrb[0].mxu0 %v1155
      %v1335 = vpop.f32.mrb[0].mxu0
      %v1336 = vadd.f32 0.0, %v1335
      %v1337 = vpop.f32.mrb[0].mxu0
      %1338 = vmatprep.mubr.f32.mxu0 0.0
      %1339 = vmatmul.mubr.f32.gmra.mrb[0].mxu0 %v1158
      %v1340 = vpop.f32.mrb[0].mxu0
      %v1341 = vadd.f32 0.0, %v1340
      %v1342 = vpop.f32.mrb[0].mxu0
      %1343 = vmatprep.mubr.f32.mxu0 0.0
      %1344 = vmatmul.mubr.f32.gmra.mrb[0].mxu0 %v1161
      %v1345 = vpop.f32.mrb[0].mxu0
      %v1346 = vadd.f32 0.0, %v1345
      %v1347 = vpop.f32.mrb[0].mxu0
      %1348 = vmatprep.mubr.f32.mxu0 0.0
      %1349 = vmatmul.mubr.f32.gmra.mrb[0].mxu0 %v1164
      %v1350 = vpop.f32.mrb[0].mxu0
      %v1351 = vadd.f32 0.0, %v1350
      %v1352 = vpop.f32.mrb[0].mxu0
      %1353 = vmatprep.mubr.f32.mxu0 0.0
      %1354 = vmatmul.mubr.f32.gmra.mrb[0].mxu0 %v1167
      %v1355 = vpop.f32.mrb[0].mxu0
      %v1356 = vadd.f32 0.0, %v1355
      %v1357 = vpop.f32.mrb[0].mxu0
      %1358 = vmatprep.mubr.f32.mxu0 0.0
      %1359 = vmatmul.mubr.f32.gmra.mrb[0].mxu0 %v1170
      %v1360 = vpop.f32.mrb[0].mxu0
      %v1361 = vadd.f32 0.0, %v1360
      %v1362 = vpop.f32.mrb[0].mxu0
      %1363 = vmatprep.mubr.f32.mxu0 0.0
      %1364 = vmatmul.mubr.f32.gmra.mrb[0].mxu0 %v1173
      %v1365 = vpop.f32.mrb[0].mxu0
      %v1366 = vadd.f32 0.0, %v1365
      %v1367 = vpop.f32.mrb[0].mxu0
      %1368 = vmatprep.mubr.f32.mxu0 0.0
      %1369 = vmatmul.mubr.f32.gmra.mrb[0].mxu0 %v1176
      %v1370 = vpop.f32.mrb[0].mxu0
      %v1371 = vadd.f32 0.0, %v1370
      %v1372 = vpop.f32.mrb[0].mxu0
      %1373 = vmatprep.mubr.f32.mxu0 0.0
      %1374 = vmatmul.mubr.f32.gmra.mrb[0].mxu0 %v1179
      %v1375 = vpop.f32.mrb[0].mxu0
      %v1376 = vadd.f32 0.0, %v1375
      %v1377 = vpop.f32.mrb[0].mxu0
      %1378 = vmatprep.mubr.f32.mxu0 0.0
      %1379 = vmatmul.mubr.f32.gmra.mrb[0].mxu0 %v1182
      %v1380 = vpop.f32.mrb[0].mxu0
      %v1381 = vadd.f32 0.0, %v1380
      %v1382 = vpop.f32.mrb[0].mxu0
      %1383 = vmatprep.mubr.f32.mxu0 0.0
      %1384 = vmatmul.mubr.f32.gmra.mrb[0].mxu0 %v1185
      %v1385 = vpop.f32.mrb[0].mxu0
      %v1386 = vadd.f32 0.0, %v1385
      %v1387 = vpop.f32.mrb[0].mxu0
      %1388 = vmatprep.mubr.f32.mxu0 0.0
      %1389 = vmatmul.mubr.f32.gmra.mrb[0].mxu0 %v1188
      %v1390 = vpop.f32.mrb[0].mxu0
      %v1391 = vadd.f32 0.0, %v1390
      %v1392 = vpop.f32.mrb[0].mxu0
      %1393 = vmatprep.mubr.f32.mxu0 0.0
      %1394 = vmatmul.mubr.f32.gmra.mrb[0].mxu0 %v1191
      %v1395 = vpop.f32.mrb[0].mxu0
      %v1396 = vadd.f32 0.0, %v1395
      %v1397 = vpop.f32.mrb[0].mxu0
      %1398 = vmatprep.mubr.f32.mxu0 0.0
      %1399 = vmatmul.mubr.f32.gmra.mrb[0].mxu0 %v1194
      %v1400 = vpop.f32.mrb[0].mxu0
      %v1401 = vadd.f32 0.0, %v1400
      %v1402 = vpop.f32.mrb[0].mxu0
      %1403 = vdwg.mxu0
      %v1404 = vadd.f32 %v945, %v1266
      %v1405 = vadd.f32 %v950, %v1271
      %v1406 = vadd.f32 %v955, %v1276
      %v1407 = vadd.f32 %v960, %v1281
      %v1408 = vadd.f32 %v965, %v1286
      %v1409 = vadd.f32 %v970, %v1291
      %v1410 = vadd.f32 %v975, %v1296
      %v1411 = vadd.f32 %v980, %v1301
      %v1412 = vadd.f32 %v985, %v1306
      %v1413 = vadd.f32 %v990, %v1311
      %v1414 = vadd.f32 %v995, %v1316
      %v1415 = vadd.f32 %v1000, %v1321
      %v1416 = vadd.f32 %v1005, %v1326
      %v1417 = vadd.f32 %v1010, %v1331
      %v1418 = vadd.f32 %v1015, %v1336
      %v1419 = vadd.f32 %v1020, %v1341
      %v1420 = vadd.f32 %v1025, %v1346
      %v1421 = vadd.f32 %v1030, %v1351
      %v1422 = vadd.f32 %v1035, %v1356
      %v1423 = vadd.f32 %v1040, %v1361
      %v1424 = vadd.f32 %v1045, %v1366
      %v1425 = vadd.f32 %v1050, %v1371
      %v1426 = vadd.f32 %v1055, %v1376
      %v1427 = vadd.f32 %v1060, %v1381
      %v1428 = vadd.f32 %v1065, %v1386
      %v1429 = vadd.f32 %v1070, %v1391
      %v1430 = vadd.f32 %v1075, %v1396
      %v1431 = vadd.f32 %v1080, %v1401
      %v1432 = vld [vmem:[%s435 + $0x10] sm:$0xff]
      %v1433 = vld [vmem:[%s435 + $0x18] sm:$0xff]
      %v1434 = vld [vmem:[%s435 + $0x20] sm:$0xff]
      %v1435 = vld [vmem:[%s435 + $0x28] sm:$0xff]
      %v1436 = vld [vmem:[%s435 + $0x30] sm:$0xff]
      %v1437 = vld [vmem:[%s435 + $0x38] sm:$0xff]
      %v1438 = vld [vmem:[%s435 + $0x40] sm:$0xff]
      %v1439 = vld [vmem:[%s435 + $0x48] sm:$0xff]
      %v1440 = vld [vmem:[%s435 + $0x50] sm:$0xff]
      %v1441 = vld [vmem:[%s435 + $0x58] sm:$0xff]
      %v1442 = vld [vmem:[%s435 + $0x60] sm:$0xff]
      %v1443 = vld [vmem:[%s435 + $0x68] sm:$0xff]
      %v1444 = vld [vmem:[%s435 + $0x70] sm:$0xff]
      %v1445 = vld [vmem:[%s435 + $0x78] sm:$0xff]
      %v1446 = vld [vmem:[%s435 + $0x80] sm:$0xff]
      %v1447 = vld [vmem:[%s435 + $0x88] sm:$0xff]
      %v1448 = vld [vmem:[%s435 + $0x90] sm:$0xff]
      %v1449 = vld [vmem:[%s435 + $0x98] sm:$0xff]
      %v1450 = vld [vmem:[%s435 + $0xa0] sm:$0xff]
      %v1451 = vld [vmem:[%s435 + $0xa8] sm:$0xff]
      %v1452 = vld [vmem:[%s435 + $0xb0] sm:$0xff]
      %v1453 = vld [vmem:[%s435 + $0xb8] sm:$0xff]
      %v1454 = vld [vmem:[%s435 + $0xc0] sm:$0xff]
      %v1455 = vld [vmem:[%s435 + $0xc8] sm:$0xff]
      %v1456 = vld [vmem:[%s435 + $0xd0] sm:$0xff]
      %v1457 = vld [vmem:[%s435 + $0xd8] sm:$0xff]
      %v1458 = vld [vmem:[%s435 + $0xe0] sm:$0xff]
      %v1459 = vld [vmem:[%s435 + $0xe8] sm:$0x3f]
      %v1460 = vld [vmem:[%s1 + $0xc] sm:$0xf]
      %v1462 = vsel %vm497, %v1432, 0
      %v1465 = vsel %vm497, %v1433, 0
      %v1468 = vsel %vm497, %v1434, 0
      %v1471 = vsel %vm497, %v1435, 0
      %v1474 = vsel %vm497, %v1436, 0
      %v1477 = vsel %vm497, %v1437, 0
      %v1480 = vsel %vm497, %v1438, 0
      %v1483 = vsel %vm497, %v1439, 0
      %v1486 = vsel %vm497, %v1440, 0
      %v1489 = vsel %vm497, %v1441, 0
      %v1492 = vsel %vm497, %v1442, 0
      %v1495 = vsel %vm497, %v1443, 0
      %v1498 = vsel %vm497, %v1444, 0
      %v1501 = vsel %vm497, %v1445, 0
      %v1504 = vsel %vm497, %v1446, 0
      %v1507 = vsel %vm497, %v1447, 0
      %v1510 = vsel %vm497, %v1448, 0
      %v1513 = vsel %vm497, %v1449, 0
      %v1516 = vsel %vm497, %v1450, 0
      %v1519 = vsel %vm497, %v1451, 0
      %v1522 = vsel %vm497, %v1452, 0
      %v1525 = vsel %vm497, %v1453, 0
      %v1528 = vsel %vm497, %v1454, 0
      %v1531 = vsel %vm497, %v1455, 0
      %v1534 = vsel %vm497, %v1456, 0
      %v1537 = vsel %vm497, %v1457, 0
      %v1540 = vsel %vm497, %v1458, 0
      %v1543 = vsel %vm497, %v1459, 0
      %v1546 = vsel %vm582, %v1460, 0
      %1548 = vmatprep.subr.mxu0 0.0
      %1549 = vmatpush1.msra.mxu0 %v1546
      %1550 = vmatprep.subr.mxu0 0.0
      %1551 = vmatpush1.msra.mxu0 0.0
      %1552 = vmatprep.subr.mxu0 0.0
      %1553 = vmatpush1.msra.mxu0 0.0
      %1554 = vmatprep.subr.mxu0 0.0
      %1555 = vmatpush1.msra.mxu0 0.0
      %1556 = vmatprep.subr.mxu0 0.0
      %1557 = vmatpush1.msra.mxu0 0.0
      %1558 = vmatprep.subr.mxu0 0.0
      %1559 = vmatpush1.msra.mxu0 0.0
      %1560 = vmatprep.subr.mxu0 0.0
      %1561 = vmatpush1.msra.mxu0 0.0
      %1562 = vmatprep.subr.mxu0 0.0
      %1563 = vmatpush1.msra.mxu0 0.0
      %1564 = vmatprep.subr.mxu0 0.0
      %1565 = vmatpush1.msra.mxu0 0.0
      %1566 = vmatprep.subr.mxu0 0.0
      %1567 = vmatpush1.msra.mxu0 0.0
      %1568 = vmatprep.subr.mxu0 0.0
      %1569 = vmatpush1.msra.mxu0 0.0
      %1570 = vmatprep.subr.mxu0 0.0
      %1571 = vmatpush1.msra.mxu0 0.0
      %1572 = vmatprep.subr.mxu0 0.0
      %1573 = vmatpush1.msra.mxu0 0.0
      %1574 = vmatprep.subr.mxu0 0.0
      %1575 = vmatpush1.msra.mxu0 0.0
      %1576 = vmatprep.subr.mxu0 0.0
      %1577 = vmatpush1.msra.mxu0 0.0
      %1578 = vmatprep.subr.mxu0 0.0
      %1579 = vmatpush1.msra.mxu0 0.0
      %1580 = vmatprep.subr.mxu0 0.0
      %1581 = vmatpush1.msra.mxu0 0.0
      %1582 = vmatprep.subr.mxu0 0.0
      %1583 = vmatpush1.msra.mxu0 0.0
      %1584 = vmatprep.subr.mxu0 0.0
      %1585 = vmatpush1.msra.mxu0 0.0
      %1586 = vmatprep.subr.mxu0 0.0
      %1587 = vmatpush1.msra.mxu0 0.0
      %1588 = vmatprep.subr.mxu0 0.0
      %1589 = vmatpush1.msra.mxu0 0.0
      %1590 = vmatprep.subr.mxu0 0.0
      %1591 = vmatpush1.msra.mxu0 0.0
      %1592 = vmatprep.subr.mxu0 0.0
      %1593 = vmatpush1.msra.mxu0 0.0
      %1594 = vmatprep.subr.mxu0 0.0
      %1595 = vmatpush1.msra.mxu0 0.0
      %1596 = vmatprep.subr.mxu0 0.0
      %1597 = vmatpush1.msra.mxu0 0.0
      %1598 = vmatprep.subr.mxu0 0.0
      %1599 = vmatpush1.msra.mxu0 0.0
      %1600 = vmatprep.subr.mxu0 0.0
      %1601 = vmatpush1.msra.mxu0 0.0
      %1602 = vmatprep.subr.mxu0 0.0
      %1603 = vmatpush1.msra.mxu0 0.0
      %1604 = vmatprep.subr.mxu0 0.0
      %1605 = vmatpush1.msra.mxu0 0.0
      %1606 = vmatprep.subr.mxu0 0.0
      %1607 = vmatpush1.msra.mxu0 0.0
      %1608 = vmatprep.subr.mxu0 0.0
      %1609 = vmatpush1.msra.mxu0 0.0
      %1610 = vmatprep.subr.mxu0 0.0
      %1611 = vmatpush1.msra.mxu0 0.0
      %1612 = vmatprep.mubr.f32.mxu0 0.0
      %1613 = vmatmul.mubr.f32.gmra.mrb[0].mxu0 %v1462
      %v1614 = vpop.f32.mrb[0].mxu0
      %v1615 = vadd.f32 0.0, %v1614
      %v1616 = vpop.f32.mrb[0].mxu0
      %1617 = vmatprep.mubr.f32.mxu0 0.0
      %1618 = vmatmul.mubr.f32.gmra.mrb[0].mxu0 %v1465
      %v1619 = vpop.f32.mrb[0].mxu0
      %v1620 = vadd.f32 0.0, %v1619
      %v1621 = vpop.f32.mrb[0].mxu0
      %1622 = vmatprep.mubr.f32.mxu0 0.0
      %1623 = vmatmul.mubr.f32.gmra.mrb[0].mxu0 %v1468
      %v1624 = vpop.f32.mrb[0].mxu0
      %v1625 = vadd.f32 0.0, %v1624
      %v1626 = vpop.f32.mrb[0].mxu0
      %1627 = vmatprep.mubr.f32.mxu0 0.0
      %1628 = vmatmul.mubr.f32.gmra.mrb[0].mxu0 %v1471
      %v1629 = vpop.f32.mrb[0].mxu0
      %v1630 = vadd.f32 0.0, %v1629
      %v1631 = vpop.f32.mrb[0].mxu0
      %1632 = vmatprep.mubr.f32.mxu0 0.0
      %1633 = vmatmul.mubr.f32.gmra.mrb[0].mxu0 %v1474
      %v1634 = vpop.f32.mrb[0].mxu0
      %v1635 = vadd.f32 0.0, %v1634
      %v1636 = vpop.f32.mrb[0].mxu0
      %1637 = vmatprep.mubr.f32.mxu0 0.0
      %1638 = vmatmul.mubr.f32.gmra.mrb[0].mxu0 %v1477
      %v1639 = vpop.f32.mrb[0].mxu0
      %v1640 = vadd.f32 0.0, %v1639
      %v1641 = vpop.f32.mrb[0].mxu0
      %1642 = vmatprep.mubr.f32.mxu0 0.0
      %1643 = vmatmul.mubr.f32.gmra.mrb[0].mxu0 %v1480
      %v1644 = vpop.f32.mrb[0].mxu0
      %v1645 = vadd.f32 0.0, %v1644
      %v1646 = vpop.f32.mrb[0].mxu0
      %1647 = vmatprep.mubr.f32.mxu0 0.0
      %1648 = vmatmul.mubr.f32.gmra.mrb[0].mxu0 %v1483
      %v1649 = vpop.f32.mrb[0].mxu0
      %v1650 = vadd.f32 0.0, %v1649
      %v1651 = vpop.f32.mrb[0].mxu0
      %1652 = vmatprep.mubr.f32.mxu0 0.0
      %1653 = vmatmul.mubr.f32.gmra.mrb[0].mxu0 %v1486
      %v1654 = vpop.f32.mrb[0].mxu0
      %v1655 = vadd.f32 0.0, %v1654
      %v1656 = vpop.f32.mrb[0].mxu0
      %1657 = vmatprep.mubr.f32.mxu0 0.0
      %1658 = vmatmul.mubr.f32.gmra.mrb[0].mxu0 %v1489
      %v1659 = vpop.f32.mrb[0].mxu0
      %v1660 = vadd.f32 0.0, %v1659
      %v1661 = vpop.f32.mrb[0].mxu0
      %1662 = vmatprep.mubr.f32.mxu0 0.0
      %1663 = vmatmul.mubr.f32.gmra.mrb[0].mxu0 %v1492
      %v1664 = vpop.f32.mrb[0].mxu0
      %v1665 = vadd.f32 0.0, %v1664
      %v1666 = vpop.f32.mrb[0].mxu0
      %1667 = vmatprep.mubr.f32.mxu0 0.0
      %1668 = vmatmul.mubr.f32.gmra.mrb[0].mxu0 %v1495
      %v1669 = vpop.f32.mrb[0].mxu0
      %v1670 = vadd.f32 0.0, %v1669
      %v1671 = vpop.f32.mrb[0].mxu0
      %1672 = vmatprep.mubr.f32.mxu0 0.0
      %1673 = vmatmul.mubr.f32.gmra.mrb[0].mxu0 %v1498
      %v1674 = vpop.f32.mrb[0].mxu0
      %v1675 = vadd.f32 0.0, %v1674
      %v1676 = vpop.f32.mrb[0].mxu0
      %1677 = vmatprep.mubr.f32.mxu0 0.0
      %1678 = vmatmul.mubr.f32.gmra.mrb[0].mxu0 %v1501
      %v1679 = vpop.f32.mrb[0].mxu0
      %v1680 = vadd.f32 0.0, %v1679
      %v1681 = vpop.f32.mrb[0].mxu0
      %1682 = vmatprep.mubr.f32.mxu0 0.0
      %1683 = vmatmul.mubr.f32.gmra.mrb[0].mxu0 %v1504
      %v1684 = vpop.f32.mrb[0].mxu0
      %v1685 = vadd.f32 0.0, %v1684
      %v1686 = vpop.f32.mrb[0].mxu0
      %1687 = vmatprep.mubr.f32.mxu0 0.0
      %1688 = vmatmul.mubr.f32.gmra.mrb[0].mxu0 %v1507
      %v1689 = vpop.f32.mrb[0].mxu0
      %v1690 = vadd.f32 0.0, %v1689
      %v1691 = vpop.f32.mrb[0].mxu0
      %1692 = vmatprep.mubr.f32.mxu0 0.0
      %1693 = vmatmul.mubr.f32.gmra.mrb[0].mxu0 %v1510
      %v1694 = vpop.f32.mrb[0].mxu0
      %v1695 = vadd.f32 0.0, %v1694
      %v1696 = vpop.f32.mrb[0].mxu0
      %1697 = vmatprep.mubr.f32.mxu0 0.0
      %1698 = vmatmul.mubr.f32.gmra.mrb[0].mxu0 %v1513
      %v1699 = vpop.f32.mrb[0].mxu0
      %v1700 = vadd.f32 0.0, %v1699
      %v1701 = vpop.f32.mrb[0].mxu0
      %1702 = vmatprep.mubr.f32.mxu0 0.0
      %1703 = vmatmul.mubr.f32.gmra.mrb[0].mxu0 %v1516
      %v1704 = vpop.f32.mrb[0].mxu0
      %v1705 = vadd.f32 0.0, %v1704
      %v1706 = vpop.f32.mrb[0].mxu0
      %1707 = vmatprep.mubr.f32.mxu0 0.0
      %1708 = vmatmul.mubr.f32.gmra.mrb[0].mxu0 %v1519
      %v1709 = vpop.f32.mrb[0].mxu0
      %v1710 = vadd.f32 0.0, %v1709
      %v1711 = vpop.f32.mrb[0].mxu0
      %1712 = vmatprep.mubr.f32.mxu0 0.0
      %1713 = vmatmul.mubr.f32.gmra.mrb[0].mxu0 %v1522
      %v1714 = vpop.f32.mrb[0].mxu0
      %v1715 = vadd.f32 0.0, %v1714
      %v1716 = vpop.f32.mrb[0].mxu0
      %1717 = vmatprep.mubr.f32.mxu0 0.0
      %1718 = vmatmul.mubr.f32.gmra.mrb[0].mxu0 %v1525
      %v1719 = vpop.f32.mrb[0].mxu0
      %v1720 = vadd.f32 0.0, %v1719
      %v1721 = vpop.f32.mrb[0].mxu0
      %1722 = vmatprep.mubr.f32.mxu0 0.0
      %1723 = vmatmul.mubr.f32.gmra.mrb[0].mxu0 %v1528
      %v1724 = vpop.f32.mrb[0].mxu0
      %v1725 = vadd.f32 0.0, %v1724
      %v1726 = vpop.f32.mrb[0].mxu0
      %1727 = vmatprep.mubr.f32.mxu0 0.0
      %1728 = vmatmul.mubr.f32.gmra.mrb[0].mxu0 %v1531
      %v1729 = vpop.f32.mrb[0].mxu0
      %v1730 = vadd.f32 0.0, %v1729
      %v1731 = vpop.f32.mrb[0].mxu0
      %1732 = vmatprep.mubr.f32.mxu0 0.0
      %1733 = vmatmul.mubr.f32.gmra.mrb[0].mxu0 %v1534
      %v1734 = vpop.f32.mrb[0].mxu0
      %v1735 = vadd.f32 0.0, %v1734
      %v1736 = vpop.f32.mrb[0].mxu0
      %1737 = vmatprep.mubr.f32.mxu0 0.0
      %1738 = vmatmul.mubr.f32.gmra.mrb[0].mxu0 %v1537
      %v1739 = vpop.f32.mrb[0].mxu0
      %v1740 = vadd.f32 0.0, %v1739
      %v1741 = vpop.f32.mrb[0].mxu0
      %1742 = vmatprep.mubr.f32.mxu0 0.0
      %1743 = vmatmul.mubr.f32.gmra.mrb[0].mxu0 %v1540
      %v1744 = vpop.f32.mrb[0].mxu0
      %v1745 = vadd.f32 0.0, %v1744
      %v1746 = vpop.f32.mrb[0].mxu0
      %1747 = vmatprep.mubr.f32.mxu0 0.0
      %1748 = vmatmul.mubr.f32.gmra.mrb[0].mxu0 %v1543
      %v1749 = vpop.f32.mrb[0].mxu0
      %v1750 = vadd.f32 0.0, %v1749
      %v1751 = vpop.f32.mrb[0].mxu0
      %1752 = vdwg.mxu0
      %v1753 = vadd.f32 %v1404, %v1615
      %v1754 = vadd.f32 %v1405, %v1620
      %v1755 = vadd.f32 %v1406, %v1625
      %v1756 = vadd.f32 %v1407, %v1630
      %v1757 = vadd.f32 %v1408, %v1635
      %v1758 = vadd.f32 %v1409, %v1640
      %v1759 = vadd.f32 %v1410, %v1645
      %v1760 = vadd.f32 %v1411, %v1650
      %v1761 = vadd.f32 %v1412, %v1655
      %v1762 = vadd.f32 %v1413, %v1660
      %v1763 = vadd.f32 %v1414, %v1665
      %v1764 = vadd.f32 %v1415, %v1670
      %v1765 = vadd.f32 %v1416, %v1675
      %v1766 = vadd.f32 %v1417, %v1680
      %v1767 = vadd.f32 %v1418, %v1685
      %v1768 = vadd.f32 %v1419, %v1690
      %v1769 = vadd.f32 %v1420, %v1695
      %v1770 = vadd.f32 %v1421, %v1700
      %v1771 = vadd.f32 %v1422, %v1705
      %v1772 = vadd.f32 %v1423, %v1710
      %v1773 = vadd.f32 %v1424, %v1715
      %v1774 = vadd.f32 %v1425, %v1720
      %v1775 = vadd.f32 %v1426, %v1725
      %v1776 = vadd.f32 %v1427, %v1730
      %v1777 = vadd.f32 %v1428, %v1735
      %v1778 = vadd.f32 %v1429, %v1740
      %v1779 = vadd.f32 %v1430, %v1745
      %v1780 = vadd.f32 %v1431, %v1750
      %v1781 = vld [vmem:[%s435 + $0x11] sm:$0xff]
      %v1782 = vld [vmem:[%s435 + $0x19] sm:$0xff]
      %v1783 = vld [vmem:[%s435 + $0x21] sm:$0xff]
      %v1784 = vld [vmem:[%s435 + $0x29] sm:$0xff]
      %v1785 = vld [vmem:[%s435 + $0x31] sm:$0xff]
      %v1786 = vld [vmem:[%s435 + $0x39] sm:$0xff]
      %v1787 = vld [vmem:[%s435 + $0x41] sm:$0xff]
      %v1788 = vld [vmem:[%s435 + $0x49] sm:$0xff]
      %v1789 = vld [vmem:[%s435 + $0x51] sm:$0xff]
      %v1790 = vld [vmem:[%s435 + $0x59] sm:$0xff]
      %v1791 = vld [vmem:[%s435 + $0x61] sm:$0xff]
      %v1792 = vld [vmem:[%s435 + $0x69] sm:$0xff]
      %v1793 = vld [vmem:[%s435 + $0x71] sm:$0xff]
      %v1794 = vld [vmem:[%s435 + $0x79] sm:$0xff]
      %v1795 = vld [vmem:[%s435 + $0x81] sm:$0xff]
      %v1796 = vld [vmem:[%s435 + $0x89] sm:$0xff]
      %v1797 = vld [vmem:[%s435 + $0x91] sm:$0xff]
      %v1798 = vld [vmem:[%s435 + $0x99] sm:$0xff]
      %v1799 = vld [vmem:[%s435 + $0xa1] sm:$0xff]
      %v1800 = vld [vmem:[%s435 + $0xa9] sm:$0xff]
      %v1801 = vld [vmem:[%s435 + $0xb1] sm:$0xff]
      %v1802 = vld [vmem:[%s435 + $0xb9] sm:$0xff]
      %v1803 = vld [vmem:[%s435 + $0xc1] sm:$0xff]
      %v1804 = vld [vmem:[%s435 + $0xc9] sm:$0xff]
      %v1805 = vld [vmem:[%s435 + $0xd1] sm:$0xff]
      %v1806 = vld [vmem:[%s435 + $0xd9] sm:$0xff]
      %v1807 = vld [vmem:[%s435 + $0xe1] sm:$0xff]
      %v1808 = vld [vmem:[%s435 + $0xe9] sm:$0x3f]
      %v1809 = vld [vmem:[%s1 + $0x10] sm:$0xf]
      %v1811 = vsel %vm497, %v1781, 0
      %v1814 = vsel %vm497, %v1782, 0
      %v1817 = vsel %vm497, %v1783, 0
      %v1820 = vsel %vm497, %v1784, 0
      %v1823 = vsel %vm497, %v1785, 0
      %v1826 = vsel %vm497, %v1786, 0
      %v1829 = vsel %vm497, %v1787, 0
      %v1832 = vsel %vm497, %v1788, 0
      %v1835 = vsel %vm497, %v1789, 0
      %v1838 = vsel %vm497, %v1790, 0
      %v1841 = vsel %vm497, %v1791, 0
      %v1844 = vsel %vm497, %v1792, 0
      %v1847 = vsel %vm497, %v1793, 0
      %v1850 = vsel %vm497, %v1794, 0
      %v1853 = vsel %vm497, %v1795, 0
      %v1856 = vsel %vm497, %v1796, 0
      %v1859 = vsel %vm497, %v1797, 0
      %v1862 = vsel %vm497, %v1798, 0
      %v1865 = vsel %vm497, %v1799, 0
      %v1868 = vsel %vm497, %v1800, 0
      %v1871 = vsel %vm497, %v1801, 0
      %v1874 = vsel %vm497, %v1802, 0
      %v1877 = vsel %vm497, %v1803, 0
      %v1880 = vsel %vm497, %v1804, 0
      %v1883 = vsel %vm497, %v1805, 0
      %v1886 = vsel %vm497, %v1806, 0
      %v1889 = vsel %vm497, %v1807, 0
      %v1892 = vsel %vm497, %v1808, 0
      %v1895 = vsel %vm582, %v1809, 0
      %1897 = vmatprep.subr.mxu0 0.0
      %1898 = vmatpush1.msra.mxu0 %v1895
      %1899 = vmatprep.subr.mxu0 0.0
      %1900 = vmatpush1.msra.mxu0 0.0
      %1901 = vmatprep.subr.mxu0 0.0
      %1902 = vmatpush1.msra.mxu0 0.0
      %1903 = vmatprep.subr.mxu0 0.0
      %1904 = vmatpush1.msra.mxu0 0.0
      %1905 = vmatprep.subr.mxu0 0.0
      %1906 = vmatpush1.msra.mxu0 0.0
      %1907 = vmatprep.subr.mxu0 0.0
      %1908 = vmatpush1.msra.mxu0 0.0
      %1909 = vmatprep.subr.mxu0 0.0
      %1910 = vmatpush1.msra.mxu0 0.0
      %1911 = vmatprep.subr.mxu0 0.0
      %1912 = vmatpush1.msra.mxu0 0.0
      %1913 = vmatprep.subr.mxu0 0.0
      %1914 = vmatpush1.msra.mxu0 0.0
      %1915 = vmatprep.subr.mxu0 0.0
      %1916 = vmatpush1.msra.mxu0 0.0
      %1917 = vmatprep.subr.mxu0 0.0
      %1918 = vmatpush1.msra.mxu0 0.0
      %1919 = vmatprep.subr.mxu0 0.0
      %1920 = vmatpush1.msra.mxu0 0.0
      %1921 = vmatprep.subr.mxu0 0.0
      %1922 = vmatpush1.msra.mxu0 0.0
      %1923 = vmatprep.subr.mxu0 0.0
      %1924 = vmatpush1.msra.mxu0 0.0
      %1925 = vmatprep.subr.mxu0 0.0
      %1926 = vmatpush1.msra.mxu0 0.0
      %1927 = vmatprep.subr.mxu0 0.0
      %1928 = vmatpush1.msra.mxu0 0.0
      %1929 = vmatprep.subr.mxu0 0.0
      %1930 = vmatpush1.msra.mxu0 0.0
      %1931 = vmatprep.subr.mxu0 0.0
      %1932 = vmatpush1.msra.mxu0 0.0
      %1933 = vmatprep.subr.mxu0 0.0
      %1934 = vmatpush1.msra.mxu0 0.0
      %1935 = vmatprep.subr.mxu0 0.0
      %1936 = vmatpush1.msra.mxu0 0.0
      %1937 = vmatprep.subr.mxu0 0.0
      %1938 = vmatpush1.msra.mxu0 0.0
      %1939 = vmatprep.subr.mxu0 0.0
      %1940 = vmatpush1.msra.mxu0 0.0
      %1941 = vmatprep.subr.mxu0 0.0
      %1942 = vmatpush1.msra.mxu0 0.0
      %1943 = vmatprep.subr.mxu0 0.0
      %1944 = vmatpush1.msra.mxu0 0.0
      %1945 = vmatprep.subr.mxu0 0.0
      %1946 = vmatpush1.msra.mxu0 0.0
      %1947 = vmatprep.subr.mxu0 0.0
      %1948 = vmatpush1.msra.mxu0 0.0
      %1949 = vmatprep.subr.mxu0 0.0
      %1950 = vmatpush1.msra.mxu0 0.0
      %1951 = vmatprep.subr.mxu0 0.0
      %1952 = vmatpush1.msra.mxu0 0.0
      %1953 = vmatprep.subr.mxu0 0.0
      %1954 = vmatpush1.msra.mxu0 0.0
      %1955 = vmatprep.subr.mxu0 0.0
      %1956 = vmatpush1.msra.mxu0 0.0
      %1957 = vmatprep.subr.mxu0 0.0
      %1958 = vmatpush1.msra.mxu0 0.0
      %1959 = vmatprep.subr.mxu0 0.0
      %1960 = vmatpush1.msra.mxu0 0.0
      %1961 = vmatprep.mubr.f32.mxu0 0.0
      %1962 = vmatmul.mubr.f32.gmra.mrb[0].mxu0 %v1811
      %v1963 = vpop.f32.mrb[0].mxu0
      %v1964 = vadd.f32 0.0, %v1963
      %v1965 = vpop.f32.mrb[0].mxu0
      %1966 = vmatprep.mubr.f32.mxu0 0.0
      %1967 = vmatmul.mubr.f32.gmra.mrb[0].mxu0 %v1814
      %v1968 = vpop.f32.mrb[0].mxu0
      %v1969 = vadd.f32 0.0, %v1968
      %v1970 = vpop.f32.mrb[0].mxu0
      %1971 = vmatprep.mubr.f32.mxu0 0.0
      %1972 = vmatmul.mubr.f32.gmra.mrb[0].mxu0 %v1817
      %v1973 = vpop.f32.mrb[0].mxu0
      %v1974 = vadd.f32 0.0, %v1973
      %v1975 = vpop.f32.mrb[0].mxu0
      %1976 = vmatprep.mubr.f32.mxu0 0.0
      %1977 = vmatmul.mubr.f32.gmra.mrb[0].mxu0 %v1820
      %v1978 = vpop.f32.mrb[0].mxu0
      %v1979 = vadd.f32 0.0, %v1978
      %v1980 = vpop.f32.mrb[0].mxu0
      %1981 = vmatprep.mubr.f32.mxu0 0.0
      %1982 = vmatmul.mubr.f32.gmra.mrb[0].mxu0 %v1823
      %v1983 = vpop.f32.mrb[0].mxu0
      %v1984 = vadd.f32 0.0, %v1983
      %v1985 = vpop.f32.mrb[0].mxu0
      %1986 = vmatprep.mubr.f32.mxu0 0.0
      %1987 = vmatmul.mubr.f32.gmra.mrb[0].mxu0 %v1826
      %v1988 = vpop.f32.mrb[0].mxu0
      %v1989 = vadd.f32 0.0, %v1988
      %v1990 = vpop.f32.mrb[0].mxu0
      %1991 = vmatprep.mubr.f32.mxu0 0.0
      %1992 = vmatmul.mubr.f32.gmra.mrb[0].mxu0 %v1829
      %v1993 = vpop.f32.mrb[0].mxu0
      %v1994 = vadd.f32 0.0, %v1993
      %v1995 = vpop.f32.mrb[0].mxu0
      %1996 = vmatprep.mubr.f32.mxu0 0.0
      %1997 = vmatmul.mubr.f32.gmra.mrb[0].mxu0 %v1832
      %v1998 = vpop.f32.mrb[0].mxu0
      %v1999 = vadd.f32 0.0, %v1998
      %v2000 = vpop.f32.mrb[0].mxu0
      %2001 = vmatprep.mubr.f32.mxu0 0.0
      %2002 = vmatmul.mubr.f32.gmra.mrb[0].mxu0 %v1835
      %v2003 = vpop.f32.mrb[0].mxu0
      %v2004 = vadd.f32 0.0, %v2003
      %v2005 = vpop.f32.mrb[0].mxu0
      %2006 = vmatprep.mubr.f32.mxu0 0.0
      %2007 = vmatmul.mubr.f32.gmra.mrb[0].mxu0 %v1838
      %v2008 = vpop.f32.mrb[0].mxu0
      %v2009 = vadd.f32 0.0, %v2008
      %v2010 = vpop.f32.mrb[0].mxu0
      %2011 = vmatprep.mubr.f32.mxu0 0.0
      %2012 = vmatmul.mubr.f32.gmra.mrb[0].mxu0 %v1841
      %v2013 = vpop.f32.mrb[0].mxu0
      %v2014 = vadd.f32 0.0, %v2013
      %v2015 = vpop.f32.mrb[0].mxu0
      %2016 = vmatprep.mubr.f32.mxu0 0.0
      %2017 = vmatmul.mubr.f32.gmra.mrb[0].mxu0 %v1844
      %v2018 = vpop.f32.mrb[0].mxu0
      %v2019 = vadd.f32 0.0, %v2018
      %v2020 = vpop.f32.mrb[0].mxu0
      %2021 = vmatprep.mubr.f32.mxu0 0.0
      %2022 = vmatmul.mubr.f32.gmra.mrb[0].mxu0 %v1847
      %v2023 = vpop.f32.mrb[0].mxu0
      %v2024 = vadd.f32 0.0, %v2023
      %v2025 = vpop.f32.mrb[0].mxu0
      %2026 = vmatprep.mubr.f32.mxu0 0.0
      %2027 = vmatmul.mubr.f32.gmra.mrb[0].mxu0 %v1850
      %v2028 = vpop.f32.mrb[0].mxu0
      %v2029 = vadd.f32 0.0, %v2028
      %v2030 = vpop.f32.mrb[0].mxu0
      %2031 = vmatprep.mubr.f32.mxu0 0.0
      %2032 = vmatmul.mubr.f32.gmra.mrb[0].mxu0 %v1853
      %v2033 = vpop.f32.mrb[0].mxu0
      %v2034 = vadd.f32 0.0, %v2033
      %v2035 = vpop.f32.mrb[0].mxu0
      %2036 = vmatprep.mubr.f32.mxu0 0.0
      %2037 = vmatmul.mubr.f32.gmra.mrb[0].mxu0 %v1856
      %v2038 = vpop.f32.mrb[0].mxu0
      %v2039 = vadd.f32 0.0, %v2038
      %v2040 = vpop.f32.mrb[0].mxu0
      %2041 = vmatprep.mubr.f32.mxu0 0.0
      %2042 = vmatmul.mubr.f32.gmra.mrb[0].mxu0 %v1859
      %v2043 = vpop.f32.mrb[0].mxu0
      %v2044 = vadd.f32 0.0, %v2043
      %v2045 = vpop.f32.mrb[0].mxu0
      %2046 = vmatprep.mubr.f32.mxu0 0.0
      %2047 = vmatmul.mubr.f32.gmra.mrb[0].mxu0 %v1862
      %v2048 = vpop.f32.mrb[0].mxu0
      %v2049 = vadd.f32 0.0, %v2048
      %v2050 = vpop.f32.mrb[0].mxu0
      %2051 = vmatprep.mubr.f32.mxu0 0.0
      %2052 = vmatmul.mubr.f32.gmra.mrb[0].mxu0 %v1865
      %v2053 = vpop.f32.mrb[0].mxu0
      %v2054 = vadd.f32 0.0, %v2053
      %v2055 = vpop.f32.mrb[0].mxu0
      %2056 = vmatprep.mubr.f32.mxu0 0.0
      %2057 = vmatmul.mubr.f32.gmra.mrb[0].mxu0 %v1868
      %v2058 = vpop.f32.mrb[0].mxu0
      %v2059 = vadd.f32 0.0, %v2058
      %v2060 = vpop.f32.mrb[0].mxu0
      %2061 = vmatprep.mubr.f32.mxu0 0.0
      %2062 = vmatmul.mubr.f32.gmra.mrb[0].mxu0 %v1871
      %v2063 = vpop.f32.mrb[0].mxu0
      %v2064 = vadd.f32 0.0, %v2063
      %v2065 = vpop.f32.mrb[0].mxu0
      %2066 = vmatprep.mubr.f32.mxu0 0.0
      %2067 = vmatmul.mubr.f32.gmra.mrb[0].mxu0 %v1874
      %v2068 = vpop.f32.mrb[0].mxu0
      %v2069 = vadd.f32 0.0, %v2068
      %v2070 = vpop.f32.mrb[0].mxu0
      %2071 = vmatprep.mubr.f32.mxu0 0.0
      %2072 = vmatmul.mubr.f32.gmra.mrb[0].mxu0 %v1877
      %v2073 = vpop.f32.mrb[0].mxu0
      %v2074 = vadd.f32 0.0, %v2073
      %v2075 = vpop.f32.mrb[0].mxu0
      %2076 = vmatprep.mubr.f32.mxu0 0.0
      %2077 = vmatmul.mubr.f32.gmra.mrb[0].mxu0 %v1880
      %v2078 = vpop.f32.mrb[0].mxu0
      %v2079 = vadd.f32 0.0, %v2078
      %v2080 = vpop.f32.mrb[0].mxu0
      %2081 = vmatprep.mubr.f32.mxu0 0.0
      %2082 = vmatmul.mubr.f32.gmra.mrb[0].mxu0 %v1883
      %v2083 = vpop.f32.mrb[0].mxu0
      %v2084 = vadd.f32 0.0, %v2083
      %v2085 = vpop.f32.mrb[0].mxu0
      %2086 = vmatprep.mubr.f32.mxu0 0.0
      %2087 = vmatmul.mubr.f32.gmra.mrb[0].mxu0 %v1886
      %v2088 = vpop.f32.mrb[0].mxu0
      %v2089 = vadd.f32 0.0, %v2088
      %v2090 = vpop.f32.mrb[0].mxu0
      %2091 = vmatprep.mubr.f32.mxu0 0.0
      %2092 = vmatmul.mubr.f32.gmra.mrb[0].mxu0 %v1889
      %v2093 = vpop.f32.mrb[0].mxu0
      %v2094 = vadd.f32 0.0, %v2093
      %v2095 = vpop.f32.mrb[0].mxu0
      %2096 = vmatprep.mubr.f32.mxu0 0.0
      %2097 = vmatmul.mubr.f32.gmra.mrb[0].mxu0 %v1892
      %v2098 = vpop.f32.mrb[0].mxu0
      %v2099 = vadd.f32 0.0, %v2098
      %v2100 = vpop.f32.mrb[0].mxu0
      %2101 = vdwg.mxu0
      %v2102 = vadd.f32 %v1753, %v1964
      %v2103 = vadd.f32 %v1754, %v1969
      %v2104 = vadd.f32 %v1755, %v1974
      %v2105 = vadd.f32 %v1756, %v1979
      %v2106 = vadd.f32 %v1757, %v1984
      %v2107 = vadd.f32 %v1758, %v1989
      %v2108 = vadd.f32 %v1759, %v1994
      %v2109 = vadd.f32 %v1760, %v1999
      %v2110 = vadd.f32 %v1761, %v2004
      %v2111 = vadd.f32 %v1762, %v2009
      %v2112 = vadd.f32 %v1763, %v2014
      %v2113 = vadd.f32 %v1764, %v2019
      %v2114 = vadd.f32 %v1765, %v2024
      %v2115 = vadd.f32 %v1766, %v2029
      %v2116 = vadd.f32 %v1767, %v2034
      %v2117 = vadd.f32 %v1768, %v2039
      %v2118 = vadd.f32 %v1769, %v2044
      %v2119 = vadd.f32 %v1770, %v2049
      %v2120 = vadd.f32 %v1771, %v2054
      %v2121 = vadd.f32 %v1772, %v2059
      %v2122 = vadd.f32 %v1773, %v2064
      %v2123 = vadd.f32 %v1774, %v2069
      %v2124 = vadd.f32 %v1775, %v2074
      %v2125 = vadd.f32 %v1776, %v2079
      %v2126 = vadd.f32 %v1777, %v2084
      %v2127 = vadd.f32 %v1778, %v2089
      %v2128 = vadd.f32 %v1779, %v2094
      %v2129 = vadd.f32 %v1780, %v2099
      %v2130 = vld [vmem:[%s435 + $0x12] sm:$0xff]
      %v2131 = vld [vmem:[%s435 + $0x1a] sm:$0xff]
      %v2132 = vld [vmem:[%s435 + $0x22] sm:$0xff]
      %v2133 = vld [vmem:[%s435 + $0x2a] sm:$0xff]
      %v2134 = vld [vmem:[%s435 + $0x32] sm:$0xff]
      %v2135 = vld [vmem:[%s435 + $0x3a] sm:$0xff]
      %v2136 = vld [vmem:[%s435 + $0x42] sm:$0xff]
      %v2137 = vld [vmem:[%s435 + $0x4a] sm:$0xff]
      %v2138 = vld [vmem:[%s435 + $0x52] sm:$0xff]
      %v2139 = vld [vmem:[%s435 + $0x5a] sm:$0xff]
      %v2140 = vld [vmem:[%s435 + $0x62] sm:$0xff]
      %v2141 = vld [vmem:[%s435 + $0x6a] sm:$0xff]
      %v2142 = vld [vmem:[%s435 + $0x72] sm:$0xff]
      %v2143 = vld [vmem:[%s435 + $0x7a] sm:$0xff]
      %v2144 = vld [vmem:[%s435 + $0x82] sm:$0xff]
      %v2145 = vld [vmem:[%s435 + $0x8a] sm:$0xff]
      %v2146 = vld [vmem:[%s435 + $0x92] sm:$0xff]
      %v2147 = vld [vmem:[%s435 + $0x9a] sm:$0xff]
      %v2148 = vld [vmem:[%s435 + $0xa2] sm:$0xff]
      %v2149 = vld [vmem:[%s435 + $0xaa] sm:$0xff]
      %v2150 = vld [vmem:[%s435 + $0xb2] sm:$0xff]
      %v2151 = vld [vmem:[%s435 + $0xba] sm:$0xff]
      %v2152 = vld [vmem:[%s435 + $0xc2] sm:$0xff]
      %v2153 = vld [vmem:[%s435 + $0xca] sm:$0xff]
      %v2154 = vld [vmem:[%s435 + $0xd2] sm:$0xff]
      %v2155 = vld [vmem:[%s435 + $0xda] sm:$0xff]
      %v2156 = vld [vmem:[%s435 + $0xe2] sm:$0xff]
      %v2157 = vld [vmem:[%s435 + $0xea] sm:$0x3f]
      %v2158 = vld [vmem:[%s1 + $0x14] sm:$0xf]
      %v2160 = vsel %vm497, %v2130, 0
      %v2163 = vsel %vm497, %v2131, 0
      %v2166 = vsel %vm497, %v2132, 0
      %v2169 = vsel %vm497, %v2133, 0
      %v2172 = vsel %vm497, %v2134, 0
      %v2175 = vsel %vm497, %v2135, 0
      %v2178 = vsel %vm497, %v2136, 0
      %v2181 = vsel %vm497, %v2137, 0
      %v2184 = vsel %vm497, %v2138, 0
      %v2187 = vsel %vm497, %v2139, 0
      %v2190 = vsel %vm497, %v2140, 0
      %v2193 = vsel %vm497, %v2141, 0
      %v2196 = vsel %vm497, %v2142, 0
      %v2199 = vsel %vm497, %v2143, 0
      %v2202 = vsel %vm497, %v2144, 0
      %v2205 = vsel %vm497, %v2145, 0
      %v2208 = vsel %vm497, %v2146, 0
      %v2211 = vsel %vm497, %v2147, 0
      %v2214 = vsel %vm497, %v2148, 0
      %v2217 = vsel %vm497, %v2149, 0
      %v2220 = vsel %vm497, %v2150, 0
      %v2223 = vsel %vm497, %v2151, 0
      %v2226 = vsel %vm497, %v2152, 0
      %v2229 = vsel %vm497, %v2153, 0
      %v2232 = vsel %vm497, %v2154, 0
      %v2235 = vsel %vm497, %v2155, 0
      %v2238 = vsel %vm497, %v2156, 0
      %v2241 = vsel %vm497, %v2157, 0
      %v2244 = vsel %vm582, %v2158, 0
      %2246 = vmatprep.subr.mxu0 0.0
      %2247 = vmatpush1.msra.mxu0 %v2244
      %2248 = vmatprep.subr.mxu0 0.0
      %2249 = vmatpush1.msra.mxu0 0.0
      %2250 = vmatprep.subr.mxu0 0.0
      %2251 = vmatpush1.msra.mxu0 0.0
      %2252 = vmatprep.subr.mxu0 0.0
      %2253 = vmatpush1.msra.mxu0 0.0
      %2254 = vmatprep.subr.mxu0 0.0
      %2255 = vmatpush1.msra.mxu0 0.0
      %2256 = vmatprep.subr.mxu0 0.0
      %2257 = vmatpush1.msra.mxu0 0.0
      %2258 = vmatprep.subr.mxu0 0.0
      %2259 = vmatpush1.msra.mxu0 0.0
      %2260 = vmatprep.subr.mxu0 0.0
      %2261 = vmatpush1.msra.mxu0 0.0
      %2262 = vmatprep.subr.mxu0 0.0
      %2263 = vmatpush1.msra.mxu0 0.0
      %2264 = vmatprep.subr.mxu0 0.0
      %2265 = vmatpush1.msra.mxu0 0.0
      %2266 = vmatprep.subr.mxu0 0.0
      %2267 = vmatpush1.msra.mxu0 0.0
      %2268 = vmatprep.subr.mxu0 0.0
      %2269 = vmatpush1.msra.mxu0 0.0
      %2270 = vmatprep.subr.mxu0 0.0
      %2271 = vmatpush1.msra.mxu0 0.0
      %2272 = vmatprep.subr.mxu0 0.0
      %2273 = vmatpush1.msra.mxu0 0.0
      %2274 = vmatprep.subr.mxu0 0.0
      %2275 = vmatpush1.msra.mxu0 0.0
      %2276 = vmatprep.subr.mxu0 0.0
      %2277 = vmatpush1.msra.mxu0 0.0
      %2278 = vmatprep.subr.mxu0 0.0
      %2279 = vmatpush1.msra.mxu0 0.0
      %2280 = vmatprep.subr.mxu0 0.0
      %2281 = vmatpush1.msra.mxu0 0.0
      %2282 = vmatprep.subr.mxu0 0.0
      %2283 = vmatpush1.msra.mxu0 0.0
      %2284 = vmatprep.subr.mxu0 0.0
      %2285 = vmatpush1.msra.mxu0 0.0
      %2286 = vmatprep.subr.mxu0 0.0
      %2287 = vmatpush1.msra.mxu0 0.0
      %2288 = vmatprep.subr.mxu0 0.0
      %2289 = vmatpush1.msra.mxu0 0.0
      %2290 = vmatprep.subr.mxu0 0.0
      %2291 = vmatpush1.msra.mxu0 0.0
      %2292 = vmatprep.subr.mxu0 0.0
      %2293 = vmatpush1.msra.mxu0 0.0
      %2294 = vmatprep.subr.mxu0 0.0
      %2295 = vmatpush1.msra.mxu0 0.0
      %2296 = vmatprep.subr.mxu0 0.0
      %2297 = vmatpush1.msra.mxu0 0.0
      %2298 = vmatprep.subr.mxu0 0.0
      %2299 = vmatpush1.msra.mxu0 0.0
      %2300 = vmatprep.subr.mxu0 0.0
      %2301 = vmatpush1.msra.mxu0 0.0
      %2302 = vmatprep.subr.mxu0 0.0
      %2303 = vmatpush1.msra.mxu0 0.0
      %2304 = vmatprep.subr.mxu0 0.0
      %2305 = vmatpush1.msra.mxu0 0.0
      %2306 = vmatprep.subr.mxu0 0.0
      %2307 = vmatpush1.msra.mxu0 0.0
      %2308 = vmatprep.subr.mxu0 0.0
      %2309 = vmatpush1.msra.mxu0 0.0
      %2310 = vmatprep.mubr.f32.mxu0 0.0
      %2311 = vmatmul.mubr.f32.gmra.mrb[0].mxu0 %v2160
      %v2312 = vpop.f32.mrb[0].mxu0
      %v2313 = vadd.f32 0.0, %v2312
      %v2314 = vpop.f32.mrb[0].mxu0
      %2315 = vmatprep.mubr.f32.mxu0 0.0
      %2316 = vmatmul.mubr.f32.gmra.mrb[0].mxu0 %v2163
      %v2317 = vpop.f32.mrb[0].mxu0
      %v2318 = vadd.f32 0.0, %v2317
      %v2319 = vpop.f32.mrb[0].mxu0
      %2320 = vmatprep.mubr.f32.mxu0 0.0
      %2321 = vmatmul.mubr.f32.gmra.mrb[0].mxu0 %v2166
      %v2322 = vpop.f32.mrb[0].mxu0
      %v2323 = vadd.f32 0.0, %v2322
      %v2324 = vpop.f32.mrb[0].mxu0
      %2325 = vmatprep.mubr.f32.mxu0 0.0
      %2326 = vmatmul.mubr.f32.gmra.mrb[0].mxu0 %v2169
      %v2327 = vpop.f32.mrb[0].mxu0
      %v2328 = vadd.f32 0.0, %v2327
      %v2329 = vpop.f32.mrb[0].mxu0
      %2330 = vmatprep.mubr.f32.mxu0 0.0
      %2331 = vmatmul.mubr.f32.gmra.mrb[0].mxu0 %v2172
      %v2332 = vpop.f32.mrb[0].mxu0
      %v2333 = vadd.f32 0.0, %v2332
      %v2334 = vpop.f32.mrb[0].mxu0
      %2335 = vmatprep.mubr.f32.mxu0 0.0
      %2336 = vmatmul.mubr.f32.gmra.mrb[0].mxu0 %v2175
      %v2337 = vpop.f32.mrb[0].mxu0
      %v2338 = vadd.f32 0.0, %v2337
      %v2339 = vpop.f32.mrb[0].mxu0
      %2340 = vmatprep.mubr.f32.mxu0 0.0
      %2341 = vmatmul.mubr.f32.gmra.mrb[0].mxu0 %v2178
      %v2342 = vpop.f32.mrb[0].mxu0
      %v2343 = vadd.f32 0.0, %v2342
      %v2344 = vpop.f32.mrb[0].mxu0
      %2345 = vmatprep.mubr.f32.mxu0 0.0
      %2346 = vmatmul.mubr.f32.gmra.mrb[0].mxu0 %v2181
      %v2347 = vpop.f32.mrb[0].mxu0
      %v2348 = vadd.f32 0.0, %v2347
      %v2349 = vpop.f32.mrb[0].mxu0
      %2350 = vmatprep.mubr.f32.mxu0 0.0
      %2351 = vmatmul.mubr.f32.gmra.mrb[0].mxu0 %v2184
      %v2352 = vpop.f32.mrb[0].mxu0
      %v2353 = vadd.f32 0.0, %v2352
      %v2354 = vpop.f32.mrb[0].mxu0
      %2355 = vmatprep.mubr.f32.mxu0 0.0
      %2356 = vmatmul.mubr.f32.gmra.mrb[0].mxu0 %v2187
      %v2357 = vpop.f32.mrb[0].mxu0
      %v2358 = vadd.f32 0.0, %v2357
      %v2359 = vpop.f32.mrb[0].mxu0
      %2360 = vmatprep.mubr.f32.mxu0 0.0
      %2361 = vmatmul.mubr.f32.gmra.mrb[0].mxu0 %v2190
      %v2362 = vpop.f32.mrb[0].mxu0
      %v2363 = vadd.f32 0.0, %v2362
      %v2364 = vpop.f32.mrb[0].mxu0
      %2365 = vmatprep.mubr.f32.mxu0 0.0
      %2366 = vmatmul.mubr.f32.gmra.mrb[0].mxu0 %v2193
      %v2367 = vpop.f32.mrb[0].mxu0
      %v2368 = vadd.f32 0.0, %v2367
      %v2369 = vpop.f32.mrb[0].mxu0
      %2370 = vmatprep.mubr.f32.mxu0 0.0
      %2371 = vmatmul.mubr.f32.gmra.mrb[0].mxu0 %v2196
      %v2372 = vpop.f32.mrb[0].mxu0
      %v2373 = vadd.f32 0.0, %v2372
      %v2374 = vpop.f32.mrb[0].mxu0
      %2375 = vmatprep.mubr.f32.mxu0 0.0
      %2376 = vmatmul.mubr.f32.gmra.mrb[0].mxu0 %v2199
      %v2377 = vpop.f32.mrb[0].mxu0
      %v2378 = vadd.f32 0.0, %v2377
      %v2379 = vpop.f32.mrb[0].mxu0
      %2380 = vmatprep.mubr.f32.mxu0 0.0
      %2381 = vmatmul.mubr.f32.gmra.mrb[0].mxu0 %v2202
      %v2382 = vpop.f32.mrb[0].mxu0
      %v2383 = vadd.f32 0.0, %v2382
      %v2384 = vpop.f32.mrb[0].mxu0
      %2385 = vmatprep.mubr.f32.mxu0 0.0
      %2386 = vmatmul.mubr.f32.gmra.mrb[0].mxu0 %v2205
      %v2387 = vpop.f32.mrb[0].mxu0
      %v2388 = vadd.f32 0.0, %v2387
      %v2389 = vpop.f32.mrb[0].mxu0
      %2390 = vmatprep.mubr.f32.mxu0 0.0
      %2391 = vmatmul.mubr.f32.gmra.mrb[0].mxu0 %v2208
      %v2392 = vpop.f32.mrb[0].mxu0
      %v2393 = vadd.f32 0.0, %v2392
      %v2394 = vpop.f32.mrb[0].mxu0
      %2395 = vmatprep.mubr.f32.mxu0 0.0
      %2396 = vmatmul.mubr.f32.gmra.mrb[0].mxu0 %v2211
      %v2397 = vpop.f32.mrb[0].mxu0
      %v2398 = vadd.f32 0.0, %v2397
      %v2399 = vpop.f32.mrb[0].mxu0
      %2400 = vmatprep.mubr.f32.mxu0 0.0
      %2401 = vmatmul.mubr.f32.gmra.mrb[0].mxu0 %v2214
      %v2402 = vpop.f32.mrb[0].mxu0
      %v2403 = vadd.f32 0.0, %v2402
      %v2404 = vpop.f32.mrb[0].mxu0
      %2405 = vmatprep.mubr.f32.mxu0 0.0
      %2406 = vmatmul.mubr.f32.gmra.mrb[0].mxu0 %v2217
      %v2407 = vpop.f32.mrb[0].mxu0
      %v2408 = vadd.f32 0.0, %v2407
      %v2409 = vpop.f32.mrb[0].mxu0
      %2410 = vmatprep.mubr.f32.mxu0 0.0
      %2411 = vmatmul.mubr.f32.gmra.mrb[0].mxu0 %v2220
      %v2412 = vpop.f32.mrb[0].mxu0
      %v2413 = vadd.f32 0.0, %v2412
      %v2414 = vpop.f32.mrb[0].mxu0
      %2415 = vmatprep.mubr.f32.mxu0 0.0
      %2416 = vmatmul.mubr.f32.gmra.mrb[0].mxu0 %v2223
      %v2417 = vpop.f32.mrb[0].mxu0
      %v2418 = vadd.f32 0.0, %v2417
      %v2419 = vpop.f32.mrb[0].mxu0
      %2420 = vmatprep.mubr.f32.mxu0 0.0
      %2421 = vmatmul.mubr.f32.gmra.mrb[0].mxu0 %v2226
      %v2422 = vpop.f32.mrb[0].mxu0
      %v2423 = vadd.f32 0.0, %v2422
      %v2424 = vpop.f32.mrb[0].mxu0
      %2425 = vmatprep.mubr.f32.mxu0 0.0
      %2426 = vmatmul.mubr.f32.gmra.mrb[0].mxu0 %v2229
      %v2427 = vpop.f32.mrb[0].mxu0
      %v2428 = vadd.f32 0.0, %v2427
      %v2429 = vpop.f32.mrb[0].mxu0
      %2430 = vmatprep.mubr.f32.mxu0 0.0
      %2431 = vmatmul.mubr.f32.gmra.mrb[0].mxu0 %v2232
      %v2432 = vpop.f32.mrb[0].mxu0
      %v2433 = vadd.f32 0.0, %v2432
      %v2434 = vpop.f32.mrb[0].mxu0
      %2435 = vmatprep.mubr.f32.mxu0 0.0
      %2436 = vmatmul.mubr.f32.gmra.mrb[0].mxu0 %v2235
      %v2437 = vpop.f32.mrb[0].mxu0
      %v2438 = vadd.f32 0.0, %v2437
      %v2439 = vpop.f32.mrb[0].mxu0
      %2440 = vmatprep.mubr.f32.mxu0 0.0
      %2441 = vmatmul.mubr.f32.gmra.mrb[0].mxu0 %v2238
      %v2442 = vpop.f32.mrb[0].mxu0
      %v2443 = vadd.f32 0.0, %v2442
      %v2444 = vpop.f32.mrb[0].mxu0
      %2445 = vmatprep.mubr.f32.mxu0 0.0
      %2446 = vmatmul.mubr.f32.gmra.mrb[0].mxu0 %v2241
      %v2447 = vpop.f32.mrb[0].mxu0
      %v2448 = vadd.f32 0.0, %v2447
      %v2449 = vpop.f32.mrb[0].mxu0
      %2450 = vdwg.mxu0
      %v2451 = vadd.f32 %v2102, %v2313
      %v2452 = vadd.f32 %v2103, %v2318
      %v2453 = vadd.f32 %v2104, %v2323
      %v2454 = vadd.f32 %v2105, %v2328
      %v2455 = vadd.f32 %v2106, %v2333
      %v2456 = vadd.f32 %v2107, %v2338
      %v2457 = vadd.f32 %v2108, %v2343
      %v2458 = vadd.f32 %v2109, %v2348
      %v2459 = vadd.f32 %v2110, %v2353
      %v2460 = vadd.f32 %v2111, %v2358
      %v2461 = vadd.f32 %v2112, %v2363
      %v2462 = vadd.f32 %v2113, %v2368
      %v2463 = vadd.f32 %v2114, %v2373
      %v2464 = vadd.f32 %v2115, %v2378
      %v2465 = vadd.f32 %v2116, %v2383
      %v2466 = vadd.f32 %v2117, %v2388
      %v2467 = vadd.f32 %v2118, %v2393
      %v2468 = vadd.f32 %v2119, %v2398
      %v2469 = vadd.f32 %v2120, %v2403
      %v2470 = vadd.f32 %v2121, %v2408
      %v2471 = vadd.f32 %v2122, %v2413
      %v2472 = vadd.f32 %v2123, %v2418
      %v2473 = vadd.f32 %v2124, %v2423
      %v2474 = vadd.f32 %v2125, %v2428
      %v2475 = vadd.f32 %v2126, %v2433
      %v2476 = vadd.f32 %v2127, %v2438
      %v2477 = vadd.f32 %v2128, %v2443
      %v2478 = vadd.f32 %v2129, %v2448
      %v2479 = vld [vmem:[%s435 + $0x20] sm:$0xff]
      %v2480 = vld [vmem:[%s435 + $0x28] sm:$0xff]
      %v2481 = vld [vmem:[%s435 + $0x30] sm:$0xff]
      %v2482 = vld [vmem:[%s435 + $0x38] sm:$0xff]
      %v2483 = vld [vmem:[%s435 + $0x40] sm:$0xff]
      %v2484 = vld [vmem:[%s435 + $0x48] sm:$0xff]
      %v2485 = vld [vmem:[%s435 + $0x50] sm:$0xff]
      %v2486 = vld [vmem:[%s435 + $0x58] sm:$0xff]
      %v2487 = vld [vmem:[%s435 + $0x60] sm:$0xff]
      %v2488 = vld [vmem:[%s435 + $0x68] sm:$0xff]
      %v2489 = vld [vmem:[%s435 + $0x70] sm:$0xff]
      %v2490 = vld [vmem:[%s435 + $0x78] sm:$0xff]
      %v2491 = vld [vmem:[%s435 + $0x80] sm:$0xff]
      %v2492 = vld [vmem:[%s435 + $0x88] sm:$0xff]
      %v2493 = vld [vmem:[%s435 + $0x90] sm:$0xff]
      %v2494 = vld [vmem:[%s435 + $0x98] sm:$0xff]
      %v2495 = vld [vmem:[%s435 + $0xa0] sm:$0xff]
      %v2496 = vld [vmem:[%s435 + $0xa8] sm:$0xff]
      %v2497 = vld [vmem:[%s435 + $0xb0] sm:$0xff]
      %v2498 = vld [vmem:[%s435 + $0xb8] sm:$0xff]
      %v2499 = vld [vmem:[%s435 + $0xc0] sm:$0xff]
      %v2500 = vld [vmem:[%s435 + $0xc8] sm:$0xff]
      %v2501 = vld [vmem:[%s435 + $0xd0] sm:$0xff]
      %v2502 = vld [vmem:[%s435 + $0xd8] sm:$0xff]
      %v2503 = vld [vmem:[%s435 + $0xe0] sm:$0xff]
      %v2504 = vld [vmem:[%s435 + $0xe8] sm:$0xff]
      %v2505 = vld [vmem:[%s435 + $0xf0] sm:$0xff]
      %v2506 = vld [vmem:[%s435 + $0xf8] sm:$0x3f]
      %v2507 = vld [vmem:[%s1 + $0x18] sm:$0xf]
      %v2509 = vsel %vm497, %v2479, 0
      %v2512 = vsel %vm497, %v2480, 0
      %v2515 = vsel %vm497, %v2481, 0
      %v2518 = vsel %vm497, %v2482, 0
      %v2521 = vsel %vm497, %v2483, 0
      %v2524 = vsel %vm497, %v2484, 0
      %v2527 = vsel %vm497, %v2485, 0
      %v2530 = vsel %vm497, %v2486, 0
      %v2533 = vsel %vm497, %v2487, 0
      %v2536 = vsel %vm497, %v2488, 0
      %v2539 = vsel %vm497, %v2489, 0
      %v2542 = vsel %vm497, %v2490, 0
      %v2545 = vsel %vm497, %v2491, 0
      %v2548 = vsel %vm497, %v2492, 0
      %v2551 = vsel %vm497, %v2493, 0
      %v2554 = vsel %vm497, %v2494, 0
      %v2557 = vsel %vm497, %v2495, 0
      %v2560 = vsel %vm497, %v2496, 0
      %v2563 = vsel %vm497, %v2497, 0
      %v2566 = vsel %vm497, %v2498, 0
      %v2569 = vsel %vm497, %v2499, 0
      %v2572 = vsel %vm497, %v2500, 0
      %v2575 = vsel %vm497, %v2501, 0
      %v2578 = vsel %vm497, %v2502, 0
      %v2581 = vsel %vm497, %v2503, 0
      %v2584 = vsel %vm497, %v2504, 0
      %v2587 = vsel %vm497, %v2505, 0
      %v2590 = vsel %vm497, %v2506, 0
      %v2593 = vsel %vm582, %v2507, 0
      %2595 = vmatprep.subr.mxu0 0.0
      %2596 = vmatpush1.msra.mxu0 %v2593
      %2597 = vmatprep.subr.mxu0 0.0
      %2598 = vmatpush1.msra.mxu0 0.0
      %2599 = vmatprep.subr.mxu0 0.0
      %2600 = vmatpush1.msra.mxu0 0.0
      %2601 = vmatprep.subr.mxu0 0.0
      %2602 = vmatpush1.msra.mxu0 0.0
      %2603 = vmatprep.subr.mxu0 0.0
      %2604 = vmatpush1.msra.mxu0 0.0
      %2605 = vmatprep.subr.mxu0 0.0
      %2606 = vmatpush1.msra.mxu0 0.0
      %2607 = vmatprep.subr.mxu0 0.0
      %2608 = vmatpush1.msra.mxu0 0.0
      %2609 = vmatprep.subr.mxu0 0.0
      %2610 = vmatpush1.msra.mxu0 0.0
      %2611 = vmatprep.subr.mxu0 0.0
      %2612 = vmatpush1.msra.mxu0 0.0
      %2613 = vmatprep.subr.mxu0 0.0
      %2614 = vmatpush1.msra.mxu0 0.0
      %2615 = vmatprep.subr.mxu0 0.0
      %2616 = vmatpush1.msra.mxu0 0.0
      %2617 = vmatprep.subr.mxu0 0.0
      %2618 = vmatpush1.msra.mxu0 0.0
      %2619 = vmatprep.subr.mxu0 0.0
      %2620 = vmatpush1.msra.mxu0 0.0
      %2621 = vmatprep.subr.mxu0 0.0
      %2622 = vmatpush1.msra.mxu0 0.0
      %2623 = vmatprep.subr.mxu0 0.0
      %2624 = vmatpush1.msra.mxu0 0.0
      %2625 = vmatprep.subr.mxu0 0.0
      %2626 = vmatpush1.msra.mxu0 0.0
      %2627 = vmatprep.subr.mxu0 0.0
      %2628 = vmatpush1.msra.mxu0 0.0
      %2629 = vmatprep.subr.mxu0 0.0
      %2630 = vmatpush1.msra.mxu0 0.0
      %2631 = vmatprep.subr.mxu0 0.0
      %2632 = vmatpush1.msra.mxu0 0.0
      %2633 = vmatprep.subr.mxu0 0.0
      %2634 = vmatpush1.msra.mxu0 0.0
      %2635 = vmatprep.subr.mxu0 0.0
      %2636 = vmatpush1.msra.mxu0 0.0
      %2637 = vmatprep.subr.mxu0 0.0
      %2638 = vmatpush1.msra.mxu0 0.0
      %2639 = vmatprep.subr.mxu0 0.0
      %2640 = vmatpush1.msra.mxu0 0.0
      %2641 = vmatprep.subr.mxu0 0.0
      %2642 = vmatpush1.msra.mxu0 0.0
      %2643 = vmatprep.subr.mxu0 0.0
      %2644 = vmatpush1.msra.mxu0 0.0
      %2645 = vmatprep.subr.mxu0 0.0
      %2646 = vmatpush1.msra.mxu0 0.0
      %2647 = vmatprep.subr.mxu0 0.0
      %2648 = vmatpush1.msra.mxu0 0.0
      %2649 = vmatprep.subr.mxu0 0.0
      %2650 = vmatpush1.msra.mxu0 0.0
      %2651 = vmatprep.subr.mxu0 0.0
      %2652 = vmatpush1.msra.mxu0 0.0
      %2653 = vmatprep.subr.mxu0 0.0
      %2654 = vmatpush1.msra.mxu0 0.0
      %2655 = vmatprep.subr.mxu0 0.0
      %2656 = vmatpush1.msra.mxu0 0.0
      %2657 = vmatprep.subr.mxu0 0.0
      %2658 = vmatpush1.msra.mxu0 0.0
      %2659 = vmatprep.mubr.f32.mxu0 0.0
      %2660 = vmatmul.mubr.f32.gmra.mrb[0].mxu0 %v2509
      %v2661 = vpop.f32.mrb[0].mxu0
      %v2662 = vadd.f32 0.0, %v2661
      %v2663 = vpop.f32.mrb[0].mxu0
      %2664 = vmatprep.mubr.f32.mxu0 0.0
      %2665 = vmatmul.mubr.f32.gmra.mrb[0].mxu0 %v2512
      %v2666 = vpop.f32.mrb[0].mxu0
      %v2667 = vadd.f32 0.0, %v2666
      %v2668 = vpop.f32.mrb[0].mxu0
      %2669 = vmatprep.mubr.f32.mxu0 0.0
      %2670 = vmatmul.mubr.f32.gmra.mrb[0].mxu0 %v2515
      %v2671 = vpop.f32.mrb[0].mxu0
      %v2672 = vadd.f32 0.0, %v2671
      %v2673 = vpop.f32.mrb[0].mxu0
      %2674 = vmatprep.mubr.f32.mxu0 0.0
      %2675 = vmatmul.mubr.f32.gmra.mrb[0].mxu0 %v2518
      %v2676 = vpop.f32.mrb[0].mxu0
      %v2677 = vadd.f32 0.0, %v2676
      %v2678 = vpop.f32.mrb[0].mxu0
      %2679 = vmatprep.mubr.f32.mxu0 0.0
      %2680 = vmatmul.mubr.f32.gmra.mrb[0].mxu0 %v2521
      %v2681 = vpop.f32.mrb[0].mxu0
      %v2682 = vadd.f32 0.0, %v2681
      %v2683 = vpop.f32.mrb[0].mxu0
      %2684 = vmatprep.mubr.f32.mxu0 0.0
      %2685 = vmatmul.mubr.f32.gmra.mrb[0].mxu0 %v2524
      %v2686 = vpop.f32.mrb[0].mxu0
      %v2687 = vadd.f32 0.0, %v2686
      %v2688 = vpop.f32.mrb[0].mxu0
      %2689 = vmatprep.mubr.f32.mxu0 0.0
      %2690 = vmatmul.mubr.f32.gmra.mrb[0].mxu0 %v2527
      %v2691 = vpop.f32.mrb[0].mxu0
      %v2692 = vadd.f32 0.0, %v2691
      %v2693 = vpop.f32.mrb[0].mxu0
      %2694 = vmatprep.mubr.f32.mxu0 0.0
      %2695 = vmatmul.mubr.f32.gmra.mrb[0].mxu0 %v2530
      %v2696 = vpop.f32.mrb[0].mxu0
      %v2697 = vadd.f32 0.0, %v2696
      %v2698 = vpop.f32.mrb[0].mxu0
      %2699 = vmatprep.mubr.f32.mxu0 0.0
      %2700 = vmatmul.mubr.f32.gmra.mrb[0].mxu0 %v2533
      %v2701 = vpop.f32.mrb[0].mxu0
      %v2702 = vadd.f32 0.0, %v2701
      %v2703 = vpop.f32.mrb[0].mxu0
      %2704 = vmatprep.mubr.f32.mxu0 0.0
      %2705 = vmatmul.mubr.f32.gmra.mrb[0].mxu0 %v2536
      %v2706 = vpop.f32.mrb[0].mxu0
      %v2707 = vadd.f32 0.0, %v2706
      %v2708 = vpop.f32.mrb[0].mxu0
      %2709 = vmatprep.mubr.f32.mxu0 0.0
      %2710 = vmatmul.mubr.f32.gmra.mrb[0].mxu0 %v2539
      %v2711 = vpop.f32.mrb[0].mxu0
      %v2712 = vadd.f32 0.0, %v2711
      %v2713 = vpop.f32.mrb[0].mxu0
      %2714 = vmatprep.mubr.f32.mxu0 0.0
      %2715 = vmatmul.mubr.f32.gmra.mrb[0].mxu0 %v2542
      %v2716 = vpop.f32.mrb[0].mxu0
      %v2717 = vadd.f32 0.0, %v2716
      %v2718 = vpop.f32.mrb[0].mxu0
      %2719 = vmatprep.mubr.f32.mxu0 0.0
      %2720 = vmatmul.mubr.f32.gmra.mrb[0].mxu0 %v2545
      %v2721 = vpop.f32.mrb[0].mxu0
      %v2722 = vadd.f32 0.0, %v2721
      %v2723 = vpop.f32.mrb[0].mxu0
      %2724 = vmatprep.mubr.f32.mxu0 0.0
      %2725 = vmatmul.mubr.f32.gmra.mrb[0].mxu0 %v2548
      %v2726 = vpop.f32.mrb[0].mxu0
      %v2727 = vadd.f32 0.0, %v2726
      %v2728 = vpop.f32.mrb[0].mxu0
      %2729 = vmatprep.mubr.f32.mxu0 0.0
      %2730 = vmatmul.mubr.f32.gmra.mrb[0].mxu0 %v2551
      %v2731 = vpop.f32.mrb[0].mxu0
      %v2732 = vadd.f32 0.0, %v2731
      %v2733 = vpop.f32.mrb[0].mxu0
      %2734 = vmatprep.mubr.f32.mxu0 0.0
      %2735 = vmatmul.mubr.f32.gmra.mrb[0].mxu0 %v2554
      %v2736 = vpop.f32.mrb[0].mxu0
      %v2737 = vadd.f32 0.0, %v2736
      %v2738 = vpop.f32.mrb[0].mxu0
      %2739 = vmatprep.mubr.f32.mxu0 0.0
      %2740 = vmatmul.mubr.f32.gmra.mrb[0].mxu0 %v2557
      %v2741 = vpop.f32.mrb[0].mxu0
      %v2742 = vadd.f32 0.0, %v2741
      %v2743 = vpop.f32.mrb[0].mxu0
      %2744 = vmatprep.mubr.f32.mxu0 0.0
      %2745 = vmatmul.mubr.f32.gmra.mrb[0].mxu0 %v2560
      %v2746 = vpop.f32.mrb[0].mxu0
      %v2747 = vadd.f32 0.0, %v2746
      %v2748 = vpop.f32.mrb[0].mxu0
      %2749 = vmatprep.mubr.f32.mxu0 0.0
      %2750 = vmatmul.mubr.f32.gmra.mrb[0].mxu0 %v2563
      %v2751 = vpop.f32.mrb[0].mxu0
      %v2752 = vadd.f32 0.0, %v2751
      %v2753 = vpop.f32.mrb[0].mxu0
      %2754 = vmatprep.mubr.f32.mxu0 0.0
      %2755 = vmatmul.mubr.f32.gmra.mrb[0].mxu0 %v2566
      %v2756 = vpop.f32.mrb[0].mxu0
      %v2757 = vadd.f32 0.0, %v2756
      %v2758 = vpop.f32.mrb[0].mxu0
      %2759 = vmatprep.mubr.f32.mxu0 0.0
      %2760 = vmatmul.mubr.f32.gmra.mrb[0].mxu0 %v2569
      %v2761 = vpop.f32.mrb[0].mxu0
      %v2762 = vadd.f32 0.0, %v2761
      %v2763 = vpop.f32.mrb[0].mxu0
      %2764 = vmatprep.mubr.f32.mxu0 0.0
      %2765 = vmatmul.mubr.f32.gmra.mrb[0].mxu0 %v2572
      %v2766 = vpop.f32.mrb[0].mxu0
      %v2767 = vadd.f32 0.0, %v2766
      %v2768 = vpop.f32.mrb[0].mxu0
      %2769 = vmatprep.mubr.f32.mxu0 0.0
      %2770 = vmatmul.mubr.f32.gmra.mrb[0].mxu0 %v2575
      %v2771 = vpop.f32.mrb[0].mxu0
      %v2772 = vadd.f32 0.0, %v2771
      %v2773 = vpop.f32.mrb[0].mxu0
      %2774 = vmatprep.mubr.f32.mxu0 0.0
      %2775 = vmatmul.mubr.f32.gmra.mrb[0].mxu0 %v2578
      %v2776 = vpop.f32.mrb[0].mxu0
      %v2777 = vadd.f32 0.0, %v2776
      %v2778 = vpop.f32.mrb[0].mxu0
      %2779 = vmatprep.mubr.f32.mxu0 0.0
      %2780 = vmatmul.mubr.f32.gmra.mrb[0].mxu0 %v2581
      %v2781 = vpop.f32.mrb[0].mxu0
      %v2782 = vadd.f32 0.0, %v2781
      %v2783 = vpop.f32.mrb[0].mxu0
      %2784 = vmatprep.mubr.f32.mxu0 0.0
      %2785 = vmatmul.mubr.f32.gmra.mrb[0].mxu0 %v2584
      %v2786 = vpop.f32.mrb[0].mxu0
      %v2787 = vadd.f32 0.0, %v2786
      %v2788 = vpop.f32.mrb[0].mxu0
      %2789 = vmatprep.mubr.f32.mxu0 0.0
      %2790 = vmatmul.mubr.f32.gmra.mrb[0].mxu0 %v2587
      %v2791 = vpop.f32.mrb[0].mxu0
      %v2792 = vadd.f32 0.0, %v2791
      %v2793 = vpop.f32.mrb[0].mxu0
      %2794 = vmatprep.mubr.f32.mxu0 0.0
      %2795 = vmatmul.mubr.f32.gmra.mrb[0].mxu0 %v2590
      %v2796 = vpop.f32.mrb[0].mxu0
      %v2797 = vadd.f32 0.0, %v2796
      %v2798 = vpop.f32.mrb[0].mxu0
      %2799 = vdwg.mxu0
      %v2800 = vadd.f32 %v2451, %v2662
      %v2801 = vadd.f32 %v2452, %v2667
      %v2802 = vadd.f32 %v2453, %v2672
      %v2803 = vadd.f32 %v2454, %v2677
      %v2804 = vadd.f32 %v2455, %v2682
      %v2805 = vadd.f32 %v2456, %v2687
      %v2806 = vadd.f32 %v2457, %v2692
      %v2807 = vadd.f32 %v2458, %v2697
      %v2808 = vadd.f32 %v2459, %v2702
      %v2809 = vadd.f32 %v2460, %v2707
      %v2810 = vadd.f32 %v2461, %v2712
      %v2811 = vadd.f32 %v2462, %v2717
      %v2812 = vadd.f32 %v2463, %v2722
      %v2813 = vadd.f32 %v2464, %v2727
      %v2814 = vadd.f32 %v2465, %v2732
      %v2815 = vadd.f32 %v2466, %v2737
      %v2816 = vadd.f32 %v2467, %v2742
      %v2817 = vadd.f32 %v2468, %v2747
      %v2818 = vadd.f32 %v2469, %v2752
      %v2819 = vadd.f32 %v2470, %v2757
      %v2820 = vadd.f32 %v2471, %v2762
      %v2821 = vadd.f32 %v2472, %v2767
      %v2822 = vadd.f32 %v2473, %v2772
      %v2823 = vadd.f32 %v2474, %v2777
      %v2824 = vadd.f32 %v2475, %v2782
      %v2825 = vadd.f32 %v2476, %v2787
      %v2826 = vadd.f32 %v2477, %v2792
      %v2827 = vadd.f32 %v2478, %v2797
      %v2828 = vld [vmem:[%s435 + $0x21] sm:$0xff]
      %v2829 = vld [vmem:[%s435 + $0x29] sm:$0xff]
      %v2830 = vld [vmem:[%s435 + $0x31] sm:$0xff]
      %v2831 = vld [vmem:[%s435 + $0x39] sm:$0xff]
      %v2832 = vld [vmem:[%s435 + $0x41] sm:$0xff]
      %v2833 = vld [vmem:[%s435 + $0x49] sm:$0xff]
      %v2834 = vld [vmem:[%s435 + $0x51] sm:$0xff]
      %v2835 = vld [vmem:[%s435 + $0x59] sm:$0xff]
      %v2836 = vld [vmem:[%s435 + $0x61] sm:$0xff]
      %v2837 = vld [vmem:[%s435 + $0x69] sm:$0xff]
      %v2838 = vld [vmem:[%s435 + $0x71] sm:$0xff]
      %v2839 = vld [vmem:[%s435 + $0x79] sm:$0xff]
      %v2840 = vld [vmem:[%s435 + $0x81] sm:$0xff]
      %v2841 = vld [vmem:[%s435 + $0x89] sm:$0xff]
      %v2842 = vld [vmem:[%s435 + $0x91] sm:$0xff]
      %v2843 = vld [vmem:[%s435 + $0x99] sm:$0xff]
      %v2844 = vld [vmem:[%s435 + $0xa1] sm:$0xff]
      %v2845 = vld [vmem:[%s435 + $0xa9] sm:$0xff]
      %v2846 = vld [vmem:[%s435 + $0xb1] sm:$0xff]
      %v2847 = vld [vmem:[%s435 + $0xb9] sm:$0xff]
      %v2848 = vld [vmem:[%s435 + $0xc1] sm:$0xff]
      %v2849 = vld [vmem:[%s435 + $0xc9] sm:$0xff]
      %v2850 = vld [vmem:[%s435 + $0xd1] sm:$0xff]
      %v2851 = vld [vmem:[%s435 + $0xd9] sm:$0xff]
      %v2852 = vld [vmem:[%s435 + $0xe1] sm:$0xff]
      %v2853 = vld [vmem:[%s435 + $0xe9] sm:$0xff]
      %v2854 = vld [vmem:[%s435 + $0xf1] sm:$0xff]
      %v2855 = vld [vmem:[%s435 + $0xf9] sm:$0x3f]
      %v2856 = vld [vmem:[%s1 + $0x1c] sm:$0xf]
      %v2858 = vsel %vm497, %v2828, 0
      %v2861 = vsel %vm497, %v2829, 0
      %v2864 = vsel %vm497, %v2830, 0
      %v2867 = vsel %vm497, %v2831, 0
      %v2870 = vsel %vm497, %v2832, 0
      %v2873 = vsel %vm497, %v2833, 0
      %v2876 = vsel %vm497, %v2834, 0
      %v2879 = vsel %vm497, %v2835, 0
      %v2882 = vsel %vm497, %v2836, 0
      %v2885 = vsel %vm497, %v2837, 0
      %v2888 = vsel %vm497, %v2838, 0
      %v2891 = vsel %vm497, %v2839, 0
      %v2894 = vsel %vm497, %v2840, 0
      %v2897 = vsel %vm497, %v2841, 0
      %v2900 = vsel %vm497, %v2842, 0
      %v2903 = vsel %vm497, %v2843, 0
      %v2906 = vsel %vm497, %v2844, 0
      %v2909 = vsel %vm497, %v2845, 0
      %v2912 = vsel %vm497, %v2846, 0
      %v2915 = vsel %vm497, %v2847, 0
      %v2918 = vsel %vm497, %v2848, 0
      %v2921 = vsel %vm497, %v2849, 0
      %v2924 = vsel %vm497, %v2850, 0
      %v2927 = vsel %vm497, %v2851, 0
      %v2930 = vsel %vm497, %v2852, 0
      %v2933 = vsel %vm497, %v2853, 0
      %v2936 = vsel %vm497, %v2854, 0
      %v2939 = vsel %vm497, %v2855, 0
      %v2942 = vsel %vm582, %v2856, 0
      %2944 = vmatprep.subr.mxu0 0.0
      %2945 = vmatpush1.msra.mxu0 %v2942
      %2946 = vmatprep.subr.mxu0 0.0
      %2947 = vmatpush1.msra.mxu0 0.0
      %2948 = vmatprep.subr.mxu0 0.0
      %2949 = vmatpush1.msra.mxu0 0.0
      %2950 = vmatprep.subr.mxu0 0.0
      %2951 = vmatpush1.msra.mxu0 0.0
      %2952 = vmatprep.subr.mxu0 0.0
      %2953 = vmatpush1.msra.mxu0 0.0
      %2954 = vmatprep.subr.mxu0 0.0
      %2955 = vmatpush1.msra.mxu0 0.0
      %2956 = vmatprep.subr.mxu0 0.0
      %2957 = vmatpush1.msra.mxu0 0.0
      %2958 = vmatprep.subr.mxu0 0.0
      %2959 = vmatpush1.msra.mxu0 0.0
      %2960 = vmatprep.subr.mxu0 0.0
      %2961 = vmatpush1.msra.mxu0 0.0
      %2962 = vmatprep.subr.mxu0 0.0
      %2963 = vmatpush1.msra.mxu0 0.0
      %2964 = vmatprep.subr.mxu0 0.0
      %2965 = vmatpush1.msra.mxu0 0.0
      %2966 = vmatprep.subr.mxu0 0.0
      %2967 = vmatpush1.msra.mxu0 0.0
      %2968 = vmatprep.subr.mxu0 0.0
      %2969 = vmatpush1.msra.mxu0 0.0
      %2970 = vmatprep.subr.mxu0 0.0
      %2971 = vmatpush1.msra.mxu0 0.0
      %2972 = vmatprep.subr.mxu0 0.0
      %2973 = vmatpush1.msra.mxu0 0.0
      %2974 = vmatprep.subr.mxu0 0.0
      %2975 = vmatpush1.msra.mxu0 0.0
      %2976 = vmatprep.subr.mxu0 0.0
      %2977 = vmatpush1.msra.mxu0 0.0
      %2978 = vmatprep.subr.mxu0 0.0
      %2979 = vmatpush1.msra.mxu0 0.0
      %2980 = vmatprep.subr.mxu0 0.0
      %2981 = vmatpush1.msra.mxu0 0.0
      %2982 = vmatprep.subr.mxu0 0.0
      %2983 = vmatpush1.msra.mxu0 0.0
      %2984 = vmatprep.subr.mxu0 0.0
      %2985 = vmatpush1.msra.mxu0 0.0
      %2986 = vmatprep.subr.mxu0 0.0
      %2987 = vmatpush1.msra.mxu0 0.0
      %2988 = vmatprep.subr.mxu0 0.0
      %2989 = vmatpush1.msra.mxu0 0.0
      %2990 = vmatprep.subr.mxu0 0.0
      %2991 = vmatpush1.msra.mxu0 0.0
      %2992 = vmatprep.subr.mxu0 0.0
      %2993 = vmatpush1.msra.mxu0 0.0
      %2994 = vmatprep.subr.mxu0 0.0
      %2995 = vmatpush1.msra.mxu0 0.0
      %2996 = vmatprep.subr.mxu0 0.0
      %2997 = vmatpush1.msra.mxu0 0.0
      %2998 = vmatprep.subr.mxu0 0.0
      %2999 = vmatpush1.msra.mxu0 0.0
      %3000 = vmatprep.subr.mxu0 0.0
      %3001 = vmatpush1.msra.mxu0 0.0
      %3002 = vmatprep.subr.mxu0 0.0
      %3003 = vmatpush1.msra.mxu0 0.0
      %3004 = vmatprep.subr.mxu0 0.0
      %3005 = vmatpush1.msra.mxu0 0.0
      %3006 = vmatprep.subr.mxu0 0.0
      %3007 = vmatpush1.msra.mxu0 0.0
      %3008 = vmatprep.mubr.f32.mxu0 0.0
      %3009 = vmatmul.mubr.f32.gmra.mrb[0].mxu0 %v2858
      %v3010 = vpop.f32.mrb[0].mxu0
      %v3011 = vadd.f32 0.0, %v3010
      %v3012 = vpop.f32.mrb[0].mxu0
      %3013 = vmatprep.mubr.f32.mxu0 0.0
      %3014 = vmatmul.mubr.f32.gmra.mrb[0].mxu0 %v2861
      %v3015 = vpop.f32.mrb[0].mxu0
      %v3016 = vadd.f32 0.0, %v3015
      %v3017 = vpop.f32.mrb[0].mxu0
      %3018 = vmatprep.mubr.f32.mxu0 0.0
      %3019 = vmatmul.mubr.f32.gmra.mrb[0].mxu0 %v2864
      %v3020 = vpop.f32.mrb[0].mxu0
      %v3021 = vadd.f32 0.0, %v3020
      %v3022 = vpop.f32.mrb[0].mxu0
      %3023 = vmatprep.mubr.f32.mxu0 0.0
      %3024 = vmatmul.mubr.f32.gmra.mrb[0].mxu0 %v2867
      %v3025 = vpop.f32.mrb[0].mxu0
      %v3026 = vadd.f32 0.0, %v3025
      %v3027 = vpop.f32.mrb[0].mxu0
      %3028 = vmatprep.mubr.f32.mxu0 0.0
      %3029 = vmatmul.mubr.f32.gmra.mrb[0].mxu0 %v2870
      %v3030 = vpop.f32.mrb[0].mxu0
      %v3031 = vadd.f32 0.0, %v3030
      %v3032 = vpop.f32.mrb[0].mxu0
      %3033 = vmatprep.mubr.f32.mxu0 0.0
      %3034 = vmatmul.mubr.f32.gmra.mrb[0].mxu0 %v2873
      %v3035 = vpop.f32.mrb[0].mxu0
      %v3036 = vadd.f32 0.0, %v3035
      %v3037 = vpop.f32.mrb[0].mxu0
      %3038 = vmatprep.mubr.f32.mxu0 0.0
      %3039 = vmatmul.mubr.f32.gmra.mrb[0].mxu0 %v2876
      %v3040 = vpop.f32.mrb[0].mxu0
      %v3041 = vadd.f32 0.0, %v3040
      %v3042 = vpop.f32.mrb[0].mxu0
      %3043 = vmatprep.mubr.f32.mxu0 0.0
      %3044 = vmatmul.mubr.f32.gmra.mrb[0].mxu0 %v2879
      %v3045 = vpop.f32.mrb[0].mxu0
      %v3046 = vadd.f32 0.0, %v3045
      %v3047 = vpop.f32.mrb[0].mxu0
      %3048 = vmatprep.mubr.f32.mxu0 0.0
      %3049 = vmatmul.mubr.f32.gmra.mrb[0].mxu0 %v2882
      %v3050 = vpop.f32.mrb[0].mxu0
      %v3051 = vadd.f32 0.0, %v3050
      %v3052 = vpop.f32.mrb[0].mxu0
      %3053 = vmatprep.mubr.f32.mxu0 0.0
      %3054 = vmatmul.mubr.f32.gmra.mrb[0].mxu0 %v2885
      %v3055 = vpop.f32.mrb[0].mxu0
      %v3056 = vadd.f32 0.0, %v3055
      %v3057 = vpop.f32.mrb[0].mxu0
      %3058 = vmatprep.mubr.f32.mxu0 0.0
      %3059 = vmatmul.mubr.f32.gmra.mrb[0].mxu0 %v2888
      %v3060 = vpop.f32.mrb[0].mxu0
      %v3061 = vadd.f32 0.0, %v3060
      %v3062 = vpop.f32.mrb[0].mxu0
      %3063 = vmatprep.mubr.f32.mxu0 0.0
      %3064 = vmatmul.mubr.f32.gmra.mrb[0].mxu0 %v2891
      %v3065 = vpop.f32.mrb[0].mxu0
      %v3066 = vadd.f32 0.0, %v3065
      %v3067 = vpop.f32.mrb[0].mxu0
      %3068 = vmatprep.mubr.f32.mxu0 0.0
      %3069 = vmatmul.mubr.f32.gmra.mrb[0].mxu0 %v2894
      %v3070 = vpop.f32.mrb[0].mxu0
      %v3071 = vadd.f32 0.0, %v3070
      %v3072 = vpop.f32.mrb[0].mxu0
      %3073 = vmatprep.mubr.f32.mxu0 0.0
      %3074 = vmatmul.mubr.f32.gmra.mrb[0].mxu0 %v2897
      %v3075 = vpop.f32.mrb[0].mxu0
      %v3076 = vadd.f32 0.0, %v3075
      %v3077 = vpop.f32.mrb[0].mxu0
      %3078 = vmatprep.mubr.f32.mxu0 0.0
      %3079 = vmatmul.mubr.f32.gmra.mrb[0].mxu0 %v2900
      %v3080 = vpop.f32.mrb[0].mxu0
      %v3081 = vadd.f32 0.0, %v3080
      %v3082 = vpop.f32.mrb[0].mxu0
      %3083 = vmatprep.mubr.f32.mxu0 0.0
      %3084 = vmatmul.mubr.f32.gmra.mrb[0].mxu0 %v2903
      %v3085 = vpop.f32.mrb[0].mxu0
      %v3086 = vadd.f32 0.0, %v3085
      %v3087 = vpop.f32.mrb[0].mxu0
      %3088 = vmatprep.mubr.f32.mxu0 0.0
      %3089 = vmatmul.mubr.f32.gmra.mrb[0].mxu0 %v2906
      %v3090 = vpop.f32.mrb[0].mxu0
      %v3091 = vadd.f32 0.0, %v3090
      %v3092 = vpop.f32.mrb[0].mxu0
      %3093 = vmatprep.mubr.f32.mxu0 0.0
      %3094 = vmatmul.mubr.f32.gmra.mrb[0].mxu0 %v2909
      %v3095 = vpop.f32.mrb[0].mxu0
      %v3096 = vadd.f32 0.0, %v3095
      %v3097 = vpop.f32.mrb[0].mxu0
      %3098 = vmatprep.mubr.f32.mxu0 0.0
      %3099 = vmatmul.mubr.f32.gmra.mrb[0].mxu0 %v2912
      %v3100 = vpop.f32.mrb[0].mxu0
      %v3101 = vadd.f32 0.0, %v3100
      %v3102 = vpop.f32.mrb[0].mxu0
      %3103 = vmatprep.mubr.f32.mxu0 0.0
      %3104 = vmatmul.mubr.f32.gmra.mrb[0].mxu0 %v2915
      %v3105 = vpop.f32.mrb[0].mxu0
      %v3106 = vadd.f32 0.0, %v3105
      %v3107 = vpop.f32.mrb[0].mxu0
      %3108 = vmatprep.mubr.f32.mxu0 0.0
      %3109 = vmatmul.mubr.f32.gmra.mrb[0].mxu0 %v2918
      %v3110 = vpop.f32.mrb[0].mxu0
      %v3111 = vadd.f32 0.0, %v3110
      %v3112 = vpop.f32.mrb[0].mxu0
      %3113 = vmatprep.mubr.f32.mxu0 0.0
      %3114 = vmatmul.mubr.f32.gmra.mrb[0].mxu0 %v2921
      %v3115 = vpop.f32.mrb[0].mxu0
      %v3116 = vadd.f32 0.0, %v3115
      %v3117 = vpop.f32.mrb[0].mxu0
      %3118 = vmatprep.mubr.f32.mxu0 0.0
      %3119 = vmatmul.mubr.f32.gmra.mrb[0].mxu0 %v2924
      %v3120 = vpop.f32.mrb[0].mxu0
      %v3121 = vadd.f32 0.0, %v3120
      %v3122 = vpop.f32.mrb[0].mxu0
      %3123 = vmatprep.mubr.f32.mxu0 0.0
      %3124 = vmatmul.mubr.f32.gmra.mrb[0].mxu0 %v2927
      %v3125 = vpop.f32.mrb[0].mxu0
      %v3126 = vadd.f32 0.0, %v3125
      %v3127 = vpop.f32.mrb[0].mxu0
      %3128 = vmatprep.mubr.f32.mxu0 0.0
      %3129 = vmatmul.mubr.f32.gmra.mrb[0].mxu0 %v2930
      %v3130 = vpop.f32.mrb[0].mxu0
      %v3131 = vadd.f32 0.0, %v3130
      %v3132 = vpop.f32.mrb[0].mxu0
      %3133 = vmatprep.mubr.f32.mxu0 0.0
      %3134 = vmatmul.mubr.f32.gmra.mrb[0].mxu0 %v2933
      %v3135 = vpop.f32.mrb[0].mxu0
      %v3136 = vadd.f32 0.0, %v3135
      %v3137 = vpop.f32.mrb[0].mxu0
      %3138 = vmatprep.mubr.f32.mxu0 0.0
      %3139 = vmatmul.mubr.f32.gmra.mrb[0].mxu0 %v2936
      %v3140 = vpop.f32.mrb[0].mxu0
      %v3141 = vadd.f32 0.0, %v3140
      %v3142 = vpop.f32.mrb[0].mxu0
      %3143 = vmatprep.mubr.f32.mxu0 0.0
      %3144 = vmatmul.mubr.f32.gmra.mrb[0].mxu0 %v2939
      %v3145 = vpop.f32.mrb[0].mxu0
      %v3146 = vadd.f32 0.0, %v3145
      %v3147 = vpop.f32.mrb[0].mxu0
      %3148 = vdwg.mxu0
      %v3149 = vadd.f32 %v2800, %v3011
      %v3150 = vadd.f32 %v2801, %v3016
      %v3151 = vadd.f32 %v2802, %v3021
      %v3152 = vadd.f32 %v2803, %v3026
      %v3153 = vadd.f32 %v2804, %v3031
      %v3154 = vadd.f32 %v2805, %v3036
      %v3155 = vadd.f32 %v2806, %v3041
      %v3156 = vadd.f32 %v2807, %v3046
      %v3157 = vadd.f32 %v2808, %v3051
      %v3158 = vadd.f32 %v2809, %v3056
      %v3159 = vadd.f32 %v2810, %v3061
      %v3160 = vadd.f32 %v2811, %v3066
      %v3161 = vadd.f32 %v2812, %v3071
      %v3162 = vadd.f32 %v2813, %v3076
      %v3163 = vadd.f32 %v2814, %v3081
      %v3164 = vadd.f32 %v2815, %v3086
      %v3165 = vadd.f32 %v2816, %v3091
      %v3166 = vadd.f32 %v2817, %v3096
      %v3167 = vadd.f32 %v2818, %v3101
      %v3168 = vadd.f32 %v2819, %v3106
      %v3169 = vadd.f32 %v2820, %v3111
      %v3170 = vadd.f32 %v2821, %v3116
      %v3171 = vadd.f32 %v2822, %v3121
      %v3172 = vadd.f32 %v2823, %v3126
      %v3173 = vadd.f32 %v2824, %v3131
      %v3174 = vadd.f32 %v2825, %v3136
      %v3175 = vadd.f32 %v2826, %v3141
      %v3176 = vadd.f32 %v2827, %v3146
      %v3177 = vld [vmem:[%s435 + $0x22] sm:$0xff]
      %v3178 = vld [vmem:[%s435 + $0x2a] sm:$0xff]
      %v3179 = vld [vmem:[%s435 + $0x32] sm:$0xff]
      %v3180 = vld [vmem:[%s435 + $0x3a] sm:$0xff]
      %v3181 = vld [vmem:[%s435 + $0x42] sm:$0xff]
      %v3182 = vld [vmem:[%s435 + $0x4a] sm:$0xff]
      %v3183 = vld [vmem:[%s435 + $0x52] sm:$0xff]
      %v3184 = vld [vmem:[%s435 + $0x5a] sm:$0xff]
      %v3185 = vld [vmem:[%s435 + $0x62] sm:$0xff]
      %v3186 = vld [vmem:[%s435 + $0x6a] sm:$0xff]
      %v3187 = vld [vmem:[%s435 + $0x72] sm:$0xff]
      %v3188 = vld [vmem:[%s435 + $0x7a] sm:$0xff]
      %v3189 = vld [vmem:[%s435 + $0x82] sm:$0xff]
      %v3190 = vld [vmem:[%s435 + $0x8a] sm:$0xff]
      %v3191 = vld [vmem:[%s435 + $0x92] sm:$0xff]
      %v3192 = vld [vmem:[%s435 + $0x9a] sm:$0xff]
      %v3193 = vld [vmem:[%s435 + $0xa2] sm:$0xff]
      %v3194 = vld [vmem:[%s435 + $0xaa] sm:$0xff]
      %v3195 = vld [vmem:[%s435 + $0xb2] sm:$0xff]
      %v3196 = vld [vmem:[%s435 + $0xba] sm:$0xff]
      %v3197 = vld [vmem:[%s435 + $0xc2] sm:$0xff]
      %v3198 = vld [vmem:[%s435 + $0xca] sm:$0xff]
      %v3199 = vld [vmem:[%s435 + $0xd2] sm:$0xff]
      %v3200 = vld [vmem:[%s435 + $0xda] sm:$0xff]
      %v3201 = vld [vmem:[%s435 + $0xe2] sm:$0xff]
      %v3202 = vld [vmem:[%s435 + $0xea] sm:$0xff]
      %v3203 = vld [vmem:[%s435 + $0xf2] sm:$0xff]
      %v3204 = vld [vmem:[%s435 + $0xfa] sm:$0x3f]
      %v3205 = vld [vmem:[%s1 + $0x20] sm:$0xf]
      %v3207 = vsel %vm497, %v3177, 0
      %v3210 = vsel %vm497, %v3178, 0
      %v3213 = vsel %vm497, %v3179, 0
      %v3216 = vsel %vm497, %v3180, 0
      %v3219 = vsel %vm497, %v3181, 0
      %v3222 = vsel %vm497, %v3182, 0
      %v3225 = vsel %vm497, %v3183, 0
      %v3228 = vsel %vm497, %v3184, 0
      %v3231 = vsel %vm497, %v3185, 0
      %v3234 = vsel %vm497, %v3186, 0
      %v3237 = vsel %vm497, %v3187, 0
      %v3240 = vsel %vm497, %v3188, 0
      %v3243 = vsel %vm497, %v3189, 0
      %v3246 = vsel %vm497, %v3190, 0
      %v3249 = vsel %vm497, %v3191, 0
      %v3252 = vsel %vm497, %v3192, 0
      %v3255 = vsel %vm497, %v3193, 0
      %v3258 = vsel %vm497, %v3194, 0
      %v3261 = vsel %vm497, %v3195, 0
      %v3264 = vsel %vm497, %v3196, 0
      %v3267 = vsel %vm497, %v3197, 0
      %v3270 = vsel %vm497, %v3198, 0
      %v3273 = vsel %vm497, %v3199, 0
      %v3276 = vsel %vm497, %v3200, 0
      %v3279 = vsel %vm497, %v3201, 0
      %v3282 = vsel %vm497, %v3202, 0
      %v3285 = vsel %vm497, %v3203, 0
      %v3288 = vsel %vm497, %v3204, 0
      %v3291 = vsel %vm582, %v3205, 0
      %3293 = vmatprep.subr.mxu0 0.0
      %3294 = vmatpush1.msra.mxu0 %v3291
      %3295 = vmatprep.subr.mxu0 0.0
      %3296 = vmatpush1.msra.mxu0 0.0
      %3297 = vmatprep.subr.mxu0 0.0
      %3298 = vmatpush1.msra.mxu0 0.0
      %3299 = vmatprep.subr.mxu0 0.0
      %3300 = vmatpush1.msra.mxu0 0.0
      %3301 = vmatprep.subr.mxu0 0.0
      %3302 = vmatpush1.msra.mxu0 0.0
      %3303 = vmatprep.subr.mxu0 0.0
      %3304 = vmatpush1.msra.mxu0 0.0
      %3305 = vmatprep.subr.mxu0 0.0
      %3306 = vmatpush1.msra.mxu0 0.0
      %3307 = vmatprep.subr.mxu0 0.0
      %3308 = vmatpush1.msra.mxu0 0.0
      %3309 = vmatprep.subr.mxu0 0.0
      %3310 = vmatpush1.msra.mxu0 0.0
      %3311 = vmatprep.subr.mxu0 0.0
      %3312 = vmatpush1.msra.mxu0 0.0
      %3313 = vmatprep.subr.mxu0 0.0
      %3314 = vmatpush1.msra.mxu0 0.0
      %3315 = vmatprep.subr.mxu0 0.0
      %3316 = vmatpush1.msra.mxu0 0.0
      %3317 = vmatprep.subr.mxu0 0.0
      %3318 = vmatpush1.msra.mxu0 0.0
      %3319 = vmatprep.subr.mxu0 0.0
      %3320 = vmatpush1.msra.mxu0 0.0
      %3321 = vmatprep.subr.mxu0 0.0
      %3322 = vmatpush1.msra.mxu0 0.0
      %3323 = vmatprep.subr.mxu0 0.0
      %3324 = vmatpush1.msra.mxu0 0.0
      %3325 = vmatprep.subr.mxu0 0.0
      %3326 = vmatpush1.msra.mxu0 0.0
      %3327 = vmatprep.subr.mxu0 0.0
      %3328 = vmatpush1.msra.mxu0 0.0
      %3329 = vmatprep.subr.mxu0 0.0
      %3330 = vmatpush1.msra.mxu0 0.0
      %3331 = vmatprep.subr.mxu0 0.0
      %3332 = vmatpush1.msra.mxu0 0.0
      %3333 = vmatprep.subr.mxu0 0.0
      %3334 = vmatpush1.msra.mxu0 0.0
      %3335 = vmatprep.subr.mxu0 0.0
      %3336 = vmatpush1.msra.mxu0 0.0
      %3337 = vmatprep.subr.mxu0 0.0
      %3338 = vmatpush1.msra.mxu0 0.0
      %3339 = vmatprep.subr.mxu0 0.0
      %3340 = vmatpush1.msra.mxu0 0.0
      %3341 = vmatprep.subr.mxu0 0.0
      %3342 = vmatpush1.msra.mxu0 0.0
      %3343 = vmatprep.subr.mxu0 0.0
      %3344 = vmatpush1.msra.mxu0 0.0
      %3345 = vmatprep.subr.mxu0 0.0
      %3346 = vmatpush1.msra.mxu0 0.0
      %3347 = vmatprep.subr.mxu0 0.0
      %3348 = vmatpush1.msra.mxu0 0.0
      %3349 = vmatprep.subr.mxu0 0.0
      %3350 = vmatpush1.msra.mxu0 0.0
      %3351 = vmatprep.subr.mxu0 0.0
      %3352 = vmatpush1.msra.mxu0 0.0
      %3353 = vmatprep.subr.mxu0 0.0
      %3354 = vmatpush1.msra.mxu0 0.0
      %3355 = vmatprep.subr.mxu0 0.0
      %3356 = vmatpush1.msra.mxu0 0.0
      %3357 = vmatprep.mubr.f32.mxu0 0.0
      %3358 = vmatmul.mubr.f32.gmra.mrb[0].mxu0 %v3207
      %v3359 = vpop.f32.mrb[0].mxu0
      %v3360 = vadd.f32 0.0, %v3359
      %v3361 = vpop.f32.mrb[0].mxu0
      %3362 = vmatprep.mubr.f32.mxu0 0.0
      %3363 = vmatmul.mubr.f32.gmra.mrb[0].mxu0 %v3210
      %v3364 = vpop.f32.mrb[0].mxu0
      %v3365 = vadd.f32 0.0, %v3364
      %v3366 = vpop.f32.mrb[0].mxu0
      %3367 = vmatprep.mubr.f32.mxu0 0.0
      %3368 = vmatmul.mubr.f32.gmra.mrb[0].mxu0 %v3213
      %v3369 = vpop.f32.mrb[0].mxu0
      %v3370 = vadd.f32 0.0, %v3369
      %v3371 = vpop.f32.mrb[0].mxu0
      %3372 = vmatprep.mubr.f32.mxu0 0.0
      %3373 = vmatmul.mubr.f32.gmra.mrb[0].mxu0 %v3216
      %v3374 = vpop.f32.mrb[0].mxu0
      %v3375 = vadd.f32 0.0, %v3374
      %v3376 = vpop.f32.mrb[0].mxu0
      %3377 = vmatprep.mubr.f32.mxu0 0.0
      %3378 = vmatmul.mubr.f32.gmra.mrb[0].mxu0 %v3219
      %v3379 = vpop.f32.mrb[0].mxu0
      %v3380 = vadd.f32 0.0, %v3379
      %v3381 = vpop.f32.mrb[0].mxu0
      %3382 = vmatprep.mubr.f32.mxu0 0.0
      %3383 = vmatmul.mubr.f32.gmra.mrb[0].mxu0 %v3222
      %v3384 = vpop.f32.mrb[0].mxu0
      %v3385 = vadd.f32 0.0, %v3384
      %v3386 = vpop.f32.mrb[0].mxu0
      %3387 = vmatprep.mubr.f32.mxu0 0.0
      %3388 = vmatmul.mubr.f32.gmra.mrb[0].mxu0 %v3225
      %v3389 = vpop.f32.mrb[0].mxu0
      %v3390 = vadd.f32 0.0, %v3389
      %v3391 = vpop.f32.mrb[0].mxu0
      %3392 = vmatprep.mubr.f32.mxu0 0.0
      %3393 = vmatmul.mubr.f32.gmra.mrb[0].mxu0 %v3228
      %v3394 = vpop.f32.mrb[0].mxu0
      %v3395 = vadd.f32 0.0, %v3394
      %v3396 = vpop.f32.mrb[0].mxu0
      %3397 = vmatprep.mubr.f32.mxu0 0.0
      %3398 = vmatmul.mubr.f32.gmra.mrb[0].mxu0 %v3231
      %v3399 = vpop.f32.mrb[0].mxu0
      %v3400 = vadd.f32 0.0, %v3399
      %v3401 = vpop.f32.mrb[0].mxu0
      %3402 = vmatprep.mubr.f32.mxu0 0.0
      %3403 = vmatmul.mubr.f32.gmra.mrb[0].mxu0 %v3234
      %v3404 = vpop.f32.mrb[0].mxu0
      %v3405 = vadd.f32 0.0, %v3404
      %v3406 = vpop.f32.mrb[0].mxu0
      %3407 = vmatprep.mubr.f32.mxu0 0.0
      %3408 = vmatmul.mubr.f32.gmra.mrb[0].mxu0 %v3237
      %v3409 = vpop.f32.mrb[0].mxu0
      %v3410 = vadd.f32 0.0, %v3409
      %v3411 = vpop.f32.mrb[0].mxu0
      %3412 = vmatprep.mubr.f32.mxu0 0.0
      %3413 = vmatmul.mubr.f32.gmra.mrb[0].mxu0 %v3240
      %v3414 = vpop.f32.mrb[0].mxu0
      %v3415 = vadd.f32 0.0, %v3414
      %v3416 = vpop.f32.mrb[0].mxu0
      %3417 = vmatprep.mubr.f32.mxu0 0.0
      %3418 = vmatmul.mubr.f32.gmra.mrb[0].mxu0 %v3243
      %v3419 = vpop.f32.mrb[0].mxu0
      %v3420 = vadd.f32 0.0, %v3419
      %v3421 = vpop.f32.mrb[0].mxu0
      %3422 = vmatprep.mubr.f32.mxu0 0.0
      %3423 = vmatmul.mubr.f32.gmra.mrb[0].mxu0 %v3246
      %v3424 = vpop.f32.mrb[0].mxu0
      %v3425 = vadd.f32 0.0, %v3424
      %v3426 = vpop.f32.mrb[0].mxu0
      %3427 = vmatprep.mubr.f32.mxu0 0.0
      %3428 = vmatmul.mubr.f32.gmra.mrb[0].mxu0 %v3249
      %v3429 = vpop.f32.mrb[0].mxu0
      %v3430 = vadd.f32 0.0, %v3429
      %v3431 = vpop.f32.mrb[0].mxu0
      %3432 = vmatprep.mubr.f32.mxu0 0.0
      %3433 = vmatmul.mubr.f32.gmra.mrb[0].mxu0 %v3252
      %v3434 = vpop.f32.mrb[0].mxu0
      %v3435 = vadd.f32 0.0, %v3434
      %v3436 = vpop.f32.mrb[0].mxu0
      %3437 = vmatprep.mubr.f32.mxu0 0.0
      %3438 = vmatmul.mubr.f32.gmra.mrb[0].mxu0 %v3255
      %v3439 = vpop.f32.mrb[0].mxu0
      %v3440 = vadd.f32 0.0, %v3439
      %v3441 = vpop.f32.mrb[0].mxu0
      %3442 = vmatprep.mubr.f32.mxu0 0.0
      %3443 = vmatmul.mubr.f32.gmra.mrb[0].mxu0 %v3258
      %v3444 = vpop.f32.mrb[0].mxu0
      %v3445 = vadd.f32 0.0, %v3444
      %v3446 = vpop.f32.mrb[0].mxu0
      %3447 = vmatprep.mubr.f32.mxu0 0.0
      %3448 = vmatmul.mubr.f32.gmra.mrb[0].mxu0 %v3261
      %v3449 = vpop.f32.mrb[0].mxu0
      %v3450 = vadd.f32 0.0, %v3449
      %v3451 = vpop.f32.mrb[0].mxu0
      %3452 = vmatprep.mubr.f32.mxu0 0.0
      %3453 = vmatmul.mubr.f32.gmra.mrb[0].mxu0 %v3264
      %v3454 = vpop.f32.mrb[0].mxu0
      %v3455 = vadd.f32 0.0, %v3454
      %v3456 = vpop.f32.mrb[0].mxu0
      %3457 = vmatprep.mubr.f32.mxu0 0.0
      %3458 = vmatmul.mubr.f32.gmra.mrb[0].mxu0 %v3267
      %v3459 = vpop.f32.mrb[0].mxu0
      %v3460 = vadd.f32 0.0, %v3459
      %v3461 = vpop.f32.mrb[0].mxu0
      %3462 = vmatprep.mubr.f32.mxu0 0.0
      %3463 = vmatmul.mubr.f32.gmra.mrb[0].mxu0 %v3270
      %v3464 = vpop.f32.mrb[0].mxu0
      %v3465 = vadd.f32 0.0, %v3464
      %v3466 = vpop.f32.mrb[0].mxu0
      %3467 = vmatprep.mubr.f32.mxu0 0.0
      %3468 = vmatmul.mubr.f32.gmra.mrb[0].mxu0 %v3273
      %v3469 = vpop.f32.mrb[0].mxu0
      %v3470 = vadd.f32 0.0, %v3469
      %v3471 = vpop.f32.mrb[0].mxu0
      %3472 = vmatprep.mubr.f32.mxu0 0.0
      %3473 = vmatmul.mubr.f32.gmra.mrb[0].mxu0 %v3276
      %v3474 = vpop.f32.mrb[0].mxu0
      %v3475 = vadd.f32 0.0, %v3474
      %v3476 = vpop.f32.mrb[0].mxu0
      %3477 = vmatprep.mubr.f32.mxu0 0.0
      %3478 = vmatmul.mubr.f32.gmra.mrb[0].mxu0 %v3279
      %v3479 = vpop.f32.mrb[0].mxu0
      %v3480 = vadd.f32 0.0, %v3479
      %v3481 = vpop.f32.mrb[0].mxu0
      %3482 = vmatprep.mubr.f32.mxu0 0.0
      %3483 = vmatmul.mubr.f32.gmra.mrb[0].mxu0 %v3282
      %v3484 = vpop.f32.mrb[0].mxu0
      %v3485 = vadd.f32 0.0, %v3484
      %v3486 = vpop.f32.mrb[0].mxu0
      %3487 = vmatprep.mubr.f32.mxu0 0.0
      %3488 = vmatmul.mubr.f32.gmra.mrb[0].mxu0 %v3285
      %v3489 = vpop.f32.mrb[0].mxu0
      %v3490 = vadd.f32 0.0, %v3489
      %v3491 = vpop.f32.mrb[0].mxu0
      %3492 = vmatprep.mubr.f32.mxu0 0.0
      %3493 = vmatmul.mubr.f32.gmra.mrb[0].mxu0 %v3288
      %v3494 = vpop.f32.mrb[0].mxu0
      %v3495 = vadd.f32 0.0, %v3494
      %v3496 = vpop.f32.mrb[0].mxu0
      %3497 = vdwg.mxu0
      %v3498 = vadd.f32 %v3149, %v3360
      %v3499 = vadd.f32 %v3150, %v3365
      %v3500 = vadd.f32 %v3151, %v3370
      %v3501 = vadd.f32 %v3152, %v3375
      %v3502 = vadd.f32 %v3153, %v3380
      %v3503 = vadd.f32 %v3154, %v3385
      %v3504 = vadd.f32 %v3155, %v3390
      %v3505 = vadd.f32 %v3156, %v3395
      %v3506 = vadd.f32 %v3157, %v3400
      %v3507 = vadd.f32 %v3158, %v3405
      %v3508 = vadd.f32 %v3159, %v3410
      %v3509 = vadd.f32 %v3160, %v3415
      %v3510 = vadd.f32 %v3161, %v3420
      %v3511 = vadd.f32 %v3162, %v3425
      %v3512 = vadd.f32 %v3163, %v3430
      %v3513 = vadd.f32 %v3164, %v3435
      %v3514 = vadd.f32 %v3165, %v3440
      %v3515 = vadd.f32 %v3166, %v3445
      %v3516 = vadd.f32 %v3167, %v3450
      %v3517 = vadd.f32 %v3168, %v3455
      %v3518 = vadd.f32 %v3169, %v3460
      %v3519 = vadd.f32 %v3170, %v3465
      %v3520 = vadd.f32 %v3171, %v3470
      %v3521 = vadd.f32 %v3172, %v3475
      %v3522 = vadd.f32 %v3173, %v3480
      %v3523 = vadd.f32 %v3174, %v3485
      %v3524 = vadd.f32 %v3175, %v3490
      %v3525 = vadd.f32 %v3176, %v3495
      %v3526 = vld [vmem:[%s2] sm:$0x1]
      %v3528 = vlaneseq
      %v3529 = vshrl.u32 %v3528, 7
      %v3530 = vsub.s32 0, %v3529
      %v3531 = vrot.slane %v3526, %v3530
      %v3533 = vadd.f32 %v3498, %v3531
      %v3534 = vadd.f32 %v3499, %v3531
      %v3535 = vadd.f32 %v3500, %v3531
      %v3536 = vadd.f32 %v3501, %v3531
      %v3537 = vadd.f32 %v3502, %v3531
      %v3538 = vadd.f32 %v3503, %v3531
      %v3539 = vadd.f32 %v3504, %v3531
      %v3540 = vadd.f32 %v3505, %v3531
      %v3541 = vadd.f32 %v3506, %v3531
      %v3542 = vadd.f32 %v3507, %v3531
      %v3543 = vadd.f32 %v3508, %v3531
      %v3544 = vadd.f32 %v3509, %v3531
      %v3545 = vadd.f32 %v3510, %v3531
      %v3546 = vadd.f32 %v3511, %v3531
      %v3547 = vadd.f32 %v3512, %v3531
      %v3548 = vadd.f32 %v3513, %v3531
      %v3549 = vadd.f32 %v3514, %v3531
      %v3550 = vadd.f32 %v3515, %v3531
      %v3551 = vadd.f32 %v3516, %v3531
      %v3552 = vadd.f32 %v3517, %v3531
      %v3553 = vadd.f32 %v3518, %v3531
      %v3554 = vadd.f32 %v3519, %v3531
      %v3555 = vadd.f32 %v3520, %v3531
      %v3556 = vadd.f32 %v3521, %v3531
      %v3557 = vadd.f32 %v3522, %v3531
      %v3558 = vadd.f32 %v3523, %v3531
      %v3559 = vadd.f32 %v3524, %v3531
      %v3560 = vadd.f32 %v3525, %v3531
      %v3561 = vmax.f32 %v3533, 0.0
      %v3562 = vmax.f32 %v3534, 0.0
      %v3563 = vmax.f32 %v3535, 0.0
      %v3564 = vmax.f32 %v3536, 0.0
      %v3565 = vmax.f32 %v3537, 0.0
      %v3566 = vmax.f32 %v3538, 0.0
      %v3567 = vmax.f32 %v3539, 0.0
      %v3568 = vmax.f32 %v3540, 0.0
      %v3569 = vmax.f32 %v3541, 0.0
      %v3570 = vmax.f32 %v3542, 0.0
      %v3571 = vmax.f32 %v3543, 0.0
      %v3572 = vmax.f32 %v3544, 0.0
      %v3573 = vmax.f32 %v3545, 0.0
      %v3574 = vmax.f32 %v3546, 0.0
      %v3575 = vmax.f32 %v3547, 0.0
      %v3576 = vmax.f32 %v3548, 0.0
      %v3577 = vmax.f32 %v3549, 0.0
      %v3578 = vmax.f32 %v3550, 0.0
      %v3579 = vmax.f32 %v3551, 0.0
      %v3580 = vmax.f32 %v3552, 0.0
      %v3581 = vmax.f32 %v3553, 0.0
      %v3582 = vmax.f32 %v3554, 0.0
      %v3583 = vmax.f32 %v3555, 0.0
      %v3584 = vmax.f32 %v3556, 0.0
      %v3585 = vmax.f32 %v3557, 0.0
      %v3586 = vmax.f32 %v3558, 0.0
      %v3587 = vmax.f32 %v3559, 0.0
      %v3588 = vmax.f32 %v3560, 0.0
      %vm3589 = vcmask 261120
      %3590 = vst.msk [vmem:[#allocation2] sm:$0xff] %vm3589, %v3561
      %3591 = vst.msk [vmem:[#allocation2 + $0x8] sm:$0xff] %vm3589, %v3562
      %3592 = vst.msk [vmem:[#allocation2 + $0x10] sm:$0xff] %vm3589, %v3563
      %3593 = vst.msk [vmem:[#allocation2 + $0x18] sm:$0xff] %vm3589, %v3564
      %3594 = vst.msk [vmem:[#allocation2 + $0x20] sm:$0xff] %vm3589, %v3565
      %3595 = vst.msk [vmem:[#allocation2 + $0x28] sm:$0xff] %vm3589, %v3566
      %3596 = vst.msk [vmem:[#allocation2 + $0x30] sm:$0xff] %vm3589, %v3567
      %3597 = vst.msk [vmem:[#allocation2 + $0x38] sm:$0xff] %vm3589, %v3568
      %3598 = vst.msk [vmem:[#allocation2 + $0x40] sm:$0xff] %vm3589, %v3569
      %3599 = vst.msk [vmem:[#allocation2 + $0x48] sm:$0xff] %vm3589, %v3570
      %3600 = vst.msk [vmem:[#allocation2 + $0x50] sm:$0xff] %vm3589, %v3571
      %3601 = vst.msk [vmem:[#allocation2 + $0x58] sm:$0xff] %vm3589, %v3572
      %3602 = vst.msk [vmem:[#allocation2 + $0x60] sm:$0xff] %vm3589, %v3573
      %3603 = vst.msk [vmem:[#allocation2 + $0x68] sm:$0xff] %vm3589, %v3574
      %3604 = vst.msk [vmem:[#allocation2 + $0x70] sm:$0xff] %vm3589, %v3575
      %3605 = vst.msk [vmem:[#allocation2 + $0x78] sm:$0xff] %vm3589, %v3576
      %3606 = vst.msk [vmem:[#allocation2 + $0x80] sm:$0xff] %vm3589, %v3577
      %3607 = vst.msk [vmem:[#allocation2 + $0x88] sm:$0xff] %vm3589, %v3578
      %3608 = vst.msk [vmem:[#allocation2 + $0x90] sm:$0xff] %vm3589, %v3579
      %3609 = vst.msk [vmem:[#allocation2 + $0x98] sm:$0xff] %vm3589, %v3580
      %3610 = vst.msk [vmem:[#allocation2 + $0xa0] sm:$0xff] %vm3589, %v3581
      %3611 = vst.msk [vmem:[#allocation2 + $0xa8] sm:$0xff] %vm3589, %v3582
      %3612 = vst.msk [vmem:[#allocation2 + $0xb0] sm:$0xff] %vm3589, %v3583
      %3613 = vst.msk [vmem:[#allocation2 + $0xb8] sm:$0xff] %vm3589, %v3584
      %3614 = vst.msk [vmem:[#allocation2 + $0xc0] sm:$0xff] %vm3589, %v3585
      %3615 = vst.msk [vmem:[#allocation2 + $0xc8] sm:$0xff] %vm3589, %v3586
      %3616 = vst.msk [vmem:[#allocation2 + $0xd0] sm:$0xff] %vm3589, %v3587
      %vm3617 = vcmask 259072
      %3618 = vst.msk [vmem:[#allocation2 + $0xd8] sm:$0x3f] %vm3617, %v3588
      %v3619 = vld [vmem:[#allocation2] sm:$0xff]
      %v3620 = vld [vmem:[#allocation2 + $0x8] sm:$0xff]
      %v3621 = vld [vmem:[#allocation2 + $0x10] sm:$0xff]
      %v3622 = vld [vmem:[#allocation2 + $0x18] sm:$0xff]
      %v3623 = vld [vmem:[#allocation2 + $0x20] sm:$0xff]
      %v3624 = vld [vmem:[#allocation2 + $0x28] sm:$0xff]
      %v3625 = vld [vmem:[#allocation2 + $0x30] sm:$0xff]
      %v3626 = vld [vmem:[#allocation2 + $0x38] sm:$0xff]
      %v3627 = vld [vmem:[#allocation2 + $0x40] sm:$0xff]
      %v3628 = vld [vmem:[#allocation2 + $0x48] sm:$0xff]
      %v3629 = vld [vmem:[#allocation2 + $0x50] sm:$0xff]
      %v3630 = vld [vmem:[#allocation2 + $0x58] sm:$0xff]
      %v3631 = vld [vmem:[#allocation2 + $0x60] sm:$0xff]
      %v3632 = vld [vmem:[#allocation2 + $0x68] sm:$0xff]
      %v3633 = vld [vmem:[#allocation2 + $0x70] sm:$0xff]
      %v3634 = vld [vmem:[#allocation2 + $0x78] sm:$0xff]
      %v3635 = vld [vmem:[#allocation2 + $0x80] sm:$0xff]
      %v3636 = vld [vmem:[#allocation2 + $0x88] sm:$0xff]
      %v3637 = vld [vmem:[#allocation2 + $0x90] sm:$0xff]
      %v3638 = vld [vmem:[#allocation2 + $0x98] sm:$0xff]
      %v3639 = vld [vmem:[#allocation2 + $0xa0] sm:$0xff]
      %v3640 = vld [vmem:[#allocation2 + $0xa8] sm:$0xff]
      %v3641 = vld [vmem:[#allocation2 + $0xb0] sm:$0xff]
      %v3642 = vld [vmem:[#allocation2 + $0xb8] sm:$0xf]
      %v3643 = vld [vmem:[%s3] sm:$0xff]
      %v3644 = vld [vmem:[%s3 + $0x8] sm:$0xff]
      %v3645 = vld [vmem:[%s3 + $0x10] sm:$0xff]
      %v3646 = vld [vmem:[%s3 + $0x18] sm:$0xff]
      %v3647 = vld [vmem:[#allocation2 + $0x1] sm:$0xff]
      %v3648 = vld [vmem:[#allocation2 + $0x9] sm:$0xff]
      %v3649 = vld [vmem:[#allocation2 + $0x11] sm:$0xff]
      %v3650 = vld [vmem:[#allocation2 + $0x19] sm:$0xff]
      %v3651 = vld [vmem:[#allocation2 + $0x21] sm:$0xff]
      %v3652 = vld [vmem:[#allocation2 + $0x29] sm:$0xff]
      %v3653 = vld [vmem:[#allocation2 + $0x31] sm:$0xff]
      %v3654 = vld [vmem:[#allocation2 + $0x39] sm:$0xff]
      %v3655 = vld [vmem:[#allocation2 + $0x41] sm:$0xff]
      %v3656 = vld [vmem:[#allocation2 + $0x49] sm:$0xff]
      %v3657 = vld [vmem:[#allocation2 + $0x51] sm:$0xff]
      %v3658 = vld [vmem:[#allocation2 + $0x59] sm:$0xff]
      %v3659 = vld [vmem:[#allocation2 + $0x61] sm:$0xff]
      %v3660 = vld [vmem:[#allocation2 + $0x69] sm:$0xff]
      %v3661 = vld [vmem:[#allocation2 + $0x71] sm:$0xff]
      %v3662 = vld [vmem:[#allocation2 + $0x79] sm:$0xff]
      %v3663 = vld [vmem:[#allocation2 + $0x81] sm:$0xff]
      %v3664 = vld [vmem:[#allocation2 + $0x89] sm:$0xff]
      %v3665 = vld [vmem:[#allocation2 + $0x91] sm:$0xff]
      %v3666 = vld [vmem:[#allocation2 + $0x99] sm:$0xff]
      %v3667 = vld [vmem:[#allocation2 + $0xa1] sm:$0xff]
      %v3668 = vld [vmem:[#allocation2 + $0xa9] sm:$0xff]
      %v3669 = vld [vmem:[#allocation2 + $0xb1] sm:$0xff]
      %v3670 = vld [vmem:[#allocation2 + $0xb9] sm:$0xf]
      %v3671 = vld [vmem:[%s3 + $0x20] sm:$0xff]
      %v3672 = vld [vmem:[%s3 + $0x28] sm:$0xff]
      %v3673 = vld [vmem:[%s3 + $0x30] sm:$0xff]
      %v3674 = vld [vmem:[%s3 + $0x38] sm:$0xff]
      %v3676 = vsel %vm3589, %v3647, 0
      %v3679 = vsel %vm3589, %v3648, 0
      %v3682 = vsel %vm3589, %v3649, 0
      %v3685 = vsel %vm3589, %v3650, 0
      %v3688 = vsel %vm3589, %v3651, 0
      %v3691 = vsel %vm3589, %v3652, 0
      %v3694 = vsel %vm3589, %v3653, 0
      %v3697 = vsel %vm3589, %v3654, 0
      %v3700 = vsel %vm3589, %v3655, 0
      %v3703 = vsel %vm3589, %v3656, 0
      %v3706 = vsel %vm3589, %v3657, 0
      %v3709 = vsel %vm3589, %v3658, 0
      %v3712 = vsel %vm3589, %v3659, 0
      %v3715 = vsel %vm3589, %v3660, 0
      %v3718 = vsel %vm3589, %v3661, 0
      %v3721 = vsel %vm3589, %v3662, 0
      %v3724 = vsel %vm3589, %v3663, 0
      %v3727 = vsel %vm3589, %v3664, 0
      %v3730 = vsel %vm3589, %v3665, 0
      %v3733 = vsel %vm3589, %v3666, 0
      %v3736 = vsel %vm3589, %v3667, 0
      %v3739 = vsel %vm3589, %v3668, 0
      %v3742 = vsel %vm3589, %v3669, 0
      %v3745 = vsel %vm3589, %v3670, 0
      %3747 = vmatprep.subr.mxu0 0.0
      %3748 = vmatpush1.msra.mxu0 %v3671
      %3749 = vmatprep.subr.mxu0 0.0
      %3750 = vmatpush1.msra.mxu0 %v3672
      %3751 = vmatprep.subr.mxu0 0.0
      %3752 = vmatpush1.msra.mxu0 %v3673
      %3753 = vmatprep.subr.mxu0 0.0
      %3754 = vmatpush1.msra.mxu0 %v3674
      %3755 = vmatprep.subr.mxu0 0.0
      %3756 = vmatpush1.msra.mxu0 0.0
      %3757 = vmatprep.subr.mxu0 0.0
      %3758 = vmatpush1.msra.mxu0 0.0
      %3759 = vmatprep.subr.mxu0 0.0
      %3760 = vmatpush1.msra.mxu0 0.0
      %3761 = vmatprep.subr.mxu0 0.0
      %3762 = vmatpush1.msra.mxu0 0.0
      %3763 = vmatprep.subr.mxu0 0.0
      %3764 = vmatpush1.msra.mxu0 0.0
      %3765 = vmatprep.subr.mxu0 0.0
      %3766 = vmatpush1.msra.mxu0 0.0
      %3767 = vmatprep.subr.mxu0 0.0
      %3768 = vmatpush1.msra.mxu0 0.0
      %3769 = vmatprep.subr.mxu0 0.0
      %3770 = vmatpush1.msra.mxu0 0.0
      %3771 = vmatprep.subr.mxu0 0.0
      %3772 = vmatpush1.msra.mxu0 0.0
      %3773 = vmatprep.subr.mxu0 0.0
      %3774 = vmatpush1.msra.mxu0 0.0
      %3775 = vmatprep.subr.mxu0 0.0
      %3776 = vmatpush1.msra.mxu0 0.0
      %3777 = vmatprep.subr.mxu0 0.0
      %3778 = vmatpush1.msra.mxu0 0.0
      %3779 = vmatprep.subr.mxu0 0.0
      %3780 = vmatpush1.msra.mxu0 0.0
      %3781 = vmatprep.subr.mxu0 0.0
      %3782 = vmatpush1.msra.mxu0 0.0
      %3783 = vmatprep.subr.mxu0 0.0
      %3784 = vmatpush1.msra.mxu0 0.0
      %3785 = vmatprep.subr.mxu0 0.0
      %3786 = vmatpush1.msra.mxu0 0.0
      %3787 = vmatprep.subr.mxu0 0.0
      %3788 = vmatpush1.msra.mxu0 0.0
      %3789 = vmatprep.subr.mxu0 0.0
      %3790 = vmatpush1.msra.mxu0 0.0
      %3791 = vmatprep.subr.mxu0 0.0
      %3792 = vmatpush1.msra.mxu0 0.0
      %3793 = vmatprep.subr.mxu0 0.0
      %3794 = vmatpush1.msra.mxu0 0.0
      %3795 = vmatprep.subr.mxu0 0.0
      %3796 = vmatpush1.msra.mxu0 0.0
      %3797 = vmatprep.subr.mxu0 0.0
      %3798 = vmatpush1.msra.mxu0 0.0
      %3799 = vmatprep.subr.mxu0 0.0
      %3800 = vmatpush1.msra.mxu0 0.0
      %3801 = vmatprep.subr.mxu0 0.0
      %3802 = vmatpush1.msra.mxu0 0.0
      %3803 = vmatprep.subr.mxu0 0.0
      %3804 = vmatpush1.msra.mxu0 0.0
      %3805 = vmatprep.subr.mxu0 0.0
      %3806 = vmatpush1.msra.mxu0 0.0
      %3807 = vmatprep.subr.mxu0 0.0
      %3808 = vmatpush1.msra.mxu0 0.0
      %3809 = vmatprep.subr.mxu0 0.0
      %3810 = vmatpush1.msra.mxu0 0.0
      %3811 = vmatprep.mubr.f32.mxu0 0.0
      %3812 = vmatmul.mubr.f32.gmra.mrb[0].mxu0 %v3676
      %v3813 = vpop.f32.mrb[0].mxu0
      %v3814 = vadd.f32 0.0, %v3813
      %v3815 = vpop.f32.mrb[0].mxu0
      %3816 = vmatprep.mubr.f32.mxu0 0.0
      %3817 = vmatmul.mubr.f32.gmra.mrb[0].mxu0 %v3679
      %v3818 = vpop.f32.mrb[0].mxu0
      %v3819 = vadd.f32 0.0, %v3818
      %v3820 = vpop.f32.mrb[0].mxu0
      %3821 = vmatprep.mubr.f32.mxu0 0.0
      %3822 = vmatmul.mubr.f32.gmra.mrb[0].mxu0 %v3682
      %v3823 = vpop.f32.mrb[0].mxu0
      %v3824 = vadd.f32 0.0, %v3823
      %v3825 = vpop.f32.mrb[0].mxu0
      %3826 = vmatprep.mubr.f32.mxu0 0.0
      %3827 = vmatmul.mubr.f32.gmra.mrb[0].mxu0 %v3685
      %v3828 = vpop.f32.mrb[0].mxu0
      %v3829 = vadd.f32 0.0, %v3828
      %v3830 = vpop.f32.mrb[0].mxu0
      %3831 = vmatprep.mubr.f32.mxu0 0.0
      %3832 = vmatmul.mubr.f32.gmra.mrb[0].mxu0 %v3688
      %v3833 = vpop.f32.mrb[0].mxu0
      %v3834 = vadd.f32 0.0, %v3833
      %v3835 = vpop.f32.mrb[0].mxu0
      %3836 = vmatprep.mubr.f32.mxu0 0.0
      %3837 = vmatmul.mubr.f32.gmra.mrb[0].mxu0 %v3691
      %v3838 = vpop.f32.mrb[0].mxu0
      %v3839 = vadd.f32 0.0, %v3838
      %v3840 = vpop.f32.mrb[0].mxu0
      %3841 = vmatprep.mubr.f32.mxu0 0.0
      %3842 = vmatmul.mubr.f32.gmra.mrb[0].mxu0 %v3694
      %v3843 = vpop.f32.mrb[0].mxu0
      %v3844 = vadd.f32 0.0, %v3843
      %v3845 = vpop.f32.mrb[0].mxu0
      %3846 = vmatprep.mubr.f32.mxu0 0.0
      %3847 = vmatmul.mubr.f32.gmra.mrb[0].mxu0 %v3697
      %v3848 = vpop.f32.mrb[0].mxu0
      %v3849 = vadd.f32 0.0, %v3848
      %v3850 = vpop.f32.mrb[0].mxu0
      %3851 = vmatprep.mubr.f32.mxu0 0.0
      %3852 = vmatmul.mubr.f32.gmra.mrb[0].mxu0 %v3700
      %v3853 = vpop.f32.mrb[0].mxu0
      %v3854 = vadd.f32 0.0, %v3853
      %v3855 = vpop.f32.mrb[0].mxu0
      %3856 = vmatprep.mubr.f32.mxu0 0.0
      %3857 = vmatmul.mubr.f32.gmra.mrb[0].mxu0 %v3703
      %v3858 = vpop.f32.mrb[0].mxu0
      %v3859 = vadd.f32 0.0, %v3858
      %v3860 = vpop.f32.mrb[0].mxu0
      %3861 = vmatprep.mubr.f32.mxu0 0.0
      %3862 = vmatmul.mubr.f32.gmra.mrb[0].mxu0 %v3706
      %v3863 = vpop.f32.mrb[0].mxu0
      %v3864 = vadd.f32 0.0, %v3863
      %v3865 = vpop.f32.mrb[0].mxu0
      %3866 = vmatprep.mubr.f32.mxu0 0.0
      %3867 = vmatmul.mubr.f32.gmra.mrb[0].mxu0 %v3709
      %v3868 = vpop.f32.mrb[0].mxu0
      %v3869 = vadd.f32 0.0, %v3868
      %v3870 = vpop.f32.mrb[0].mxu0
      %3871 = vmatprep.mubr.f32.mxu0 0.0
      %3872 = vmatmul.mubr.f32.gmra.mrb[0].mxu0 %v3712
      %v3873 = vpop.f32.mrb[0].mxu0
      %v3874 = vadd.f32 0.0, %v3873
      %v3875 = vpop.f32.mrb[0].mxu0
      %3876 = vmatprep.mubr.f32.mxu0 0.0
      %3877 = vmatmul.mubr.f32.gmra.mrb[0].mxu0 %v3715
      %v3878 = vpop.f32.mrb[0].mxu0
      %v3879 = vadd.f32 0.0, %v3878
      %v3880 = vpop.f32.mrb[0].mxu0
      %3881 = vmatprep.mubr.f32.mxu0 0.0
      %3882 = vmatmul.mubr.f32.gmra.mrb[0].mxu0 %v3718
      %v3883 = vpop.f32.mrb[0].mxu0
      %v3884 = vadd.f32 0.0, %v3883
      %v3885 = vpop.f32.mrb[0].mxu0
      %3886 = vmatprep.mubr.f32.mxu0 0.0
      %3887 = vmatmul.mubr.f32.gmra.mrb[0].mxu0 %v3721
      %v3888 = vpop.f32.mrb[0].mxu0
      %v3889 = vadd.f32 0.0, %v3888
      %v3890 = vpop.f32.mrb[0].mxu0
      %3891 = vmatprep.mubr.f32.mxu0 0.0
      %3892 = vmatmul.mubr.f32.gmra.mrb[0].mxu0 %v3724
      %v3893 = vpop.f32.mrb[0].mxu0
      %v3894 = vadd.f32 0.0, %v3893
      %v3895 = vpop.f32.mrb[0].mxu0
      %3896 = vmatprep.mubr.f32.mxu0 0.0
      %3897 = vmatmul.mubr.f32.gmra.mrb[0].mxu0 %v3727
      %v3898 = vpop.f32.mrb[0].mxu0
      %v3899 = vadd.f32 0.0, %v3898
      %v3900 = vpop.f32.mrb[0].mxu0
      %3901 = vmatprep.mubr.f32.mxu0 0.0
      %3902 = vmatmul.mubr.f32.gmra.mrb[0].mxu0 %v3730
      %v3903 = vpop.f32.mrb[0].mxu0
      %v3904 = vadd.f32 0.0, %v3903
      %v3905 = vpop.f32.mrb[0].mxu0
      %3906 = vmatprep.mubr.f32.mxu0 0.0
      %3907 = vmatmul.mubr.f32.gmra.mrb[0].mxu0 %v3733
      %v3908 = vpop.f32.mrb[0].mxu0
      %v3909 = vadd.f32 0.0, %v3908
      %v3910 = vpop.f32.mrb[0].mxu0
      %3911 = vmatprep.mubr.f32.mxu0 0.0
      %3912 = vmatmul.mubr.f32.gmra.mrb[0].mxu0 %v3736
      %v3913 = vpop.f32.mrb[0].mxu0
      %v3914 = vadd.f32 0.0, %v3913
      %v3915 = vpop.f32.mrb[0].mxu0
      %3916 = vmatprep.mubr.f32.mxu0 0.0
      %3917 = vmatmul.mubr.f32.gmra.mrb[0].mxu0 %v3739
      %v3918 = vpop.f32.mrb[0].mxu0
      %v3919 = vadd.f32 0.0, %v3918
      %v3920 = vpop.f32.mrb[0].mxu0
      %3921 = vmatprep.mubr.f32.mxu0 0.0
      %3922 = vmatmul.mubr.f32.gmra.mrb[0].mxu0 %v3742
      %v3923 = vpop.f32.mrb[0].mxu0
      %v3924 = vadd.f32 0.0, %v3923
      %v3925 = vpop.f32.mrb[0].mxu0
      %3926 = vmatprep.mubr.f32.mxu0 0.0
      %3927 = vmatmul.mubr.f32.gmra.mrb[0].mxu0 %v3745
      %v3928 = vpop.f32.mrb[0].mxu0
      %v3929 = vadd.f32 0.0, %v3928
      %v3930 = vpop.f32.mrb[0].mxu0
      %3931 = vdwg.mxu0
      %v3933 = vsel %vm3589, %v3619, 0
      %v3936 = vsel %vm3589, %v3620, 0
      %v3939 = vsel %vm3589, %v3621, 0
      %v3942 = vsel %vm3589, %v3622, 0
      %v3945 = vsel %vm3589, %v3623, 0
      %v3948 = vsel %vm3589, %v3624, 0
      %v3951 = vsel %vm3589, %v3625, 0
      %v3954 = vsel %vm3589, %v3626, 0
      %v3957 = vsel %vm3589, %v3627, 0
      %v3960 = vsel %vm3589, %v3628, 0
      %v3963 = vsel %vm3589, %v3629, 0
      %v3966 = vsel %vm3589, %v3630, 0
      %v3969 = vsel %vm3589, %v3631, 0
      %v3972 = vsel %vm3589, %v3632, 0
      %v3975 = vsel %vm3589, %v3633, 0
      %v3978 = vsel %vm3589, %v3634, 0
      %v3981 = vsel %vm3589, %v3635, 0
      %v3984 = vsel %vm3589, %v3636, 0
      %v3987 = vsel %vm3589, %v3637, 0
      %v3990 = vsel %vm3589, %v3638, 0
      %v3993 = vsel %vm3589, %v3639, 0
      %v3996 = vsel %vm3589, %v3640, 0
      %v3999 = vsel %vm3589, %v3641, 0
      %v4002 = vsel %vm3589, %v3642, 0
      %4004 = vmatprep.subr.mxu0 0.0
      %4005 = vmatpush1.msra.mxu0 %v3643
      %4006 = vmatprep.subr.mxu0 0.0
      %4007 = vmatpush1.msra.mxu0 %v3644
      %4008 = vmatprep.subr.mxu0 0.0
      %4009 = vmatpush1.msra.mxu0 %v3645
      %4010 = vmatprep.subr.mxu0 0.0
      %4011 = vmatpush1.msra.mxu0 %v3646
      %4012 = vmatprep.subr.mxu0 0.0
      %4013 = vmatpush1.msra.mxu0 0.0
      %4014 = vmatprep.subr.mxu0 0.0
      %4015 = vmatpush1.msra.mxu0 0.0
      %4016 = vmatprep.subr.mxu0 0.0
      %4017 = vmatpush1.msra.mxu0 0.0
      %4018 = vmatprep.subr.mxu0 0.0
      %4019 = vmatpush1.msra.mxu0 0.0
      %4020 = vmatprep.subr.mxu0 0.0
      %4021 = vmatpush1.msra.mxu0 0.0
      %4022 = vmatprep.subr.mxu0 0.0
      %4023 = vmatpush1.msra.mxu0 0.0
      %4024 = vmatprep.subr.mxu0 0.0
      %4025 = vmatpush1.msra.mxu0 0.0
      %4026 = vmatprep.subr.mxu0 0.0
      %4027 = vmatpush1.msra.mxu0 0.0
      %4028 = vmatprep.subr.mxu0 0.0
      %4029 = vmatpush1.msra.mxu0 0.0
      %4030 = vmatprep.subr.mxu0 0.0
      %4031 = vmatpush1.msra.mxu0 0.0
      %4032 = vmatprep.subr.mxu0 0.0
      %4033 = vmatpush1.msra.mxu0 0.0
      %4034 = vmatprep.subr.mxu0 0.0
      %4035 = vmatpush1.msra.mxu0 0.0
      %4036 = vmatprep.subr.mxu0 0.0
      %4037 = vmatpush1.msra.mxu0 0.0
      %4038 = vmatprep.subr.mxu0 0.0
      %4039 = vmatpush1.msra.mxu0 0.0
      %4040 = vmatprep.subr.mxu0 0.0
      %4041 = vmatpush1.msra.mxu0 0.0
      %4042 = vmatprep.subr.mxu0 0.0
      %4043 = vmatpush1.msra.mxu0 0.0
      %4044 = vmatprep.subr.mxu0 0.0
      %4045 = vmatpush1.msra.mxu0 0.0
      %4046 = vmatprep.subr.mxu0 0.0
      %4047 = vmatpush1.msra.mxu0 0.0
      %4048 = vmatprep.subr.mxu0 0.0
      %4049 = vmatpush1.msra.mxu0 0.0
      %4050 = vmatprep.subr.mxu0 0.0
      %4051 = vmatpush1.msra.mxu0 0.0
      %4052 = vmatprep.subr.mxu0 0.0
      %4053 = vmatpush1.msra.mxu0 0.0
      %4054 = vmatprep.subr.mxu0 0.0
      %4055 = vmatpush1.msra.mxu0 0.0
      %4056 = vmatprep.subr.mxu0 0.0
      %4057 = vmatpush1.msra.mxu0 0.0
      %4058 = vmatprep.subr.mxu0 0.0
      %4059 = vmatpush1.msra.mxu0 0.0
      %4060 = vmatprep.subr.mxu0 0.0
      %4061 = vmatpush1.msra.mxu0 0.0
      %4062 = vmatprep.subr.mxu0 0.0
      %4063 = vmatpush1.msra.mxu0 0.0
      %4064 = vmatprep.subr.mxu0 0.0
      %4065 = vmatpush1.msra.mxu0 0.0
      %4066 = vmatprep.subr.mxu0 0.0
      %4067 = vmatpush1.msra.mxu0 0.0
      %4068 = vmatprep.mubr.f32.mxu0 0.0
      %4069 = vmatmul.mubr.f32.gmra.mrb[0].mxu0 %v3933
      %v4070 = vpop.f32.mrb[0].mxu0
      %v4071 = vadd.f32 %v3814, %v4070
      %v4072 = vpop.f32.mrb[0].mxu0
      %4073 = vmatprep.mubr.f32.mxu0 0.0
      %4074 = vmatmul.mubr.f32.gmra.mrb[0].mxu0 %v3936
      %v4075 = vpop.f32.mrb[0].mxu0
      %v4076 = vadd.f32 %v3819, %v4075
      %v4077 = vpop.f32.mrb[0].mxu0
      %4078 = vmatprep.mubr.f32.mxu0 0.0
      %4079 = vmatmul.mubr.f32.gmra.mrb[0].mxu0 %v3939
      %v4080 = vpop.f32.mrb[0].mxu0
      %v4081 = vadd.f32 %v3824, %v4080
      %v4082 = vpop.f32.mrb[0].mxu0
      %4083 = vmatprep.mubr.f32.mxu0 0.0
      %4084 = vmatmul.mubr.f32.gmra.mrb[0].mxu0 %v3942
      %v4085 = vpop.f32.mrb[0].mxu0
      %v4086 = vadd.f32 %v3829, %v4085
      %v4087 = vpop.f32.mrb[0].mxu0
      %4088 = vmatprep.mubr.f32.mxu0 0.0
      %4089 = vmatmul.mubr.f32.gmra.mrb[0].mxu0 %v3945
      %v4090 = vpop.f32.mrb[0].mxu0
      %v4091 = vadd.f32 %v3834, %v4090
      %v4092 = vpop.f32.mrb[0].mxu0
      %4093 = vmatprep.mubr.f32.mxu0 0.0
      %4094 = vmatmul.mubr.f32.gmra.mrb[0].mxu0 %v3948
      %v4095 = vpop.f32.mrb[0].mxu0
      %v4096 = vadd.f32 %v3839, %v4095
      %v4097 = vpop.f32.mrb[0].mxu0
      %4098 = vmatprep.mubr.f32.mxu0 0.0
      %4099 = vmatmul.mubr.f32.gmra.mrb[0].mxu0 %v3951
      %v4100 = vpop.f32.mrb[0].mxu0
      %v4101 = vadd.f32 %v3844, %v4100
      %v4102 = vpop.f32.mrb[0].mxu0
      %4103 = vmatprep.mubr.f32.mxu0 0.0
      %4104 = vmatmul.mubr.f32.gmra.mrb[0].mxu0 %v3954
      %v4105 = vpop.f32.mrb[0].mxu0
      %v4106 = vadd.f32 %v3849, %v4105
      %v4107 = vpop.f32.mrb[0].mxu0
      %4108 = vmatprep.mubr.f32.mxu0 0.0
      %4109 = vmatmul.mubr.f32.gmra.mrb[0].mxu0 %v3957
      %v4110 = vpop.f32.mrb[0].mxu0
      %v4111 = vadd.f32 %v3854, %v4110
      %v4112 = vpop.f32.mrb[0].mxu0
      %4113 = vmatprep.mubr.f32.mxu0 0.0
      %4114 = vmatmul.mubr.f32.gmra.mrb[0].mxu0 %v3960
      %v4115 = vpop.f32.mrb[0].mxu0
      %v4116 = vadd.f32 %v3859, %v4115
      %v4117 = vpop.f32.mrb[0].mxu0
      %4118 = vmatprep.mubr.f32.mxu0 0.0
      %4119 = vmatmul.mubr.f32.gmra.mrb[0].mxu0 %v3963
      %v4120 = vpop.f32.mrb[0].mxu0
      %v4121 = vadd.f32 %v3864, %v4120
      %v4122 = vpop.f32.mrb[0].mxu0
      %4123 = vmatprep.mubr.f32.mxu0 0.0
      %4124 = vmatmul.mubr.f32.gmra.mrb[0].mxu0 %v3966
      %v4125 = vpop.f32.mrb[0].mxu0
      %v4126 = vadd.f32 %v3869, %v4125
      %v4127 = vpop.f32.mrb[0].mxu0
      %4128 = vmatprep.mubr.f32.mxu0 0.0
      %4129 = vmatmul.mubr.f32.gmra.mrb[0].mxu0 %v3969
      %v4130 = vpop.f32.mrb[0].mxu0
      %v4131 = vadd.f32 %v3874, %v4130
      %v4132 = vpop.f32.mrb[0].mxu0
      %4133 = vmatprep.mubr.f32.mxu0 0.0
      %4134 = vmatmul.mubr.f32.gmra.mrb[0].mxu0 %v3972
      %v4135 = vpop.f32.mrb[0].mxu0
      %v4136 = vadd.f32 %v3879, %v4135
      %v4137 = vpop.f32.mrb[0].mxu0
      %4138 = vmatprep.mubr.f32.mxu0 0.0
      %4139 = vmatmul.mubr.f32.gmra.mrb[0].mxu0 %v3975
      %v4140 = vpop.f32.mrb[0].mxu0
      %v4141 = vadd.f32 %v3884, %v4140
      %v4142 = vpop.f32.mrb[0].mxu0
      %4143 = vmatprep.mubr.f32.mxu0 0.0
      %4144 = vmatmul.mubr.f32.gmra.mrb[0].mxu0 %v3978
      %v4145 = vpop.f32.mrb[0].mxu0
      %v4146 = vadd.f32 %v3889, %v4145
      %v4147 = vpop.f32.mrb[0].mxu0
      %4148 = vmatprep.mubr.f32.mxu0 0.0
      %4149 = vmatmul.mubr.f32.gmra.mrb[0].mxu0 %v3981
      %v4150 = vpop.f32.mrb[0].mxu0
      %v4151 = vadd.f32 %v3894, %v4150
      %v4152 = vpop.f32.mrb[0].mxu0
      %4153 = vmatprep.mubr.f32.mxu0 0.0
      %4154 = vmatmul.mubr.f32.gmra.mrb[0].mxu0 %v3984
      %v4155 = vpop.f32.mrb[0].mxu0
      %v4156 = vadd.f32 %v3899, %v4155
      %v4157 = vpop.f32.mrb[0].mxu0
      %4158 = vmatprep.mubr.f32.mxu0 0.0
      %4159 = vmatmul.mubr.f32.gmra.mrb[0].mxu0 %v3987
      %v4160 = vpop.f32.mrb[0].mxu0
      %v4161 = vadd.f32 %v3904, %v4160
      %v4162 = vpop.f32.mrb[0].mxu0
      %4163 = vmatprep.mubr.f32.mxu0 0.0
      %4164 = vmatmul.mubr.f32.gmra.mrb[0].mxu0 %v3990
      %v4165 = vpop.f32.mrb[0].mxu0
      %v4166 = vadd.f32 %v3909, %v4165
      %v4167 = vpop.f32.mrb[0].mxu0
      %4168 = vmatprep.mubr.f32.mxu0 0.0
      %4169 = vmatmul.mubr.f32.gmra.mrb[0].mxu0 %v3993
      %v4170 = vpop.f32.mrb[0].mxu0
      %v4171 = vadd.f32 %v3914, %v4170
      %v4172 = vpop.f32.mrb[0].mxu0
      %4173 = vmatprep.mubr.f32.mxu0 0.0
      %4174 = vmatmul.mubr.f32.gmra.mrb[0].mxu0 %v3996
      %v4175 = vpop.f32.mrb[0].mxu0
      %v4176 = vadd.f32 %v3919, %v4175
      %v4177 = vpop.f32.mrb[0].mxu0
      %4178 = vmatprep.mubr.f32.mxu0 0.0
      %4179 = vmatmul.mubr.f32.gmra.mrb[0].mxu0 %v3999
      %v4180 = vpop.f32.mrb[0].mxu0
      %v4181 = vadd.f32 %v3924, %v4180
      %v4182 = vpop.f32.mrb[0].mxu0
      %4183 = vmatprep.mubr.f32.mxu0 0.0
      %4184 = vmatmul.mubr.f32.gmra.mrb[0].mxu0 %v4002
      %v4185 = vpop.f32.mrb[0].mxu0
      %v4186 = vadd.f32 %v3929, %v4185
      %v4187 = vpop.f32.mrb[0].mxu0
      %4188 = vdwg.mxu0
      %v4189 = vld [vmem:[#allocation2 + $0x2] sm:$0xff]
      %v4190 = vld [vmem:[#allocation2 + $0xa] sm:$0xff]
      %v4191 = vld [vmem:[#allocation2 + $0x12] sm:$0xff]
      %v4192 = vld [vmem:[#allocation2 + $0x1a] sm:$0xff]
      %v4193 = vld [vmem:[#allocation2 + $0x22] sm:$0xff]
      %v4194 = vld [vmem:[#allocation2 + $0x2a] sm:$0xff]
      %v4195 = vld [vmem:[#allocation2 + $0x32] sm:$0xff]
      %v4196 = vld [vmem:[#allocation2 + $0x3a] sm:$0xff]
      %v4197 = vld [vmem:[#allocation2 + $0x42] sm:$0xff]
      %v4198 = vld [vmem:[#allocation2 + $0x4a] sm:$0xff]
      %v4199 = vld [vmem:[#allocation2 + $0x52] sm:$0xff]
      %v4200 = vld [vmem:[#allocation2 + $0x5a] sm:$0xff]
      %v4201 = vld [vmem:[#allocation2 + $0x62] sm:$0xff]
      %v4202 = vld [vmem:[#allocation2 + $0x6a] sm:$0xff]
      %v4203 = vld [vmem:[#allocation2 + $0x72] sm:$0xff]
      %v4204 = vld [vmem:[#allocation2 + $0x7a] sm:$0xff]
      %v4205 = vld [vmem:[#allocation2 + $0x82] sm:$0xff]
      %v4206 = vld [vmem:[#allocation2 + $0x8a] sm:$0xff]
      %v4207 = vld [vmem:[#allocation2 + $0x92] sm:$0xff]
      %v4208 = vld [vmem:[#allocation2 + $0x9a] sm:$0xff]
      %v4209 = vld [vmem:[#allocation2 + $0xa2] sm:$0xff]
      %v4210 = vld [vmem:[#allocation2 + $0xaa] sm:$0xff]
      %v4211 = vld [vmem:[#allocation2 + $0xb2] sm:$0xff]
      %v4212 = vld [vmem:[#allocation2 + $0xba] sm:$0xf]
      %v4213 = vld [vmem:[%s3 + $0x40] sm:$0xff]
      %v4214 = vld [vmem:[%s3 + $0x48] sm:$0xff]
      %v4215 = vld [vmem:[%s3 + $0x50] sm:$0xff]
      %v4216 = vld [vmem:[%s3 + $0x58] sm:$0xff]
      %v4218 = vsel %vm3589, %v4189, 0
      %v4221 = vsel %vm3589, %v4190, 0
      %v4224 = vsel %vm3589, %v4191, 0
      %v4227 = vsel %vm3589, %v4192, 0
      %v4230 = vsel %vm3589, %v4193, 0
      %v4233 = vsel %vm3589, %v4194, 0
      %v4236 = vsel %vm3589, %v4195, 0
      %v4239 = vsel %vm3589, %v4196, 0
      %v4242 = vsel %vm3589, %v4197, 0
      %v4245 = vsel %vm3589, %v4198, 0
      %v4248 = vsel %vm3589, %v4199, 0
      %v4251 = vsel %vm3589, %v4200, 0
      %v4254 = vsel %vm3589, %v4201, 0
      %v4257 = vsel %vm3589, %v4202, 0
      %v4260 = vsel %vm3589, %v4203, 0
      %v4263 = vsel %vm3589, %v4204, 0
      %v4266 = vsel %vm3589, %v4205, 0
      %v4269 = vsel %vm3589, %v4206, 0
      %v4272 = vsel %vm3589, %v4207, 0
      %v4275 = vsel %vm3589, %v4208, 0
      %v4278 = vsel %vm3589, %v4209, 0
      %v4281 = vsel %vm3589, %v4210, 0
      %v4284 = vsel %vm3589, %v4211, 0
      %v4287 = vsel %vm3589, %v4212, 0
      %4289 = vmatprep.subr.mxu0 0.0
      %4290 = vmatpush1.msra.mxu0 %v4213
      %4291 = vmatprep.subr.mxu0 0.0
      %4292 = vmatpush1.msra.mxu0 %v4214
      %4293 = vmatprep.subr.mxu0 0.0
      %4294 = vmatpush1.msra.mxu0 %v4215
      %4295 = vmatprep.subr.mxu0 0.0
      %4296 = vmatpush1.msra.mxu0 %v4216
      %4297 = vmatprep.subr.mxu0 0.0
      %4298 = vmatpush1.msra.mxu0 0.0
      %4299 = vmatprep.subr.mxu0 0.0
      %4300 = vmatpush1.msra.mxu0 0.0
      %4301 = vmatprep.subr.mxu0 0.0
      %4302 = vmatpush1.msra.mxu0 0.0
      %4303 = vmatprep.subr.mxu0 0.0
      %4304 = vmatpush1.msra.mxu0 0.0
      %4305 = vmatprep.subr.mxu0 0.0
      %4306 = vmatpush1.msra.mxu0 0.0
      %4307 = vmatprep.subr.mxu0 0.0
      %4308 = vmatpush1.msra.mxu0 0.0
      %4309 = vmatprep.subr.mxu0 0.0
      %4310 = vmatpush1.msra.mxu0 0.0
      %4311 = vmatprep.subr.mxu0 0.0
      %4312 = vmatpush1.msra.mxu0 0.0
      %4313 = vmatprep.subr.mxu0 0.0
      %4314 = vmatpush1.msra.mxu0 0.0
      %4315 = vmatprep.subr.mxu0 0.0
      %4316 = vmatpush1.msra.mxu0 0.0
      %4317 = vmatprep.subr.mxu0 0.0
      %4318 = vmatpush1.msra.mxu0 0.0
      %4319 = vmatprep.subr.mxu0 0.0
      %4320 = vmatpush1.msra.mxu0 0.0
      %4321 = vmatprep.subr.mxu0 0.0
      %4322 = vmatpush1.msra.mxu0 0.0
      %4323 = vmatprep.subr.mxu0 0.0
      %4324 = vmatpush1.msra.mxu0 0.0
      %4325 = vmatprep.subr.mxu0 0.0
      %4326 = vmatpush1.msra.mxu0 0.0
      %4327 = vmatprep.subr.mxu0 0.0
      %4328 = vmatpush1.msra.mxu0 0.0
      %4329 = vmatprep.subr.mxu0 0.0
      %4330 = vmatpush1.msra.mxu0 0.0
      %4331 = vmatprep.subr.mxu0 0.0
      %4332 = vmatpush1.msra.mxu0 0.0
      %4333 = vmatprep.subr.mxu0 0.0
      %4334 = vmatpush1.msra.mxu0 0.0
      %4335 = vmatprep.subr.mxu0 0.0
      %4336 = vmatpush1.msra.mxu0 0.0
      %4337 = vmatprep.subr.mxu0 0.0
      %4338 = vmatpush1.msra.mxu0 0.0
      %4339 = vmatprep.subr.mxu0 0.0
      %4340 = vmatpush1.msra.mxu0 0.0
      %4341 = vmatprep.subr.mxu0 0.0
      %4342 = vmatpush1.msra.mxu0 0.0
      %4343 = vmatprep.subr.mxu0 0.0
      %4344 = vmatpush1.msra.mxu0 0.0
      %4345 = vmatprep.subr.mxu0 0.0
      %4346 = vmatpush1.msra.mxu0 0.0
      %4347 = vmatprep.subr.mxu0 0.0
      %4348 = vmatpush1.msra.mxu0 0.0
      %4349 = vmatprep.subr.mxu0 0.0
      %4350 = vmatpush1.msra.mxu0 0.0
      %4351 = vmatprep.subr.mxu0 0.0
      %4352 = vmatpush1.msra.mxu0 0.0
      %4353 = vmatprep.mubr.f32.mxu0 0.0
      %4354 = vmatmul.mubr.f32.gmra.mrb[0].mxu0 %v4218
      %v4355 = vpop.f32.mrb[0].mxu0
      %v4356 = vadd.f32 0.0, %v4355
      %v4357 = vpop.f32.mrb[0].mxu0
      %4358 = vmatprep.mubr.f32.mxu0 0.0
      %4359 = vmatmul.mubr.f32.gmra.mrb[0].mxu0 %v4221
      %v4360 = vpop.f32.mrb[0].mxu0
      %v4361 = vadd.f32 0.0, %v4360
      %v4362 = vpop.f32.mrb[0].mxu0
      %4363 = vmatprep.mubr.f32.mxu0 0.0
      %4364 = vmatmul.mubr.f32.gmra.mrb[0].mxu0 %v4224
      %v4365 = vpop.f32.mrb[0].mxu0
      %v4366 = vadd.f32 0.0, %v4365
      %v4367 = vpop.f32.mrb[0].mxu0
      %4368 = vmatprep.mubr.f32.mxu0 0.0
      %4369 = vmatmul.mubr.f32.gmra.mrb[0].mxu0 %v4227
      %v4370 = vpop.f32.mrb[0].mxu0
      %v4371 = vadd.f32 0.0, %v4370
      %v4372 = vpop.f32.mrb[0].mxu0
      %4373 = vmatprep.mubr.f32.mxu0 0.0
      %4374 = vmatmul.mubr.f32.gmra.mrb[0].mxu0 %v4230
      %v4375 = vpop.f32.mrb[0].mxu0
      %v4376 = vadd.f32 0.0, %v4375
      %v4377 = vpop.f32.mrb[0].mxu0
      %4378 = vmatprep.mubr.f32.mxu0 0.0
      %4379 = vmatmul.mubr.f32.gmra.mrb[0].mxu0 %v4233
      %v4380 = vpop.f32.mrb[0].mxu0
      %v4381 = vadd.f32 0.0, %v4380
      %v4382 = vpop.f32.mrb[0].mxu0
      %4383 = vmatprep.mubr.f32.mxu0 0.0
      %4384 = vmatmul.mubr.f32.gmra.mrb[0].mxu0 %v4236
      %v4385 = vpop.f32.mrb[0].mxu0
      %v4386 = vadd.f32 0.0, %v4385
      %v4387 = vpop.f32.mrb[0].mxu0
      %4388 = vmatprep.mubr.f32.mxu0 0.0
      %4389 = vmatmul.mubr.f32.gmra.mrb[0].mxu0 %v4239
      %v4390 = vpop.f32.mrb[0].mxu0
      %v4391 = vadd.f32 0.0, %v4390
      %v4392 = vpop.f32.mrb[0].mxu0
      %4393 = vmatprep.mubr.f32.mxu0 0.0
      %4394 = vmatmul.mubr.f32.gmra.mrb[0].mxu0 %v4242
      %v4395 = vpop.f32.mrb[0].mxu0
      %v4396 = vadd.f32 0.0, %v4395
      %v4397 = vpop.f32.mrb[0].mxu0
      %4398 = vmatprep.mubr.f32.mxu0 0.0
      %4399 = vmatmul.mubr.f32.gmra.mrb[0].mxu0 %v4245
      %v4400 = vpop.f32.mrb[0].mxu0
      %v4401 = vadd.f32 0.0, %v4400
      %v4402 = vpop.f32.mrb[0].mxu0
      %4403 = vmatprep.mubr.f32.mxu0 0.0
      %4404 = vmatmul.mubr.f32.gmra.mrb[0].mxu0 %v4248
      %v4405 = vpop.f32.mrb[0].mxu0
      %v4406 = vadd.f32 0.0, %v4405
      %v4407 = vpop.f32.mrb[0].mxu0
      %4408 = vmatprep.mubr.f32.mxu0 0.0
      %4409 = vmatmul.mubr.f32.gmra.mrb[0].mxu0 %v4251
      %v4410 = vpop.f32.mrb[0].mxu0
      %v4411 = vadd.f32 0.0, %v4410
      %v4412 = vpop.f32.mrb[0].mxu0
      %4413 = vmatprep.mubr.f32.mxu0 0.0
      %4414 = vmatmul.mubr.f32.gmra.mrb[0].mxu0 %v4254
      %v4415 = vpop.f32.mrb[0].mxu0
      %v4416 = vadd.f32 0.0, %v4415
      %v4417 = vpop.f32.mrb[0].mxu0
      %4418 = vmatprep.mubr.f32.mxu0 0.0
      %4419 = vmatmul.mubr.f32.gmra.mrb[0].mxu0 %v4257
      %v4420 = vpop.f32.mrb[0].mxu0
      %v4421 = vadd.f32 0.0, %v4420
      %v4422 = vpop.f32.mrb[0].mxu0
      %4423 = vmatprep.mubr.f32.mxu0 0.0
      %4424 = vmatmul.mubr.f32.gmra.mrb[0].mxu0 %v4260
      %v4425 = vpop.f32.mrb[0].mxu0
      %v4426 = vadd.f32 0.0, %v4425
      %v4427 = vpop.f32.mrb[0].mxu0
      %4428 = vmatprep.mubr.f32.mxu0 0.0
      %4429 = vmatmul.mubr.f32.gmra.mrb[0].mxu0 %v4263
      %v4430 = vpop.f32.mrb[0].mxu0
      %v4431 = vadd.f32 0.0, %v4430
      %v4432 = vpop.f32.mrb[0].mxu0
      %4433 = vmatprep.mubr.f32.mxu0 0.0
      %4434 = vmatmul.mubr.f32.gmra.mrb[0].mxu0 %v4266
      %v4435 = vpop.f32.mrb[0].mxu0
      %v4436 = vadd.f32 0.0, %v4435
      %v4437 = vpop.f32.mrb[0].mxu0
      %4438 = vmatprep.mubr.f32.mxu0 0.0
      %4439 = vmatmul.mubr.f32.gmra.mrb[0].mxu0 %v4269
      %v4440 = vpop.f32.mrb[0].mxu0
      %v4441 = vadd.f32 0.0, %v4440
      %v4442 = vpop.f32.mrb[0].mxu0
      %4443 = vmatprep.mubr.f32.mxu0 0.0
      %4444 = vmatmul.mubr.f32.gmra.mrb[0].mxu0 %v4272
      %v4445 = vpop.f32.mrb[0].mxu0
      %v4446 = vadd.f32 0.0, %v4445
      %v4447 = vpop.f32.mrb[0].mxu0
      %4448 = vmatprep.mubr.f32.mxu0 0.0
      %4449 = vmatmul.mubr.f32.gmra.mrb[0].mxu0 %v4275
      %v4450 = vpop.f32.mrb[0].mxu0
      %v4451 = vadd.f32 0.0, %v4450
      %v4452 = vpop.f32.mrb[0].mxu0
      %4453 = vmatprep.mubr.f32.mxu0 0.0
      %4454 = vmatmul.mubr.f32.gmra.mrb[0].mxu0 %v4278
      %v4455 = vpop.f32.mrb[0].mxu0
      %v4456 = vadd.f32 0.0, %v4455
      %v4457 = vpop.f32.mrb[0].mxu0
      %4458 = vmatprep.mubr.f32.mxu0 0.0
      %4459 = vmatmul.mubr.f32.gmra.mrb[0].mxu0 %v4281
      %v4460 = vpop.f32.mrb[0].mxu0
      %v4461 = vadd.f32 0.0, %v4460
      %v4462 = vpop.f32.mrb[0].mxu0
      %4463 = vmatprep.mubr.f32.mxu0 0.0
      %4464 = vmatmul.mubr.f32.gmra.mrb[0].mxu0 %v4284
      %v4465 = vpop.f32.mrb[0].mxu0
      %v4466 = vadd.f32 0.0, %v4465
      %v4467 = vpop.f32.mrb[0].mxu0
      %4468 = vmatprep.mubr.f32.mxu0 0.0
      %4469 = vmatmul.mubr.f32.gmra.mrb[0].mxu0 %v4287
      %v4470 = vpop.f32.mrb[0].mxu0
      %v4471 = vadd.f32 0.0, %v4470
      %v4472 = vpop.f32.mrb[0].mxu0
      %4473 = vdwg.mxu0
      %v4474 = vadd.f32 %v4071, %v4356
      %v4475 = vadd.f32 %v4076, %v4361
      %v4476 = vadd.f32 %v4081, %v4366
      %v4477 = vadd.f32 %v4086, %v4371
      %v4478 = vadd.f32 %v4091, %v4376
      %v4479 = vadd.f32 %v4096, %v4381
      %v4480 = vadd.f32 %v4101, %v4386
      %v4481 = vadd.f32 %v4106, %v4391
      %v4482 = vadd.f32 %v4111, %v4396
      %v4483 = vadd.f32 %v4116, %v4401
      %v4484 = vadd.f32 %v4121, %v4406
      %v4485 = vadd.f32 %v4126, %v4411
      %v4486 = vadd.f32 %v4131, %v4416
      %v4487 = vadd.f32 %v4136, %v4421
      %v4488 = vadd.f32 %v4141, %v4426
      %v4489 = vadd.f32 %v4146, %v4431
      %v4490 = vadd.f32 %v4151, %v4436
      %v4491 = vadd.f32 %v4156, %v4441
      %v4492 = vadd.f32 %v4161, %v4446
      %v4493 = vadd.f32 %v4166, %v4451
      %v4494 = vadd.f32 %v4171, %v4456
      %v4495 = vadd.f32 %v4176, %v4461
      %v4496 = vadd.f32 %v4181, %v4466
      %v4497 = vadd.f32 %v4186, %v4471
      %v4498 = vld [vmem:[#allocation2 + $0x10] sm:$0xff]
      %v4499 = vld [vmem:[#allocation2 + $0x18] sm:$0xff]
      %v4500 = vld [vmem:[#allocation2 + $0x20] sm:$0xff]
      %v4501 = vld [vmem:[#allocation2 + $0x28] sm:$0xff]
      %v4502 = vld [vmem:[#allocation2 + $0x30] sm:$0xff]
      %v4503 = vld [vmem:[#allocation2 + $0x38] sm:$0xff]
      %v4504 = vld [vmem:[#allocation2 + $0x40] sm:$0xff]
      %v4505 = vld [vmem:[#allocation2 + $0x48] sm:$0xff]
      %v4506 = vld [vmem:[#allocation2 + $0x50] sm:$0xff]
      %v4507 = vld [vmem:[#allocation2 + $0x58] sm:$0xff]
      %v4508 = vld [vmem:[#allocation2 + $0x60] sm:$0xff]
      %v4509 = vld [vmem:[#allocation2 + $0x68] sm:$0xff]
      %v4510 = vld [vmem:[#allocation2 + $0x70] sm:$0xff]
      %v4511 = vld [vmem:[#allocation2 + $0x78] sm:$0xff]
      %v4512 = vld [vmem:[#allocation2 + $0x80] sm:$0xff]
      %v4513 = vld [vmem:[#allocation2 + $0x88] sm:$0xff]
      %v4514 = vld [vmem:[#allocation2 + $0x90] sm:$0xff]
      %v4515 = vld [vmem:[#allocation2 + $0x98] sm:$0xff]
      %v4516 = vld [vmem:[#allocation2 + $0xa0] sm:$0xff]
      %v4517 = vld [vmem:[#allocation2 + $0xa8] sm:$0xff]
      %v4518 = vld [vmem:[#allocation2 + $0xb0] sm:$0xff]
      %v4519 = vld [vmem:[#allocation2 + $0xb8] sm:$0xff]
      %v4520 = vld [vmem:[#allocation2 + $0xc0] sm:$0xff]
      %v4521 = vld [vmem:[#allocation2 + $0xc8] sm:$0xf]
      %v4522 = vld [vmem:[%s3 + $0x60] sm:$0xff]
      %v4523 = vld [vmem:[%s3 + $0x68] sm:$0xff]
      %v4524 = vld [vmem:[%s3 + $0x70] sm:$0xff]
      %v4525 = vld [vmem:[%s3 + $0x78] sm:$0xff]
      %v4527 = vsel %vm3589, %v4498, 0
      %v4530 = vsel %vm3589, %v4499, 0
      %v4533 = vsel %vm3589, %v4500, 0
      %v4536 = vsel %vm3589, %v4501, 0
      %v4539 = vsel %vm3589, %v4502, 0
      %v4542 = vsel %vm3589, %v4503, 0
      %v4545 = vsel %vm3589, %v4504, 0
      %v4548 = vsel %vm3589, %v4505, 0
      %v4551 = vsel %vm3589, %v4506, 0
      %v4554 = vsel %vm3589, %v4507, 0
      %v4557 = vsel %vm3589, %v4508, 0
      %v4560 = vsel %vm3589, %v4509, 0
      %v4563 = vsel %vm3589, %v4510, 0
      %v4566 = vsel %vm3589, %v4511, 0
      %v4569 = vsel %vm3589, %v4512, 0
      %v4572 = vsel %vm3589, %v4513, 0
      %v4575 = vsel %vm3589, %v4514, 0
      %v4578 = vsel %vm3589, %v4515, 0
      %v4581 = vsel %vm3589, %v4516, 0
      %v4584 = vsel %vm3589, %v4517, 0
      %v4587 = vsel %vm3589, %v4518, 0
      %v4590 = vsel %vm3589, %v4519, 0
      %v4593 = vsel %vm3589, %v4520, 0
      %v4596 = vsel %vm3589, %v4521, 0
      %4598 = vmatprep.subr.mxu0 0.0
      %4599 = vmatpush1.msra.mxu0 %v4522
      %4600 = vmatprep.subr.mxu0 0.0
      %4601 = vmatpush1.msra.mxu0 %v4523
      %4602 = vmatprep.subr.mxu0 0.0
      %4603 = vmatpush1.msra.mxu0 %v4524
      %4604 = vmatprep.subr.mxu0 0.0
      %4605 = vmatpush1.msra.mxu0 %v4525
      %4606 = vmatprep.subr.mxu0 0.0
      %4607 = vmatpush1.msra.mxu0 0.0
      %4608 = vmatprep.subr.mxu0 0.0
      %4609 = vmatpush1.msra.mxu0 0.0
      %4610 = vmatprep.subr.mxu0 0.0
      %4611 = vmatpush1.msra.mxu0 0.0
      %4612 = vmatprep.subr.mxu0 0.0
      %4613 = vmatpush1.msra.mxu0 0.0
      %4614 = vmatprep.subr.mxu0 0.0
      %4615 = vmatpush1.msra.mxu0 0.0
      %4616 = vmatprep.subr.mxu0 0.0
      %4617 = vmatpush1.msra.mxu0 0.0
      %4618 = vmatprep.subr.mxu0 0.0
      %4619 = vmatpush1.msra.mxu0 0.0
      %4620 = vmatprep.subr.mxu0 0.0
      %4621 = vmatpush1.msra.mxu0 0.0
      %4622 = vmatprep.subr.mxu0 0.0
      %4623 = vmatpush1.msra.mxu0 0.0
      %4624 = vmatprep.subr.mxu0 0.0
      %4625 = vmatpush1.msra.mxu0 0.0
      %4626 = vmatprep.subr.mxu0 0.0
      %4627 = vmatpush1.msra.mxu0 0.0
      %4628 = vmatprep.subr.mxu0 0.0
      %4629 = vmatpush1.msra.mxu0 0.0
      %4630 = vmatprep.subr.mxu0 0.0
      %4631 = vmatpush1.msra.mxu0 0.0
      %4632 = vmatprep.subr.mxu0 0.0
      %4633 = vmatpush1.msra.mxu0 0.0
      %4634 = vmatprep.subr.mxu0 0.0
      %4635 = vmatpush1.msra.mxu0 0.0
      %4636 = vmatprep.subr.mxu0 0.0
      %4637 = vmatpush1.msra.mxu0 0.0
      %4638 = vmatprep.subr.mxu0 0.0
      %4639 = vmatpush1.msra.mxu0 0.0
      %4640 = vmatprep.subr.mxu0 0.0
      %4641 = vmatpush1.msra.mxu0 0.0
      %4642 = vmatprep.subr.mxu0 0.0
      %4643 = vmatpush1.msra.mxu0 0.0
      %4644 = vmatprep.subr.mxu0 0.0
      %4645 = vmatpush1.msra.mxu0 0.0
      %4646 = vmatprep.subr.mxu0 0.0
      %4647 = vmatpush1.msra.mxu0 0.0
      %4648 = vmatprep.subr.mxu0 0.0
      %4649 = vmatpush1.msra.mxu0 0.0
      %4650 = vmatprep.subr.mxu0 0.0
      %4651 = vmatpush1.msra.mxu0 0.0
      %4652 = vmatprep.subr.mxu0 0.0
      %4653 = vmatpush1.msra.mxu0 0.0
      %4654 = vmatprep.subr.mxu0 0.0
      %4655 = vmatpush1.msra.mxu0 0.0
      %4656 = vmatprep.subr.mxu0 0.0
      %4657 = vmatpush1.msra.mxu0 0.0
      %4658 = vmatprep.subr.mxu0 0.0
      %4659 = vmatpush1.msra.mxu0 0.0
      %4660 = vmatprep.subr.mxu0 0.0
      %4661 = vmatpush1.msra.mxu0 0.0
      %4662 = vmatprep.mubr.f32.mxu0 0.0
      %4663 = vmatmul.mubr.f32.gmra.mrb[0].mxu0 %v4527
      %v4664 = vpop.f32.mrb[0].mxu0
      %v4665 = vadd.f32 0.0, %v4664
      %v4666 = vpop.f32.mrb[0].mxu0
      %4667 = vmatprep.mubr.f32.mxu0 0.0
      %4668 = vmatmul.mubr.f32.gmra.mrb[0].mxu0 %v4530
      %v4669 = vpop.f32.mrb[0].mxu0
      %v4670 = vadd.f32 0.0, %v4669
      %v4671 = vpop.f32.mrb[0].mxu0
      %4672 = vmatprep.mubr.f32.mxu0 0.0
      %4673 = vmatmul.mubr.f32.gmra.mrb[0].mxu0 %v4533
      %v4674 = vpop.f32.mrb[0].mxu0
      %v4675 = vadd.f32 0.0, %v4674
      %v4676 = vpop.f32.mrb[0].mxu0
      %4677 = vmatprep.mubr.f32.mxu0 0.0
      %4678 = vmatmul.mubr.f32.gmra.mrb[0].mxu0 %v4536
      %v4679 = vpop.f32.mrb[0].mxu0
      %v4680 = vadd.f32 0.0, %v4679
      %v4681 = vpop.f32.mrb[0].mxu0
      %4682 = vmatprep.mubr.f32.mxu0 0.0
      %4683 = vmatmul.mubr.f32.gmra.mrb[0].mxu0 %v4539
      %v4684 = vpop.f32.mrb[0].mxu0
      %v4685 = vadd.f32 0.0, %v4684
      %v4686 = vpop.f32.mrb[0].mxu0
      %4687 = vmatprep.mubr.f32.mxu0 0.0
      %4688 = vmatmul.mubr.f32.gmra.mrb[0].mxu0 %v4542
      %v4689 = vpop.f32.mrb[0].mxu0
      %v4690 = vadd.f32 0.0, %v4689
      %v4691 = vpop.f32.mrb[0].mxu0
      %4692 = vmatprep.mubr.f32.mxu0 0.0
      %4693 = vmatmul.mubr.f32.gmra.mrb[0].mxu0 %v4545
      %v4694 = vpop.f32.mrb[0].mxu0
      %v4695 = vadd.f32 0.0, %v4694
      %v4696 = vpop.f32.mrb[0].mxu0
      %4697 = vmatprep.mubr.f32.mxu0 0.0
      %4698 = vmatmul.mubr.f32.gmra.mrb[0].mxu0 %v4548
      %v4699 = vpop.f32.mrb[0].mxu0
      %v4700 = vadd.f32 0.0, %v4699
      %v4701 = vpop.f32.mrb[0].mxu0
      %4702 = vmatprep.mubr.f32.mxu0 0.0
      %4703 = vmatmul.mubr.f32.gmra.mrb[0].mxu0 %v4551
      %v4704 = vpop.f32.mrb[0].mxu0
      %v4705 = vadd.f32 0.0, %v4704
      %v4706 = vpop.f32.mrb[0].mxu0
      %4707 = vmatprep.mubr.f32.mxu0 0.0
      %4708 = vmatmul.mubr.f32.gmra.mrb[0].mxu0 %v4554
      %v4709 = vpop.f32.mrb[0].mxu0
      %v4710 = vadd.f32 0.0, %v4709
      %v4711 = vpop.f32.mrb[0].mxu0
      %4712 = vmatprep.mubr.f32.mxu0 0.0
      %4713 = vmatmul.mubr.f32.gmra.mrb[0].mxu0 %v4557
      %v4714 = vpop.f32.mrb[0].mxu0
      %v4715 = vadd.f32 0.0, %v4714
      %v4716 = vpop.f32.mrb[0].mxu0
      %4717 = vmatprep.mubr.f32.mxu0 0.0
      %4718 = vmatmul.mubr.f32.gmra.mrb[0].mxu0 %v4560
      %v4719 = vpop.f32.mrb[0].mxu0
      %v4720 = vadd.f32 0.0, %v4719
      %v4721 = vpop.f32.mrb[0].mxu0
      %4722 = vmatprep.mubr.f32.mxu0 0.0
      %4723 = vmatmul.mubr.f32.gmra.mrb[0].mxu0 %v4563
      %v4724 = vpop.f32.mrb[0].mxu0
      %v4725 = vadd.f32 0.0, %v4724
      %v4726 = vpop.f32.mrb[0].mxu0
      %4727 = vmatprep.mubr.f32.mxu0 0.0
      %4728 = vmatmul.mubr.f32.gmra.mrb[0].mxu0 %v4566
      %v4729 = vpop.f32.mrb[0].mxu0
      %v4730 = vadd.f32 0.0, %v4729
      %v4731 = vpop.f32.mrb[0].mxu0
      %4732 = vmatprep.mubr.f32.mxu0 0.0
      %4733 = vmatmul.mubr.f32.gmra.mrb[0].mxu0 %v4569
      %v4734 = vpop.f32.mrb[0].mxu0
      %v4735 = vadd.f32 0.0, %v4734
      %v4736 = vpop.f32.mrb[0].mxu0
      %4737 = vmatprep.mubr.f32.mxu0 0.0
      %4738 = vmatmul.mubr.f32.gmra.mrb[0].mxu0 %v4572
      %v4739 = vpop.f32.mrb[0].mxu0
      %v4740 = vadd.f32 0.0, %v4739
      %v4741 = vpop.f32.mrb[0].mxu0
      %4742 = vmatprep.mubr.f32.mxu0 0.0
      %4743 = vmatmul.mubr.f32.gmra.mrb[0].mxu0 %v4575
      %v4744 = vpop.f32.mrb[0].mxu0
      %v4745 = vadd.f32 0.0, %v4744
      %v4746 = vpop.f32.mrb[0].mxu0
      %4747 = vmatprep.mubr.f32.mxu0 0.0
      %4748 = vmatmul.mubr.f32.gmra.mrb[0].mxu0 %v4578
      %v4749 = vpop.f32.mrb[0].mxu0
      %v4750 = vadd.f32 0.0, %v4749
      %v4751 = vpop.f32.mrb[0].mxu0
      %4752 = vmatprep.mubr.f32.mxu0 0.0
      %4753 = vmatmul.mubr.f32.gmra.mrb[0].mxu0 %v4581
      %v4754 = vpop.f32.mrb[0].mxu0
      %v4755 = vadd.f32 0.0, %v4754
      %v4756 = vpop.f32.mrb[0].mxu0
      %4757 = vmatprep.mubr.f32.mxu0 0.0
      %4758 = vmatmul.mubr.f32.gmra.mrb[0].mxu0 %v4584
      %v4759 = vpop.f32.mrb[0].mxu0
      %v4760 = vadd.f32 0.0, %v4759
      %v4761 = vpop.f32.mrb[0].mxu0
      %4762 = vmatprep.mubr.f32.mxu0 0.0
      %4763 = vmatmul.mubr.f32.gmra.mrb[0].mxu0 %v4587
      %v4764 = vpop.f32.mrb[0].mxu0
      %v4765 = vadd.f32 0.0, %v4764
      %v4766 = vpop.f32.mrb[0].mxu0
      %4767 = vmatprep.mubr.f32.mxu0 0.0
      %4768 = vmatmul.mubr.f32.gmra.mrb[0].mxu0 %v4590
      %v4769 = vpop.f32.mrb[0].mxu0
      %v4770 = vadd.f32 0.0, %v4769
      %v4771 = vpop.f32.mrb[0].mxu0
      %4772 = vmatprep.mubr.f32.mxu0 0.0
      %4773 = vmatmul.mubr.f32.gmra.mrb[0].mxu0 %v4593
      %v4774 = vpop.f32.mrb[0].mxu0
      %v4775 = vadd.f32 0.0, %v4774
      %v4776 = vpop.f32.mrb[0].mxu0
      %4777 = vmatprep.mubr.f32.mxu0 0.0
      %4778 = vmatmul.mubr.f32.gmra.mrb[0].mxu0 %v4596
      %v4779 = vpop.f32.mrb[0].mxu0
      %v4780 = vadd.f32 0.0, %v4779
      %v4781 = vpop.f32.mrb[0].mxu0
      %4782 = vdwg.mxu0
      %v4783 = vadd.f32 %v4474, %v4665
      %v4784 = vadd.f32 %v4475, %v4670
      %v4785 = vadd.f32 %v4476, %v4675
      %v4786 = vadd.f32 %v4477, %v4680
      %v4787 = vadd.f32 %v4478, %v4685
      %v4788 = vadd.f32 %v4479, %v4690
      %v4789 = vadd.f32 %v4480, %v4695
      %v4790 = vadd.f32 %v4481, %v4700
      %v4791 = vadd.f32 %v4482, %v4705
      %v4792 = vadd.f32 %v4483, %v4710
      %v4793 = vadd.f32 %v4484, %v4715
      %v4794 = vadd.f32 %v4485, %v4720
      %v4795 = vadd.f32 %v4486, %v4725
      %v4796 = vadd.f32 %v4487, %v4730
      %v4797 = vadd.f32 %v4488, %v4735
      %v4798 = vadd.f32 %v4489, %v4740
      %v4799 = vadd.f32 %v4490, %v4745
      %v4800 = vadd.f32 %v4491, %v4750
      %v4801 = vadd.f32 %v4492, %v4755
      %v4802 = vadd.f32 %v4493, %v4760
      %v4803 = vadd.f32 %v4494, %v4765
      %v4804 = vadd.f32 %v4495, %v4770
      %v4805 = vadd.f32 %v4496, %v4775
      %v4806 = vadd.f32 %v4497, %v4780
      %v4807 = vld [vmem:[#allocation2 + $0x11] sm:$0xff]
      %v4808 = vld [vmem:[#allocation2 + $0x19] sm:$0xff]
      %v4809 = vld [vmem:[#allocation2 + $0x21] sm:$0xff]
      %v4810 = vld [vmem:[#allocation2 + $0x29] sm:$0xff]
      %v4811 = vld [vmem:[#allocation2 + $0x31] sm:$0xff]
      %v4812 = vld [vmem:[#allocation2 + $0x39] sm:$0xff]
      %v4813 = vld [vmem:[#allocation2 + $0x41] sm:$0xff]
      %v4814 = vld [vmem:[#allocation2 + $0x49] sm:$0xff]
      %v4815 = vld [vmem:[#allocation2 + $0x51] sm:$0xff]
      %v4816 = vld [vmem:[#allocation2 + $0x59] sm:$0xff]
      %v4817 = vld [vmem:[#allocation2 + $0x61] sm:$0xff]
      %v4818 = vld [vmem:[#allocation2 + $0x69] sm:$0xff]
      %v4819 = vld [vmem:[#allocation2 + $0x71] sm:$0xff]
      %v4820 = vld [vmem:[#allocation2 + $0x79] sm:$0xff]
      %v4821 = vld [vmem:[#allocation2 + $0x81] sm:$0xff]
      %v4822 = vld [vmem:[#allocation2 + $0x89] sm:$0xff]
      %v4823 = vld [vmem:[#allocation2 + $0x91] sm:$0xff]
      %v4824 = vld [vmem:[#allocation2 + $0x99] sm:$0xff]
      %v4825 = vld [vmem:[#allocation2 + $0xa1] sm:$0xff]
      %v4826 = vld [vmem:[#allocation2 + $0xa9] sm:$0xff]
      %v4827 = vld [vmem:[#allocation2 + $0xb1] sm:$0xff]
      %v4828 = vld [vmem:[#allocation2 + $0xb9] sm:$0xff]
      %v4829 = vld [vmem:[#allocation2 + $0xc1] sm:$0xff]
      %v4830 = vld [vmem:[#allocation2 + $0xc9] sm:$0xf]
      %v4831 = vld [vmem:[%s3 + $0x80] sm:$0xff]
      %v4832 = vld [vmem:[%s3 + $0x88] sm:$0xff]
      %v4833 = vld [vmem:[%s3 + $0x90] sm:$0xff]
      %v4834 = vld [vmem:[%s3 + $0x98] sm:$0xff]
      %v4836 = vsel %vm3589, %v4807, 0
      %v4839 = vsel %vm3589, %v4808, 0
      %v4842 = vsel %vm3589, %v4809, 0
      %v4845 = vsel %vm3589, %v4810, 0
      %v4848 = vsel %vm3589, %v4811, 0
      %v4851 = vsel %vm3589, %v4812, 0
      %v4854 = vsel %vm3589, %v4813, 0
      %v4857 = vsel %vm3589, %v4814, 0
      %v4860 = vsel %vm3589, %v4815, 0
      %v4863 = vsel %vm3589, %v4816, 0
      %v4866 = vsel %vm3589, %v4817, 0
      %v4869 = vsel %vm3589, %v4818, 0
      %v4872 = vsel %vm3589, %v4819, 0
      %v4875 = vsel %vm3589, %v4820, 0
      %v4878 = vsel %vm3589, %v4821, 0
      %v4881 = vsel %vm3589, %v4822, 0
      %v4884 = vsel %vm3589, %v4823, 0
      %v4887 = vsel %vm3589, %v4824, 0
      %v4890 = vsel %vm3589, %v4825, 0
      %v4893 = vsel %vm3589, %v4826, 0
      %v4896 = vsel %vm3589, %v4827, 0
      %v4899 = vsel %vm3589, %v4828, 0
      %v4902 = vsel %vm3589, %v4829, 0
      %v4905 = vsel %vm3589, %v4830, 0
      %4907 = vmatprep.subr.mxu0 0.0
      %4908 = vmatpush1.msra.mxu0 %v4831
      %4909 = vmatprep.subr.mxu0 0.0
      %4910 = vmatpush1.msra.mxu0 %v4832
      %4911 = vmatprep.subr.mxu0 0.0
      %4912 = vmatpush1.msra.mxu0 %v4833
      %4913 = vmatprep.subr.mxu0 0.0
      %4914 = vmatpush1.msra.mxu0 %v4834
      %4915 = vmatprep.subr.mxu0 0.0
      %4916 = vmatpush1.msra.mxu0 0.0
      %4917 = vmatprep.subr.mxu0 0.0
      %4918 = vmatpush1.msra.mxu0 0.0
      %4919 = vmatprep.subr.mxu0 0.0
      %4920 = vmatpush1.msra.mxu0 0.0
      %4921 = vmatprep.subr.mxu0 0.0
      %4922 = vmatpush1.msra.mxu0 0.0
      %4923 = vmatprep.subr.mxu0 0.0
      %4924 = vmatpush1.msra.mxu0 0.0
      %4925 = vmatprep.subr.mxu0 0.0
      %4926 = vmatpush1.msra.mxu0 0.0
      %4927 = vmatprep.subr.mxu0 0.0
      %4928 = vmatpush1.msra.mxu0 0.0
      %4929 = vmatprep.subr.mxu0 0.0
      %4930 = vmatpush1.msra.mxu0 0.0
      %4931 = vmatprep.subr.mxu0 0.0
      %4932 = vmatpush1.msra.mxu0 0.0
      %4933 = vmatprep.subr.mxu0 0.0
      %4934 = vmatpush1.msra.mxu0 0.0
      %4935 = vmatprep.subr.mxu0 0.0
      %4936 = vmatpush1.msra.mxu0 0.0
      %4937 = vmatprep.subr.mxu0 0.0
      %4938 = vmatpush1.msra.mxu0 0.0
      %4939 = vmatprep.subr.mxu0 0.0
      %4940 = vmatpush1.msra.mxu0 0.0
      %4941 = vmatprep.subr.mxu0 0.0
      %4942 = vmatpush1.msra.mxu0 0.0
      %4943 = vmatprep.subr.mxu0 0.0
      %4944 = vmatpush1.msra.mxu0 0.0
      %4945 = vmatprep.subr.mxu0 0.0
      %4946 = vmatpush1.msra.mxu0 0.0
      %4947 = vmatprep.subr.mxu0 0.0
      %4948 = vmatpush1.msra.mxu0 0.0
      %4949 = vmatprep.subr.mxu0 0.0
      %4950 = vmatpush1.msra.mxu0 0.0
      %4951 = vmatprep.subr.mxu0 0.0
      %4952 = vmatpush1.msra.mxu0 0.0
      %4953 = vmatprep.subr.mxu0 0.0
      %4954 = vmatpush1.msra.mxu0 0.0
      %4955 = vmatprep.subr.mxu0 0.0
      %4956 = vmatpush1.msra.mxu0 0.0
      %4957 = vmatprep.subr.mxu0 0.0
      %4958 = vmatpush1.msra.mxu0 0.0
      %4959 = vmatprep.subr.mxu0 0.0
      %4960 = vmatpush1.msra.mxu0 0.0
      %4961 = vmatprep.subr.mxu0 0.0
      %4962 = vmatpush1.msra.mxu0 0.0
      %4963 = vmatprep.subr.mxu0 0.0
      %4964 = vmatpush1.msra.mxu0 0.0
      %4965 = vmatprep.subr.mxu0 0.0
      %4966 = vmatpush1.msra.mxu0 0.0
      %4967 = vmatprep.subr.mxu0 0.0
      %4968 = vmatpush1.msra.mxu0 0.0
      %4969 = vmatprep.subr.mxu0 0.0
      %4970 = vmatpush1.msra.mxu0 0.0
      %4971 = vmatprep.mubr.f32.mxu0 0.0
      %4972 = vmatmul.mubr.f32.gmra.mrb[0].mxu0 %v4836
      %v4973 = vpop.f32.mrb[0].mxu0
      %v4974 = vadd.f32 0.0, %v4973
      %v4975 = vpop.f32.mrb[0].mxu0
      %4976 = vmatprep.mubr.f32.mxu0 0.0
      %4977 = vmatmul.mubr.f32.gmra.mrb[0].mxu0 %v4839
      %v4978 = vpop.f32.mrb[0].mxu0
      %v4979 = vadd.f32 0.0, %v4978
      %v4980 = vpop.f32.mrb[0].mxu0
      %4981 = vmatprep.mubr.f32.mxu0 0.0
      %4982 = vmatmul.mubr.f32.gmra.mrb[0].mxu0 %v4842
      %v4983 = vpop.f32.mrb[0].mxu0
      %v4984 = vadd.f32 0.0, %v4983
      %v4985 = vpop.f32.mrb[0].mxu0
      %4986 = vmatprep.mubr.f32.mxu0 0.0
      %4987 = vmatmul.mubr.f32.gmra.mrb[0].mxu0 %v4845
      %v4988 = vpop.f32.mrb[0].mxu0
      %v4989 = vadd.f32 0.0, %v4988
      %v4990 = vpop.f32.mrb[0].mxu0
      %4991 = vmatprep.mubr.f32.mxu0 0.0
      %4992 = vmatmul.mubr.f32.gmra.mrb[0].mxu0 %v4848
      %v4993 = vpop.f32.mrb[0].mxu0
      %v4994 = vadd.f32 0.0, %v4993
      %v4995 = vpop.f32.mrb[0].mxu0
      %4996 = vmatprep.mubr.f32.mxu0 0.0
      %4997 = vmatmul.mubr.f32.gmra.mrb[0].mxu0 %v4851
      %v4998 = vpop.f32.mrb[0].mxu0
      %v4999 = vadd.f32 0.0, %v4998
      %v5000 = vpop.f32.mrb[0].mxu0
      %5001 = vmatprep.mubr.f32.mxu0 0.0
      %5002 = vmatmul.mubr.f32.gmra.mrb[0].mxu0 %v4854
      %v5003 = vpop.f32.mrb[0].mxu0
      %v5004 = vadd.f32 0.0, %v5003
      %v5005 = vpop.f32.mrb[0].mxu0
      %5006 = vmatprep.mubr.f32.mxu0 0.0
      %5007 = vmatmul.mubr.f32.gmra.mrb[0].mxu0 %v4857
      %v5008 = vpop.f32.mrb[0].mxu0
      %v5009 = vadd.f32 0.0, %v5008
      %v5010 = vpop.f32.mrb[0].mxu0
      %5011 = vmatprep.mubr.f32.mxu0 0.0
      %5012 = vmatmul.mubr.f32.gmra.mrb[0].mxu0 %v4860
      %v5013 = vpop.f32.mrb[0].mxu0
      %v5014 = vadd.f32 0.0, %v5013
      %v5015 = vpop.f32.mrb[0].mxu0
      %5016 = vmatprep.mubr.f32.mxu0 0.0
      %5017 = vmatmul.mubr.f32.gmra.mrb[0].mxu0 %v4863
      %v5018 = vpop.f32.mrb[0].mxu0
      %v5019 = vadd.f32 0.0, %v5018
      %v5020 = vpop.f32.mrb[0].mxu0
      %5021 = vmatprep.mubr.f32.mxu0 0.0
      %5022 = vmatmul.mubr.f32.gmra.mrb[0].mxu0 %v4866
      %v5023 = vpop.f32.mrb[0].mxu0
      %v5024 = vadd.f32 0.0, %v5023
      %v5025 = vpop.f32.mrb[0].mxu0
      %5026 = vmatprep.mubr.f32.mxu0 0.0
      %5027 = vmatmul.mubr.f32.gmra.mrb[0].mxu0 %v4869
      %v5028 = vpop.f32.mrb[0].mxu0
      %v5029 = vadd.f32 0.0, %v5028
      %v5030 = vpop.f32.mrb[0].mxu0
      %5031 = vmatprep.mubr.f32.mxu0 0.0
      %5032 = vmatmul.mubr.f32.gmra.mrb[0].mxu0 %v4872
      %v5033 = vpop.f32.mrb[0].mxu0
      %v5034 = vadd.f32 0.0, %v5033
      %v5035 = vpop.f32.mrb[0].mxu0
      %5036 = vmatprep.mubr.f32.mxu0 0.0
      %5037 = vmatmul.mubr.f32.gmra.mrb[0].mxu0 %v4875
      %v5038 = vpop.f32.mrb[0].mxu0
      %v5039 = vadd.f32 0.0, %v5038
      %v5040 = vpop.f32.mrb[0].mxu0
      %5041 = vmatprep.mubr.f32.mxu0 0.0
      %5042 = vmatmul.mubr.f32.gmra.mrb[0].mxu0 %v4878
      %v5043 = vpop.f32.mrb[0].mxu0
      %v5044 = vadd.f32 0.0, %v5043
      %v5045 = vpop.f32.mrb[0].mxu0
      %5046 = vmatprep.mubr.f32.mxu0 0.0
      %5047 = vmatmul.mubr.f32.gmra.mrb[0].mxu0 %v4881
      %v5048 = vpop.f32.mrb[0].mxu0
      %v5049 = vadd.f32 0.0, %v5048
      %v5050 = vpop.f32.mrb[0].mxu0
      %5051 = vmatprep.mubr.f32.mxu0 0.0
      %5052 = vmatmul.mubr.f32.gmra.mrb[0].mxu0 %v4884
      %v5053 = vpop.f32.mrb[0].mxu0
      %v5054 = vadd.f32 0.0, %v5053
      %v5055 = vpop.f32.mrb[0].mxu0
      %5056 = vmatprep.mubr.f32.mxu0 0.0
      %5057 = vmatmul.mubr.f32.gmra.mrb[0].mxu0 %v4887
      %v5058 = vpop.f32.mrb[0].mxu0
      %v5059 = vadd.f32 0.0, %v5058
      %v5060 = vpop.f32.mrb[0].mxu0
      %5061 = vmatprep.mubr.f32.mxu0 0.0
      %5062 = vmatmul.mubr.f32.gmra.mrb[0].mxu0 %v4890
      %v5063 = vpop.f32.mrb[0].mxu0
      %v5064 = vadd.f32 0.0, %v5063
      %v5065 = vpop.f32.mrb[0].mxu0
      %5066 = vmatprep.mubr.f32.mxu0 0.0
      %5067 = vmatmul.mubr.f32.gmra.mrb[0].mxu0 %v4893
      %v5068 = vpop.f32.mrb[0].mxu0
      %v5069 = vadd.f32 0.0, %v5068
      %v5070 = vpop.f32.mrb[0].mxu0
      %5071 = vmatprep.mubr.f32.mxu0 0.0
      %5072 = vmatmul.mubr.f32.gmra.mrb[0].mxu0 %v4896
      %v5073 = vpop.f32.mrb[0].mxu0
      %v5074 = vadd.f32 0.0, %v5073
      %v5075 = vpop.f32.mrb[0].mxu0
      %5076 = vmatprep.mubr.f32.mxu0 0.0
      %5077 = vmatmul.mubr.f32.gmra.mrb[0].mxu0 %v4899
      %v5078 = vpop.f32.mrb[0].mxu0
      %v5079 = vadd.f32 0.0, %v5078
      %v5080 = vpop.f32.mrb[0].mxu0
      %5081 = vmatprep.mubr.f32.mxu0 0.0
      %5082 = vmatmul.mubr.f32.gmra.mrb[0].mxu0 %v4902
      %v5083 = vpop.f32.mrb[0].mxu0
      %v5084 = vadd.f32 0.0, %v5083
      %v5085 = vpop.f32.mrb[0].mxu0
      %5086 = vmatprep.mubr.f32.mxu0 0.0
      %5087 = vmatmul.mubr.f32.gmra.mrb[0].mxu0 %v4905
      %v5088 = vpop.f32.mrb[0].mxu0
      %v5089 = vadd.f32 0.0, %v5088
      %v5090 = vpop.f32.mrb[0].mxu0
      %5091 = vdwg.mxu0
      %v5092 = vadd.f32 %v4783, %v4974
      %v5093 = vadd.f32 %v4784, %v4979
      %v5094 = vadd.f32 %v4785, %v4984
      %v5095 = vadd.f32 %v4786, %v4989
      %v5096 = vadd.f32 %v4787, %v4994
      %v5097 = vadd.f32 %v4788, %v4999
      %v5098 = vadd.f32 %v4789, %v5004
      %v5099 = vadd.f32 %v4790, %v5009
      %v5100 = vadd.f32 %v4791, %v5014
      %v5101 = vadd.f32 %v4792, %v5019
      %v5102 = vadd.f32 %v4793, %v5024
      %v5103 = vadd.f32 %v4794, %v5029
      %v5104 = vadd.f32 %v4795, %v5034
      %v5105 = vadd.f32 %v4796, %v5039
      %v5106 = vadd.f32 %v4797, %v5044
      %v5107 = vadd.f32 %v4798, %v5049
      %v5108 = vadd.f32 %v4799, %v5054
      %v5109 = vadd.f32 %v4800, %v5059
      %v5110 = vadd.f32 %v4801, %v5064
      %v5111 = vadd.f32 %v4802, %v5069
      %v5112 = vadd.f32 %v4803, %v5074
      %v5113 = vadd.f32 %v4804, %v5079
      %v5114 = vadd.f32 %v4805, %v5084
      %v5115 = vadd.f32 %v4806, %v5089
      %v5116 = vld [vmem:[#allocation2 + $0x12] sm:$0xff]
      %v5117 = vld [vmem:[#allocation2 + $0x1a] sm:$0xff]
      %v5118 = vld [vmem:[#allocation2 + $0x22] sm:$0xff]
      %v5119 = vld [vmem:[#allocation2 + $0x2a] sm:$0xff]
      %v5120 = vld [vmem:[#allocation2 + $0x32] sm:$0xff]
      %v5121 = vld [vmem:[#allocation2 + $0x3a] sm:$0xff]
      %v5122 = vld [vmem:[#allocation2 + $0x42] sm:$0xff]
      %v5123 = vld [vmem:[#allocation2 + $0x4a] sm:$0xff]
      %v5124 = vld [vmem:[#allocation2 + $0x52] sm:$0xff]
      %v5125 = vld [vmem:[#allocation2 + $0x5a] sm:$0xff]
      %v5126 = vld [vmem:[#allocation2 + $0x62] sm:$0xff]
      %v5127 = vld [vmem:[#allocation2 + $0x6a] sm:$0xff]
      %v5128 = vld [vmem:[#allocation2 + $0x72] sm:$0xff]
      %v5129 = vld [vmem:[#allocation2 + $0x7a] sm:$0xff]
      %v5130 = vld [vmem:[#allocation2 + $0x82] sm:$0xff]
      %v5131 = vld [vmem:[#allocation2 + $0x8a] sm:$0xff]
      %v5132 = vld [vmem:[#allocation2 + $0x92] sm:$0xff]
      %v5133 = vld [vmem:[#allocation2 + $0x9a] sm:$0xff]
      %v5134 = vld [vmem:[#allocation2 + $0xa2] sm:$0xff]
      %v5135 = vld [vmem:[#allocation2 + $0xaa] sm:$0xff]
      %v5136 = vld [vmem:[#allocation2 + $0xb2] sm:$0xff]
      %v5137 = vld [vmem:[#allocation2 + $0xba] sm:$0xff]
      %v5138 = vld [vmem:[#allocation2 + $0xc2] sm:$0xff]
      %v5139 = vld [vmem:[#allocation2 + $0xca] sm:$0xf]
      %v5140 = vld [vmem:[%s3 + $0xa0] sm:$0xff]
      %v5141 = vld [vmem:[%s3 + $0xa8] sm:$0xff]
      %v5142 = vld [vmem:[%s3 + $0xb0] sm:$0xff]
      %v5143 = vld [vmem:[%s3 + $0xb8] sm:$0xff]
      %v5145 = vsel %vm3589, %v5116, 0
      %v5148 = vsel %vm3589, %v5117, 0
      %v5151 = vsel %vm3589, %v5118, 0
      %v5154 = vsel %vm3589, %v5119, 0
      %v5157 = vsel %vm3589, %v5120, 0
      %v5160 = vsel %vm3589, %v5121, 0
      %v5163 = vsel %vm3589, %v5122, 0
      %v5166 = vsel %vm3589, %v5123, 0
      %v5169 = vsel %vm3589, %v5124, 0
      %v5172 = vsel %vm3589, %v5125, 0
      %v5175 = vsel %vm3589, %v5126, 0
      %v5178 = vsel %vm3589, %v5127, 0
      %v5181 = vsel %vm3589, %v5128, 0
      %v5184 = vsel %vm3589, %v5129, 0
      %v5187 = vsel %vm3589, %v5130, 0
      %v5190 = vsel %vm3589, %v5131, 0
      %v5193 = vsel %vm3589, %v5132, 0
      %v5196 = vsel %vm3589, %v5133, 0
      %v5199 = vsel %vm3589, %v5134, 0
      %v5202 = vsel %vm3589, %v5135, 0
      %v5205 = vsel %vm3589, %v5136, 0
      %v5208 = vsel %vm3589, %v5137, 0
      %v5211 = vsel %vm3589, %v5138, 0
      %v5214 = vsel %vm3589, %v5139, 0
      %5216 = vmatprep.subr.mxu0 0.0
      %5217 = vmatpush1.msra.mxu0 %v5140
      %5218 = vmatprep.subr.mxu0 0.0
      %5219 = vmatpush1.msra.mxu0 %v5141
      %5220 = vmatprep.subr.mxu0 0.0
      %5221 = vmatpush1.msra.mxu0 %v5142
      %5222 = vmatprep.subr.mxu0 0.0
      %5223 = vmatpush1.msra.mxu0 %v5143
      %5224 = vmatprep.subr.mxu0 0.0
      %5225 = vmatpush1.msra.mxu0 0.0
      %5226 = vmatprep.subr.mxu0 0.0
      %5227 = vmatpush1.msra.mxu0 0.0
      %5228 = vmatprep.subr.mxu0 0.0
      %5229 = vmatpush1.msra.mxu0 0.0
      %5230 = vmatprep.subr.mxu0 0.0
      %5231 = vmatpush1.msra.mxu0 0.0
      %5232 = vmatprep.subr.mxu0 0.0
      %5233 = vmatpush1.msra.mxu0 0.0
      %5234 = vmatprep.subr.mxu0 0.0
      %5235 = vmatpush1.msra.mxu0 0.0
      %5236 = vmatprep.subr.mxu0 0.0
      %5237 = vmatpush1.msra.mxu0 0.0
      %5238 = vmatprep.subr.mxu0 0.0
      %5239 = vmatpush1.msra.mxu0 0.0
      %5240 = vmatprep.subr.mxu0 0.0
      %5241 = vmatpush1.msra.mxu0 0.0
      %5242 = vmatprep.subr.mxu0 0.0
      %5243 = vmatpush1.msra.mxu0 0.0
      %5244 = vmatprep.subr.mxu0 0.0
      %5245 = vmatpush1.msra.mxu0 0.0
      %5246 = vmatprep.subr.mxu0 0.0
      %5247 = vmatpush1.msra.mxu0 0.0
      %5248 = vmatprep.subr.mxu0 0.0
      %5249 = vmatpush1.msra.mxu0 0.0
      %5250 = vmatprep.subr.mxu0 0.0
      %5251 = vmatpush1.msra.mxu0 0.0
      %5252 = vmatprep.subr.mxu0 0.0
      %5253 = vmatpush1.msra.mxu0 0.0
      %5254 = vmatprep.subr.mxu0 0.0
      %5255 = vmatpush1.msra.mxu0 0.0
      %5256 = vmatprep.subr.mxu0 0.0
      %5257 = vmatpush1.msra.mxu0 0.0
      %5258 = vmatprep.subr.mxu0 0.0
      %5259 = vmatpush1.msra.mxu0 0.0
      %5260 = vmatprep.subr.mxu0 0.0
      %5261 = vmatpush1.msra.mxu0 0.0
      %5262 = vmatprep.subr.mxu0 0.0
      %5263 = vmatpush1.msra.mxu0 0.0
      %5264 = vmatprep.subr.mxu0 0.0
      %5265 = vmatpush1.msra.mxu0 0.0
      %5266 = vmatprep.subr.mxu0 0.0
      %5267 = vmatpush1.msra.mxu0 0.0
      %5268 = vmatprep.subr.mxu0 0.0
      %5269 = vmatpush1.msra.mxu0 0.0
      %5270 = vmatprep.subr.mxu0 0.0
      %5271 = vmatpush1.msra.mxu0 0.0
      %5272 = vmatprep.subr.mxu0 0.0
      %5273 = vmatpush1.msra.mxu0 0.0
      %5274 = vmatprep.subr.mxu0 0.0
      %5275 = vmatpush1.msra.mxu0 0.0
      %5276 = vmatprep.subr.mxu0 0.0
      %5277 = vmatpush1.msra.mxu0 0.0
      %5278 = vmatprep.subr.mxu0 0.0
      %5279 = vmatpush1.msra.mxu0 0.0
      %5280 = vmatprep.mubr.f32.mxu0 0.0
      %5281 = vmatmul.mubr.f32.gmra.mrb[0].mxu0 %v5145
      %v5282 = vpop.f32.mrb[0].mxu0
      %v5283 = vadd.f32 0.0, %v5282
      %v5284 = vpop.f32.mrb[0].mxu0
      %5285 = vmatprep.mubr.f32.mxu0 0.0
      %5286 = vmatmul.mubr.f32.gmra.mrb[0].mxu0 %v5148
      %v5287 = vpop.f32.mrb[0].mxu0
      %v5288 = vadd.f32 0.0, %v5287
      %v5289 = vpop.f32.mrb[0].mxu0
      %5290 = vmatprep.mubr.f32.mxu0 0.0
      %5291 = vmatmul.mubr.f32.gmra.mrb[0].mxu0 %v5151
      %v5292 = vpop.f32.mrb[0].mxu0
      %v5293 = vadd.f32 0.0, %v5292
      %v5294 = vpop.f32.mrb[0].mxu0
      %5295 = vmatprep.mubr.f32.mxu0 0.0
      %5296 = vmatmul.mubr.f32.gmra.mrb[0].mxu0 %v5154
      %v5297 = vpop.f32.mrb[0].mxu0
      %v5298 = vadd.f32 0.0, %v5297
      %v5299 = vpop.f32.mrb[0].mxu0
      %5300 = vmatprep.mubr.f32.mxu0 0.0
      %5301 = vmatmul.mubr.f32.gmra.mrb[0].mxu0 %v5157
      %v5302 = vpop.f32.mrb[0].mxu0
      %v5303 = vadd.f32 0.0, %v5302
      %v5304 = vpop.f32.mrb[0].mxu0
      %5305 = vmatprep.mubr.f32.mxu0 0.0
      %5306 = vmatmul.mubr.f32.gmra.mrb[0].mxu0 %v5160
      %v5307 = vpop.f32.mrb[0].mxu0
      %v5308 = vadd.f32 0.0, %v5307
      %v5309 = vpop.f32.mrb[0].mxu0
      %5310 = vmatprep.mubr.f32.mxu0 0.0
      %5311 = vmatmul.mubr.f32.gmra.mrb[0].mxu0 %v5163
      %v5312 = vpop.f32.mrb[0].mxu0
      %v5313 = vadd.f32 0.0, %v5312
      %v5314 = vpop.f32.mrb[0].mxu0
      %5315 = vmatprep.mubr.f32.mxu0 0.0
      %5316 = vmatmul.mubr.f32.gmra.mrb[0].mxu0 %v5166
      %v5317 = vpop.f32.mrb[0].mxu0
      %v5318 = vadd.f32 0.0, %v5317
      %v5319 = vpop.f32.mrb[0].mxu0
      %5320 = vmatprep.mubr.f32.mxu0 0.0
      %5321 = vmatmul.mubr.f32.gmra.mrb[0].mxu0 %v5169
      %v5322 = vpop.f32.mrb[0].mxu0
      %v5323 = vadd.f32 0.0, %v5322
      %v5324 = vpop.f32.mrb[0].mxu0
      %5325 = vmatprep.mubr.f32.mxu0 0.0
      %5326 = vmatmul.mubr.f32.gmra.mrb[0].mxu0 %v5172
      %v5327 = vpop.f32.mrb[0].mxu0
      %v5328 = vadd.f32 0.0, %v5327
      %v5329 = vpop.f32.mrb[0].mxu0
      %5330 = vmatprep.mubr.f32.mxu0 0.0
      %5331 = vmatmul.mubr.f32.gmra.mrb[0].mxu0 %v5175
      %v5332 = vpop.f32.mrb[0].mxu0
      %v5333 = vadd.f32 0.0, %v5332
      %v5334 = vpop.f32.mrb[0].mxu0
      %5335 = vmatprep.mubr.f32.mxu0 0.0
      %5336 = vmatmul.mubr.f32.gmra.mrb[0].mxu0 %v5178
      %v5337 = vpop.f32.mrb[0].mxu0
      %v5338 = vadd.f32 0.0, %v5337
      %v5339 = vpop.f32.mrb[0].mxu0
      %5340 = vmatprep.mubr.f32.mxu0 0.0
      %5341 = vmatmul.mubr.f32.gmra.mrb[0].mxu0 %v5181
      %v5342 = vpop.f32.mrb[0].mxu0
      %v5343 = vadd.f32 0.0, %v5342
      %v5344 = vpop.f32.mrb[0].mxu0
      %5345 = vmatprep.mubr.f32.mxu0 0.0
      %5346 = vmatmul.mubr.f32.gmra.mrb[0].mxu0 %v5184
      %v5347 = vpop.f32.mrb[0].mxu0
      %v5348 = vadd.f32 0.0, %v5347
      %v5349 = vpop.f32.mrb[0].mxu0
      %5350 = vmatprep.mubr.f32.mxu0 0.0
      %5351 = vmatmul.mubr.f32.gmra.mrb[0].mxu0 %v5187
      %v5352 = vpop.f32.mrb[0].mxu0
      %v5353 = vadd.f32 0.0, %v5352
      %v5354 = vpop.f32.mrb[0].mxu0
      %5355 = vmatprep.mubr.f32.mxu0 0.0
      %5356 = vmatmul.mubr.f32.gmra.mrb[0].mxu0 %v5190
      %v5357 = vpop.f32.mrb[0].mxu0
      %v5358 = vadd.f32 0.0, %v5357
      %v5359 = vpop.f32.mrb[0].mxu0
      %5360 = vmatprep.mubr.f32.mxu0 0.0
      %5361 = vmatmul.mubr.f32.gmra.mrb[0].mxu0 %v5193
      %v5362 = vpop.f32.mrb[0].mxu0
      %v5363 = vadd.f32 0.0, %v5362
      %v5364 = vpop.f32.mrb[0].mxu0
      %5365 = vmatprep.mubr.f32.mxu0 0.0
      %5366 = vmatmul.mubr.f32.gmra.mrb[0].mxu0 %v5196
      %v5367 = vpop.f32.mrb[0].mxu0
      %v5368 = vadd.f32 0.0, %v5367
      %v5369 = vpop.f32.mrb[0].mxu0
      %5370 = vmatprep.mubr.f32.mxu0 0.0
      %5371 = vmatmul.mubr.f32.gmra.mrb[0].mxu0 %v5199
      %v5372 = vpop.f32.mrb[0].mxu0
      %v5373 = vadd.f32 0.0, %v5372
      %v5374 = vpop.f32.mrb[0].mxu0
      %5375 = vmatprep.mubr.f32.mxu0 0.0
      %5376 = vmatmul.mubr.f32.gmra.mrb[0].mxu0 %v5202
      %v5377 = vpop.f32.mrb[0].mxu0
      %v5378 = vadd.f32 0.0, %v5377
      %v5379 = vpop.f32.mrb[0].mxu0
      %5380 = vmatprep.mubr.f32.mxu0 0.0
      %5381 = vmatmul.mubr.f32.gmra.mrb[0].mxu0 %v5205
      %v5382 = vpop.f32.mrb[0].mxu0
      %v5383 = vadd.f32 0.0, %v5382
      %v5384 = vpop.f32.mrb[0].mxu0
      %5385 = vmatprep.mubr.f32.mxu0 0.0
      %5386 = vmatmul.mubr.f32.gmra.mrb[0].mxu0 %v5208
      %v5387 = vpop.f32.mrb[0].mxu0
      %v5388 = vadd.f32 0.0, %v5387
      %v5389 = vpop.f32.mrb[0].mxu0
      %5390 = vmatprep.mubr.f32.mxu0 0.0
      %5391 = vmatmul.mubr.f32.gmra.mrb[0].mxu0 %v5211
      %v5392 = vpop.f32.mrb[0].mxu0
      %v5393 = vadd.f32 0.0, %v5392
      %v5394 = vpop.f32.mrb[0].mxu0
      %5395 = vmatprep.mubr.f32.mxu0 0.0
      %5396 = vmatmul.mubr.f32.gmra.mrb[0].mxu0 %v5214
      %v5397 = vpop.f32.mrb[0].mxu0
      %v5398 = vadd.f32 0.0, %v5397
      %v5399 = vpop.f32.mrb[0].mxu0
      %5400 = vdwg.mxu0
      %v5401 = vadd.f32 %v5092, %v5283
      %v5402 = vadd.f32 %v5093, %v5288
      %v5403 = vadd.f32 %v5094, %v5293
      %v5404 = vadd.f32 %v5095, %v5298
      %v5405 = vadd.f32 %v5096, %v5303
      %v5406 = vadd.f32 %v5097, %v5308
      %v5407 = vadd.f32 %v5098, %v5313
      %v5408 = vadd.f32 %v5099, %v5318
      %v5409 = vadd.f32 %v5100, %v5323
      %v5410 = vadd.f32 %v5101, %v5328
      %v5411 = vadd.f32 %v5102, %v5333
      %v5412 = vadd.f32 %v5103, %v5338
      %v5413 = vadd.f32 %v5104, %v5343
      %v5414 = vadd.f32 %v5105, %v5348
      %v5415 = vadd.f32 %v5106, %v5353
      %v5416 = vadd.f32 %v5107, %v5358
      %v5417 = vadd.f32 %v5108, %v5363
      %v5418 = vadd.f32 %v5109, %v5368
      %v5419 = vadd.f32 %v5110, %v5373
      %v5420 = vadd.f32 %v5111, %v5378
      %v5421 = vadd.f32 %v5112, %v5383
      %v5422 = vadd.f32 %v5113, %v5388
      %v5423 = vadd.f32 %v5114, %v5393
      %v5424 = vadd.f32 %v5115, %v5398
      %v5425 = vld [vmem:[#allocation2 + $0x20] sm:$0xff]
      %v5426 = vld [vmem:[#allocation2 + $0x28] sm:$0xff]
      %v5427 = vld [vmem:[#allocation2 + $0x30] sm:$0xff]
      %v5428 = vld [vmem:[#allocation2 + $0x38] sm:$0xff]
      %v5429 = vld [vmem:[#allocation2 + $0x40] sm:$0xff]
      %v5430 = vld [vmem:[#allocation2 + $0x48] sm:$0xff]
      %v5431 = vld [vmem:[#allocation2 + $0x50] sm:$0xff]
      %v5432 = vld [vmem:[#allocation2 + $0x58] sm:$0xff]
      %v5433 = vld [vmem:[#allocation2 + $0x60] sm:$0xff]
      %v5434 = vld [vmem:[#allocation2 + $0x68] sm:$0xff]
      %v5435 = vld [vmem:[#allocation2 + $0x70] sm:$0xff]
      %v5436 = vld [vmem:[#allocation2 + $0x78] sm:$0xff]
      %v5437 = vld [vmem:[#allocation2 + $0x80] sm:$0xff]
      %v5438 = vld [vmem:[#allocation2 + $0x88] sm:$0xff]
      %v5439 = vld [vmem:[#allocation2 + $0x90] sm:$0xff]
      %v5440 = vld [vmem:[#allocation2 + $0x98] sm:$0xff]
      %v5441 = vld [vmem:[#allocation2 + $0xa0] sm:$0xff]
      %v5442 = vld [vmem:[#allocation2 + $0xa8] sm:$0xff]
      %v5443 = vld [vmem:[#allocation2 + $0xb0] sm:$0xff]
      %v5444 = vld [vmem:[#allocation2 + $0xb8] sm:$0xff]
      %v5445 = vld [vmem:[#allocation2 + $0xc0] sm:$0xff]
      %v5446 = vld [vmem:[#allocation2 + $0xc8] sm:$0xff]
      %v5447 = vld [vmem:[#allocation2 + $0xd0] sm:$0xff]
      %v5448 = vld [vmem:[#allocation2 + $0xd8] sm:$0xf]
      %v5449 = vld [vmem:[%s3 + $0xc0] sm:$0xff]
      %v5450 = vld [vmem:[%s3 + $0xc8] sm:$0xff]
      %v5451 = vld [vmem:[%s3 + $0xd0] sm:$0xff]
      %v5452 = vld [vmem:[%s3 + $0xd8] sm:$0xff]
      %v5454 = vsel %vm3589, %v5425, 0
      %v5457 = vsel %vm3589, %v5426, 0
      %v5460 = vsel %vm3589, %v5427, 0
      %v5463 = vsel %vm3589, %v5428, 0
      %v5466 = vsel %vm3589, %v5429, 0
      %v5469 = vsel %vm3589, %v5430, 0
      %v5472 = vsel %vm3589, %v5431, 0
      %v5475 = vsel %vm3589, %v5432, 0
      %v5478 = vsel %vm3589, %v5433, 0
      %v5481 = vsel %vm3589, %v5434, 0
      %v5484 = vsel %vm3589, %v5435, 0
      %v5487 = vsel %vm3589, %v5436, 0
      %v5490 = vsel %vm3589, %v5437, 0
      %v5493 = vsel %vm3589, %v5438, 0
      %v5496 = vsel %vm3589, %v5439, 0
      %v5499 = vsel %vm3589, %v5440, 0
      %v5502 = vsel %vm3589, %v5441, 0
      %v5505 = vsel %vm3589, %v5442, 0
      %v5508 = vsel %vm3589, %v5443, 0
      %v5511 = vsel %vm3589, %v5444, 0
      %v5514 = vsel %vm3589, %v5445, 0
      %v5517 = vsel %vm3589, %v5446, 0
      %v5520 = vsel %vm3589, %v5447, 0
      %v5523 = vsel %vm3589, %v5448, 0
      %5525 = vmatprep.subr.mxu0 0.0
      %5526 = vmatpush1.msra.mxu0 %v5449
      %5527 = vmatprep.subr.mxu0 0.0
      %5528 = vmatpush1.msra.mxu0 %v5450
      %5529 = vmatprep.subr.mxu0 0.0
      %5530 = vmatpush1.msra.mxu0 %v5451
      %5531 = vmatprep.subr.mxu0 0.0
      %5532 = vmatpush1.msra.mxu0 %v5452
      %5533 = vmatprep.subr.mxu0 0.0
      %5534 = vmatpush1.msra.mxu0 0.0
      %5535 = vmatprep.subr.mxu0 0.0
      %5536 = vmatpush1.msra.mxu0 0.0
      %5537 = vmatprep.subr.mxu0 0.0
      %5538 = vmatpush1.msra.mxu0 0.0
      %5539 = vmatprep.subr.mxu0 0.0
      %5540 = vmatpush1.msra.mxu0 0.0
      %5541 = vmatprep.subr.mxu0 0.0
      %5542 = vmatpush1.msra.mxu0 0.0
      %5543 = vmatprep.subr.mxu0 0.0
      %5544 = vmatpush1.msra.mxu0 0.0
      %5545 = vmatprep.subr.mxu0 0.0
      %5546 = vmatpush1.msra.mxu0 0.0
      %5547 = vmatprep.subr.mxu0 0.0
      %5548 = vmatpush1.msra.mxu0 0.0
      %5549 = vmatprep.subr.mxu0 0.0
      %5550 = vmatpush1.msra.mxu0 0.0
      %5551 = vmatprep.subr.mxu0 0.0
      %5552 = vmatpush1.msra.mxu0 0.0
      %5553 = vmatprep.subr.mxu0 0.0
      %5554 = vmatpush1.msra.mxu0 0.0
      %5555 = vmatprep.subr.mxu0 0.0
      %5556 = vmatpush1.msra.mxu0 0.0
      %5557 = vmatprep.subr.mxu0 0.0
      %5558 = vmatpush1.msra.mxu0 0.0
      %5559 = vmatprep.subr.mxu0 0.0
      %5560 = vmatpush1.msra.mxu0 0.0
      %5561 = vmatprep.subr.mxu0 0.0
      %5562 = vmatpush1.msra.mxu0 0.0
      %5563 = vmatprep.subr.mxu0 0.0
      %5564 = vmatpush1.msra.mxu0 0.0
      %5565 = vmatprep.subr.mxu0 0.0
      %5566 = vmatpush1.msra.mxu0 0.0
      %5567 = vmatprep.subr.mxu0 0.0
      %5568 = vmatpush1.msra.mxu0 0.0
      %5569 = vmatprep.subr.mxu0 0.0
      %5570 = vmatpush1.msra.mxu0 0.0
      %5571 = vmatprep.subr.mxu0 0.0
      %5572 = vmatpush1.msra.mxu0 0.0
      %5573 = vmatprep.subr.mxu0 0.0
      %5574 = vmatpush1.msra.mxu0 0.0
      %5575 = vmatprep.subr.mxu0 0.0
      %5576 = vmatpush1.msra.mxu0 0.0
      %5577 = vmatprep.subr.mxu0 0.0
      %5578 = vmatpush1.msra.mxu0 0.0
      %5579 = vmatprep.subr.mxu0 0.0
      %5580 = vmatpush1.msra.mxu0 0.0
      %5581 = vmatprep.subr.mxu0 0.0
      %5582 = vmatpush1.msra.mxu0 0.0
      %5583 = vmatprep.subr.mxu0 0.0
      %5584 = vmatpush1.msra.mxu0 0.0
      %5585 = vmatprep.subr.mxu0 0.0
      %5586 = vmatpush1.msra.mxu0 0.0
      %5587 = vmatprep.subr.mxu0 0.0
      %5588 = vmatpush1.msra.mxu0 0.0
      %5589 = vmatprep.mubr.f32.mxu0 0.0
      %5590 = vmatmul.mubr.f32.gmra.mrb[0].mxu0 %v5454
      %v5591 = vpop.f32.mrb[0].mxu0
      %v5592 = vadd.f32 0.0, %v5591
      %v5593 = vpop.f32.mrb[0].mxu0
      %5594 = vmatprep.mubr.f32.mxu0 0.0
      %5595 = vmatmul.mubr.f32.gmra.mrb[0].mxu0 %v5457
      %v5596 = vpop.f32.mrb[0].mxu0
      %v5597 = vadd.f32 0.0, %v5596
      %v5598 = vpop.f32.mrb[0].mxu0
      %5599 = vmatprep.mubr.f32.mxu0 0.0
      %5600 = vmatmul.mubr.f32.gmra.mrb[0].mxu0 %v5460
      %v5601 = vpop.f32.mrb[0].mxu0
      %v5602 = vadd.f32 0.0, %v5601
      %v5603 = vpop.f32.mrb[0].mxu0
      %5604 = vmatprep.mubr.f32.mxu0 0.0
      %5605 = vmatmul.mubr.f32.gmra.mrb[0].mxu0 %v5463
      %v5606 = vpop.f32.mrb[0].mxu0
      %v5607 = vadd.f32 0.0, %v5606
      %v5608 = vpop.f32.mrb[0].mxu0
      %5609 = vmatprep.mubr.f32.mxu0 0.0
      %5610 = vmatmul.mubr.f32.gmra.mrb[0].mxu0 %v5466
      %v5611 = vpop.f32.mrb[0].mxu0
      %v5612 = vadd.f32 0.0, %v5611
      %v5613 = vpop.f32.mrb[0].mxu0
      %5614 = vmatprep.mubr.f32.mxu0 0.0
      %5615 = vmatmul.mubr.f32.gmra.mrb[0].mxu0 %v5469
      %v5616 = vpop.f32.mrb[0].mxu0
      %v5617 = vadd.f32 0.0, %v5616
      %v5618 = vpop.f32.mrb[0].mxu0
      %5619 = vmatprep.mubr.f32.mxu0 0.0
      %5620 = vmatmul.mubr.f32.gmra.mrb[0].mxu0 %v5472
      %v5621 = vpop.f32.mrb[0].mxu0
      %v5622 = vadd.f32 0.0, %v5621
      %v5623 = vpop.f32.mrb[0].mxu0
      %5624 = vmatprep.mubr.f32.mxu0 0.0
      %5625 = vmatmul.mubr.f32.gmra.mrb[0].mxu0 %v5475
      %v5626 = vpop.f32.mrb[0].mxu0
      %v5627 = vadd.f32 0.0, %v5626
      %v5628 = vpop.f32.mrb[0].mxu0
      %5629 = vmatprep.mubr.f32.mxu0 0.0
      %5630 = vmatmul.mubr.f32.gmra.mrb[0].mxu0 %v5478
      %v5631 = vpop.f32.mrb[0].mxu0
      %v5632 = vadd.f32 0.0, %v5631
      %v5633 = vpop.f32.mrb[0].mxu0
      %5634 = vmatprep.mubr.f32.mxu0 0.0
      %5635 = vmatmul.mubr.f32.gmra.mrb[0].mxu0 %v5481
      %v5636 = vpop.f32.mrb[0].mxu0
      %v5637 = vadd.f32 0.0, %v5636
      %v5638 = vpop.f32.mrb[0].mxu0
      %5639 = vmatprep.mubr.f32.mxu0 0.0
      %5640 = vmatmul.mubr.f32.gmra.mrb[0].mxu0 %v5484
      %v5641 = vpop.f32.mrb[0].mxu0
      %v5642 = vadd.f32 0.0, %v5641
      %v5643 = vpop.f32.mrb[0].mxu0
      %5644 = vmatprep.mubr.f32.mxu0 0.0
      %5645 = vmatmul.mubr.f32.gmra.mrb[0].mxu0 %v5487
      %v5646 = vpop.f32.mrb[0].mxu0
      %v5647 = vadd.f32 0.0, %v5646
      %v5648 = vpop.f32.mrb[0].mxu0
      %5649 = vmatprep.mubr.f32.mxu0 0.0
      %5650 = vmatmul.mubr.f32.gmra.mrb[0].mxu0 %v5490
      %v5651 = vpop.f32.mrb[0].mxu0
      %v5652 = vadd.f32 0.0, %v5651
      %v5653 = vpop.f32.mrb[0].mxu0
      %5654 = vmatprep.mubr.f32.mxu0 0.0
      %5655 = vmatmul.mubr.f32.gmra.mrb[0].mxu0 %v5493
      %v5656 = vpop.f32.mrb[0].mxu0
      %v5657 = vadd.f32 0.0, %v5656
      %v5658 = vpop.f32.mrb[0].mxu0
      %5659 = vmatprep.mubr.f32.mxu0 0.0
      %5660 = vmatmul.mubr.f32.gmra.mrb[0].mxu0 %v5496
      %v5661 = vpop.f32.mrb[0].mxu0
      %v5662 = vadd.f32 0.0, %v5661
      %v5663 = vpop.f32.mrb[0].mxu0
      %5664 = vmatprep.mubr.f32.mxu0 0.0
      %5665 = vmatmul.mubr.f32.gmra.mrb[0].mxu0 %v5499
      %v5666 = vpop.f32.mrb[0].mxu0
      %v5667 = vadd.f32 0.0, %v5666
      %v5668 = vpop.f32.mrb[0].mxu0
      %5669 = vmatprep.mubr.f32.mxu0 0.0
      %5670 = vmatmul.mubr.f32.gmra.mrb[0].mxu0 %v5502
      %v5671 = vpop.f32.mrb[0].mxu0
      %v5672 = vadd.f32 0.0, %v5671
      %v5673 = vpop.f32.mrb[0].mxu0
      %5674 = vmatprep.mubr.f32.mxu0 0.0
      %5675 = vmatmul.mubr.f32.gmra.mrb[0].mxu0 %v5505
      %v5676 = vpop.f32.mrb[0].mxu0
      %v5677 = vadd.f32 0.0, %v5676
      %v5678 = vpop.f32.mrb[0].mxu0
      %5679 = vmatprep.mubr.f32.mxu0 0.0
      %5680 = vmatmul.mubr.f32.gmra.mrb[0].mxu0 %v5508
      %v5681 = vpop.f32.mrb[0].mxu0
      %v5682 = vadd.f32 0.0, %v5681
      %v5683 = vpop.f32.mrb[0].mxu0
      %5684 = vmatprep.mubr.f32.mxu0 0.0
      %5685 = vmatmul.mubr.f32.gmra.mrb[0].mxu0 %v5511
      %v5686 = vpop.f32.mrb[0].mxu0
      %v5687 = vadd.f32 0.0, %v5686
      %v5688 = vpop.f32.mrb[0].mxu0
      %5689 = vmatprep.mubr.f32.mxu0 0.0
      %5690 = vmatmul.mubr.f32.gmra.mrb[0].mxu0 %v5514
      %v5691 = vpop.f32.mrb[0].mxu0
      %v5692 = vadd.f32 0.0, %v5691
      %v5693 = vpop.f32.mrb[0].mxu0
      %5694 = vmatprep.mubr.f32.mxu0 0.0
      %5695 = vmatmul.mubr.f32.gmra.mrb[0].mxu0 %v5517
      %v5696 = vpop.f32.mrb[0].mxu0
      %v5697 = vadd.f32 0.0, %v5696
      %v5698 = vpop.f32.mrb[0].mxu0
      %5699 = vmatprep.mubr.f32.mxu0 0.0
      %5700 = vmatmul.mubr.f32.gmra.mrb[0].mxu0 %v5520
      %v5701 = vpop.f32.mrb[0].mxu0
      %v5702 = vadd.f32 0.0, %v5701
      %v5703 = vpop.f32.mrb[0].mxu0
      %5704 = vmatprep.mubr.f32.mxu0 0.0
      %5705 = vmatmul.mubr.f32.gmra.mrb[0].mxu0 %v5523
      %v5706 = vpop.f32.mrb[0].mxu0
      %v5707 = vadd.f32 0.0, %v5706
      %v5708 = vpop.f32.mrb[0].mxu0
      %5709 = vdwg.mxu0
      %v5710 = vadd.f32 %v5401, %v5592
      %v5711 = vadd.f32 %v5402, %v5597
      %v5712 = vadd.f32 %v5403, %v5602
      %v5713 = vadd.f32 %v5404, %v5607
      %v5714 = vadd.f32 %v5405, %v5612
      %v5715 = vadd.f32 %v5406, %v5617
      %v5716 = vadd.f32 %v5407, %v5622
      %v5717 = vadd.f32 %v5408, %v5627
      %v5718 = vadd.f32 %v5409, %v5632
      %v5719 = vadd.f32 %v5410, %v5637
      %v5720 = vadd.f32 %v5411, %v5642
      %v5721 = vadd.f32 %v5412, %v5647
      %v5722 = vadd.f32 %v5413, %v5652
      %v5723 = vadd.f32 %v5414, %v5657
      %v5724 = vadd.f32 %v5415, %v5662
      %v5725 = vadd.f32 %v5416, %v5667
      %v5726 = vadd.f32 %v5417, %v5672
      %v5727 = vadd.f32 %v5418, %v5677
      %v5728 = vadd.f32 %v5419, %v5682
      %v5729 = vadd.f32 %v5420, %v5687
      %v5730 = vadd.f32 %v5421, %v5692
      %v5731 = vadd.f32 %v5422, %v5697
      %v5732 = vadd.f32 %v5423, %v5702
      %v5733 = vadd.f32 %v5424, %v5707
      %v5734 = vld [vmem:[#allocation2 + $0x21] sm:$0xff]
      %v5735 = vld [vmem:[#allocation2 + $0x29] sm:$0xff]
      %v5736 = vld [vmem:[#allocation2 + $0x31] sm:$0xff]
      %v5737 = vld [vmem:[#allocation2 + $0x39] sm:$0xff]
      %v5738 = vld [vmem:[#allocation2 + $0x41] sm:$0xff]
      %v5739 = vld [vmem:[#allocation2 + $0x49] sm:$0xff]
      %v5740 = vld [vmem:[#allocation2 + $0x51] sm:$0xff]
      %v5741 = vld [vmem:[#allocation2 + $0x59] sm:$0xff]
      %v5742 = vld [vmem:[#allocation2 + $0x61] sm:$0xff]
      %v5743 = vld [vmem:[#allocation2 + $0x69] sm:$0xff]
      %v5744 = vld [vmem:[#allocation2 + $0x71] sm:$0xff]
      %v5745 = vld [vmem:[#allocation2 + $0x79] sm:$0xff]
      %v5746 = vld [vmem:[#allocation2 + $0x81] sm:$0xff]
      %v5747 = vld [vmem:[#allocation2 + $0x89] sm:$0xff]
      %v5748 = vld [vmem:[#allocation2 + $0x91] sm:$0xff]
      %v5749 = vld [vmem:[#allocation2 + $0x99] sm:$0xff]
      %v5750 = vld [vmem:[#allocation2 + $0xa1] sm:$0xff]
      %v5751 = vld [vmem:[#allocation2 + $0xa9] sm:$0xff]
      %v5752 = vld [vmem:[#allocation2 + $0xb1] sm:$0xff]
      %v5753 = vld [vmem:[#allocation2 + $0xb9] sm:$0xff]
      %v5754 = vld [vmem:[#allocation2 + $0xc1] sm:$0xff]
      %v5755 = vld [vmem:[#allocation2 + $0xc9] sm:$0xff]
      %v5756 = vld [vmem:[#allocation2 + $0xd1] sm:$0xff]
      %v5757 = vld [vmem:[#allocation2 + $0xd9] sm:$0xf]
      %v5758 = vld [vmem:[%s3 + $0xe0] sm:$0xff]
      %v5759 = vld [vmem:[%s3 + $0xe8] sm:$0xff]
      %v5760 = vld [vmem:[%s3 + $0xf0] sm:$0xff]
      %v5761 = vld [vmem:[%s3 + $0xf8] sm:$0xff]
      %v5763 = vsel %vm3589, %v5734, 0
      %v5766 = vsel %vm3589, %v5735, 0
      %v5769 = vsel %vm3589, %v5736, 0
      %v5772 = vsel %vm3589, %v5737, 0
      %v5775 = vsel %vm3589, %v5738, 0
      %v5778 = vsel %vm3589, %v5739, 0
      %v5781 = vsel %vm3589, %v5740, 0
      %v5784 = vsel %vm3589, %v5741, 0
      %v5787 = vsel %vm3589, %v5742, 0
      %v5790 = vsel %vm3589, %v5743, 0
      %v5793 = vsel %vm3589, %v5744, 0
      %v5796 = vsel %vm3589, %v5745, 0
      %v5799 = vsel %vm3589, %v5746, 0
      %v5802 = vsel %vm3589, %v5747, 0
      %v5805 = vsel %vm3589, %v5748, 0
      %v5808 = vsel %vm3589, %v5749, 0
      %v5811 = vsel %vm3589, %v5750, 0
      %v5814 = vsel %vm3589, %v5751, 0
      %v5817 = vsel %vm3589, %v5752, 0
      %v5820 = vsel %vm3589, %v5753, 0
      %v5823 = vsel %vm3589, %v5754, 0
      %v5826 = vsel %vm3589, %v5755, 0
      %v5829 = vsel %vm3589, %v5756, 0
      %v5832 = vsel %vm3589, %v5757, 0
      %5834 = vmatprep.subr.mxu0 0.0
      %5835 = vmatpush1.msra.mxu0 %v5758
      %5836 = vmatprep.subr.mxu0 0.0
      %5837 = vmatpush1.msra.mxu0 %v5759
      %5838 = vmatprep.subr.mxu0 0.0
      %5839 = vmatpush1.msra.mxu0 %v5760
      %5840 = vmatprep.subr.mxu0 0.0
      %5841 = vmatpush1.msra.mxu0 %v5761
      %5842 = vmatprep.subr.mxu0 0.0
      %5843 = vmatpush1.msra.mxu0 0.0
      %5844 = vmatprep.subr.mxu0 0.0
      %5845 = vmatpush1.msra.mxu0 0.0
      %5846 = vmatprep.subr.mxu0 0.0
      %5847 = vmatpush1.msra.mxu0 0.0
      %5848 = vmatprep.subr.mxu0 0.0
      %5849 = vmatpush1.msra.mxu0 0.0
      %5850 = vmatprep.subr.mxu0 0.0
      %5851 = vmatpush1.msra.mxu0 0.0
      %5852 = vmatprep.subr.mxu0 0.0
      %5853 = vmatpush1.msra.mxu0 0.0
      %5854 = vmatprep.subr.mxu0 0.0
      %5855 = vmatpush1.msra.mxu0 0.0
      %5856 = vmatprep.subr.mxu0 0.0
      %5857 = vmatpush1.msra.mxu0 0.0
      %5858 = vmatprep.subr.mxu0 0.0
      %5859 = vmatpush1.msra.mxu0 0.0
      %5860 = vmatprep.subr.mxu0 0.0
      %5861 = vmatpush1.msra.mxu0 0.0
      %5862 = vmatprep.subr.mxu0 0.0
      %5863 = vmatpush1.msra.mxu0 0.0
      %5864 = vmatprep.subr.mxu0 0.0
      %5865 = vmatpush1.msra.mxu0 0.0
      %5866 = vmatprep.subr.mxu0 0.0
      %5867 = vmatpush1.msra.mxu0 0.0
      %5868 = vmatprep.subr.mxu0 0.0
      %5869 = vmatpush1.msra.mxu0 0.0
      %5870 = vmatprep.subr.mxu0 0.0
      %5871 = vmatpush1.msra.mxu0 0.0
      %5872 = vmatprep.subr.mxu0 0.0
      %5873 = vmatpush1.msra.mxu0 0.0
      %5874 = vmatprep.subr.mxu0 0.0
      %5875 = vmatpush1.msra.mxu0 0.0
      %5876 = vmatprep.subr.mxu0 0.0
      %5877 = vmatpush1.msra.mxu0 0.0
      %5878 = vmatprep.subr.mxu0 0.0
      %5879 = vmatpush1.msra.mxu0 0.0
      %5880 = vmatprep.subr.mxu0 0.0
      %5881 = vmatpush1.msra.mxu0 0.0
      %5882 = vmatprep.subr.mxu0 0.0
      %5883 = vmatpush1.msra.mxu0 0.0
      %5884 = vmatprep.subr.mxu0 0.0
      %5885 = vmatpush1.msra.mxu0 0.0
      %5886 = vmatprep.subr.mxu0 0.0
      %5887 = vmatpush1.msra.mxu0 0.0
      %5888 = vmatprep.subr.mxu0 0.0
      %5889 = vmatpush1.msra.mxu0 0.0
      %5890 = vmatprep.subr.mxu0 0.0
      %5891 = vmatpush1.msra.mxu0 0.0
      %5892 = vmatprep.subr.mxu0 0.0
      %5893 = vmatpush1.msra.mxu0 0.0
      %5894 = vmatprep.subr.mxu0 0.0
      %5895 = vmatpush1.msra.mxu0 0.0
      %5896 = vmatprep.subr.mxu0 0.0
      %5897 = vmatpush1.msra.mxu0 0.0
      %5898 = vmatprep.mubr.f32.mxu0 0.0
      %5899 = vmatmul.mubr.f32.gmra.mrb[0].mxu0 %v5763
      %v5900 = vpop.f32.mrb[0].mxu0
      %v5901 = vadd.f32 0.0, %v5900
      %v5902 = vpop.f32.mrb[0].mxu0
      %5903 = vmatprep.mubr.f32.mxu0 0.0
      %5904 = vmatmul.mubr.f32.gmra.mrb[0].mxu0 %v5766
      %v5905 = vpop.f32.mrb[0].mxu0
      %v5906 = vadd.f32 0.0, %v5905
      %v5907 = vpop.f32.mrb[0].mxu0
      %5908 = vmatprep.mubr.f32.mxu0 0.0
      %5909 = vmatmul.mubr.f32.gmra.mrb[0].mxu0 %v5769
      %v5910 = vpop.f32.mrb[0].mxu0
      %v5911 = vadd.f32 0.0, %v5910
      %v5912 = vpop.f32.mrb[0].mxu0
      %5913 = vmatprep.mubr.f32.mxu0 0.0
      %5914 = vmatmul.mubr.f32.gmra.mrb[0].mxu0 %v5772
      %v5915 = vpop.f32.mrb[0].mxu0
      %v5916 = vadd.f32 0.0, %v5915
      %v5917 = vpop.f32.mrb[0].mxu0
      %5918 = vmatprep.mubr.f32.mxu0 0.0
      %5919 = vmatmul.mubr.f32.gmra.mrb[0].mxu0 %v5775
      %v5920 = vpop.f32.mrb[0].mxu0
      %v5921 = vadd.f32 0.0, %v5920
      %v5922 = vpop.f32.mrb[0].mxu0
      %5923 = vmatprep.mubr.f32.mxu0 0.0
      %5924 = vmatmul.mubr.f32.gmra.mrb[0].mxu0 %v5778
      %v5925 = vpop.f32.mrb[0].mxu0
      %v5926 = vadd.f32 0.0, %v5925
      %v5927 = vpop.f32.mrb[0].mxu0
      %5928 = vmatprep.mubr.f32.mxu0 0.0
      %5929 = vmatmul.mubr.f32.gmra.mrb[0].mxu0 %v5781
      %v5930 = vpop.f32.mrb[0].mxu0
      %v5931 = vadd.f32 0.0, %v5930
      %v5932 = vpop.f32.mrb[0].mxu0
      %5933 = vmatprep.mubr.f32.mxu0 0.0
      %5934 = vmatmul.mubr.f32.gmra.mrb[0].mxu0 %v5784
      %v5935 = vpop.f32.mrb[0].mxu0
      %v5936 = vadd.f32 0.0, %v5935
      %v5937 = vpop.f32.mrb[0].mxu0
      %5938 = vmatprep.mubr.f32.mxu0 0.0
      %5939 = vmatmul.mubr.f32.gmra.mrb[0].mxu0 %v5787
      %v5940 = vpop.f32.mrb[0].mxu0
      %v5941 = vadd.f32 0.0, %v5940
      %v5942 = vpop.f32.mrb[0].mxu0
      %5943 = vmatprep.mubr.f32.mxu0 0.0
      %5944 = vmatmul.mubr.f32.gmra.mrb[0].mxu0 %v5790
      %v5945 = vpop.f32.mrb[0].mxu0
      %v5946 = vadd.f32 0.0, %v5945
      %v5947 = vpop.f32.mrb[0].mxu0
      %5948 = vmatprep.mubr.f32.mxu0 0.0
      %5949 = vmatmul.mubr.f32.gmra.mrb[0].mxu0 %v5793
      %v5950 = vpop.f32.mrb[0].mxu0
      %v5951 = vadd.f32 0.0, %v5950
      %v5952 = vpop.f32.mrb[0].mxu0
      %5953 = vmatprep.mubr.f32.mxu0 0.0
      %5954 = vmatmul.mubr.f32.gmra.mrb[0].mxu0 %v5796
      %v5955 = vpop.f32.mrb[0].mxu0
      %v5956 = vadd.f32 0.0, %v5955
      %v5957 = vpop.f32.mrb[0].mxu0
      %5958 = vmatprep.mubr.f32.mxu0 0.0
      %5959 = vmatmul.mubr.f32.gmra.mrb[0].mxu0 %v5799
      %v5960 = vpop.f32.mrb[0].mxu0
      %v5961 = vadd.f32 0.0, %v5960
      %v5962 = vpop.f32.mrb[0].mxu0
      %5963 = vmatprep.mubr.f32.mxu0 0.0
      %5964 = vmatmul.mubr.f32.gmra.mrb[0].mxu0 %v5802
      %v5965 = vpop.f32.mrb[0].mxu0
      %v5966 = vadd.f32 0.0, %v5965
      %v5967 = vpop.f32.mrb[0].mxu0
      %5968 = vmatprep.mubr.f32.mxu0 0.0
      %5969 = vmatmul.mubr.f32.gmra.mrb[0].mxu0 %v5805
      %v5970 = vpop.f32.mrb[0].mxu0
      %v5971 = vadd.f32 0.0, %v5970
      %v5972 = vpop.f32.mrb[0].mxu0
      %5973 = vmatprep.mubr.f32.mxu0 0.0
      %5974 = vmatmul.mubr.f32.gmra.mrb[0].mxu0 %v5808
      %v5975 = vpop.f32.mrb[0].mxu0
      %v5976 = vadd.f32 0.0, %v5975
      %v5977 = vpop.f32.mrb[0].mxu0
      %5978 = vmatprep.mubr.f32.mxu0 0.0
      %5979 = vmatmul.mubr.f32.gmra.mrb[0].mxu0 %v5811
      %v5980 = vpop.f32.mrb[0].mxu0
      %v5981 = vadd.f32 0.0, %v5980
      %v5982 = vpop.f32.mrb[0].mxu0
      %5983 = vmatprep.mubr.f32.mxu0 0.0
      %5984 = vmatmul.mubr.f32.gmra.mrb[0].mxu0 %v5814
      %v5985 = vpop.f32.mrb[0].mxu0
      %v5986 = vadd.f32 0.0, %v5985
      %v5987 = vpop.f32.mrb[0].mxu0
      %5988 = vmatprep.mubr.f32.mxu0 0.0
      %5989 = vmatmul.mubr.f32.gmra.mrb[0].mxu0 %v5817
      %v5990 = vpop.f32.mrb[0].mxu0
      %v5991 = vadd.f32 0.0, %v5990
      %v5992 = vpop.f32.mrb[0].mxu0
      %5993 = vmatprep.mubr.f32.mxu0 0.0
      %5994 = vmatmul.mubr.f32.gmra.mrb[0].mxu0 %v5820
      %v5995 = vpop.f32.mrb[0].mxu0
      %v5996 = vadd.f32 0.0, %v5995
      %v5997 = vpop.f32.mrb[0].mxu0
      %5998 = vmatprep.mubr.f32.mxu0 0.0
      %5999 = vmatmul.mubr.f32.gmra.mrb[0].mxu0 %v5823
      %v6000 = vpop.f32.mrb[0].mxu0
      %v6001 = vadd.f32 0.0, %v6000
      %v6002 = vpop.f32.mrb[0].mxu0
      %6003 = vmatprep.mubr.f32.mxu0 0.0
      %6004 = vmatmul.mubr.f32.gmra.mrb[0].mxu0 %v5826
      %v6005 = vpop.f32.mrb[0].mxu0
      %v6006 = vadd.f32 0.0, %v6005
      %v6007 = vpop.f32.mrb[0].mxu0
      %6008 = vmatprep.mubr.f32.mxu0 0.0
      %6009 = vmatmul.mubr.f32.gmra.mrb[0].mxu0 %v5829
      %v6010 = vpop.f32.mrb[0].mxu0
      %v6011 = vadd.f32 0.0, %v6010
      %v6012 = vpop.f32.mrb[0].mxu0
      %6013 = vmatprep.mubr.f32.mxu0 0.0
      %6014 = vmatmul.mubr.f32.gmra.mrb[0].mxu0 %v5832
      %v6015 = vpop.f32.mrb[0].mxu0
      %v6016 = vadd.f32 0.0, %v6015
      %v6017 = vpop.f32.mrb[0].mxu0
      %6018 = vdwg.mxu0
      %v6019 = vadd.f32 %v5710, %v5901
      %v6020 = vadd.f32 %v5711, %v5906
      %v6021 = vadd.f32 %v5712, %v5911
      %v6022 = vadd.f32 %v5713, %v5916
      %v6023 = vadd.f32 %v5714, %v5921
      %v6024 = vadd.f32 %v5715, %v5926
      %v6025 = vadd.f32 %v5716, %v5931
      %v6026 = vadd.f32 %v5717, %v5936
      %v6027 = vadd.f32 %v5718, %v5941
      %v6028 = vadd.f32 %v5719, %v5946
      %v6029 = vadd.f32 %v5720, %v5951
      %v6030 = vadd.f32 %v5721, %v5956
      %v6031 = vadd.f32 %v5722, %v5961
      %v6032 = vadd.f32 %v5723, %v5966
      %v6033 = vadd.f32 %v5724, %v5971
      %v6034 = vadd.f32 %v5725, %v5976
      %v6035 = vadd.f32 %v5726, %v5981
      %v6036 = vadd.f32 %v5727, %v5986
      %v6037 = vadd.f32 %v5728, %v5991
      %v6038 = vadd.f32 %v5729, %v5996
      %v6039 = vadd.f32 %v5730, %v6001
      %v6040 = vadd.f32 %v5731, %v6006
      %v6041 = vadd.f32 %v5732, %v6011
      %v6042 = vadd.f32 %v5733, %v6016
      %v6043 = vld [vmem:[#allocation2 + $0x22] sm:$0xff]
      %v6044 = vld [vmem:[#allocation2 + $0x2a] sm:$0xff]
      %v6045 = vld [vmem:[#allocation2 + $0x32] sm:$0xff]
      %v6046 = vld [vmem:[#allocation2 + $0x3a] sm:$0xff]
      %v6047 = vld [vmem:[#allocation2 + $0x42] sm:$0xff]
      %v6048 = vld [vmem:[#allocation2 + $0x4a] sm:$0xff]
      %v6049 = vld [vmem:[#allocation2 + $0x52] sm:$0xff]
      %v6050 = vld [vmem:[#allocation2 + $0x5a] sm:$0xff]
      %v6051 = vld [vmem:[#allocation2 + $0x62] sm:$0xff]
      %v6052 = vld [vmem:[#allocation2 + $0x6a] sm:$0xff]
      %v6053 = vld [vmem:[#allocation2 + $0x72] sm:$0xff]
      %v6054 = vld [vmem:[#allocation2 + $0x7a] sm:$0xff]
      %v6055 = vld [vmem:[#allocation2 + $0x82] sm:$0xff]
      %v6056 = vld [vmem:[#allocation2 + $0x8a] sm:$0xff]
      %v6057 = vld [vmem:[#allocation2 + $0x92] sm:$0xff]
      %v6058 = vld [vmem:[#allocation2 + $0x9a] sm:$0xff]
      %v6059 = vld [vmem:[#allocation2 + $0xa2] sm:$0xff]
      %v6060 = vld [vmem:[#allocation2 + $0xaa] sm:$0xff]
      %v6061 = vld [vmem:[#allocation2 + $0xb2] sm:$0xff]
      %v6062 = vld [vmem:[#allocation2 + $0xba] sm:$0xff]
      %v6063 = vld [vmem:[#allocation2 + $0xc2] sm:$0xff]
      %v6064 = vld [vmem:[#allocation2 + $0xca] sm:$0xff]
      %v6065 = vld [vmem:[#allocation2 + $0xd2] sm:$0xff]
      %v6066 = vld [vmem:[#allocation2 + $0xda] sm:$0xf]
      %v6067 = vld [vmem:[%s3 + $0x100] sm:$0xff]
      %v6068 = vld [vmem:[%s3 + $0x108] sm:$0xff]
      %v6069 = vld [vmem:[%s3 + $0x110] sm:$0xff]
      %v6070 = vld [vmem:[%s3 + $0x118] sm:$0xff]
      %v6072 = vsel %vm3589, %v6043, 0
      %v6075 = vsel %vm3589, %v6044, 0
      %v6078 = vsel %vm3589, %v6045, 0
      %v6081 = vsel %vm3589, %v6046, 0
      %v6084 = vsel %vm3589, %v6047, 0
      %v6087 = vsel %vm3589, %v6048, 0
      %v6090 = vsel %vm3589, %v6049, 0
      %v6093 = vsel %vm3589, %v6050, 0
      %v6096 = vsel %vm3589, %v6051, 0
      %v6099 = vsel %vm3589, %v6052, 0
      %v6102 = vsel %vm3589, %v6053, 0
      %v6105 = vsel %vm3589, %v6054, 0
      %v6108 = vsel %vm3589, %v6055, 0
      %v6111 = vsel %vm3589, %v6056, 0
      %v6114 = vsel %vm3589, %v6057, 0
      %v6117 = vsel %vm3589, %v6058, 0
      %v6120 = vsel %vm3589, %v6059, 0
      %v6123 = vsel %vm3589, %v6060, 0
      %v6126 = vsel %vm3589, %v6061, 0
      %v6129 = vsel %vm3589, %v6062, 0
      %v6132 = vsel %vm3589, %v6063, 0
      %v6135 = vsel %vm3589, %v6064, 0
      %v6138 = vsel %vm3589, %v6065, 0
      %v6141 = vsel %vm3589, %v6066, 0
      %6143 = vmatprep.subr.mxu0 0.0
      %6144 = vmatpush1.msra.mxu0 %v6067
      %6145 = vmatprep.subr.mxu0 0.0
      %6146 = vmatpush1.msra.mxu0 %v6068
      %6147 = vmatprep.subr.mxu0 0.0
      %6148 = vmatpush1.msra.mxu0 %v6069
      %6149 = vmatprep.subr.mxu0 0.0
      %6150 = vmatpush1.msra.mxu0 %v6070
      %6151 = vmatprep.subr.mxu0 0.0
      %6152 = vmatpush1.msra.mxu0 0.0
      %6153 = vmatprep.subr.mxu0 0.0
      %6154 = vmatpush1.msra.mxu0 0.0
      %6155 = vmatprep.subr.mxu0 0.0
      %6156 = vmatpush1.msra.mxu0 0.0
      %6157 = vmatprep.subr.mxu0 0.0
      %6158 = vmatpush1.msra.mxu0 0.0
      %6159 = vmatprep.subr.mxu0 0.0
      %6160 = vmatpush1.msra.mxu0 0.0
      %6161 = vmatprep.subr.mxu0 0.0
      %6162 = vmatpush1.msra.mxu0 0.0
      %6163 = vmatprep.subr.mxu0 0.0
      %6164 = vmatpush1.msra.mxu0 0.0
      %6165 = vmatprep.subr.mxu0 0.0
      %6166 = vmatpush1.msra.mxu0 0.0
      %6167 = vmatprep.subr.mxu0 0.0
      %6168 = vmatpush1.msra.mxu0 0.0
      %6169 = vmatprep.subr.mxu0 0.0
      %6170 = vmatpush1.msra.mxu0 0.0
      %6171 = vmatprep.subr.mxu0 0.0
      %6172 = vmatpush1.msra.mxu0 0.0
      %6173 = vmatprep.subr.mxu0 0.0
      %6174 = vmatpush1.msra.mxu0 0.0
      %6175 = vmatprep.subr.mxu0 0.0
      %6176 = vmatpush1.msra.mxu0 0.0
      %6177 = vmatprep.subr.mxu0 0.0
      %6178 = vmatpush1.msra.mxu0 0.0
      %6179 = vmatprep.subr.mxu0 0.0
      %6180 = vmatpush1.msra.mxu0 0.0
      %6181 = vmatprep.subr.mxu0 0.0
      %6182 = vmatpush1.msra.mxu0 0.0
      %6183 = vmatprep.subr.mxu0 0.0
      %6184 = vmatpush1.msra.mxu0 0.0
      %6185 = vmatprep.subr.mxu0 0.0
      %6186 = vmatpush1.msra.mxu0 0.0
      %6187 = vmatprep.subr.mxu0 0.0
      %6188 = vmatpush1.msra.mxu0 0.0
      %6189 = vmatprep.subr.mxu0 0.0
      %6190 = vmatpush1.msra.mxu0 0.0
      %6191 = vmatprep.subr.mxu0 0.0
      %6192 = vmatpush1.msra.mxu0 0.0
      %6193 = vmatprep.subr.mxu0 0.0
      %6194 = vmatpush1.msra.mxu0 0.0
      %6195 = vmatprep.subr.mxu0 0.0
      %6196 = vmatpush1.msra.mxu0 0.0
      %6197 = vmatprep.subr.mxu0 0.0
      %6198 = vmatpush1.msra.mxu0 0.0
      %6199 = vmatprep.subr.mxu0 0.0
      %6200 = vmatpush1.msra.mxu0 0.0
      %6201 = vmatprep.subr.mxu0 0.0
      %6202 = vmatpush1.msra.mxu0 0.0
      %6203 = vmatprep.subr.mxu0 0.0
      %6204 = vmatpush1.msra.mxu0 0.0
      %6205 = vmatprep.subr.mxu0 0.0
      %6206 = vmatpush1.msra.mxu0 0.0
      %6207 = vmatprep.mubr.f32.mxu0 0.0
      %6208 = vmatmul.mubr.f32.gmra.mrb[0].mxu0 %v6072
      %v6209 = vpop.f32.mrb[0].mxu0
      %v6210 = vadd.f32 0.0, %v6209
      %v6211 = vpop.f32.mrb[0].mxu0
      %6212 = vmatprep.mubr.f32.mxu0 0.0
      %6213 = vmatmul.mubr.f32.gmra.mrb[0].mxu0 %v6075
      %v6214 = vpop.f32.mrb[0].mxu0
      %v6215 = vadd.f32 0.0, %v6214
      %v6216 = vpop.f32.mrb[0].mxu0
      %6217 = vmatprep.mubr.f32.mxu0 0.0
      %6218 = vmatmul.mubr.f32.gmra.mrb[0].mxu0 %v6078
      %v6219 = vpop.f32.mrb[0].mxu0
      %v6220 = vadd.f32 0.0, %v6219
      %v6221 = vpop.f32.mrb[0].mxu0
      %6222 = vmatprep.mubr.f32.mxu0 0.0
      %6223 = vmatmul.mubr.f32.gmra.mrb[0].mxu0 %v6081
      %v6224 = vpop.f32.mrb[0].mxu0
      %v6225 = vadd.f32 0.0, %v6224
      %v6226 = vpop.f32.mrb[0].mxu0
      %6227 = vmatprep.mubr.f32.mxu0 0.0
      %6228 = vmatmul.mubr.f32.gmra.mrb[0].mxu0 %v6084
      %v6229 = vpop.f32.mrb[0].mxu0
      %v6230 = vadd.f32 0.0, %v6229
      %v6231 = vpop.f32.mrb[0].mxu0
      %6232 = vmatprep.mubr.f32.mxu0 0.0
      %6233 = vmatmul.mubr.f32.gmra.mrb[0].mxu0 %v6087
      %v6234 = vpop.f32.mrb[0].mxu0
      %v6235 = vadd.f32 0.0, %v6234
      %v6236 = vpop.f32.mrb[0].mxu0
      %6237 = vmatprep.mubr.f32.mxu0 0.0
      %6238 = vmatmul.mubr.f32.gmra.mrb[0].mxu0 %v6090
      %v6239 = vpop.f32.mrb[0].mxu0
      %v6240 = vadd.f32 0.0, %v6239
      %v6241 = vpop.f32.mrb[0].mxu0
      %6242 = vmatprep.mubr.f32.mxu0 0.0
      %6243 = vmatmul.mubr.f32.gmra.mrb[0].mxu0 %v6093
      %v6244 = vpop.f32.mrb[0].mxu0
      %v6245 = vadd.f32 0.0, %v6244
      %v6246 = vpop.f32.mrb[0].mxu0
      %6247 = vmatprep.mubr.f32.mxu0 0.0
      %6248 = vmatmul.mubr.f32.gmra.mrb[0].mxu0 %v6096
      %v6249 = vpop.f32.mrb[0].mxu0
      %v6250 = vadd.f32 0.0, %v6249
      %v6251 = vpop.f32.mrb[0].mxu0
      %6252 = vmatprep.mubr.f32.mxu0 0.0
      %6253 = vmatmul.mubr.f32.gmra.mrb[0].mxu0 %v6099
      %v6254 = vpop.f32.mrb[0].mxu0
      %v6255 = vadd.f32 0.0, %v6254
      %v6256 = vpop.f32.mrb[0].mxu0
      %6257 = vmatprep.mubr.f32.mxu0 0.0
      %6258 = vmatmul.mubr.f32.gmra.mrb[0].mxu0 %v6102
      %v6259 = vpop.f32.mrb[0].mxu0
      %v6260 = vadd.f32 0.0, %v6259
      %v6261 = vpop.f32.mrb[0].mxu0
      %6262 = vmatprep.mubr.f32.mxu0 0.0
      %6263 = vmatmul.mubr.f32.gmra.mrb[0].mxu0 %v6105
      %v6264 = vpop.f32.mrb[0].mxu0
      %v6265 = vadd.f32 0.0, %v6264
      %v6266 = vpop.f32.mrb[0].mxu0
      %6267 = vmatprep.mubr.f32.mxu0 0.0
      %6268 = vmatmul.mubr.f32.gmra.mrb[0].mxu0 %v6108
      %v6269 = vpop.f32.mrb[0].mxu0
      %v6270 = vadd.f32 0.0, %v6269
      %v6271 = vpop.f32.mrb[0].mxu0
      %6272 = vmatprep.mubr.f32.mxu0 0.0
      %6273 = vmatmul.mubr.f32.gmra.mrb[0].mxu0 %v6111
      %v6274 = vpop.f32.mrb[0].mxu0
      %v6275 = vadd.f32 0.0, %v6274
      %v6276 = vpop.f32.mrb[0].mxu0
      %6277 = vmatprep.mubr.f32.mxu0 0.0
      %6278 = vmatmul.mubr.f32.gmra.mrb[0].mxu0 %v6114
      %v6279 = vpop.f32.mrb[0].mxu0
      %v6280 = vadd.f32 0.0, %v6279
      %v6281 = vpop.f32.mrb[0].mxu0
      %6282 = vmatprep.mubr.f32.mxu0 0.0
      %6283 = vmatmul.mubr.f32.gmra.mrb[0].mxu0 %v6117
      %v6284 = vpop.f32.mrb[0].mxu0
      %v6285 = vadd.f32 0.0, %v6284
      %v6286 = vpop.f32.mrb[0].mxu0
      %6287 = vmatprep.mubr.f32.mxu0 0.0
      %6288 = vmatmul.mubr.f32.gmra.mrb[0].mxu0 %v6120
      %v6289 = vpop.f32.mrb[0].mxu0
      %v6290 = vadd.f32 0.0, %v6289
      %v6291 = vpop.f32.mrb[0].mxu0
      %6292 = vmatprep.mubr.f32.mxu0 0.0
      %6293 = vmatmul.mubr.f32.gmra.mrb[0].mxu0 %v6123
      %v6294 = vpop.f32.mrb[0].mxu0
      %v6295 = vadd.f32 0.0, %v6294
      %v6296 = vpop.f32.mrb[0].mxu0
      %6297 = vmatprep.mubr.f32.mxu0 0.0
      %6298 = vmatmul.mubr.f32.gmra.mrb[0].mxu0 %v6126
      %v6299 = vpop.f32.mrb[0].mxu0
      %v6300 = vadd.f32 0.0, %v6299
      %v6301 = vpop.f32.mrb[0].mxu0
      %6302 = vmatprep.mubr.f32.mxu0 0.0
      %6303 = vmatmul.mubr.f32.gmra.mrb[0].mxu0 %v6129
      %v6304 = vpop.f32.mrb[0].mxu0
      %v6305 = vadd.f32 0.0, %v6304
      %v6306 = vpop.f32.mrb[0].mxu0
      %6307 = vmatprep.mubr.f32.mxu0 0.0
      %6308 = vmatmul.mubr.f32.gmra.mrb[0].mxu0 %v6132
      %v6309 = vpop.f32.mrb[0].mxu0
      %v6310 = vadd.f32 0.0, %v6309
      %v6311 = vpop.f32.mrb[0].mxu0
      %6312 = vmatprep.mubr.f32.mxu0 0.0
      %6313 = vmatmul.mubr.f32.gmra.mrb[0].mxu0 %v6135
      %v6314 = vpop.f32.mrb[0].mxu0
      %v6315 = vadd.f32 0.0, %v6314
      %v6316 = vpop.f32.mrb[0].mxu0
      %6317 = vmatprep.mubr.f32.mxu0 0.0
      %6318 = vmatmul.mubr.f32.gmra.mrb[0].mxu0 %v6138
      %v6319 = vpop.f32.mrb[0].mxu0
      %v6320 = vadd.f32 0.0, %v6319
      %v6321 = vpop.f32.mrb[0].mxu0
      %6322 = vmatprep.mubr.f32.mxu0 0.0
      %6323 = vmatmul.mubr.f32.gmra.mrb[0].mxu0 %v6141
      %v6324 = vpop.f32.mrb[0].mxu0
      %v6325 = vadd.f32 0.0, %v6324
      %v6326 = vpop.f32.mrb[0].mxu0
      %6327 = vdwg.mxu0
      %v6328 = vadd.f32 %v6019, %v6210
      %v6329 = vadd.f32 %v6020, %v6215
      %v6330 = vadd.f32 %v6021, %v6220
      %v6331 = vadd.f32 %v6022, %v6225
      %v6332 = vadd.f32 %v6023, %v6230
      %v6333 = vadd.f32 %v6024, %v6235
      %v6334 = vadd.f32 %v6025, %v6240
      %v6335 = vadd.f32 %v6026, %v6245
      %v6336 = vadd.f32 %v6027, %v6250
      %v6337 = vadd.f32 %v6028, %v6255
      %v6338 = vadd.f32 %v6029, %v6260
      %v6339 = vadd.f32 %v6030, %v6265
      %v6340 = vadd.f32 %v6031, %v6270
      %v6341 = vadd.f32 %v6032, %v6275
      %v6342 = vadd.f32 %v6033, %v6280
      %v6343 = vadd.f32 %v6034, %v6285
      %v6344 = vadd.f32 %v6035, %v6290
      %v6345 = vadd.f32 %v6036, %v6295
      %v6346 = vadd.f32 %v6037, %v6300
      %v6347 = vadd.f32 %v6038, %v6305
      %v6348 = vadd.f32 %v6039, %v6310
      %v6349 = vadd.f32 %v6040, %v6315
      %v6350 = vadd.f32 %v6041, %v6320
      %v6351 = vadd.f32 %v6042, %v6325
      %v6352 = vld [vmem:[%s4] sm:$0x1]
      %v6354 = vlaneseq
      %v6355 = vshrl.u32 %v6354, 7
      %v6356 = vsub.s32 0, %v6355
      %v6357 = vrot.slane %v6352, %v6356
      %v6359 = vadd.f32 %v6328, %v6357
      %v6360 = vadd.f32 %v6329, %v6357
      %v6361 = vadd.f32 %v6330, %v6357
      %v6362 = vadd.f32 %v6331, %v6357
      %v6363 = vadd.f32 %v6332, %v6357
      %v6364 = vadd.f32 %v6333, %v6357
      %v6365 = vadd.f32 %v6334, %v6357
      %v6366 = vadd.f32 %v6335, %v6357
      %v6367 = vadd.f32 %v6336, %v6357
      %v6368 = vadd.f32 %v6337, %v6357
      %v6369 = vadd.f32 %v6338, %v6357
      %v6370 = vadd.f32 %v6339, %v6357
      %v6371 = vadd.f32 %v6340, %v6357
      %v6372 = vadd.f32 %v6341, %v6357
      %v6373 = vadd.f32 %v6342, %v6357
      %v6374 = vadd.f32 %v6343, %v6357
      %v6375 = vadd.f32 %v6344, %v6357
      %v6376 = vadd.f32 %v6345, %v6357
      %v6377 = vadd.f32 %v6346, %v6357
      %v6378 = vadd.f32 %v6347, %v6357
      %v6379 = vadd.f32 %v6348, %v6357
      %v6380 = vadd.f32 %v6349, %v6357
      %v6381 = vadd.f32 %v6350, %v6357
      %v6382 = vadd.f32 %v6351, %v6357
      %v6383 = vmax.f32 %v6359, 0.0
      %v6384 = vmax.f32 %v6360, 0.0
      %v6385 = vmax.f32 %v6361, 0.0
      %v6386 = vmax.f32 %v6362, 0.0
      %v6387 = vmax.f32 %v6363, 0.0
      %v6388 = vmax.f32 %v6364, 0.0
      %v6389 = vmax.f32 %v6365, 0.0
      %v6390 = vmax.f32 %v6366, 0.0
      %v6391 = vmax.f32 %v6367, 0.0
      %v6392 = vmax.f32 %v6368, 0.0
      %v6393 = vmax.f32 %v6369, 0.0
      %v6394 = vmax.f32 %v6370, 0.0
      %v6395 = vmax.f32 %v6371, 0.0
      %v6396 = vmax.f32 %v6372, 0.0
      %v6397 = vmax.f32 %v6373, 0.0
      %v6398 = vmax.f32 %v6374, 0.0
      %v6399 = vmax.f32 %v6375, 0.0
      %v6400 = vmax.f32 %v6376, 0.0
      %v6401 = vmax.f32 %v6377, 0.0
      %v6402 = vmax.f32 %v6378, 0.0
      %v6403 = vmax.f32 %v6379, 0.0
      %v6404 = vmax.f32 %v6380, 0.0
      %v6405 = vmax.f32 %v6381, 0.0
      %v6406 = vmax.f32 %v6382, 0.0
      %vm6407 = vcmask 523264
      %6408 = vst.msk [vmem:[#allocation3] sm:$0xff] %vm6407, %v6383
      %6409 = vst.msk [vmem:[#allocation3 + $0x8] sm:$0xff] %vm6407, %v6384
      %6410 = vst.msk [vmem:[#allocation3 + $0x10] sm:$0xff] %vm6407, %v6385
      %6411 = vst.msk [vmem:[#allocation3 + $0x18] sm:$0xff] %vm6407, %v6386
      %6412 = vst.msk [vmem:[#allocation3 + $0x20] sm:$0xff] %vm6407, %v6387
      %6413 = vst.msk [vmem:[#allocation3 + $0x28] sm:$0xff] %vm6407, %v6388
      %6414 = vst.msk [vmem:[#allocation3 + $0x30] sm:$0xff] %vm6407, %v6389
      %6415 = vst.msk [vmem:[#allocation3 + $0x38] sm:$0xff] %vm6407, %v6390
      %6416 = vst.msk [vmem:[#allocation3 + $0x40] sm:$0xff] %vm6407, %v6391
      %6417 = vst.msk [vmem:[#allocation3 + $0x48] sm:$0xff] %vm6407, %v6392
      %6418 = vst.msk [vmem:[#allocation3 + $0x50] sm:$0xff] %vm6407, %v6393
      %6419 = vst.msk [vmem:[#allocation3 + $0x58] sm:$0xff] %vm6407, %v6394
      %6420 = vst.msk [vmem:[#allocation3 + $0x60] sm:$0xff] %vm6407, %v6395
      %6421 = vst.msk [vmem:[#allocation3 + $0x68] sm:$0xff] %vm6407, %v6396
      %6422 = vst.msk [vmem:[#allocation3 + $0x70] sm:$0xff] %vm6407, %v6397
      %6423 = vst.msk [vmem:[#allocation3 + $0x78] sm:$0xff] %vm6407, %v6398
      %6424 = vst.msk [vmem:[#allocation3 + $0x80] sm:$0xff] %vm6407, %v6399
      %6425 = vst.msk [vmem:[#allocation3 + $0x88] sm:$0xff] %vm6407, %v6400
      %6426 = vst.msk [vmem:[#allocation3 + $0x90] sm:$0xff] %vm6407, %v6401
      %6427 = vst.msk [vmem:[#allocation3 + $0x98] sm:$0xff] %vm6407, %v6402
      %6428 = vst.msk [vmem:[#allocation3 + $0xa0] sm:$0xff] %vm6407, %v6403
      %6429 = vst.msk [vmem:[#allocation3 + $0xa8] sm:$0xff] %vm6407, %v6404
      %6430 = vst.msk [vmem:[#allocation3 + $0xb0] sm:$0xff] %vm6407, %v6405
      %vm6431 = vcmask 519168
      %6432 = vst.msk [vmem:[#allocation3 + $0xb8] sm:$0xf] %vm6431, %v6406
      %v6433 = vld [vmem:[#allocation3] sm:$0xff]
      %v6434 = vld [vmem:[#allocation3 + $0x8] sm:$0xff]
      %v6435 = vld [vmem:[#allocation3 + $0x10] sm:$0xff]
      %v6436 = vld [vmem:[#allocation3 + $0x18] sm:$0xff]
      %v6437 = vld [vmem:[#allocation3 + $0x20] sm:$0xff]
      %v6438 = vld [vmem:[#allocation3 + $0x28] sm:$0xff]
      %v6439 = vld [vmem:[#allocation3 + $0x30] sm:$0xff]
      %v6440 = vld [vmem:[#allocation3 + $0x38] sm:$0xff]
      %v6441 = vld [vmem:[#allocation3 + $0x40] sm:$0xff]
      %v6442 = vld [vmem:[#allocation3 + $0x48] sm:$0xff]
      %v6443 = vld [vmem:[#allocation3 + $0x50] sm:$0xff]
      %v6444 = vld [vmem:[#allocation3 + $0x58] sm:$0xff]
      %v6445 = vld [vmem:[#allocation3 + $0x60] sm:$0xff]
      %v6446 = vld [vmem:[#allocation3 + $0x68] sm:$0xff]
      %v6447 = vld [vmem:[#allocation3 + $0x70] sm:$0xff]
      %v6448 = vld [vmem:[#allocation3 + $0x78] sm:$0xff]
      %v6449 = vld [vmem:[#allocation3 + $0x80] sm:$0xff]
      %v6450 = vld [vmem:[#allocation3 + $0x88] sm:$0xff]
      %v6451 = vld [vmem:[#allocation3 + $0x90] sm:$0xff]
      %v6452 = vld [vmem:[#allocation3 + $0x98] sm:$0xff]
      %v6453 = vld [vmem:[#allocation3 + $0xa0] sm:$0xff]
      %v6454 = vld [vmem:[#allocation3 + $0xa8] sm:$0x7]
      %v6455 = vld [vmem:[#allocation3 + $0x1] sm:$0xff]
      %v6456 = vld [vmem:[#allocation3 + $0x9] sm:$0xff]
      %v6457 = vld [vmem:[#allocation3 + $0x11] sm:$0xff]
      %v6458 = vld [vmem:[#allocation3 + $0x19] sm:$0xff]
      %v6459 = vld [vmem:[#allocation3 + $0x21] sm:$0xff]
      %v6460 = vld [vmem:[#allocation3 + $0x29] sm:$0xff]
      %v6461 = vld [vmem:[#allocation3 + $0x31] sm:$0xff]
      %v6462 = vld [vmem:[#allocation3 + $0x39] sm:$0xff]
      %v6463 = vld [vmem:[#allocation3 + $0x41] sm:$0xff]
      %v6464 = vld [vmem:[#allocation3 + $0x49] sm:$0xff]
      %v6465 = vld [vmem:[#allocation3 + $0x51] sm:$0xff]
      %v6466 = vld [vmem:[#allocation3 + $0x59] sm:$0xff]
      %v6467 = vld [vmem:[#allocation3 + $0x61] sm:$0xff]
      %v6468 = vld [vmem:[#allocation3 + $0x69] sm:$0xff]
      %v6469 = vld [vmem:[#allocation3 + $0x71] sm:$0xff]
      %v6470 = vld [vmem:[#allocation3 + $0x79] sm:$0xff]
      %v6471 = vld [vmem:[#allocation3 + $0x81] sm:$0xff]
      %v6472 = vld [vmem:[#allocation3 + $0x89] sm:$0xff]
      %v6473 = vld [vmem:[#allocation3 + $0x91] sm:$0xff]
      %v6474 = vld [vmem:[#allocation3 + $0x99] sm:$0xff]
      %v6475 = vld [vmem:[#allocation3 + $0xa1] sm:$0xff]
      %v6476 = vld [vmem:[#allocation3 + $0xa9] sm:$0x7]
      %v6477 = vmax.f32 %v6433, %v6455
      %v6478 = vmax.f32 %v6434, %v6456
      %v6479 = vmax.f32 %v6435, %v6457
      %v6480 = vmax.f32 %v6436, %v6458
      %v6481 = vmax.f32 %v6437, %v6459
      %v6482 = vmax.f32 %v6438, %v6460
      %v6483 = vmax.f32 %v6439, %v6461
      %v6484 = vmax.f32 %v6440, %v6462
      %v6485 = vmax.f32 %v6441, %v6463
      %v6486 = vmax.f32 %v6442, %v6464
      %v6487 = vmax.f32 %v6443, %v6465
      %v6488 = vmax.f32 %v6444, %v6466
      %v6489 = vmax.f32 %v6445, %v6467
      %v6490 = vmax.f32 %v6446, %v6468
      %v6491 = vmax.f32 %v6447, %v6469
      %v6492 = vmax.f32 %v6448, %v6470
      %v6493 = vmax.f32 %v6449, %v6471
      %v6494 = vmax.f32 %v6450, %v6472
      %v6495 = vmax.f32 %v6451, %v6473
      %v6496 = vmax.f32 %v6452, %v6474
      %v6497 = vmax.f32 %v6453, %v6475
      %v6498 = vmax.f32 %v6454, %v6476
      %v6499 = vld [vmem:[#allocation3 + $0xa8] sm:$0xff]
      %v6500 = vld [vmem:[#allocation3 + $0xb0] sm:$0xff]
      %v6501 = vld [vmem:[#allocation3 + $0xb8] sm:$0x7]
      %v6502 = vld [vmem:[#allocation3 + $0xa9] sm:$0xff]
      %v6503 = vld [vmem:[#allocation3 + $0xb1] sm:$0xff]
      %v6504 = vld [vmem:[#allocation3 + $0xb9] sm:$0x7]
      %v6505 = vmax.f32 %v6499, %v6502
      %v6506 = vmax.f32 %v6500, %v6503
      %v6507 = vmax.f32 %v6501, %v6504
      %v6508 = vmax.f32 %v6477, %v6479
      %v6509 = vmax.f32 %v6478, %v6480
      %v6510 = vmax.f32 %v6479, %v6481
      %v6511 = vmax.f32 %v6480, %v6482
      %v6512 = vmax.f32 %v6481, %v6483
      %v6513 = vmax.f32 %v6482, %v6484
      %v6514 = vmax.f32 %v6483, %v6485
      %v6515 = vmax.f32 %v6484, %v6486
      %v6516 = vmax.f32 %v6485, %v6487
      %v6517 = vmax.f32 %v6486, %v6488
      %v6518 = vmax.f32 %v6487, %v6489
      %v6519 = vmax.f32 %v6488, %v6490
      %v6520 = vmax.f32 %v6489, %v6491
      %v6521 = vmax.f32 %v6490, %v6492
      %v6522 = vmax.f32 %v6491, %v6493
      %v6523 = vmax.f32 %v6492, %v6494
      %v6524 = vmax.f32 %v6493, %v6495
      %v6525 = vmax.f32 %v6494, %v6496
      %v6526 = vmax.f32 %v6495, %v6497
      %v6527 = vmax.f32 %v6496, %v6505
      %v6528 = vmax.f32 %v6497, %v6506
      %v6529 = vmax.f32 %v6498, %v6507
      %v6530 = vld [vmem:[%s7] sm:$0xff]
      %v6531 = vld [vmem:[%s7 + $0x8] sm:$0xff]
      %v6532 = vld [vmem:[%s7 + $0x10] sm:$0xff]
      %v6533 = vld [vmem:[%s7 + $0x18] sm:$0xff]
      %v6534 = vld [vmem:[%s7 + $0x20] sm:$0xff]
      %v6535 = vld [vmem:[%s7 + $0x28] sm:$0xff]
      %v6536 = vld [vmem:[%s7 + $0x30] sm:$0xff]
      %v6537 = vld [vmem:[%s7 + $0x38] sm:$0xff]
      %v6538 = vld [vmem:[%s7 + $0x40] sm:$0xf]
      %v6539 = vld [vmem:[%s7 + $0x48] sm:$0xf]
      %vm6540 = vcmask 351232
      %v6542 = vsel %vm6540, %v6531, 0
      %v6545 = vsel %vm6540, %v6533, 0
      %v6548 = vsel %vm6540, %v6535, 0
      %v6551 = vsel %vm6540, %v6537, 0
      %v6554 = vsel %vm6540, %v6539, 0
      %vm6556 = vcmask 1042432
      %v6558 = vsel %vm6556, %v6529, 0
      %6560 = vmatprep.subr.mxu0 0.0
      %6561 = vmatpush1.msra.mxu0 %v6508
      %6562 = vmatprep.subr.mxu0 0.0
      %6563 = vmatpush1.msra.mxu0 %v6509
      %6564 = vmatprep.subr.mxu0 0.0
      %6565 = vmatpush1.msra.mxu0 %v6510
      %6566 = vmatprep.subr.mxu0 0.0
      %6567 = vmatpush1.msra.mxu0 %v6511
      %6568 = vmatprep.subr.mxu0 0.0
      %6569 = vmatpush1.msra.mxu0 %v6512
      %6570 = vmatprep.subr.mxu0 0.0
      %6571 = vmatpush1.msra.mxu0 %v6513
      %6572 = vmatprep.subr.mxu0 0.0
      %6573 = vmatpush1.msra.mxu0 %v6514
      %6574 = vmatprep.subr.mxu0 0.0
      %6575 = vmatpush1.msra.mxu0 %v6515
      %6576 = vmatprep.subr.mxu0 0.0
      %6577 = vmatpush1.msra.mxu0 %v6516
      %6578 = vmatprep.subr.mxu0 0.0
      %6579 = vmatpush1.msra.mxu0 %v6517
      %6580 = vmatprep.subr.mxu0 0.0
      %6581 = vmatpush1.msra.mxu0 %v6518
      %6582 = vmatprep.subr.mxu0 0.0
      %6583 = vmatpush1.msra.mxu0 %v6519
      %6584 = vmatprep.subr.mxu0 0.0
      %6585 = vmatpush1.msra.mxu0 %v6520
      %6586 = vmatprep.subr.mxu0 0.0
      %6587 = vmatpush1.msra.mxu0 %v6521
      %6588 = vmatprep.subr.mxu0 0.0
      %6589 = vmatpush1.msra.mxu0 %v6522
      %6590 = vmatprep.subr.mxu0 0.0
      %6591 = vmatpush1.msra.mxu0 %v6523
      %6592 = vmatprep.subr.mxu0 0.0
      %6593 = vmatpush1.msra.mxu0 %v6524
      %6594 = vmatprep.subr.mxu0 0.0
      %6595 = vmatpush1.msra.mxu0 %v6525
      %6596 = vmatprep.subr.mxu0 0.0
      %6597 = vmatpush1.msra.mxu0 %v6526
      %6598 = vmatprep.subr.mxu0 0.0
      %6599 = vmatpush1.msra.mxu0 %v6527
      %6600 = vmatprep.subr.mxu0 0.0
      %6601 = vmatpush1.msra.mxu0 %v6528
      %6602 = vmatprep.subr.mxu0 0.0
      %6603 = vmatpush1.msra.mxu0 %v6558
      %6604 = vmatprep.subr.mxu0 0.0
      %6605 = vmatpush1.msra.mxu0 0.0
      %6606 = vmatprep.subr.mxu0 0.0
      %6607 = vmatpush1.msra.mxu0 0.0
      %6608 = vmatprep.subr.mxu0 0.0
      %6609 = vmatpush1.msra.mxu0 0.0
      %6610 = vmatprep.subr.mxu0 0.0
      %6611 = vmatpush1.msra.mxu0 0.0
      %6612 = vmatprep.subr.mxu0 0.0
      %6613 = vmatpush1.msra.mxu0 0.0
      %6614 = vmatprep.subr.mxu0 0.0
      %6615 = vmatpush1.msra.mxu0 0.0
      %6616 = vmatprep.subr.mxu0 0.0
      %6617 = vmatpush1.msra.mxu0 0.0
      %6618 = vmatprep.subr.mxu0 0.0
      %6619 = vmatpush1.msra.mxu0 0.0
      %6620 = vmatprep.subr.mxu0 0.0
      %6621 = vmatpush1.msra.mxu0 0.0
      %6622 = vmatprep.subr.mxu0 0.0
      %6623 = vmatpush1.msra.mxu0 0.0
      %6624 = vmatprep.mubr.f32.mxu0 %v6542
      %6625 = vmatmul.mubr.f32.gmra.mrb[0].mxu0 %v6530
      %v6626 = vpop.f32.mrb[0].mxu0
      %v6627 = vadd.f32 0.0, %v6626
      %v6628 = vpop.f32.mrb[0].mxu0
      %6629 = vmatprep.mubr.f32.mxu0 %v6545
      %6630 = vmatmul.mubr.f32.gmra.mrb[0].mxu0 %v6532
      %v6631 = vpop.f32.mrb[0].mxu0
      %v6632 = vadd.f32 0.0, %v6631
      %v6633 = vpop.f32.mrb[0].mxu0
      %6634 = vmatprep.mubr.f32.mxu0 %v6548
      %6635 = vmatmul.mubr.f32.gmra.mrb[0].mxu0 %v6534
      %v6636 = vpop.f32.mrb[0].mxu0
      %v6637 = vadd.f32 0.0, %v6636
      %v6638 = vpop.f32.mrb[0].mxu0
      %6639 = vmatprep.mubr.f32.mxu0 %v6551
      %6640 = vmatmul.mubr.f32.gmra.mrb[0].mxu0 %v6536
      %v6641 = vpop.f32.mrb[0].mxu0
      %v6642 = vadd.f32 0.0, %v6641
      %v6643 = vpop.f32.mrb[0].mxu0
      %6644 = vmatprep.mubr.f32.mxu0 %v6554
      %6645 = vmatmul.mubr.f32.gmra.mrb[0].mxu0 %v6538
      %v6646 = vpop.f32.mrb[0].mxu0
      %v6647 = vadd.f32 0.0, %v6646
      %v6648 = vpop.f32.mrb[0].mxu0
      %6649 = vdwg.mxu0
      %v6650 = vld [vmem:[%s5] sm:$0xff]
      %v6651 = vld [vmem:[%s5 + $0x8] sm:$0xff]
      %v6652 = vld [vmem:[%s5 + $0x10] sm:$0xff]
      %v6653 = vld [vmem:[%s5 + $0x18] sm:$0xff]
      %v6654 = vld [vmem:[%s5 + $0x20] sm:$0xff]
      %v6655 = vld [vmem:[%s5 + $0x28] sm:$0xff]
      %v6656 = vld [vmem:[%s5 + $0x30] sm:$0xff]
      %v6657 = vld [vmem:[%s5 + $0x38] sm:$0xff]
      %v6658 = vld [vmem:[%s5 + $0x40] sm:$0xff]
      %v6659 = vld [vmem:[%s5 + $0x48] sm:$0xff]
      %v6660 = vld [vmem:[%s5 + $0x50] sm:$0xff]
      %v6661 = vld [vmem:[%s5 + $0x58] sm:$0xff]
      %v6662 = vld [vmem:[%s5 + $0x60] sm:$0xff]
      %v6663 = vld [vmem:[%s5 + $0x68] sm:$0xff]
      %v6664 = vld [vmem:[%s5 + $0x70] sm:$0xff]
      %v6665 = vld [vmem:[%s5 + $0x78] sm:$0xff]
      %vm6669 = vcmask 1046528
      %v6670 = vrot.slane %v6627, 1
      %v6671 = vrot.slane %v6632, 1
      %v6672 = vsel %vm6669, %v6670, %v6671
      %v6673 = vrot.slane %v6637, 1
      %v6674 = vsel %vm6669, %v6671, %v6673
      %v6675 = vsel %vm6407, %v6672, 0
      %v6677 = vsel %vm6407, %v6674, 0
      %v6679 = vsel %vm6407, %v6673, 0
      %6681 = vmatprep.subr.mxu0 0.0
      %6682 = vmatpush1.msra.mxu0 %v6658
      %6683 = vmatprep.subr.mxu0 0.0
      %6684 = vmatpush1.msra.mxu0 %v6659
      %6685 = vmatprep.subr.mxu0 0.0
      %6686 = vmatpush1.msra.mxu0 %v6660
      %6687 = vmatprep.subr.mxu0 0.0
      %6688 = vmatpush1.msra.mxu0 %v6661
      %6689 = vmatprep.subr.mxu0 0.0
      %6690 = vmatpush1.msra.mxu0 %v6662
      %6691 = vmatprep.subr.mxu0 0.0
      %6692 = vmatpush1.msra.mxu0 %v6663
      %6693 = vmatprep.subr.mxu0 0.0
      %6694 = vmatpush1.msra.mxu0 %v6664
      %6695 = vmatprep.subr.mxu0 0.0
      %6696 = vmatpush1.msra.mxu0 %v6665
      %6697 = vmatprep.subr.mxu0 0.0
      %6698 = vmatpush1.msra.mxu0 0.0
      %6699 = vmatprep.subr.mxu0 0.0
      %6700 = vmatpush1.msra.mxu0 0.0
      %6701 = vmatprep.subr.mxu0 0.0
      %6702 = vmatpush1.msra.mxu0 0.0
      %6703 = vmatprep.subr.mxu0 0.0
      %6704 = vmatpush1.msra.mxu0 0.0
      %6705 = vmatprep.subr.mxu0 0.0
      %6706 = vmatpush1.msra.mxu0 0.0
      %6707 = vmatprep.subr.mxu0 0.0
      %6708 = vmatpush1.msra.mxu0 0.0
      %6709 = vmatprep.subr.mxu0 0.0
      %6710 = vmatpush1.msra.mxu0 0.0
      %6711 = vmatprep.subr.mxu0 0.0
      %6712 = vmatpush1.msra.mxu0 0.0
      %6713 = vmatprep.subr.mxu0 0.0
      %6714 = vmatpush1.msra.mxu0 0.0
      %6715 = vmatprep.subr.mxu0 0.0
      %6716 = vmatpush1.msra.mxu0 0.0
      %6717 = vmatprep.subr.mxu0 0.0
      %6718 = vmatpush1.msra.mxu0 0.0
      %6719 = vmatprep.subr.mxu0 0.0
      %6720 = vmatpush1.msra.mxu0 0.0
      %6721 = vmatprep.subr.mxu0 0.0
      %6722 = vmatpush1.msra.mxu0 0.0
      %6723 = vmatprep.subr.mxu0 0.0
      %6724 = vmatpush1.msra.mxu0 0.0
      %6725 = vmatprep.subr.mxu0 0.0
      %6726 = vmatpush1.msra.mxu0 0.0
      %6727 = vmatprep.subr.mxu0 0.0
      %6728 = vmatpush1.msra.mxu0 0.0
      %6729 = vmatprep.subr.mxu0 0.0
      %6730 = vmatpush1.msra.mxu0 0.0
      %6731 = vmatprep.subr.mxu0 0.0
      %6732 = vmatpush1.msra.mxu0 0.0
      %6733 = vmatprep.subr.mxu0 0.0
      %6734 = vmatpush1.msra.mxu0 0.0
      %6735 = vmatprep.subr.mxu0 0.0
      %6736 = vmatpush1.msra.mxu0 0.0
      %6737 = vmatprep.subr.mxu0 0.0
      %6738 = vmatpush1.msra.mxu0 0.0
      %6739 = vmatprep.subr.mxu0 0.0
      %6740 = vmatpush1.msra.mxu0 0.0
      %6741 = vmatprep.subr.mxu0 0.0
      %6742 = vmatpush1.msra.mxu0 0.0
      %6743 = vmatprep.subr.mxu0 0.0
      %6744 = vmatpush1.msra.mxu0 0.0
      %6745 = vmatprep.mubr.f32.mxu0 0.0
      %6746 = vmatmul.mubr.f32.gmra.mrb[0].mxu0 %v6675
      %v6747 = vpop.f32.mrb[0].mxu0
      %v6748 = vadd.f32 0.0, %v6747
      %v6749 = vpop.f32.mrb[0].mxu0
      %6750 = vmatprep.mubr.f32.mxu0 0.0
      %6751 = vmatmul.mubr.f32.gmra.mrb[0].mxu0 %v6677
      %v6752 = vpop.f32.mrb[0].mxu0
      %v6753 = vadd.f32 0.0, %v6752
      %v6754 = vpop.f32.mrb[0].mxu0
      %6755 = vmatprep.mubr.f32.mxu0 0.0
      %6756 = vmatmul.mubr.f32.gmra.mrb[0].mxu0 %v6679
      %v6757 = vpop.f32.mrb[0].mxu0
      %v6758 = vadd.f32 0.0, %v6757
      %v6759 = vpop.f32.mrb[0].mxu0
      %6760 = vdwg.mxu0
      %v6761 = vsel %vm6407, %v6627, 0
      %v6763 = vsel %vm6407, %v6632, 0
      %v6765 = vsel %vm6407, %v6637, 0
      %6767 = vmatprep.subr.mxu0 0.0
      %6768 = vmatpush1.msra.mxu0 %v6650
      %6769 = vmatprep.subr.mxu0 0.0
      %6770 = vmatpush1.msra.mxu0 %v6651
      %6771 = vmatprep.subr.mxu0 0.0
      %6772 = vmatpush1.msra.mxu0 %v6652
      %6773 = vmatprep.subr.mxu0 0.0
      %6774 = vmatpush1.msra.mxu0 %v6653
      %6775 = vmatprep.subr.mxu0 0.0
      %6776 = vmatpush1.msra.mxu0 %v6654
      %6777 = vmatprep.subr.mxu0 0.0
      %6778 = vmatpush1.msra.mxu0 %v6655
      %6779 = vmatprep.subr.mxu0 0.0
      %6780 = vmatpush1.msra.mxu0 %v6656
      %6781 = vmatprep.subr.mxu0 0.0
      %6782 = vmatpush1.msra.mxu0 %v6657
      %6783 = vmatprep.subr.mxu0 0.0
      %6784 = vmatpush1.msra.mxu0 0.0
      %6785 = vmatprep.subr.mxu0 0.0
      %6786 = vmatpush1.msra.mxu0 0.0
      %6787 = vmatprep.subr.mxu0 0.0
      %6788 = vmatpush1.msra.mxu0 0.0
      %6789 = vmatprep.subr.mxu0 0.0
      %6790 = vmatpush1.msra.mxu0 0.0
      %6791 = vmatprep.subr.mxu0 0.0
      %6792 = vmatpush1.msra.mxu0 0.0
      %6793 = vmatprep.subr.mxu0 0.0
      %6794 = vmatpush1.msra.mxu0 0.0
      %6795 = vmatprep.subr.mxu0 0.0
      %6796 = vmatpush1.msra.mxu0 0.0
      %6797 = vmatprep.subr.mxu0 0.0
      %6798 = vmatpush1.msra.mxu0 0.0
      %6799 = vmatprep.subr.mxu0 0.0
      %6800 = vmatpush1.msra.mxu0 0.0
      %6801 = vmatprep.subr.mxu0 0.0
      %6802 = vmatpush1.msra.mxu0 0.0
      %6803 = vmatprep.subr.mxu0 0.0
      %6804 = vmatpush1.msra.mxu0 0.0
      %6805 = vmatprep.subr.mxu0 0.0
      %6806 = vmatpush1.msra.mxu0 0.0
      %6807 = vmatprep.subr.mxu0 0.0
      %6808 = vmatpush1.msra.mxu0 0.0
      %6809 = vmatprep.subr.mxu0 0.0
      %6810 = vmatpush1.msra.mxu0 0.0
      %6811 = vmatprep.subr.mxu0 0.0
      %6812 = vmatpush1.msra.mxu0 0.0
      %6813 = vmatprep.subr.mxu0 0.0
      %6814 = vmatpush1.msra.mxu0 0.0
      %6815 = vmatprep.subr.mxu0 0.0
      %6816 = vmatpush1.msra.mxu0 0.0
      %6817 = vmatprep.subr.mxu0 0.0
      %6818 = vmatpush1.msra.mxu0 0.0
      %6819 = vmatprep.subr.mxu0 0.0
      %6820 = vmatpush1.msra.mxu0 0.0
      %6821 = vmatprep.subr.mxu0 0.0
      %6822 = vmatpush1.msra.mxu0 0.0
      %6823 = vmatprep.subr.mxu0 0.0
      %6824 = vmatpush1.msra.mxu0 0.0
      %6825 = vmatprep.subr.mxu0 0.0
      %6826 = vmatpush1.msra.mxu0 0.0
      %6827 = vmatprep.subr.mxu0 0.0
      %6828 = vmatpush1.msra.mxu0 0.0
      %6829 = vmatprep.subr.mxu0 0.0
      %6830 = vmatpush1.msra.mxu0 0.0
      %6831 = vmatprep.mubr.f32.mxu0 0.0
      %6832 = vmatmul.mubr.f32.gmra.mrb[0].mxu0 %v6761
      %v6833 = vpop.f32.mrb[0].mxu0
      %v6834 = vadd.f32 %v6748, %v6833
      %v6835 = vpop.f32.mrb[0].mxu0
      %6836 = vmatprep.mubr.f32.mxu0 0.0
      %6837 = vmatmul.mubr.f32.gmra.mrb[0].mxu0 %v6763
      %v6838 = vpop.f32.mrb[0].mxu0
      %v6839 = vadd.f32 %v6753, %v6838
      %v6840 = vpop.f32.mrb[0].mxu0
      %6841 = vmatprep.mubr.f32.mxu0 0.0
      %6842 = vmatmul.mubr.f32.gmra.mrb[0].mxu0 %v6765
      %v6843 = vpop.f32.mrb[0].mxu0
      %v6844 = vadd.f32 %v6758, %v6843
      %v6845 = vpop.f32.mrb[0].mxu0
      %6846 = vdwg.mxu0
      %v6847 = vld [vmem:[%s5 + $0x80] sm:$0xff]
      %v6848 = vld [vmem:[%s5 + $0x88] sm:$0xff]
      %v6849 = vld [vmem:[%s5 + $0x90] sm:$0xff]
      %v6850 = vld [vmem:[%s5 + $0x98] sm:$0xff]
      %v6851 = vld [vmem:[%s5 + $0xa0] sm:$0xff]
      %v6852 = vld [vmem:[%s5 + $0xa8] sm:$0xff]
      %v6853 = vld [vmem:[%s5 + $0xb0] sm:$0xff]
      %v6854 = vld [vmem:[%s5 + $0xb8] sm:$0xff]
      %vm6855 = vcmask 1045504
      %v6856 = vrot.slane %v6627, 2
      %v6857 = vrot.slane %v6632, 2
      %v6858 = vsel %vm6855, %v6856, %v6857
      %v6859 = vrot.slane %v6637, 2
      %v6860 = vsel %vm6855, %v6857, %v6859
      %v6861 = vsel %vm6407, %v6858, 0
      %v6863 = vsel %vm6407, %v6860, 0
      %v6865 = vsel %vm6407, %v6859, 0
      %6867 = vmatprep.subr.mxu0 0.0
      %6868 = vmatpush1.msra.mxu0 %v6847
      %6869 = vmatprep.subr.mxu0 0.0
      %6870 = vmatpush1.msra.mxu0 %v6848
      %6871 = vmatprep.subr.mxu0 0.0
      %6872 = vmatpush1.msra.mxu0 %v6849
      %6873 = vmatprep.subr.mxu0 0.0
      %6874 = vmatpush1.msra.mxu0 %v6850
      %6875 = vmatprep.subr.mxu0 0.0
      %6876 = vmatpush1.msra.mxu0 %v6851
      %6877 = vmatprep.subr.mxu0 0.0
      %6878 = vmatpush1.msra.mxu0 %v6852
      %6879 = vmatprep.subr.mxu0 0.0
      %6880 = vmatpush1.msra.mxu0 %v6853
      %6881 = vmatprep.subr.mxu0 0.0
      %6882 = vmatpush1.msra.mxu0 %v6854
      %6883 = vmatprep.subr.mxu0 0.0
      %6884 = vmatpush1.msra.mxu0 0.0
      %6885 = vmatprep.subr.mxu0 0.0
      %6886 = vmatpush1.msra.mxu0 0.0
      %6887 = vmatprep.subr.mxu0 0.0
      %6888 = vmatpush1.msra.mxu0 0.0
      %6889 = vmatprep.subr.mxu0 0.0
      %6890 = vmatpush1.msra.mxu0 0.0
      %6891 = vmatprep.subr.mxu0 0.0
      %6892 = vmatpush1.msra.mxu0 0.0
      %6893 = vmatprep.subr.mxu0 0.0
      %6894 = vmatpush1.msra.mxu0 0.0
      %6895 = vmatprep.subr.mxu0 0.0
      %6896 = vmatpush1.msra.mxu0 0.0
      %6897 = vmatprep.subr.mxu0 0.0
      %6898 = vmatpush1.msra.mxu0 0.0
      %6899 = vmatprep.subr.mxu0 0.0
      %6900 = vmatpush1.msra.mxu0 0.0
      %6901 = vmatprep.subr.mxu0 0.0
      %6902 = vmatpush1.msra.mxu0 0.0
      %6903 = vmatprep.subr.mxu0 0.0
      %6904 = vmatpush1.msra.mxu0 0.0
      %6905 = vmatprep.subr.mxu0 0.0
      %6906 = vmatpush1.msra.mxu0 0.0
      %6907 = vmatprep.subr.mxu0 0.0
      %6908 = vmatpush1.msra.mxu0 0.0
      %6909 = vmatprep.subr.mxu0 0.0
      %6910 = vmatpush1.msra.mxu0 0.0
      %6911 = vmatprep.subr.mxu0 0.0
      %6912 = vmatpush1.msra.mxu0 0.0
      %6913 = vmatprep.subr.mxu0 0.0
      %6914 = vmatpush1.msra.mxu0 0.0
      %6915 = vmatprep.subr.mxu0 0.0
      %6916 = vmatpush1.msra.mxu0 0.0
      %6917 = vmatprep.subr.mxu0 0.0
      %6918 = vmatpush1.msra.mxu0 0.0
      %6919 = vmatprep.subr.mxu0 0.0
      %6920 = vmatpush1.msra.mxu0 0.0
      %6921 = vmatprep.subr.mxu0 0.0
      %6922 = vmatpush1.msra.mxu0 0.0
      %6923 = vmatprep.subr.mxu0 0.0
      %6924 = vmatpush1.msra.mxu0 0.0
      %6925 = vmatprep.subr.mxu0 0.0
      %6926 = vmatpush1.msra.mxu0 0.0
      %6927 = vmatprep.subr.mxu0 0.0
      %6928 = vmatpush1.msra.mxu0 0.0
      %6929 = vmatprep.subr.mxu0 0.0
      %6930 = vmatpush1.msra.mxu0 0.0
      %6931 = vmatprep.mubr.f32.mxu0 0.0
      %6932 = vmatmul.mubr.f32.gmra.mrb[0].mxu0 %v6861
      %v6933 = vpop.f32.mrb[0].mxu0
      %v6934 = vadd.f32 0.0, %v6933
      %v6935 = vpop.f32.mrb[0].mxu0
      %6936 = vmatprep.mubr.f32.mxu0 0.0
      %6937 = vmatmul.mubr.f32.gmra.mrb[0].mxu0 %v6863
      %v6938 = vpop.f32.mrb[0].mxu0
      %v6939 = vadd.f32 0.0, %v6938
      %v6940 = vpop.f32.mrb[0].mxu0
      %6941 = vmatprep.mubr.f32.mxu0 0.0
      %6942 = vmatmul.mubr.f32.gmra.mrb[0].mxu0 %v6865
      %v6943 = vpop.f32.mrb[0].mxu0
      %v6944 = vadd.f32 0.0, %v6943
      %v6945 = vpop.f32.mrb[0].mxu0
      %6946 = vdwg.mxu0
      %v6947 = vadd.f32 %v6834, %v6934
      %v6948 = vadd.f32 %v6839, %v6939
      %v6949 = vadd.f32 %v6844, %v6944
      %v6950 = vld [vmem:[%s5 + $0xc0] sm:$0xff]
      %v6951 = vld [vmem:[%s5 + $0xc8] sm:$0xff]
      %v6952 = vld [vmem:[%s5 + $0xd0] sm:$0xff]
      %v6953 = vld [vmem:[%s5 + $0xd8] sm:$0xff]
      %v6954 = vld [vmem:[%s5 + $0xe0] sm:$0xff]
      %v6955 = vld [vmem:[%s5 + $0xe8] sm:$0xff]
      %v6956 = vld [vmem:[%s5 + $0xf0] sm:$0xff]
      %v6957 = vld [vmem:[%s5 + $0xf8] sm:$0xff]
      %vm6959 = vcmask 1041408
      %v6960 = vrot.slane %v6627, 6
      %v6961 = vrot.slane %v6632, 6
      %v6962 = vsel %vm6959, %v6960, %v6961
      %v6963 = vrot.slane %v6637, 6
      %v6964 = vsel %vm6959, %v6961, %v6963
      %v6965 = vrot.slane %v6642, 6
      %v6966 = vsel %vm6959, %v6963, %v6965
      %v6967 = vsel %vm6407, %v6962, 0
      %v6969 = vsel %vm6407, %v6964, 0
      %v6971 = vsel %vm6407, %v6966, 0
      %6973 = vmatprep.subr.mxu0 0.0
      %6974 = vmatpush1.msra.mxu0 %v6950
      %6975 = vmatprep.subr.mxu0 0.0
      %6976 = vmatpush1.msra.mxu0 %v6951
      %6977 = vmatprep.subr.mxu0 0.0
      %6978 = vmatpush1.msra.mxu0 %v6952
      %6979 = vmatprep.subr.mxu0 0.0
      %6980 = vmatpush1.msra.mxu0 %v6953
      %6981 = vmatprep.subr.mxu0 0.0
      %6982 = vmatpush1.msra.mxu0 %v6954
      %6983 = vmatprep.subr.mxu0 0.0
      %6984 = vmatpush1.msra.mxu0 %v6955
      %6985 = vmatprep.subr.mxu0 0.0
      %6986 = vmatpush1.msra.mxu0 %v6956
      %6987 = vmatprep.subr.mxu0 0.0
      %6988 = vmatpush1.msra.mxu0 %v6957
      %6989 = vmatprep.subr.mxu0 0.0
      %6990 = vmatpush1.msra.mxu0 0.0
      %6991 = vmatprep.subr.mxu0 0.0
      %6992 = vmatpush1.msra.mxu0 0.0
      %6993 = vmatprep.subr.mxu0 0.0
      %6994 = vmatpush1.msra.mxu0 0.0
      %6995 = vmatprep.subr.mxu0 0.0
      %6996 = vmatpush1.msra.mxu0 0.0
      %6997 = vmatprep.subr.mxu0 0.0
      %6998 = vmatpush1.msra.mxu0 0.0
      %6999 = vmatprep.subr.mxu0 0.0
      %7000 = vmatpush1.msra.mxu0 0.0
      %7001 = vmatprep.subr.mxu0 0.0
      %7002 = vmatpush1.msra.mxu0 0.0
      %7003 = vmatprep.subr.mxu0 0.0
      %7004 = vmatpush1.msra.mxu0 0.0
      %7005 = vmatprep.subr.mxu0 0.0
      %7006 = vmatpush1.msra.mxu0 0.0
      %7007 = vmatprep.subr.mxu0 0.0
      %7008 = vmatpush1.msra.mxu0 0.0
      %7009 = vmatprep.subr.mxu0 0.0
      %7010 = vmatpush1.msra.mxu0 0.0
      %7011 = vmatprep.subr.mxu0 0.0
      %7012 = vmatpush1.msra.mxu0 0.0
      %7013 = vmatprep.subr.mxu0 0.0
      %7014 = vmatpush1.msra.mxu0 0.0
      %7015 = vmatprep.subr.mxu0 0.0
      %7016 = vmatpush1.msra.mxu0 0.0
      %7017 = vmatprep.subr.mxu0 0.0
      %7018 = vmatpush1.msra.mxu0 0.0
      %7019 = vmatprep.subr.mxu0 0.0
      %7020 = vmatpush1.msra.mxu0 0.0
      %7021 = vmatprep.subr.mxu0 0.0
      %7022 = vmatpush1.msra.mxu0 0.0
      %7023 = vmatprep.subr.mxu0 0.0
      %7024 = vmatpush1.msra.mxu0 0.0
      %7025 = vmatprep.subr.mxu0 0.0
      %7026 = vmatpush1.msra.mxu0 0.0
      %7027 = vmatprep.subr.mxu0 0.0
      %7028 = vmatpush1.msra.mxu0 0.0
      %7029 = vmatprep.subr.mxu0 0.0
      %7030 = vmatpush1.msra.mxu0 0.0
      %7031 = vmatprep.subr.mxu0 0.0
      %7032 = vmatpush1.msra.mxu0 0.0
      %7033 = vmatprep.subr.mxu0 0.0
      %7034 = vmatpush1.msra.mxu0 0.0
      %7035 = vmatprep.subr.mxu0 0.0
      %7036 = vmatpush1.msra.mxu0 0.0
      %7037 = vmatprep.mubr.f32.mxu0 0.0
      %7038 = vmatmul.mubr.f32.gmra.mrb[0].mxu0 %v6967
      %v7039 = vpop.f32.mrb[0].mxu0
      %v7040 = vadd.f32 0.0, %v7039
      %v7041 = vpop.f32.mrb[0].mxu0
      %7042 = vmatprep.mubr.f32.mxu0 0.0
      %7043 = vmatmul.mubr.f32.gmra.mrb[0].mxu0 %v6969
      %v7044 = vpop.f32.mrb[0].mxu0
      %v7045 = vadd.f32 0.0, %v7044
      %v7046 = vpop.f32.mrb[0].mxu0
      %7047 = vmatprep.mubr.f32.mxu0 0.0
      %7048 = vmatmul.mubr.f32.gmra.mrb[0].mxu0 %v6971
      %v7049 = vpop.f32.mrb[0].mxu0
      %v7050 = vadd.f32 0.0, %v7049
      %v7051 = vpop.f32.mrb[0].mxu0
      %7052 = vdwg.mxu0
      %v7053 = vadd.f32 %v6947, %v7040
      %v7054 = vadd.f32 %v6948, %v7045
      %v7055 = vadd.f32 %v6949, %v7050
      %v7056 = vld [vmem:[%s5 + $0x100] sm:$0xff]
      %v7057 = vld [vmem:[%s5 + $0x108] sm:$0xff]
      %v7058 = vld [vmem:[%s5 + $0x110] sm:$0xff]
      %v7059 = vld [vmem:[%s5 + $0x118] sm:$0xff]
      %v7060 = vld [vmem:[%s5 + $0x120] sm:$0xff]
      %v7061 = vld [vmem:[%s5 + $0x128] sm:$0xff]
      %v7062 = vld [vmem:[%s5 + $0x130] sm:$0xff]
      %v7063 = vld [vmem:[%s5 + $0x138] sm:$0xff]
      %vm7064 = vcmask 1040384
      %v7065 = vrot.slane %v6627, 7
      %v7066 = vrot.slane %v6632, 7
      %v7067 = vsel %vm7064, %v7065, %v7066
      %v7068 = vrot.slane %v6637, 7
      %v7069 = vsel %vm7064, %v7066, %v7068
      %v7070 = vrot.slane %v6642, 7
      %v7071 = vsel %vm7064, %v7068, %v7070
      %v7072 = vsel %vm6407, %v7067, 0
      %v7074 = vsel %vm6407, %v7069, 0
      %v7076 = vsel %vm6407, %v7071, 0
      %7078 = vmatprep.subr.mxu0 0.0
      %7079 = vmatpush1.msra.mxu0 %v7056
      %7080 = vmatprep.subr.mxu0 0.0
      %7081 = vmatpush1.msra.mxu0 %v7057
      %7082 = vmatprep.subr.mxu0 0.0
      %7083 = vmatpush1.msra.mxu0 %v7058
      %7084 = vmatprep.subr.mxu0 0.0
      %7085 = vmatpush1.msra.mxu0 %v7059
      %7086 = vmatprep.subr.mxu0 0.0
      %7087 = vmatpush1.msra.mxu0 %v7060
      %7088 = vmatprep.subr.mxu0 0.0
      %7089 = vmatpush1.msra.mxu0 %v7061
      %7090 = vmatprep.subr.mxu0 0.0
      %7091 = vmatpush1.msra.mxu0 %v7062
      %7092 = vmatprep.subr.mxu0 0.0
      %7093 = vmatpush1.msra.mxu0 %v7063
      %7094 = vmatprep.subr.mxu0 0.0
      %7095 = vmatpush1.msra.mxu0 0.0
      %7096 = vmatprep.subr.mxu0 0.0
      %7097 = vmatpush1.msra.mxu0 0.0
      %7098 = vmatprep.subr.mxu0 0.0
      %7099 = vmatpush1.msra.mxu0 0.0
      %7100 = vmatprep.subr.mxu0 0.0
      %7101 = vmatpush1.msra.mxu0 0.0
      %7102 = vmatprep.subr.mxu0 0.0
      %7103 = vmatpush1.msra.mxu0 0.0
      %7104 = vmatprep.subr.mxu0 0.0
      %7105 = vmatpush1.msra.mxu0 0.0
      %7106 = vmatprep.subr.mxu0 0.0
      %7107 = vmatpush1.msra.mxu0 0.0
      %7108 = vmatprep.subr.mxu0 0.0
      %7109 = vmatpush1.msra.mxu0 0.0
      %7110 = vmatprep.subr.mxu0 0.0
      %7111 = vmatpush1.msra.mxu0 0.0
      %7112 = vmatprep.subr.mxu0 0.0
      %7113 = vmatpush1.msra.mxu0 0.0
      %7114 = vmatprep.subr.mxu0 0.0
      %7115 = vmatpush1.msra.mxu0 0.0
      %7116 = vmatprep.subr.mxu0 0.0
      %7117 = vmatpush1.msra.mxu0 0.0
      %7118 = vmatprep.subr.mxu0 0.0
      %7119 = vmatpush1.msra.mxu0 0.0
      %7120 = vmatprep.subr.mxu0 0.0
      %7121 = vmatpush1.msra.mxu0 0.0
      %7122 = vmatprep.subr.mxu0 0.0
      %7123 = vmatpush1.msra.mxu0 0.0
      %7124 = vmatprep.subr.mxu0 0.0
      %7125 = vmatpush1.msra.mxu0 0.0
      %7126 = vmatprep.subr.mxu0 0.0
      %7127 = vmatpush1.msra.mxu0 0.0
      %7128 = vmatprep.subr.mxu0 0.0
      %7129 = vmatpush1.msra.mxu0 0.0
      %7130 = vmatprep.subr.mxu0 0.0
      %7131 = vmatpush1.msra.mxu0 0.0
      %7132 = vmatprep.subr.mxu0 0.0
      %7133 = vmatpush1.msra.mxu0 0.0
      %7134 = vmatprep.subr.mxu0 0.0
      %7135 = vmatpush1.msra.mxu0 0.0
      %7136 = vmatprep.subr.mxu0 0.0
      %7137 = vmatpush1.msra.mxu0 0.0
      %7138 = vmatprep.subr.mxu0 0.0
      %7139 = vmatpush1.msra.mxu0 0.0
      %7140 = vmatprep.subr.mxu0 0.0
      %7141 = vmatpush1.msra.mxu0 0.0
      %7142 = vmatprep.mubr.f32.mxu0 0.0
      %7143 = vmatmul.mubr.f32.gmra.mrb[0].mxu0 %v7072
      %v7144 = vpop.f32.mrb[0].mxu0
      %v7145 = vadd.f32 0.0, %v7144
      %v7146 = vpop.f32.mrb[0].mxu0
      %7147 = vmatprep.mubr.f32.mxu0 0.0
      %7148 = vmatmul.mubr.f32.gmra.mrb[0].mxu0 %v7074
      %v7149 = vpop.f32.mrb[0].mxu0
      %v7150 = vadd.f32 0.0, %v7149
      %v7151 = vpop.f32.mrb[0].mxu0
      %7152 = vmatprep.mubr.f32.mxu0 0.0
      %7153 = vmatmul.mubr.f32.gmra.mrb[0].mxu0 %v7076
      %v7154 = vpop.f32.mrb[0].mxu0
      %v7155 = vadd.f32 0.0, %v7154
      %v7156 = vpop.f32.mrb[0].mxu0
      %7157 = vdwg.mxu0
      %v7158 = vadd.f32 %v7053, %v7145
      %v7159 = vadd.f32 %v7054, %v7150
      %v7160 = vadd.f32 %v7055, %v7155
      %v7161 = vld [vmem:[%s5 + $0x140] sm:$0xff]
      %v7162 = vld [vmem:[%s5 + $0x148] sm:$0xff]
      %v7163 = vld [vmem:[%s5 + $0x150] sm:$0xff]
      %v7164 = vld [vmem:[%s5 + $0x158] sm:$0xff]
      %v7165 = vld [vmem:[%s5 + $0x160] sm:$0xff]
      %v7166 = vld [vmem:[%s5 + $0x168] sm:$0xff]
      %v7167 = vld [vmem:[%s5 + $0x170] sm:$0xff]
      %v7168 = vld [vmem:[%s5 + $0x178] sm:$0xff]
      %v7169 = vsel %vm6407, %v6642, 0
      %7171 = vmatprep.subr.mxu0 0.0
      %7172 = vmatpush1.msra.mxu0 %v7161
      %7173 = vmatprep.subr.mxu0 0.0
      %7174 = vmatpush1.msra.mxu0 %v7162
      %7175 = vmatprep.subr.mxu0 0.0
      %7176 = vmatpush1.msra.mxu0 %v7163
      %7177 = vmatprep.subr.mxu0 0.0
      %7178 = vmatpush1.msra.mxu0 %v7164
      %7179 = vmatprep.subr.mxu0 0.0
      %7180 = vmatpush1.msra.mxu0 %v7165
      %7181 = vmatprep.subr.mxu0 0.0
      %7182 = vmatpush1.msra.mxu0 %v7166
      %7183 = vmatprep.subr.mxu0 0.0
      %7184 = vmatpush1.msra.mxu0 %v7167
      %7185 = vmatprep.subr.mxu0 0.0
      %7186 = vmatpush1.msra.mxu0 %v7168
      %7187 = vmatprep.subr.mxu0 0.0
      %7188 = vmatpush1.msra.mxu0 0.0
      %7189 = vmatprep.subr.mxu0 0.0
      %7190 = vmatpush1.msra.mxu0 0.0
      %7191 = vmatprep.subr.mxu0 0.0
      %7192 = vmatpush1.msra.mxu0 0.0
      %7193 = vmatprep.subr.mxu0 0.0
      %7194 = vmatpush1.msra.mxu0 0.0
      %7195 = vmatprep.subr.mxu0 0.0
      %7196 = vmatpush1.msra.mxu0 0.0
      %7197 = vmatprep.subr.mxu0 0.0
      %7198 = vmatpush1.msra.mxu0 0.0
      %7199 = vmatprep.subr.mxu0 0.0
      %7200 = vmatpush1.msra.mxu0 0.0
      %7201 = vmatprep.subr.mxu0 0.0
      %7202 = vmatpush1.msra.mxu0 0.0
      %7203 = vmatprep.subr.mxu0 0.0
      %7204 = vmatpush1.msra.mxu0 0.0
      %7205 = vmatprep.subr.mxu0 0.0
      %7206 = vmatpush1.msra.mxu0 0.0
      %7207 = vmatprep.subr.mxu0 0.0
      %7208 = vmatpush1.msra.mxu0 0.0
      %7209 = vmatprep.subr.mxu0 0.0
      %7210 = vmatpush1.msra.mxu0 0.0
      %7211 = vmatprep.subr.mxu0 0.0
      %7212 = vmatpush1.msra.mxu0 0.0
      %7213 = vmatprep.subr.mxu0 0.0
      %7214 = vmatpush1.msra.mxu0 0.0
      %7215 = vmatprep.subr.mxu0 0.0
      %7216 = vmatpush1.msra.mxu0 0.0
      %7217 = vmatprep.subr.mxu0 0.0
      %7218 = vmatpush1.msra.mxu0 0.0
      %7219 = vmatprep.subr.mxu0 0.0
      %7220 = vmatpush1.msra.mxu0 0.0
      %7221 = vmatprep.subr.mxu0 0.0
      %7222 = vmatpush1.msra.mxu0 0.0
      %7223 = vmatprep.subr.mxu0 0.0
      %7224 = vmatpush1.msra.mxu0 0.0
      %7225 = vmatprep.subr.mxu0 0.0
      %7226 = vmatpush1.msra.mxu0 0.0
      %7227 = vmatprep.subr.mxu0 0.0
      %7228 = vmatpush1.msra.mxu0 0.0
      %7229 = vmatprep.subr.mxu0 0.0
      %7230 = vmatpush1.msra.mxu0 0.0
      %7231 = vmatprep.subr.mxu0 0.0
      %7232 = vmatpush1.msra.mxu0 0.0
      %7233 = vmatprep.subr.mxu0 0.0
      %7234 = vmatpush1.msra.mxu0 0.0
      %7235 = vmatprep.mubr.f32.mxu0 0.0
      %7236 = vmatmul.mubr.f32.gmra.mrb[0].mxu0 %v6763
      %v7237 = vpop.f32.mrb[0].mxu0
      %v7238 = vadd.f32 0.0, %v7237
      %v7239 = vpop.f32.mrb[0].mxu0
      %7240 = vmatprep.mubr.f32.mxu0 0.0
      %7241 = vmatmul.mubr.f32.gmra.mrb[0].mxu0 %v6765
      %v7242 = vpop.f32.mrb[0].mxu0
      %v7243 = vadd.f32 0.0, %v7242
      %v7244 = vpop.f32.mrb[0].mxu0
      %7245 = vmatprep.mubr.f32.mxu0 0.0
      %7246 = vmatmul.mubr.f32.gmra.mrb[0].mxu0 %v7169
      %v7247 = vpop.f32.mrb[0].mxu0
      %v7248 = vadd.f32 0.0, %v7247
      %v7249 = vpop.f32.mrb[0].mxu0
      %7250 = vdwg.mxu0
      %v7251 = vadd.f32 %v7158, %v7238
      %v7252 = vadd.f32 %v7159, %v7243
      %v7253 = vadd.f32 %v7160, %v7248
      %v7254 = vld [vmem:[%s5 + $0x180] sm:$0xff]
      %v7255 = vld [vmem:[%s5 + $0x188] sm:$0xff]
      %v7256 = vld [vmem:[%s5 + $0x190] sm:$0xff]
      %v7257 = vld [vmem:[%s5 + $0x198] sm:$0xff]
      %v7258 = vld [vmem:[%s5 + $0x1a0] sm:$0xff]
      %v7259 = vld [vmem:[%s5 + $0x1a8] sm:$0xff]
      %v7260 = vld [vmem:[%s5 + $0x1b0] sm:$0xff]
      %v7261 = vld [vmem:[%s5 + $0x1b8] sm:$0xff]
      %v7263 = vrot.slane %v6632, 4
      %v7264 = vrot.slane %v6637, 4
      %v7265 = vsel %vm582, %v7263, %v7264
      %v7266 = vrot.slane %v6642, 4
      %v7267 = vsel %vm582, %v7264, %v7266
      %v7268 = vrot.slane %v6647, 4
      %v7269 = vsel %vm582, %v7266, %v7268
      %v7270 = vsel %vm6407, %v7265, 0
      %v7272 = vsel %vm6407, %v7267, 0
      %v7274 = vsel %vm6407, %v7269, 0
      %7276 = vmatprep.subr.mxu0 0.0
      %7277 = vmatpush1.msra.mxu0 %v7254
      %7278 = vmatprep.subr.mxu0 0.0
      %7279 = vmatpush1.msra.mxu0 %v7255
      %7280 = vmatprep.subr.mxu0 0.0
      %7281 = vmatpush1.msra.mxu0 %v7256
      %7282 = vmatprep.subr.mxu0 0.0
      %7283 = vmatpush1.msra.mxu0 %v7257
      %7284 = vmatprep.subr.mxu0 0.0
      %7285 = vmatpush1.msra.mxu0 %v7258
      %7286 = vmatprep.subr.mxu0 0.0
      %7287 = vmatpush1.msra.mxu0 %v7259
      %7288 = vmatprep.subr.mxu0 0.0
      %7289 = vmatpush1.msra.mxu0 %v7260
      %7290 = vmatprep.subr.mxu0 0.0
      %7291 = vmatpush1.msra.mxu0 %v7261
      %7292 = vmatprep.subr.mxu0 0.0
      %7293 = vmatpush1.msra.mxu0 0.0
      %7294 = vmatprep.subr.mxu0 0.0
      %7295 = vmatpush1.msra.mxu0 0.0
      %7296 = vmatprep.subr.mxu0 0.0
      %7297 = vmatpush1.msra.mxu0 0.0
      %7298 = vmatprep.subr.mxu0 0.0
      %7299 = vmatpush1.msra.mxu0 0.0
      %7300 = vmatprep.subr.mxu0 0.0
      %7301 = vmatpush1.msra.mxu0 0.0
      %7302 = vmatprep.subr.mxu0 0.0
      %7303 = vmatpush1.msra.mxu0 0.0
      %7304 = vmatprep.subr.mxu0 0.0
      %7305 = vmatpush1.msra.mxu0 0.0
      %7306 = vmatprep.subr.mxu0 0.0
      %7307 = vmatpush1.msra.mxu0 0.0
      %7308 = vmatprep.subr.mxu0 0.0
      %7309 = vmatpush1.msra.mxu0 0.0
      %7310 = vmatprep.subr.mxu0 0.0
      %7311 = vmatpush1.msra.mxu0 0.0
      %7312 = vmatprep.subr.mxu0 0.0
      %7313 = vmatpush1.msra.mxu0 0.0
      %7314 = vmatprep.subr.mxu0 0.0
      %7315 = vmatpush1.msra.mxu0 0.0
      %7316 = vmatprep.subr.mxu0 0.0
      %7317 = vmatpush1.msra.mxu0 0.0
      %7318 = vmatprep.subr.mxu0 0.0
      %7319 = vmatpush1.msra.mxu0 0.0
      %7320 = vmatprep.subr.mxu0 0.0
      %7321 = vmatpush1.msra.mxu0 0.0
      %7322 = vmatprep.subr.mxu0 0.0
      %7323 = vmatpush1.msra.mxu0 0.0
      %7324 = vmatprep.subr.mxu0 0.0
      %7325 = vmatpush1.msra.mxu0 0.0
      %7326 = vmatprep.subr.mxu0 0.0
      %7327 = vmatpush1.msra.mxu0 0.0
      %7328 = vmatprep.subr.mxu0 0.0
      %7329 = vmatpush1.msra.mxu0 0.0
      %7330 = vmatprep.subr.mxu0 0.0
      %7331 = vmatpush1.msra.mxu0 0.0
      %7332 = vmatprep.subr.mxu0 0.0
      %7333 = vmatpush1.msra.mxu0 0.0
      %7334 = vmatprep.subr.mxu0 0.0
      %7335 = vmatpush1.msra.mxu0 0.0
      %7336 = vmatprep.subr.mxu0 0.0
      %7337 = vmatpush1.msra.mxu0 0.0
      %7338 = vmatprep.subr.mxu0 0.0
      %7339 = vmatpush1.msra.mxu0 0.0
      %7340 = vmatprep.mubr.f32.mxu0 0.0
      %7341 = vmatmul.mubr.f32.gmra.mrb[0].mxu0 %v7270
      %v7342 = vpop.f32.mrb[0].mxu0
      %v7343 = vadd.f32 0.0, %v7342
      %v7344 = vpop.f32.mrb[0].mxu0
      %7345 = vmatprep.mubr.f32.mxu0 0.0
      %7346 = vmatmul.mubr.f32.gmra.mrb[0].mxu0 %v7272
      %v7347 = vpop.f32.mrb[0].mxu0
      %v7348 = vadd.f32 0.0, %v7347
      %v7349 = vpop.f32.mrb[0].mxu0
      %7350 = vmatprep.mubr.f32.mxu0 0.0
      %7351 = vmatmul.mubr.f32.gmra.mrb[0].mxu0 %v7274
      %v7352 = vpop.f32.mrb[0].mxu0
      %v7353 = vadd.f32 0.0, %v7352
      %v7354 = vpop.f32.mrb[0].mxu0
      %7355 = vdwg.mxu0
      %v7356 = vadd.f32 %v7251, %v7343
      %v7357 = vadd.f32 %v7252, %v7348
      %v7358 = vadd.f32 %v7253, %v7353
      %v7359 = vld [vmem:[%s5 + $0x1c0] sm:$0xff]
      %v7360 = vld [vmem:[%s5 + $0x1c8] sm:$0xff]
      %v7361 = vld [vmem:[%s5 + $0x1d0] sm:$0xff]
      %v7362 = vld [vmem:[%s5 + $0x1d8] sm:$0xff]
      %v7363 = vld [vmem:[%s5 + $0x1e0] sm:$0xff]
      %v7364 = vld [vmem:[%s5 + $0x1e8] sm:$0xff]
      %v7365 = vld [vmem:[%s5 + $0x1f0] sm:$0xff]
      %v7366 = vld [vmem:[%s5 + $0x1f8] sm:$0xff]
      %v7367 = vrot.slane %v6632, 5
      %v7368 = vrot.slane %v6637, 5
      %v7369 = vsel %vm6556, %v7367, %v7368
      %v7370 = vrot.slane %v6642, 5
      %v7371 = vsel %vm6556, %v7368, %v7370
      %v7372 = vrot.slane %v6647, 5
      %v7373 = vsel %vm6556, %v7370, %v7372
      %v7374 = vsel %vm6407, %v7369, 0
      %v7376 = vsel %vm6407, %v7371, 0
      %v7378 = vsel %vm6407, %v7373, 0
      %7380 = vmatprep.subr.mxu0 0.0
      %7381 = vmatpush1.msra.mxu0 %v7359
      %7382 = vmatprep.subr.mxu0 0.0
      %7383 = vmatpush1.msra.mxu0 %v7360
      %7384 = vmatprep.subr.mxu0 0.0
      %7385 = vmatpush1.msra.mxu0 %v7361
      %7386 = vmatprep.subr.mxu0 0.0
      %7387 = vmatpush1.msra.mxu0 %v7362
      %7388 = vmatprep.subr.mxu0 0.0
      %7389 = vmatpush1.msra.mxu0 %v7363
      %7390 = vmatprep.subr.mxu0 0.0
      %7391 = vmatpush1.msra.mxu0 %v7364
      %7392 = vmatprep.subr.mxu0 0.0
      %7393 = vmatpush1.msra.mxu0 %v7365
      %7394 = vmatprep.subr.mxu0 0.0
      %7395 = vmatpush1.msra.mxu0 %v7366
      %7396 = vmatprep.subr.mxu0 0.0
      %7397 = vmatpush1.msra.mxu0 0.0
      %7398 = vmatprep.subr.mxu0 0.0
      %7399 = vmatpush1.msra.mxu0 0.0
      %7400 = vmatprep.subr.mxu0 0.0
      %7401 = vmatpush1.msra.mxu0 0.0
      %7402 = vmatprep.subr.mxu0 0.0
      %7403 = vmatpush1.msra.mxu0 0.0
      %7404 = vmatprep.subr.mxu0 0.0
      %7405 = vmatpush1.msra.mxu0 0.0
      %7406 = vmatprep.subr.mxu0 0.0
      %7407 = vmatpush1.msra.mxu0 0.0
      %7408 = vmatprep.subr.mxu0 0.0
      %7409 = vmatpush1.msra.mxu0 0.0
      %7410 = vmatprep.subr.mxu0 0.0
      %7411 = vmatpush1.msra.mxu0 0.0
      %7412 = vmatprep.subr.mxu0 0.0
      %7413 = vmatpush1.msra.mxu0 0.0
      %7414 = vmatprep.subr.mxu0 0.0
      %7415 = vmatpush1.msra.mxu0 0.0
      %7416 = vmatprep.subr.mxu0 0.0
      %7417 = vmatpush1.msra.mxu0 0.0
      %7418 = vmatprep.subr.mxu0 0.0
      %7419 = vmatpush1.msra.mxu0 0.0
      %7420 = vmatprep.subr.mxu0 0.0
      %7421 = vmatpush1.msra.mxu0 0.0
      %7422 = vmatprep.subr.mxu0 0.0
      %7423 = vmatpush1.msra.mxu0 0.0
      %7424 = vmatprep.subr.mxu0 0.0
      %7425 = vmatpush1.msra.mxu0 0.0
      %7426 = vmatprep.subr.mxu0 0.0
      %7427 = vmatpush1.msra.mxu0 0.0
      %7428 = vmatprep.subr.mxu0 0.0
      %7429 = vmatpush1.msra.mxu0 0.0
      %7430 = vmatprep.subr.mxu0 0.0
      %7431 = vmatpush1.msra.mxu0 0.0
      %7432 = vmatprep.subr.mxu0 0.0
      %7433 = vmatpush1.msra.mxu0 0.0
      %7434 = vmatprep.subr.mxu0 0.0
      %7435 = vmatpush1.msra.mxu0 0.0
      %7436 = vmatprep.subr.mxu0 0.0
      %7437 = vmatpush1.msra.mxu0 0.0
      %7438 = vmatprep.subr.mxu0 0.0
      %7439 = vmatpush1.msra.mxu0 0.0
      %7440 = vmatprep.subr.mxu0 0.0
      %7441 = vmatpush1.msra.mxu0 0.0
      %7442 = vmatprep.subr.mxu0 0.0
      %7443 = vmatpush1.msra.mxu0 0.0
      %7444 = vmatprep.mubr.f32.mxu0 0.0
      %7445 = vmatmul.mubr.f32.gmra.mrb[0].mxu0 %v7374
      %v7446 = vpop.f32.mrb[0].mxu0
      %v7447 = vadd.f32 0.0, %v7446
      %v7448 = vpop.f32.mrb[0].mxu0
      %7449 = vmatprep.mubr.f32.mxu0 0.0
      %7450 = vmatmul.mubr.f32.gmra.mrb[0].mxu0 %v7376
      %v7451 = vpop.f32.mrb[0].mxu0
      %v7452 = vadd.f32 0.0, %v7451
      %v7453 = vpop.f32.mrb[0].mxu0
      %7454 = vmatprep.mubr.f32.mxu0 0.0
      %7455 = vmatmul.mubr.f32.gmra.mrb[0].mxu0 %v7378
      %v7456 = vpop.f32.mrb[0].mxu0
      %v7457 = vadd.f32 0.0, %v7456
      %v7458 = vpop.f32.mrb[0].mxu0
      %7459 = vdwg.mxu0
      %v7460 = vadd.f32 %v7356, %v7447
      %v7461 = vadd.f32 %v7357, %v7452
      %v7462 = vadd.f32 %v7358, %v7457
      %v7463 = vld [vmem:[%s5 + $0x200] sm:$0xff]
      %v7464 = vld [vmem:[%s5 + $0x208] sm:$0xff]
      %v7465 = vld [vmem:[%s5 + $0x210] sm:$0xff]
      %v7466 = vld [vmem:[%s5 + $0x218] sm:$0xff]
      %v7467 = vld [vmem:[%s5 + $0x220] sm:$0xff]
      %v7468 = vld [vmem:[%s5 + $0x228] sm:$0xff]
      %v7469 = vld [vmem:[%s5 + $0x230] sm:$0xff]
      %v7470 = vld [vmem:[%s5 + $0x238] sm:$0xff]
      %v7471 = vrot.slane %v6647, 6
      %v7472 = vsel %vm6959, %v6965, %v7471
      %v7473 = vsel %vm6407, %v7472, 0
      %7475 = vmatprep.subr.mxu0 0.0
      %7476 = vmatpush1.msra.mxu0 %v7463
      %7477 = vmatprep.subr.mxu0 0.0
      %7478 = vmatpush1.msra.mxu0 %v7464
      %7479 = vmatprep.subr.mxu0 0.0
      %7480 = vmatpush1.msra.mxu0 %v7465
      %7481 = vmatprep.subr.mxu0 0.0
      %7482 = vmatpush1.msra.mxu0 %v7466
      %7483 = vmatprep.subr.mxu0 0.0
      %7484 = vmatpush1.msra.mxu0 %v7467
      %7485 = vmatprep.subr.mxu0 0.0
      %7486 = vmatpush1.msra.mxu0 %v7468
      %7487 = vmatprep.subr.mxu0 0.0
      %7488 = vmatpush1.msra.mxu0 %v7469
      %7489 = vmatprep.subr.mxu0 0.0
      %7490 = vmatpush1.msra.mxu0 %v7470
      %7491 = vmatprep.subr.mxu0 0.0
      %7492 = vmatpush1.msra.mxu0 0.0
      %7493 = vmatprep.subr.mxu0 0.0
      %7494 = vmatpush1.msra.mxu0 0.0
      %7495 = vmatprep.subr.mxu0 0.0
      %7496 = vmatpush1.msra.mxu0 0.0
      %7497 = vmatprep.subr.mxu0 0.0
      %7498 = vmatpush1.msra.mxu0 0.0
      %7499 = vmatprep.subr.mxu0 0.0
      %7500 = vmatpush1.msra.mxu0 0.0
      %7501 = vmatprep.subr.mxu0 0.0
      %7502 = vmatpush1.msra.mxu0 0.0
      %7503 = vmatprep.subr.mxu0 0.0
      %7504 = vmatpush1.msra.mxu0 0.0
      %7505 = vmatprep.subr.mxu0 0.0
      %7506 = vmatpush1.msra.mxu0 0.0
      %7507 = vmatprep.subr.mxu0 0.0
      %7508 = vmatpush1.msra.mxu0 0.0
      %7509 = vmatprep.subr.mxu0 0.0
      %7510 = vmatpush1.msra.mxu0 0.0
      %7511 = vmatprep.subr.mxu0 0.0
      %7512 = vmatpush1.msra.mxu0 0.0
      %7513 = vmatprep.subr.mxu0 0.0
      %7514 = vmatpush1.msra.mxu0 0.0
      %7515 = vmatprep.subr.mxu0 0.0
      %7516 = vmatpush1.msra.mxu0 0.0
      %7517 = vmatprep.subr.mxu0 0.0
      %7518 = vmatpush1.msra.mxu0 0.0
      %7519 = vmatprep.subr.mxu0 0.0
      %7520 = vmatpush1.msra.mxu0 0.0
      %7521 = vmatprep.subr.mxu0 0.0
      %7522 = vmatpush1.msra.mxu0 0.0
      %7523 = vmatprep.subr.mxu0 0.0
      %7524 = vmatpush1.msra.mxu0 0.0
      %7525 = vmatprep.subr.mxu0 0.0
      %7526 = vmatpush1.msra.mxu0 0.0
      %7527 = vmatprep.subr.mxu0 0.0
      %7528 = vmatpush1.msra.mxu0 0.0
      %7529 = vmatprep.subr.mxu0 0.0
      %7530 = vmatpush1.msra.mxu0 0.0
      %7531 = vmatprep.subr.mxu0 0.0
      %7532 = vmatpush1.msra.mxu0 0.0
      %7533 = vmatprep.subr.mxu0 0.0
      %7534 = vmatpush1.msra.mxu0 0.0
      %7535 = vmatprep.subr.mxu0 0.0
      %7536 = vmatpush1.msra.mxu0 0.0
      %7537 = vmatprep.subr.mxu0 0.0
      %7538 = vmatpush1.msra.mxu0 0.0
      %7539 = vmatprep.mubr.f32.mxu0 0.0
      %7540 = vmatmul.mubr.f32.gmra.mrb[0].mxu0 %v6969
      %v7541 = vpop.f32.mrb[0].mxu0
      %v7542 = vadd.f32 0.0, %v7541
      %v7543 = vpop.f32.mrb[0].mxu0
      %7544 = vmatprep.mubr.f32.mxu0 0.0
      %7545 = vmatmul.mubr.f32.gmra.mrb[0].mxu0 %v6971
      %v7546 = vpop.f32.mrb[0].mxu0
      %v7547 = vadd.f32 0.0, %v7546
      %v7548 = vpop.f32.mrb[0].mxu0
      %7549 = vmatprep.mubr.f32.mxu0 0.0
      %7550 = vmatmul.mubr.f32.gmra.mrb[0].mxu0 %v7473
      %v7551 = vpop.f32.mrb[0].mxu0
      %v7552 = vadd.f32 0.0, %v7551
      %v7553 = vpop.f32.mrb[0].mxu0
      %7554 = vdwg.mxu0
      %v7555 = vadd.f32 %v7460, %v7542
      %v7556 = vadd.f32 %v7461, %v7547
      %v7557 = vadd.f32 %v7462, %v7552
      %v7558 = vld [vmem:[%s6] sm:$0x1]
      %v7560 = vlaneseq
      %v7561 = vshrl.u32 %v7560, 7
      %v7562 = vsub.s32 0, %v7561
      %v7563 = vrot.slane %v7558, %v7562
      %v7565 = vadd.f32 %v7555, %v7563
      %v7566 = vadd.f32 %v7556, %v7563
      %v7567 = vadd.f32 %v7557, %v7563
      %v7568 = vmax.f32 %v7565, 0.0
      %v7569 = vmax.f32 %v7566, 0.0
      %v7570 = vmax.f32 %v7567, 0.0
      %v7573 = vrot.slane %v7568, 1
      %v7574 = vrot.slane %v7569, 1
      %v7575 = vsel %vm6669, %v7573, %v7574
      %v7578 = vmax.f32 %v7568, %v7575
      %v7579 = vmax.f32 %v7569, %v7574
      %v7581 = vrot.slane %v7570, 1
      %v7582 = vsel %vm6669, %v7574, %v7581
      %v7585 = vmax.f32 %v7569, %v7582
      %v7586 = vmax.f32 %v7570, %v7581
      %v7590 = vrot.slane %v7578, 6
      %v7591 = vrot.slane %v7585, 6
      %v7592 = vsel %vm6959, %v7590, %v7591
      %v7593 = vrot.slane %v7586, 6
      %v7594 = vsel %vm6959, %v7591, %v7593
      %v7597 = vmax.f32 %v7578, %v7592
      %v7598 = vmax.f32 %v7579, %v7594
      %v7599 = vld [vmem:[%s8] sm:$0xf]
      %vm7600 = vcmask 121856
      %v7602 = vsel %vm7600, %v7599, 0
      %v7605 = vsel %vm6669, %v7598, 0
      %7607 = vmatprep.subr.mxu0 0.0
      %7608 = vmatpush1.msra.mxu0 %v7597
      %7609 = vmatprep.subr.mxu0 0.0
      %7610 = vmatpush1.msra.mxu0 %v7605
      %7611 = vmatprep.subr.mxu0 0.0
      %7612 = vmatpush1.msra.mxu0 0.0
      %7613 = vmatprep.subr.mxu0 0.0
      %7614 = vmatpush1.msra.mxu0 0.0
      %7615 = vmatprep.subr.mxu0 0.0
      %7616 = vmatpush1.msra.mxu0 0.0
      %7617 = vmatprep.subr.mxu0 0.0
      %7618 = vmatpush1.msra.mxu0 0.0
      %7619 = vmatprep.subr.mxu0 0.0
      %7620 = vmatpush1.msra.mxu0 0.0
      %7621 = vmatprep.subr.mxu0 0.0
      %7622 = vmatpush1.msra.mxu0 0.0
      %7623 = vmatprep.subr.mxu0 0.0
      %7624 = vmatpush1.msra.mxu0 0.0
      %7625 = vmatprep.subr.mxu0 0.0
      %7626 = vmatpush1.msra.mxu0 0.0
      %7627 = vmatprep.subr.mxu0 0.0
      %7628 = vmatpush1.msra.mxu0 0.0
      %7629 = vmatprep.subr.mxu0 0.0
      %7630 = vmatpush1.msra.mxu0 0.0
      %7631 = vmatprep.subr.mxu0 0.0
      %7632 = vmatpush1.msra.mxu0 0.0
      %7633 = vmatprep.subr.mxu0 0.0
      %7634 = vmatpush1.msra.mxu0 0.0
      %7635 = vmatprep.subr.mxu0 0.0
      %7636 = vmatpush1.msra.mxu0 0.0
      %7637 = vmatprep.subr.mxu0 0.0
      %7638 = vmatpush1.msra.mxu0 0.0
      %7639 = vmatprep.subr.mxu0 0.0
      %7640 = vmatpush1.msra.mxu0 0.0
      %7641 = vmatprep.subr.mxu0 0.0
      %7642 = vmatpush1.msra.mxu0 0.0
      %7643 = vmatprep.subr.mxu0 0.0
      %7644 = vmatpush1.msra.mxu0 0.0
      %7645 = vmatprep.subr.mxu0 0.0
      %7646 = vmatpush1.msra.mxu0 0.0
      %7647 = vmatprep.subr.mxu0 0.0
      %7648 = vmatpush1.msra.mxu0 0.0
      %7649 = vmatprep.subr.mxu0 0.0
      %7650 = vmatpush1.msra.mxu0 0.0
      %7651 = vmatprep.subr.mxu0 0.0
      %7652 = vmatpush1.msra.mxu0 0.0
      %7653 = vmatprep.subr.mxu0 0.0
      %7654 = vmatpush1.msra.mxu0 0.0
      %7655 = vmatprep.subr.mxu0 0.0
      %7656 = vmatpush1.msra.mxu0 0.0
      %7657 = vmatprep.subr.mxu0 0.0
      %7658 = vmatpush1.msra.mxu0 0.0
      %7659 = vmatprep.subr.mxu0 0.0
      %7660 = vmatpush1.msra.mxu0 0.0
      %7661 = vmatprep.subr.mxu0 0.0
      %7662 = vmatpush1.msra.mxu0 0.0
      %7663 = vmatprep.subr.mxu0 0.0
      %7664 = vmatpush1.msra.mxu0 0.0
      %7665 = vmatprep.subr.mxu0 0.0
      %7666 = vmatpush1.msra.mxu0 0.0
      %7667 = vmatprep.subr.mxu0 0.0
      %7668 = vmatpush1.msra.mxu0 0.0
      %7669 = vmatprep.subr.mxu0 0.0
      %7670 = vmatpush1.msra.mxu0 0.0
      %7671 = vmatprep.mubr.f32.mxu0 0.0
      %7672 = vmatmul.mubr.f32.gmra.mrb[0].mxu0 %v7602
      %v7673 = vpop.f32.mrb[0].mxu0
      %v7674 = vadd.f32 0.0, %v7673
      %v7675 = vpop.f32.mrb[0].mxu0
      %7676 = vdwg.mxu0
      %v7677 = vld [vmem:[%s9] sm:$0xff]
      %v7678 = vld [vmem:[%s9 + $0x8] sm:$0xff]
      %v7679 = vld [vmem:[%s9 + $0x10] sm:$0xff]
      %v7680 = vld [vmem:[%s9 + $0x18] sm:$0xff]
      %v7681 = vld [vmem:[%s9 + $0x20] sm:$0xff]
      %v7682 = vld [vmem:[%s9 + $0x28] sm:$0xff]
      %v7683 = vld [vmem:[%s9 + $0x30] sm:$0xff]
      %v7684 = vld [vmem:[%s9 + $0x38] sm:$0xff]
      %v7685 = vld [vmem:[%s9 + $0x40] sm:$0xff]
      %v7686 = vld [vmem:[%s9 + $0x48] sm:$0xff]
      %v7687 = vld [vmem:[%s9 + $0x50] sm:$0xff]
      %v7688 = vld [vmem:[%s9 + $0x58] sm:$0xff]
      %v7689 = vld [vmem:[%s9 + $0x60] sm:$0xff]
      %v7690 = vld [vmem:[%s9 + $0x68] sm:$0xff]
      %v7691 = vld [vmem:[%s9 + $0x70] sm:$0xff]
      %v7692 = vld [vmem:[%s9 + $0x78] sm:$0xff]
      %v7693 = vld [vmem:[%s9 + $0x80] sm:$0xff]
      %v7694 = vld [vmem:[%s9 + $0x88] sm:$0xff]
      %v7695 = vld [vmem:[%s9 + $0x90] sm:$0xff]
      %v7696 = vld [vmem:[%s9 + $0x98] sm:$0xff]
      %v7697 = vld [vmem:[%s9 + $0xa0] sm:$0xff]
      %v7698 = vld [vmem:[%s9 + $0xa8] sm:$0xff]
      %v7699 = vld [vmem:[%s9 + $0xb0] sm:$0xff]
      %v7700 = vld [vmem:[%s9 + $0xb8] sm:$0xff]
      %v7701 = vld [vmem:[%s9 + $0xc0] sm:$0xff]
      %v7702 = vld [vmem:[%s9 + $0xc8] sm:$0xff]
      %v7703 = vld [vmem:[%s9 + $0xd0] sm:$0xff]
      %v7704 = vld [vmem:[%s9 + $0xd8] sm:$0xff]
      %v7705 = vld [vmem:[%s9 + $0xe0] sm:$0xff]
      %v7706 = vld [vmem:[%s9 + $0xe8] sm:$0xff]
      %v7707 = vld [vmem:[%s9 + $0xf0] sm:$0xff]
      %v7708 = vld [vmem:[%s9 + $0xf8] sm:$0xff]
      %v7710 = vsel %vm6407, %v7674, 0
      %7712 = vmatprep.subr.mxu0 %v7678
      %7713 = vmatpush1.msra.mxu0 %v7677
      %7714 = vmatprep.subr.mxu0 %v7682
      %7715 = vmatpush1.msra.mxu0 %v7681
      %7716 = vmatprep.subr.mxu0 %v7686
      %7717 = vmatpush1.msra.mxu0 %v7685
      %7718 = vmatprep.subr.mxu0 %v7690
      %7719 = vmatpush1.msra.mxu0 %v7689
      %7720 = vmatprep.subr.mxu0 %v7694
      %7721 = vmatpush1.msra.mxu0 %v7693
      %7722 = vmatprep.subr.mxu0 %v7698
      %7723 = vmatpush1.msra.mxu0 %v7697
      %7724 = vmatprep.subr.mxu0 %v7702
      %7725 = vmatpush1.msra.mxu0 %v7701
      %7726 = vmatprep.subr.mxu0 %v7706
      %7727 = vmatpush1.msra.mxu0 %v7705
      %7728 = vmatprep.subr.mxu0 0.0
      %7729 = vmatpush1.msra.mxu0 0.0
      %7730 = vmatprep.subr.mxu0 0.0
      %7731 = vmatpush1.msra.mxu0 0.0
      %7732 = vmatprep.subr.mxu0 0.0
      %7733 = vmatpush1.msra.mxu0 0.0
      %7734 = vmatprep.subr.mxu0 0.0
      %7735 = vmatpush1.msra.mxu0 0.0
      %7736 = vmatprep.subr.mxu0 0.0
      %7737 = vmatpush1.msra.mxu0 0.0
      %7738 = vmatprep.subr.mxu0 0.0
      %7739 = vmatpush1.msra.mxu0 0.0
      %7740 = vmatprep.subr.mxu0 0.0
      %7741 = vmatpush1.msra.mxu0 0.0
      %7742 = vmatprep.subr.mxu0 0.0
      %7743 = vmatpush1.msra.mxu0 0.0
      %7744 = vmatprep.subr.mxu0 0.0
      %7745 = vmatpush1.msra.mxu0 0.0
      %7746 = vmatprep.subr.mxu0 0.0
      %7747 = vmatpush1.msra.mxu0 0.0
      %7748 = vmatprep.subr.mxu0 0.0
      %7749 = vmatpush1.msra.mxu0 0.0
      %7750 = vmatprep.subr.mxu0 0.0
      %7751 = vmatpush1.msra.mxu0 0.0
      %7752 = vmatprep.subr.mxu0 0.0
      %7753 = vmatpush1.msra.mxu0 0.0
      %7754 = vmatprep.subr.mxu0 0.0
      %7755 = vmatpush1.msra.mxu0 0.0
      %7756 = vmatprep.subr.mxu0 0.0
      %7757 = vmatpush1.msra.mxu0 0.0
      %7758 = vmatprep.subr.mxu0 0.0
      %7759 = vmatpush1.msra.mxu0 0.0
      %7760 = vmatprep.subr.mxu0 0.0
      %7761 = vmatpush1.msra.mxu0 0.0
      %7762 = vmatprep.subr.mxu0 0.0
      %7763 = vmatpush1.msra.mxu0 0.0
      %7764 = vmatprep.subr.mxu0 0.0
      %7765 = vmatpush1.msra.mxu0 0.0
      %7766 = vmatprep.subr.mxu0 0.0
      %7767 = vmatpush1.msra.mxu0 0.0
      %7768 = vmatprep.subr.mxu0 0.0
      %7769 = vmatpush1.msra.mxu0 0.0
      %7770 = vmatprep.subr.mxu0 0.0
      %7771 = vmatpush1.msra.mxu0 0.0
      %7772 = vmatprep.subr.mxu0 0.0
      %7773 = vmatpush1.msra.mxu0 0.0
      %7774 = vmatprep.subr.mxu0 0.0
      %7775 = vmatpush1.msra.mxu0 0.0
      %7776 = vmatprep.mubr.f32.mxu0 0.0
      %7777 = vmatmul.mubr.f32.gmra.mrb[0].mxu0 %v7710
      %v7778 = vpop.f32.mrb[0].mxu0
      %v7779 = vadd.f32 0.0, %v7778
      %v7780 = vpop.f32.mrb[0].mxu0
      %v7781 = vadd.f32 0.0, %v7780
      %7782 = vdwg.mxu0
      %7783 = vmatprep.subr.mxu0 %v7680
      %7784 = vmatpush1.msra.mxu0 %v7679
      %7785 = vmatprep.subr.mxu0 %v7684
      %7786 = vmatpush1.msra.mxu0 %v7683
      %7787 = vmatprep.subr.mxu0 %v7688
      %7788 = vmatpush1.msra.mxu0 %v7687
      %7789 = vmatprep.subr.mxu0 %v7692
      %7790 = vmatpush1.msra.mxu0 %v7691
      %7791 = vmatprep.subr.mxu0 %v7696
      %7792 = vmatpush1.msra.mxu0 %v7695
      %7793 = vmatprep.subr.mxu0 %v7700
      %7794 = vmatpush1.msra.mxu0 %v7699
      %7795 = vmatprep.subr.mxu0 %v7704
      %7796 = vmatpush1.msra.mxu0 %v7703
      %7797 = vmatprep.subr.mxu0 %v7708
      %7798 = vmatpush1.msra.mxu0 %v7707
      %7799 = vmatprep.subr.mxu0 0.0
      %7800 = vmatpush1.msra.mxu0 0.0
      %7801 = vmatprep.subr.mxu0 0.0
      %7802 = vmatpush1.msra.mxu0 0.0
      %7803 = vmatprep.subr.mxu0 0.0
      %7804 = vmatpush1.msra.mxu0 0.0
      %7805 = vmatprep.subr.mxu0 0.0
      %7806 = vmatpush1.msra.mxu0 0.0
      %7807 = vmatprep.subr.mxu0 0.0
      %7808 = vmatpush1.msra.mxu0 0.0
      %7809 = vmatprep.subr.mxu0 0.0
      %7810 = vmatpush1.msra.mxu0 0.0
      %7811 = vmatprep.subr.mxu0 0.0
      %7812 = vmatpush1.msra.mxu0 0.0
      %7813 = vmatprep.subr.mxu0 0.0
      %7814 = vmatpush1.msra.mxu0 0.0
      %7815 = vmatprep.subr.mxu0 0.0
      %7816 = vmatpush1.msra.mxu0 0.0
      %7817 = vmatprep.subr.mxu0 0.0
      %7818 = vmatpush1.msra.mxu0 0.0
      %7819 = vmatprep.subr.mxu0 0.0
      %7820 = vmatpush1.msra.mxu0 0.0
      %7821 = vmatprep.subr.mxu0 0.0
      %7822 = vmatpush1.msra.mxu0 0.0
      %7823 = vmatprep.subr.mxu0 0.0
      %7824 = vmatpush1.msra.mxu0 0.0
      %7825 = vmatprep.subr.mxu0 0.0
      %7826 = vmatpush1.msra.mxu0 0.0
      %7827 = vmatprep.subr.mxu0 0.0
      %7828 = vmatpush1.msra.mxu0 0.0
      %7829 = vmatprep.subr.mxu0 0.0
      %7830 = vmatpush1.msra.mxu0 0.0
      %7831 = vmatprep.subr.mxu0 0.0
      %7832 = vmatpush1.msra.mxu0 0.0
      %7833 = vmatprep.subr.mxu0 0.0
      %7834 = vmatpush1.msra.mxu0 0.0
      %7835 = vmatprep.subr.mxu0 0.0
      %7836 = vmatpush1.msra.mxu0 0.0
      %7837 = vmatprep.subr.mxu0 0.0
      %7838 = vmatpush1.msra.mxu0 0.0
      %7839 = vmatprep.subr.mxu0 0.0
      %7840 = vmatpush1.msra.mxu0 0.0
      %7841 = vmatprep.subr.mxu0 0.0
      %7842 = vmatpush1.msra.mxu0 0.0
      %7843 = vmatprep.subr.mxu0 0.0
      %7844 = vmatpush1.msra.mxu0 0.0
      %7845 = vmatprep.subr.mxu0 0.0
      %7846 = vmatpush1.msra.mxu0 0.0
      %7847 = vmatprep.mubr.f32.mxu0 0.0
      %7848 = vmatmul.mubr.f32.gmra.mrb[0].mxu0 %v7710
      %v7849 = vpop.f32.mrb[0].mxu0
      %v7850 = vadd.f32 0.0, %v7849
      %v7851 = vpop.f32.mrb[0].mxu0
      %v7852 = vadd.f32 0.0, %v7851
      %7853 = vdwg.mxu0
      %v7854 = vld [vmem:[%s10] sm:$0x1]
      %v7855 = vadd.f32 %v7854, %v7779
      %v7858 = vunpack.c.l.s4 1966171168
      %v7859 = vunpack.c.0.s8 %v7858
      %v7860 = vlaneseq
      %v7861 = vshrl.u32 %v7860, 7
      %v7862 = vsub.s32 %v7859, %v7861
      %v7863 = vrot.slane %v7781, %v7862
      %v7864 = vcombine.high %v7863, %v7863
      %v7866 = vunpack.c.l.s4 1966171168
      %v7867 = vunpack.c.0.s8 %v7866
      %v7868 = vlaneseq
      %v7869 = vshrl.u32 %v7868, 7
      %v7870 = vsub.s32 %v7867, %v7869
      %v7871 = vrot.slane %v7864, %v7870
      %v7873 = vadd.f32 %v7855, %v7871
      %v7876 = vunpack.c.l.s4 1966171168
      %v7877 = vunpack.c.0.s8 %v7876
      %v7878 = vlaneseq
      %v7879 = vshrl.u32 %v7878, 7
      %v7880 = vsub.s32 %v7877, %v7879
      %v7881 = vrot.slane %v7850, %v7880
      %v7883 = vunpack.c.l.s4 1966171168
      %v7884 = vunpack.c.0.s8 %v7883
      %v7885 = vlaneseq
      %v7886 = vshrl.u32 %v7885, 7
      %v7887 = vsub.s32 %v7884, %v7886
      %v7888 = vrot.slane %v7881, %v7887
      %v7889 = vcombine.high %v7888, %v7888
      %v7891 = vadd.f32 %v7873, %v7889
      %v7894 = vunpack.c.l.s4 1966171168
      %v7895 = vunpack.c.0.s8 %v7894
      %v7896 = vlaneseq
      %v7897 = vshrl.u32 %v7896, 7
      %v7898 = vsub.s32 %v7895, %v7897
      %v7899 = vrot.slane %v7852, %v7898
      %v7900 = vcombine.high %v7899, %v7899
      %v7902 = vunpack.c.l.s4 1966171168
      %v7903 = vunpack.c.0.s8 %v7902
      %v7904 = vlaneseq
      %v7905 = vshrl.u32 %v7904, 7
      %v7906 = vsub.s32 %v7903, %v7905
      %v7907 = vrot.slane %v7900, %v7906
      %v7908 = vcombine.high %v7907, %v7907
      %v7910 = vadd.f32 %v7891, %v7908
      %v7911 = vmax.f32 %v7910, 0.0
      %v7912 = vld [vmem:[%s11] sm:$0x1]
      %v7913 = vmul.f32 %v7911, %v7912
      %v7914 = vsel %vm7064, %v7913, 0.0
      %7915 = vadd.xlane.f32.xlu0 %v7914
      %v7916 = vpop.xlane.xlu0 %7915
      %v7917 = vld [vmem:[#allocation4] sm:$0x1]
      %v7918 = vadd.f32 %v7916, %v7917
      %vm7919 = vcmask 0
      %7920 = vst.msk [vmem:[%s438] sm:$0x1] %vm7919, %v7918
      %p7921 = scmp.lt.s32.totalorder %s26, 1
      %s7922 = scalar_select %p7921, %s26, 1
      %s7923 = scalar_lea.vmem %s13, %s7922
      // Predicated region
      $region73: #{trainable_reward_forward.1} parent=71 // pred_check
        %p7924 = pneg %p322
      $region74: #{trainable_reward_forward.1} parent=71 // pred_check_branch
        %7926 = sbr.rel (%p7924) target = $region76
      $region75: #{trainable_reward_forward.1} parent=71 // pred_region
        _
      $region76: #{trainable_reward_forward.1} parent=71 // pred_fallthru
        _
    $region72: #{trainable_reward_forward.1} parent=5 // pred_fallthru
      _
    %p7927 = scmp.le.s32.totalorder 2, %s21
    // Predicated region
    $region77: #{trainable_reward_forward.1} parent=5 // pred_check
      %p7928 = pneg %p7927
    $region78: #{trainable_reward_forward.1} parent=5 // pred_check_branch
      %7930 = sbr.rel (%p7928) target = $region80
    $region79: #{trainable_reward_forward.1} parent=5 // pred_region
      %s7931 = ssub.s32 %s21, 2
      // Predicated region
      $region81: #{trainable_reward_forward.1} parent=79 // pred_check
        %p7932 = pneg %p328
      $region82: #{trainable_reward_forward.1} parent=79 // pred_check_branch
        %7934 = sbr.rel (%p7932) target = $region84
      $region83: #{trainable_reward_forward.1} parent=79 // pred_region
        %p7935 = scmp.lt.s32.totalorder %s27, 1
        %s7936 = scalar_select %p7935, %s27, 1
        %s7937 = scalar_lea.vmem %s13, %s7936
      $region84: #{trainable_reward_forward.1} parent=79 // pred_fallthru
        _
    $region80: #{trainable_reward_forward.1} parent=5 // pred_fallthru
      _
  $region6: #{trainable_reward_forward.1} parent=0 // loop_footer
    %s25 = sadd.s32 1, %s21
  $region7: #{trainable_reward_forward.1} parent=0 // loop_footer_branch
    %20 = sbr.rel target = $region3
  $region8: #{trainable_reward_forward.1} parent=0 // loop_exit
    _

</llo_original>
